<compile_context>
chip_gen: v7x
topology: tpu7x:2x2x1
jax: 0.10.0
libtpu: 0.0.40
codegen_flags: <defaults>
</compile_context>

<pallas_src>
import functools

import jax
import jax.numpy as jnp
from jax.experimental import pallas as pl
from jax.experimental.pallas import tpu as pltpu

BN_EPS = 1e-5
LEAKY_SLOPE = 0.01
LANES = 128     # lane width of activations / weight output dim
SUBLANE = 16    # bf16 sublane multiple used to pad the weight C_in (contraction) dim

# (kernel_size, stride, padding, transposed?, use_bn?, activation) per layer
LAYERS = (
    (7,  1, 0, False, True,  "leaky"),   # Conv1d   w      -> 2w
    (4,  2, 1, False, True,  "leaky"),   # Conv1d   2w     -> 4w
    (4,  2, 1, False, True,  "leaky"),   # Conv1d   4w     -> 8w
    (4,  2, 1, False, True,  "leaky"),   # Conv1d   8w     -> 16w
    (10, 1, 0, False, False, "none"),    # Conv1d   16w    -> latent
    (10, 1, 0, True,  True,  "relu"),    # ConvT1d  latent -> 16w
    (4,  2, 1, True,  True,  "relu"),    # ConvT1d  16w    -> 8w
    (4,  2, 1, True,  True,  "relu"),    # ConvT1d  8w     -> 4w
    (4,  2, 1, True,  True,  "relu"),    # ConvT1d  4w     -> 2w
    (7,  1, 0, True,  False, "tanh"),    # ConvT1d  2w     -> w
)
LAYER_NAMES = ("e1", "e2", "e3", "e4", "e5", "d1", "d2", "d3", "d4", "d5")


def _round_up(x, m):
    return ((x + m - 1) // m) * m


# ------------------------------- static plan -----------------------------------
def _build_plan(params, l0):
    """Static per-layer geometry: lengths, channel padding, weight-pack row offsets."""
    plan = []
    row_off = 0
    l_in = l0
    for name, (k, s, p, transposed, use_bn, act) in zip(LAYER_NAMES, LAYERS):
        w = params[name + "_w"]
        if transposed:
            cin, cout = int(w.shape[0]), int(w.shape[1])
        else:
            cout, cin = int(w.shape[0]), int(w.shape[1])
        assert cin <= LANES and cout <= LANES
        cin_pad = _round_up(cin, SUBLANE)
        if transposed:
            assert k - 1 - p >= 0
            l_out = (l_in - 1) * s - 2 * p + k
            # zero-stuffed (stride) + symmetrically padded (k-1-p) effective input
            l_e = s * (l_in - 1) + 1 + 2 * (k - 1 - p)
            l_s1 = l_e - k + 1            # == l_out
            down = False
        else:
            l_out = (l_in + 2 * p - k) // s + 1
            l_e = l_in + 2 * p
            l_s1 = l_e - k + 1            # stride-1 conv length; downsample if s > 1
            down = s != 1
        assert l_out >= 1
        plan.append(dict(name=name, k=k, stride=s, pad=p, transposed=transposed,
                         use_bn=use_bn, act=act, cin=cin, cout=cout, cin_pad=cin_pad,
                         row_off=row_off, l_in=l_in, l_out=l_out, l_e=l_e, l_s1=l_s1,
                         down=down))
        row_off += k * cin_pad
        l_in = l_out
    return tuple(plan)


# ------------------------------ Pallas kernel -----------------------------------
def _autoencoder_kernel(plan, n_batch, x_ref, w_ref, bias_ref, gamma_ref, beta_ref, o_ref):
    bias_all = bias_ref[...]     # (n_layers, 128) f32
    gamma_all = gamma_ref[...]   # (n_layers, 128) f32
    beta_all = beta_ref[...]     # (n_layers, 128) f32

    # Batch-stacked activation, (n_batch * l, 128) bf16, lane-dense, entirely in VMEM.
    h_stack = x_ref[...]
    n_layers = len(plan)

    for li, lp in enumerate(plan):
        k, s, p = lp["k"], lp["stride"], lp["pad"]
        cin_pad = lp["cin_pad"]
        rows = k * cin_pad
        l_in, l_out, l_e, l_s1 = lp["l_in"], lp["l_out"], lp["l_e"], lp["l_s1"]
        transposed, down = lp["transposed"], lp["down"]

        w_l = w_ref[lp["row_off"]:lp["row_off"] + rows, :]       # (k*cin_pad, 128) bf16

        # ---- 1) per-sample stride-1 "effective" input e_b of length l_e ----------
        if transposed and s > 1:
            # Zero-stuffing + symmetric (k-1-p) padding as ONE batched 0/1 matmul
            # (exact on bf16); handles both samples block-diagonally.
            off = k - 1 - p
            r = jax.lax.broadcasted_iota(jnp.int32, (n_batch * l_e, n_batch * l_in), 0)
            c = jax.lax.broadcasted_iota(jnp.int32, (n_batch * l_e, n_batch * l_in), 1)
            sel = None
            for b in range(n_batch):
                blk = (c >= b * l_in) & (c < (b + 1) * l_in)
                term = blk & (r == s * (c - b * l_in) + off + b * l_e)
                sel = term if sel is None else (sel | term)
            u = jnp.where(sel, 1.0, 0.0).astype(jnp.bfloat16)
            e_stack = jnp.dot(u, h_stack,
                              preferred_element_type=jnp.float32).astype(jnp.bfloat16)
            es = [e_stack[b * l_e:(b + 1) * l_e, :] for b in range(n_batch)]
        else:
            # stride-1 (forward or transposed) / forward-padded input: zero rows only.
            lpad = (k - 1 - p) if transposed else p
            if lpad > 0:
                z = jnp.zeros((lpad, LANES), jnp.bfloat16)
                es = [jnp.concatenate(
                          [z, h_stack[b * l_in:(b + 1) * l_in, :], z], axis=0)
                      for b in range(n_batch)]
            else:
                es = [h_stack[b * l_in:(b + 1) * l_in, :] for b in range(n_batch)]

        # ---- 2) im2col: lane-concat of k static tap slices, batch stacked on M ---
        patches = []
        for e in es:
            taps = [e[t:t + l_s1, :cin_pad] for t in range(k)]
            patches.append(jnp.concatenate(taps, axis=1))        # (l_s1, k*cin_pad)
        pmat = jnp.concatenate(patches, axis=0)                  # (n*l_s1, k*cin_pad)

        # ---- 3) forward strided conv: select every s-th output row (0/1 matmul) --
        if down:
            r = jax.lax.broadcasted_iota(jnp.int32, (n_batch * l_out, n_batch * l_s1), 0)
            c = jax.lax.broadcasted_iota(jnp.int32, (n_batch * l_out, n_batch * l_s1), 1)
            sel = None
            for b in range(n_batch):
                blk = (r >= b * l_out) & (r < (b + 1) * l_out)
                term = blk & (c == s * (r - b * l_out) + b * l_s1)
                sel = term if sel is None else (sel | term)
            dmat = jnp.where(sel, 1.0, 0.0).astype(jnp.bfloat16)
            pmat = jnp.dot(dmat, pmat,
                           preferred_element_type=jnp.float32).astype(jnp.bfloat16)

        # ---- 4) ONE conv matmul per layer for the whole batch (f32 accumulation) -
        y = jnp.dot(pmat, w_l, preferred_element_type=jnp.float32)   # (n*l_out, 128)
        y = y + bias_all[li:li + 1, :]

        # ---- 5) BatchNorm1d training-mode batch stats (biased var, eps=1e-5), f32 -
        if lp["use_bn"]:
            cnt = float(n_batch * l_out)
            mean = jnp.sum(y, axis=0, keepdims=True) / cnt
            d0 = y - mean
            var = jnp.sum(d0 * d0, axis=0, keepdims=True) / cnt
            inv = jax.lax.rsqrt(var + BN_EPS)
            y = d0 * inv * gamma_all[li:li + 1, :] + beta_all[li:li + 1, :]

        act = lp["act"]
        if act == "leaky":
            y = jnp.where(y > 0, y, LEAKY_SLOPE * y)
        elif act == "relu":
            y = jnp.maximum(y, 0.0)
        elif act == "tanh":
            y = jnp.tanh(y)

        if li == n_layers - 1:
            o_ref[...] = y.astype(o_ref.dtype)       # single lane-dense full store
        else:
            h_stack = y.astype(jnp.bfloat16)


# ----------------------------- parameter packing --------------------------------
def _pad_vec(v):
    return jnp.pad(v.astype(jnp.float32), (0, LANES - v.shape[0]))


def _pack_weight_block(w, k, transposed, cin, cout, cin_pad):
    """Per-layer (k*cin_pad, 128) bf16 block; tap t occupies rows [t*cin_pad, (t+1)*cin_pad)."""
    if transposed:
        # torch ConvTranspose1d weight (C_in, C_out, k); taps stored flipped so the
        # in-kernel stride-1 correlation over the padded/zero-stuffed input is exact.
        taps = [w[:, :, k - 1 - t] for t in range(k)]               # (cin, cout)
    else:
        # torch Conv1d weight (C_out, C_in, k); tap t as an in->out map is w[:,:,t].T
        taps = [jnp.transpose(w[:, :, t]) for t in range(k)]        # (cin, cout)
    taps = [jnp.pad(tp.astype(jnp.float32),
                    ((0, cin_pad - cin), (0, LANES - cout))) for tp in taps]
    return jnp.concatenate(taps, axis=0)


def _pack_params(params, plan):
    blocks, biases, gammas, betas = [], [], [], []
    for lp in plan:
        name = lp["name"]
        blocks.append(_pack_weight_block(params[name + "_w"], lp["k"], lp["transposed"],
                                         lp["cin"], lp["cout"], lp["cin_pad"]))
        biases.append(_pad_vec(params[name + "_b"]))
        if lp["use_bn"]:
            gammas.append(_pad_vec(params[name + "_g"]))
            betas.append(_pad_vec(params[name + "_be"]))
        else:
            gammas.append(jnp.zeros((LANES,), jnp.float32))
            betas.append(jnp.zeros((LANES,), jnp.float32))
    w_pack = jnp.concatenate(blocks, axis=0).astype(jnp.bfloat16)   # (sum_rows, 128)
    return w_pack, jnp.stack(biases), jnp.stack(gammas), jnp.stack(betas)


# ------------------------------- forward pass -----------------------------------
def autoencoder_forward(params, x):
    """x: (N, window_size, L) in PyTorch NCL layout -> (N, window_size, L_out)."""
    n, c_in, l0 = x.shape
    plan = _build_plan(params, l0)
    l_final = plan[-1]["l_out"]
    w_pack, bias_s, gamma_s, beta_s = _pack_params(params, plan)

    # One host-side layout change: NCL -> batch-stacked (N*L, 128), lane-dense, bf16.
    x_nlc = jnp.transpose(x, (0, 2, 1))
    x_pad = jnp.pad(x_nlc, ((0, 0), (0, 0), (0, LANES - c_in)))
    x2d = x_pad.reshape(n * l0, LANES).astype(jnp.bfloat16)

    vmem = pl.BlockSpec(memory_space=pltpu.MemorySpace.VMEM)
    kernel = functools.partial(_autoencoder_kernel, plan, n)
    out2d = pl.pallas_call(
        kernel,
        out_shape=jax.ShapeDtypeStruct((n * l_final, LANES), jnp.float32),
        in_specs=[vmem] * 5,
        out_specs=vmem,
        compiler_params=pltpu.CompilerParams(vmem_limit_bytes=32 * 1024 * 1024),
    )(x2d, w_pack, bias_s, gamma_s, beta_s)

    # Drop padded lanes, back to PyTorch NCL layout (single transpose).
    out = out2d.reshape(n, l_final, LANES)[:, :, :c_in]
    return jnp.transpose(out, (0, 2, 1))


# ----------------------------- parameter creation --------------------------------
def _init_conv(key, c_out, c_in, k):
    kw, kb = jax.random.split(key)
    w = jax.random.normal(kw, (c_out, c_in, k), jnp.float32) * 0.05
    b = jax.random.normal(kb, (c_out,), jnp.float32) * 0.05
    return w, b


def _init_convt(key, c_in, c_out, k):
    kw, kb = jax.random.split(key)
    w = jax.random.normal(kw, (c_in, c_out, k), jnp.float32) * 0.05
    b = jax.random.normal(kb, (c_out,), jnp.float32) * 0.05
    return w, b


def _init_bn(c):
    return jnp.ones((c,), jnp.float32), jnp.zeros((c,), jnp.float32)


def make_params(key, window_size, latent_size):
    w = window_size
    keys = jax.random.split(key, 10)
    p = {}
    # Encoder
    p["e1_w"], p["e1_b"] = _init_conv(keys[0], 2 * w, w, 7)
    p["e1_g"], p["e1_be"] = _init_bn(2 * w)
    p["e2_w"], p["e2_b"] = _init_conv(keys[1], 4 * w, 2 * w, 4)
    p["e2_g"], p["e2_be"] = _init_bn(4 * w)
    p["e3_w"], p["e3_b"] = _init_conv(keys[2], 8 * w, 4 * w, 4)
    p["e3_g"], p["e3_be"] = _init_bn(8 * w)
    p["e4_w"], p["e4_b"] = _init_conv(keys[3], 16 * w, 8 * w, 4)
    p["e4_g"], p["e4_be"] = _init_bn(16 * w)
    p["e5_w"], p["e5_b"] = _init_conv(keys[4], latent_size, 16 * w, 10)
    # Decoder
    p["d1_w"], p["d1_b"] = _init_convt(keys[5], latent_size, 16 * w, 10)
    p["d1_g"], p["d1_be"] = _init_bn(16 * w)
    p["d2_w"], p["d2_b"] = _init_convt(keys[6], 16 * w, 8 * w, 4)
    p["d2_g"], p["d2_be"] = _init_bn(8 * w)
    p["d3_w"], p["d3_b"] = _init_convt(keys[7], 8 * w, 4 * w, 4)
    p["d3_g"], p["d3_be"] = _init_bn(4 * w)
    p["d4_w"], p["d4_b"] = _init_convt(keys[8], 4 * w, 2 * w, 4)
    p["d4_g"], p["d4_be"] = _init_bn(2 * w)
    p["d5_w"], p["d5_b"] = _init_convt(keys[9], 2 * w, w, 7)
    return p


# ---------------------------------- main ------------------------------------------
if __name__ == "__main__":
    window_size = 4
    latent_size = 8
    batch = 2
    seq_len = 86   # encoder: 86 -> 80 -> 40 -> 20 -> 10 -> 1 ; decoder maps back to 86

    key = jax.random.PRNGKey(0)
    k_param, k_x = jax.random.split(key)
    params = make_params(k_param, window_size, latent_size)
    x = jax.random.normal(k_x, (batch, window_size, seq_len), jnp.float32)

    fwd = jax.jit(autoencoder_forward)
    y = jax.block_until_ready(fwd(params, x))

    assert y.shape == (batch, window_size, seq_len), y.shape
    assert bool(jnp.all(jnp.isfinite(y)))
    print("KERNEL_OK")
</pallas_src>

<mosaic_0001>
module attributes {stable_mosaic.version = 11 : i64} {
  func.func @_autoencoder_kernel(%arg0: memref<172x128xbf16, #tpu.memory_space<vmem>>, %arg1: memref<1728x128xbf16, #tpu.memory_space<vmem>>, %arg2: memref<10x128xf32, #tpu.memory_space<vmem>>, %arg3: memref<10x128xf32, #tpu.memory_space<vmem>>, %arg4: memref<10x128xf32, #tpu.memory_space<vmem>>, %arg5: memref<172x128xf32, #tpu.memory_space<vmem>>) attributes {dimension_semantics = [], scalar_prefetch = 0 : i64, scratch_operands = 0 : i64, tpu.core_type = #tpu.core_type<tc>} {
    %c0 = arith.constant 0 : index
    %c0_0 = arith.constant 0 : index
    %0 = vector.load %arg2[%c0, %c0_0] : memref<10x128xf32, #tpu.memory_space<vmem>>, vector<10x128xf32>
    %c0_1 = arith.constant 0 : index
    %c0_2 = arith.constant 0 : index
    %1 = vector.load %arg3[%c0_1, %c0_2] : memref<10x128xf32, #tpu.memory_space<vmem>>, vector<10x128xf32>
    %c0_3 = arith.constant 0 : index
    %c0_4 = arith.constant 0 : index
    %2 = vector.load %arg4[%c0_3, %c0_4] : memref<10x128xf32, #tpu.memory_space<vmem>>, vector<10x128xf32>
    %c0_5 = arith.constant 0 : index
    %c0_6 = arith.constant 0 : index
    %3 = vector.load %arg0[%c0_5, %c0_6] : memref<172x128xbf16, #tpu.memory_space<vmem>>, vector<172x128xbf16>
    %c0_7 = arith.constant 0 : index
    %c0_8 = arith.constant 0 : index
    %4 = vector.load %arg1[%c0_7, %c0_8] : memref<1728x128xbf16, #tpu.memory_space<vmem>>, vector<112x128xbf16>
    %5 = vector.extract_strided_slice %3 {offsets = [0, 0], sizes = [86, 128], strides = [1, 1]} : vector<172x128xbf16> to vector<86x128xbf16>
    %6 = vector.extract_strided_slice %3 {offsets = [86, 0], sizes = [86, 128], strides = [1, 1]} : vector<172x128xbf16> to vector<86x128xbf16>
    %7 = vector.extract_strided_slice %5 {offsets = [0, 0], sizes = [80, 16], strides = [1, 1]} : vector<86x128xbf16> to vector<80x16xbf16>
    %8 = vector.extract_strided_slice %5 {offsets = [1, 0], sizes = [80, 16], strides = [1, 1]} : vector<86x128xbf16> to vector<80x16xbf16>
    %9 = vector.extract_strided_slice %5 {offsets = [2, 0], sizes = [80, 16], strides = [1, 1]} : vector<86x128xbf16> to vector<80x16xbf16>
    %10 = vector.extract_strided_slice %5 {offsets = [3, 0], sizes = [80, 16], strides = [1, 1]} : vector<86x128xbf16> to vector<80x16xbf16>
    %11 = vector.extract_strided_slice %5 {offsets = [4, 0], sizes = [80, 16], strides = [1, 1]} : vector<86x128xbf16> to vector<80x16xbf16>
    %12 = vector.extract_strided_slice %5 {offsets = [5, 0], sizes = [80, 16], strides = [1, 1]} : vector<86x128xbf16> to vector<80x16xbf16>
    %13 = vector.extract_strided_slice %5 {offsets = [6, 0], sizes = [80, 16], strides = [1, 1]} : vector<86x128xbf16> to vector<80x16xbf16>
    %14 = tpu.concatenate %7, %8, %9, %10, %11, %12, %13 in 1 : vector<80x16xbf16>, vector<80x16xbf16>, vector<80x16xbf16>, vector<80x16xbf16>, vector<80x16xbf16>, vector<80x16xbf16>, vector<80x16xbf16> -> vector<80x112xbf16>
    %15 = vector.extract_strided_slice %6 {offsets = [0, 0], sizes = [80, 16], strides = [1, 1]} : vector<86x128xbf16> to vector<80x16xbf16>
    %16 = vector.extract_strided_slice %6 {offsets = [1, 0], sizes = [80, 16], strides = [1, 1]} : vector<86x128xbf16> to vector<80x16xbf16>
    %17 = vector.extract_strided_slice %6 {offsets = [2, 0], sizes = [80, 16], strides = [1, 1]} : vector<86x128xbf16> to vector<80x16xbf16>
    %18 = vector.extract_strided_slice %6 {offsets = [3, 0], sizes = [80, 16], strides = [1, 1]} : vector<86x128xbf16> to vector<80x16xbf16>
    %19 = vector.extract_strided_slice %6 {offsets = [4, 0], sizes = [80, 16], strides = [1, 1]} : vector<86x128xbf16> to vector<80x16xbf16>
    %20 = vector.extract_strided_slice %6 {offsets = [5, 0], sizes = [80, 16], strides = [1, 1]} : vector<86x128xbf16> to vector<80x16xbf16>
    %21 = vector.extract_strided_slice %6 {offsets = [6, 0], sizes = [80, 16], strides = [1, 1]} : vector<86x128xbf16> to vector<80x16xbf16>
    %22 = tpu.concatenate %15, %16, %17, %18, %19, %20, %21 in 1 : vector<80x16xbf16>, vector<80x16xbf16>, vector<80x16xbf16>, vector<80x16xbf16>, vector<80x16xbf16>, vector<80x16xbf16>, vector<80x16xbf16> -> vector<80x112xbf16>
    %23 = tpu.concatenate %14, %22 in 0 : vector<80x112xbf16>, vector<80x112xbf16> -> vector<160x112xbf16>
    %cst = arith.constant dense<0.000000e+00> : vector<160x128xf32>
    %24 = tpu.matmul %23, %4, %cst {dimension_numbers = #tpu.dot_dimension_numbers<[1], [0], [0], [1], [0, 0, 1, 1], [], []>} : vector<160x112xbf16>, vector<112x128xbf16>, vector<160x128xf32> -> vector<160x128xf32>
    %25 = vector.extract_strided_slice %0 {offsets = [0, 0], sizes = [1, 128], strides = [1, 1]} : vector<10x128xf32> to vector<1x128xf32>
    %26 = vector.broadcast %25 : vector<1x128xf32> to vector<160x128xf32>
    %27 = arith.addf %24, %26 : vector<160x128xf32>
    %cst_9 = arith.constant dense<0.000000e+00> : vector<128xf32>
    %28 = vector.multi_reduction <add>, %27, %cst_9 [0] : vector<160x128xf32> to vector<128xf32>
    %29 = vector.shape_cast %28 : vector<128xf32> to vector<1x128xf32>
    %cst_10 = arith.constant 1.600000e+02 : f32
    %30 = vector.broadcast %cst_10 : f32 to vector<1x128xf32>
    %31 = arith.divf %29, %30 : vector<1x128xf32>
    %32 = vector.broadcast %31 : vector<1x128xf32> to vector<160x128xf32>
    %33 = arith.subf %27, %32 : vector<160x128xf32>
    %34 = arith.mulf %33, %33 : vector<160x128xf32>
    %cst_11 = arith.constant dense<0.000000e+00> : vector<128xf32>
    %35 = vector.multi_reduction <add>, %34, %cst_11 [0] : vector<160x128xf32> to vector<128xf32>
    %36 = vector.shape_cast %35 : vector<128xf32> to vector<1x128xf32>
    %cst_12 = arith.constant 1.600000e+02 : f32
    %37 = vector.broadcast %cst_12 : f32 to vector<1x128xf32>
    %38 = arith.divf %36, %37 : vector<1x128xf32>
    %cst_13 = arith.constant 9.99999974E-6 : f32
    %39 = vector.broadcast %cst_13 : f32 to vector<1x128xf32>
    %40 = arith.addf %38, %39 : vector<1x128xf32>
    %41 = math.rsqrt %40 : vector<1x128xf32>
    %42 = vector.broadcast %41 : vector<1x128xf32> to vector<160x128xf32>
    %43 = arith.mulf %33, %42 : vector<160x128xf32>
    %44 = vector.extract_strided_slice %1 {offsets = [0, 0], sizes = [1, 128], strides = [1, 1]} : vector<10x128xf32> to vector<1x128xf32>
    %45 = vector.broadcast %44 : vector<1x128xf32> to vector<160x128xf32>
    %46 = arith.mulf %43, %45 : vector<160x128xf32>
    %47 = vector.extract_strided_slice %2 {offsets = [0, 0], sizes = [1, 128], strides = [1, 1]} : vector<10x128xf32> to vector<1x128xf32>
    %48 = vector.broadcast %47 : vector<1x128xf32> to vector<160x128xf32>
    %49 = arith.addf %46, %48 : vector<160x128xf32>
    %cst_14 = arith.constant 0.000000e+00 : f32
    %50 = vector.broadcast %cst_14 : f32 to vector<160x128xf32>
    %51 = arith.cmpf ogt, %49, %50 : vector<160x128xf32>
    %cst_15 = arith.constant 0.00999999977 : f32
    %52 = vector.broadcast %cst_15 : f32 to vector<160x128xf32>
    %53 = arith.mulf %52, %49 : vector<160x128xf32>
    %54 = arith.select %51, %49, %53 : vector<160x128xi1>, vector<160x128xf32>
    %55 = arith.truncf %54 : vector<160x128xf32> to vector<160x128xbf16>
    %c112 = arith.constant 112 : index
    %c0_16 = arith.constant 0 : index
    %56 = vector.load %arg1[%c112, %c0_16] : memref<1728x128xbf16, #tpu.memory_space<vmem>>, vector<64x128xbf16>
    %cst_17 = arith.constant 0.000000e+00 : bf16
    %57 = vector.broadcast %cst_17 : bf16 to vector<1x128xbf16>
    %58 = vector.extract_strided_slice %55 {offsets = [0, 0], sizes = [80, 128], strides = [1, 1]} : vector<160x128xbf16> to vector<80x128xbf16>
    %59 = tpu.concatenate %57, %58, %57 in 0 : vector<1x128xbf16>, vector<80x128xbf16>, vector<1x128xbf16> -> vector<82x128xbf16>
    %60 = vector.extract_strided_slice %55 {offsets = [80, 0], sizes = [80, 128], strides = [1, 1]} : vector<160x128xbf16> to vector<80x128xbf16>
    %61 = tpu.concatenate %57, %60, %57 in 0 : vector<1x128xbf16>, vector<80x128xbf16>, vector<1x128xbf16> -> vector<82x128xbf16>
    %62 = vector.extract_strided_slice %59 {offsets = [0, 0], sizes = [79, 16], strides = [1, 1]} : vector<82x128xbf16> to vector<79x16xbf16>
    %63 = vector.extract_strided_slice %59 {offsets = [1, 0], sizes = [79, 16], strides = [1, 1]} : vector<82x128xbf16> to vector<79x16xbf16>
    %64 = vector.extract_strided_slice %59 {offsets = [2, 0], sizes = [79, 16], strides = [1, 1]} : vector<82x128xbf16> to vector<79x16xbf16>
    %65 = vector.extract_strided_slice %59 {offsets = [3, 0], sizes = [79, 16], strides = [1, 1]} : vector<82x128xbf16> to vector<79x16xbf16>
    %66 = tpu.concatenate %62, %63, %64, %65 in 1 : vector<79x16xbf16>, vector<79x16xbf16>, vector<79x16xbf16>, vector<79x16xbf16> -> vector<79x64xbf16>
    %67 = vector.extract_strided_slice %61 {offsets = [0, 0], sizes = [79, 16], strides = [1, 1]} : vector<82x128xbf16> to vector<79x16xbf16>
    %68 = vector.extract_strided_slice %61 {offsets = [1, 0], sizes = [79, 16], strides = [1, 1]} : vector<82x128xbf16> to vector<79x16xbf16>
    %69 = vector.extract_strided_slice %61 {offsets = [2, 0], sizes = [79, 16], strides = [1, 1]} : vector<82x128xbf16> to vector<79x16xbf16>
    %70 = vector.extract_strided_slice %61 {offsets = [3, 0], sizes = [79, 16], strides = [1, 1]} : vector<82x128xbf16> to vector<79x16xbf16>
    %71 = tpu.concatenate %67, %68, %69, %70 in 1 : vector<79x16xbf16>, vector<79x16xbf16>, vector<79x16xbf16>, vector<79x16xbf16> -> vector<79x64xbf16>
    %72 = tpu.concatenate %66, %71 in 0 : vector<79x64xbf16>, vector<79x64xbf16> -> vector<158x64xbf16>
    %73 = tpu.iota {dimensions = array<i32: 0>} : vector<80x158xi32>
    %74 = tpu.iota {dimensions = array<i32: 1>} : vector<80x158xi32>
    %c0_i32 = arith.constant 0 : i32
    %75 = vector.broadcast %c0_i32 : i32 to vector<80x158xi32>
    %76 = arith.cmpi sge, %73, %75 : vector<80x158xi32>
    %c40_i32 = arith.constant 40 : i32
    %77 = vector.broadcast %c40_i32 : i32 to vector<80x158xi32>
    %78 = arith.cmpi slt, %73, %77 : vector<80x158xi32>
    %79 = arith.andi %76, %78 : vector<80x158xi1>
    %c0_i32_18 = arith.constant 0 : i32
    %80 = vector.broadcast %c0_i32_18 : i32 to vector<80x158xi32>
    %81 = arith.subi %73, %80 : vector<80x158xi32>
    %c2_i32 = arith.constant 2 : i32
    %82 = vector.broadcast %c2_i32 : i32 to vector<80x158xi32>
    %83 = arith.muli %82, %81 : vector<80x158xi32>
    %c0_i32_19 = arith.constant 0 : i32
    %84 = vector.broadcast %c0_i32_19 : i32 to vector<80x158xi32>
    %85 = arith.addi %83, %84 : vector<80x158xi32>
    %86 = arith.cmpi eq, %74, %85 : vector<80x158xi32>
    %87 = arith.andi %79, %86 : vector<80x158xi1>
    %c40_i32_20 = arith.constant 40 : i32
    %88 = vector.broadcast %c40_i32_20 : i32 to vector<80x158xi32>
    %89 = arith.cmpi sge, %73, %88 : vector<80x158xi32>
    %c80_i32 = arith.constant 80 : i32
    %90 = vector.broadcast %c80_i32 : i32 to vector<80x158xi32>
    %91 = arith.cmpi slt, %73, %90 : vector<80x158xi32>
    %92 = arith.andi %89, %91 : vector<80x158xi1>
    %c40_i32_21 = arith.constant 40 : i32
    %93 = vector.broadcast %c40_i32_21 : i32 to vector<80x158xi32>
    %94 = arith.subi %73, %93 : vector<80x158xi32>
    %c2_i32_22 = arith.constant 2 : i32
    %95 = vector.broadcast %c2_i32_22 : i32 to vector<80x158xi32>
    %96 = arith.muli %95, %94 : vector<80x158xi32>
    %c79_i32 = arith.constant 79 : i32
    %97 = vector.broadcast %c79_i32 : i32 to vector<80x158xi32>
    %98 = arith.addi %96, %97 : vector<80x158xi32>
    %99 = arith.cmpi eq, %74, %98 : vector<80x158xi32>
    %100 = arith.andi %92, %99 : vector<80x158xi1>
    %101 = arith.ori %87, %100 : vector<80x158xi1>
    %cst_23 = arith.constant 1.000000e+00 : f32
    %cst_24 = arith.constant 0.000000e+00 : f32
    %102 = vector.broadcast %cst_23 : f32 to vector<80x158xf32>
    %103 = vector.broadcast %cst_24 : f32 to vector<80x158xf32>
    %104 = arith.select %101, %102, %103 : vector<80x158xi1>, vector<80x158xf32>
    %105 = arith.truncf %104 : vector<80x158xf32> to vector<80x158xbf16>
    %cst_25 = arith.constant dense<0.000000e+00> : vector<80x64xf32>
    %106 = tpu.matmul %105, %72, %cst_25 {dimension_numbers = #tpu.dot_dimension_numbers<[1], [0], [0], [1], [0, 0, 1, 1], [], []>} : vector<80x158xbf16>, vector<158x64xbf16>, vector<80x64xf32> -> vector<80x64xf32>
    %107 = arith.truncf %106 : vector<80x64xf32> to vector<80x64xbf16>
    %cst_26 = arith.constant dense<0.000000e+00> : vector<80x128xf32>
    %108 = tpu.matmul %107, %56, %cst_26 {dimension_numbers = #tpu.dot_dimension_numbers<[1], [0], [0], [1], [0, 0, 1, 1], [], []>} : vector<80x64xbf16>, vector<64x128xbf16>, vector<80x128xf32> -> vector<80x128xf32>
    %109 = vector.extract_strided_slice %0 {offsets = [1, 0], sizes = [1, 128], strides = [1, 1]} : vector<10x128xf32> to vector<1x128xf32>
    %110 = vector.broadcast %109 : vector<1x128xf32> to vector<80x128xf32>
    %111 = arith.addf %108, %110 : vector<80x128xf32>
    %cst_27 = arith.constant dense<0.000000e+00> : vector<128xf32>
    %112 = vector.multi_reduction <add>, %111, %cst_27 [0] : vector<80x128xf32> to vector<128xf32>
    %113 = vector.shape_cast %112 : vector<128xf32> to vector<1x128xf32>
    %cst_28 = arith.constant 8.000000e+01 : f32
    %114 = vector.broadcast %cst_28 : f32 to vector<1x128xf32>
    %115 = arith.divf %113, %114 : vector<1x128xf32>
    %116 = vector.broadcast %115 : vector<1x128xf32> to vector<80x128xf32>
    %117 = arith.subf %111, %116 : vector<80x128xf32>
    %118 = arith.mulf %117, %117 : vector<80x128xf32>
    %cst_29 = arith.constant dense<0.000000e+00> : vector<128xf32>
    %119 = vector.multi_reduction <add>, %118, %cst_29 [0] : vector<80x128xf32> to vector<128xf32>
    %120 = vector.shape_cast %119 : vector<128xf32> to vector<1x128xf32>
    %cst_30 = arith.constant 8.000000e+01 : f32
    %121 = vector.broadcast %cst_30 : f32 to vector<1x128xf32>
    %122 = arith.divf %120, %121 : vector<1x128xf32>
    %cst_31 = arith.constant 9.99999974E-6 : f32
    %123 = vector.broadcast %cst_31 : f32 to vector<1x128xf32>
    %124 = arith.addf %122, %123 : vector<1x128xf32>
    %125 = math.rsqrt %124 : vector<1x128xf32>
    %126 = vector.broadcast %125 : vector<1x128xf32> to vector<80x128xf32>
    %127 = arith.mulf %117, %126 : vector<80x128xf32>
    %128 = vector.extract_strided_slice %1 {offsets = [1, 0], sizes = [1, 128], strides = [1, 1]} : vector<10x128xf32> to vector<1x128xf32>
    %129 = vector.broadcast %128 : vector<1x128xf32> to vector<80x128xf32>
    %130 = arith.mulf %127, %129 : vector<80x128xf32>
    %131 = vector.extract_strided_slice %2 {offsets = [1, 0], sizes = [1, 128], strides = [1, 1]} : vector<10x128xf32> to vector<1x128xf32>
    %132 = vector.broadcast %131 : vector<1x128xf32> to vector<80x128xf32>
    %133 = arith.addf %130, %132 : vector<80x128xf32>
    %cst_32 = arith.constant 0.000000e+00 : f32
    %134 = vector.broadcast %cst_32 : f32 to vector<80x128xf32>
    %135 = arith.cmpf ogt, %133, %134 : vector<80x128xf32>
    %cst_33 = arith.constant 0.00999999977 : f32
    %136 = vector.broadcast %cst_33 : f32 to vector<80x128xf32>
    %137 = arith.mulf %136, %133 : vector<80x128xf32>
    %138 = arith.select %135, %133, %137 : vector<80x128xi1>, vector<80x128xf32>
    %139 = arith.truncf %138 : vector<80x128xf32> to vector<80x128xbf16>
    %c176 = arith.constant 176 : index
    %c0_34 = arith.constant 0 : index
    %140 = vector.load %arg1[%c176, %c0_34] : memref<1728x128xbf16, #tpu.memory_space<vmem>>, vector<64x128xbf16>
    %cst_35 = arith.constant 0.000000e+00 : bf16
    %141 = vector.broadcast %cst_35 : bf16 to vector<1x128xbf16>
    %142 = vector.extract_strided_slice %139 {offsets = [0, 0], sizes = [40, 128], strides = [1, 1]} : vector<80x128xbf16> to vector<40x128xbf16>
    %143 = tpu.concatenate %141, %142, %141 in 0 : vector<1x128xbf16>, vector<40x128xbf16>, vector<1x128xbf16> -> vector<42x128xbf16>
    %144 = vector.extract_strided_slice %139 {offsets = [40, 0], sizes = [40, 128], strides = [1, 1]} : vector<80x128xbf16> to vector<40x128xbf16>
    %145 = tpu.concatenate %141, %144, %141 in 0 : vector<1x128xbf16>, vector<40x128xbf16>, vector<1x128xbf16> -> vector<42x128xbf16>
    %146 = vector.extract_strided_slice %143 {offsets = [0, 0], sizes = [39, 16], strides = [1, 1]} : vector<42x128xbf16> to vector<39x16xbf16>
    %147 = vector.extract_strided_slice %143 {offsets = [1, 0], sizes = [39, 16], strides = [1, 1]} : vector<42x128xbf16> to vector<39x16xbf16>
    %148 = vector.extract_strided_slice %143 {offsets = [2, 0], sizes = [39, 16], strides = [1, 1]} : vector<42x128xbf16> to vector<39x16xbf16>
    %149 = vector.extract_strided_slice %143 {offsets = [3, 0], sizes = [39, 16], strides = [1, 1]} : vector<42x128xbf16> to vector<39x16xbf16>
    %150 = tpu.concatenate %146, %147, %148, %149 in 1 : vector<39x16xbf16>, vector<39x16xbf16>, vector<39x16xbf16>, vector<39x16xbf16> -> vector<39x64xbf16>
    %151 = vector.extract_strided_slice %145 {offsets = [0, 0], sizes = [39, 16], strides = [1, 1]} : vector<42x128xbf16> to vector<39x16xbf16>
    %152 = vector.extract_strided_slice %145 {offsets = [1, 0], sizes = [39, 16], strides = [1, 1]} : vector<42x128xbf16> to vector<39x16xbf16>
    %153 = vector.extract_strided_slice %145 {offsets = [2, 0], sizes = [39, 16], strides = [1, 1]} : vector<42x128xbf16> to vector<39x16xbf16>
    %154 = vector.extract_strided_slice %145 {offsets = [3, 0], sizes = [39, 16], strides = [1, 1]} : vector<42x128xbf16> to vector<39x16xbf16>
    %155 = tpu.concatenate %151, %152, %153, %154 in 1 : vector<39x16xbf16>, vector<39x16xbf16>, vector<39x16xbf16>, vector<39x16xbf16> -> vector<39x64xbf16>
    %156 = tpu.concatenate %150, %155 in 0 : vector<39x64xbf16>, vector<39x64xbf16> -> vector<78x64xbf16>
    %157 = tpu.iota {dimensions = array<i32: 0>} : vector<40x78xi32>
    %158 = tpu.iota {dimensions = array<i32: 1>} : vector<40x78xi32>
    %c0_i32_36 = arith.constant 0 : i32
    %159 = vector.broadcast %c0_i32_36 : i32 to vector<40x78xi32>
    %160 = arith.cmpi sge, %157, %159 : vector<40x78xi32>
    %c20_i32 = arith.constant 20 : i32
    %161 = vector.broadcast %c20_i32 : i32 to vector<40x78xi32>
    %162 = arith.cmpi slt, %157, %161 : vector<40x78xi32>
    %163 = arith.andi %160, %162 : vector<40x78xi1>
    %c0_i32_37 = arith.constant 0 : i32
    %164 = vector.broadcast %c0_i32_37 : i32 to vector<40x78xi32>
    %165 = arith.subi %157, %164 : vector<40x78xi32>
    %c2_i32_38 = arith.constant 2 : i32
    %166 = vector.broadcast %c2_i32_38 : i32 to vector<40x78xi32>
    %167 = arith.muli %166, %165 : vector<40x78xi32>
    %c0_i32_39 = arith.constant 0 : i32
    %168 = vector.broadcast %c0_i32_39 : i32 to vector<40x78xi32>
    %169 = arith.addi %167, %168 : vector<40x78xi32>
    %170 = arith.cmpi eq, %158, %169 : vector<40x78xi32>
    %171 = arith.andi %163, %170 : vector<40x78xi1>
    %c20_i32_40 = arith.constant 20 : i32
    %172 = vector.broadcast %c20_i32_40 : i32 to vector<40x78xi32>
    %173 = arith.cmpi sge, %157, %172 : vector<40x78xi32>
    %c40_i32_41 = arith.constant 40 : i32
    %174 = vector.broadcast %c40_i32_41 : i32 to vector<40x78xi32>
    %175 = arith.cmpi slt, %157, %174 : vector<40x78xi32>
    %176 = arith.andi %173, %175 : vector<40x78xi1>
    %c20_i32_42 = arith.constant 20 : i32
    %177 = vector.broadcast %c20_i32_42 : i32 to vector<40x78xi32>
    %178 = arith.subi %157, %177 : vector<40x78xi32>
    %c2_i32_43 = arith.constant 2 : i32
    %179 = vector.broadcast %c2_i32_43 : i32 to vector<40x78xi32>
    %180 = arith.muli %179, %178 : vector<40x78xi32>
    %c39_i32 = arith.constant 39 : i32
    %181 = vector.broadcast %c39_i32 : i32 to vector<40x78xi32>
    %182 = arith.addi %180, %181 : vector<40x78xi32>
    %183 = arith.cmpi eq, %158, %182 : vector<40x78xi32>
    %184 = arith.andi %176, %183 : vector<40x78xi1>
    %185 = arith.ori %171, %184 : vector<40x78xi1>
    %cst_44 = arith.constant 1.000000e+00 : f32
    %cst_45 = arith.constant 0.000000e+00 : f32
    %186 = vector.broadcast %cst_44 : f32 to vector<40x78xf32>
    %187 = vector.broadcast %cst_45 : f32 to vector<40x78xf32>
    %188 = arith.select %185, %186, %187 : vector<40x78xi1>, vector<40x78xf32>
    %189 = arith.truncf %188 : vector<40x78xf32> to vector<40x78xbf16>
    %cst_46 = arith.constant dense<0.000000e+00> : vector<40x64xf32>
    %190 = tpu.matmul %189, %156, %cst_46 {dimension_numbers = #tpu.dot_dimension_numbers<[1], [0], [0], [1], [0, 0, 1, 1], [], []>} : vector<40x78xbf16>, vector<78x64xbf16>, vector<40x64xf32> -> vector<40x64xf32>
    %191 = arith.truncf %190 : vector<40x64xf32> to vector<40x64xbf16>
    %cst_47 = arith.constant dense<0.000000e+00> : vector<40x128xf32>
    %192 = tpu.matmul %191, %140, %cst_47 {dimension_numbers = #tpu.dot_dimension_numbers<[1], [0], [0], [1], [0, 0, 1, 1], [], []>} : vector<40x64xbf16>, vector<64x128xbf16>, vector<40x128xf32> -> vector<40x128xf32>
    %193 = vector.extract_strided_slice %0 {offsets = [2, 0], sizes = [1, 128], strides = [1, 1]} : vector<10x128xf32> to vector<1x128xf32>
    %194 = vector.broadcast %193 : vector<1x128xf32> to vector<40x128xf32>
    %195 = arith.addf %192, %194 : vector<40x128xf32>
    %cst_48 = arith.constant dense<0.000000e+00> : vector<128xf32>
    %196 = vector.multi_reduction <add>, %195, %cst_48 [0] : vector<40x128xf32> to vector<128xf32>
    %197 = vector.shape_cast %196 : vector<128xf32> to vector<1x128xf32>
    %cst_49 = arith.constant 4.000000e+01 : f32
    %198 = vector.broadcast %cst_49 : f32 to vector<1x128xf32>
    %199 = arith.divf %197, %198 : vector<1x128xf32>
    %200 = vector.broadcast %199 : vector<1x128xf32> to vector<40x128xf32>
    %201 = arith.subf %195, %200 : vector<40x128xf32>
    %202 = arith.mulf %201, %201 : vector<40x128xf32>
    %cst_50 = arith.constant dense<0.000000e+00> : vector<128xf32>
    %203 = vector.multi_reduction <add>, %202, %cst_50 [0] : vector<40x128xf32> to vector<128xf32>
    %204 = vector.shape_cast %203 : vector<128xf32> to vector<1x128xf32>
    %cst_51 = arith.constant 4.000000e+01 : f32
    %205 = vector.broadcast %cst_51 : f32 to vector<1x128xf32>
    %206 = arith.divf %204, %205 : vector<1x128xf32>
    %cst_52 = arith.constant 9.99999974E-6 : f32
    %207 = vector.broadcast %cst_52 : f32 to vector<1x128xf32>
    %208 = arith.addf %206, %207 : vector<1x128xf32>
    %209 = math.rsqrt %208 : vector<1x128xf32>
    %210 = vector.broadcast %209 : vector<1x128xf32> to vector<40x128xf32>
    %211 = arith.mulf %201, %210 : vector<40x128xf32>
    %212 = vector.extract_strided_slice %1 {offsets = [2, 0], sizes = [1, 128], strides = [1, 1]} : vector<10x128xf32> to vector<1x128xf32>
    %213 = vector.broadcast %212 : vector<1x128xf32> to vector<40x128xf32>
    %214 = arith.mulf %211, %213 : vector<40x128xf32>
    %215 = vector.extract_strided_slice %2 {offsets = [2, 0], sizes = [1, 128], strides = [1, 1]} : vector<10x128xf32> to vector<1x128xf32>
    %216 = vector.broadcast %215 : vector<1x128xf32> to vector<40x128xf32>
    %217 = arith.addf %214, %216 : vector<40x128xf32>
    %cst_53 = arith.constant 0.000000e+00 : f32
    %218 = vector.broadcast %cst_53 : f32 to vector<40x128xf32>
    %219 = arith.cmpf ogt, %217, %218 : vector<40x128xf32>
    %cst_54 = arith.constant 0.00999999977 : f32
    %220 = vector.broadcast %cst_54 : f32 to vector<40x128xf32>
    %221 = arith.mulf %220, %217 : vector<40x128xf32>
    %222 = arith.select %219, %217, %221 : vector<40x128xi1>, vector<40x128xf32>
    %223 = arith.truncf %222 : vector<40x128xf32> to vector<40x128xbf16>
    %c240 = arith.constant 240 : index
    %c0_55 = arith.constant 0 : index
    %224 = vector.load %arg1[%c240, %c0_55] : memref<1728x128xbf16, #tpu.memory_space<vmem>>, vector<128x128xbf16>
    %cst_56 = arith.constant 0.000000e+00 : bf16
    %225 = vector.broadcast %cst_56 : bf16 to vector<1x128xbf16>
    %226 = vector.extract_strided_slice %223 {offsets = [0, 0], sizes = [20, 128], strides = [1, 1]} : vector<40x128xbf16> to vector<20x128xbf16>
    %227 = tpu.concatenate %225, %226, %225 in 0 : vector<1x128xbf16>, vector<20x128xbf16>, vector<1x128xbf16> -> vector<22x128xbf16>
    %228 = vector.extract_strided_slice %223 {offsets = [20, 0], sizes = [20, 128], strides = [1, 1]} : vector<40x128xbf16> to vector<20x128xbf16>
    %229 = tpu.concatenate %225, %228, %225 in 0 : vector<1x128xbf16>, vector<20x128xbf16>, vector<1x128xbf16> -> vector<22x128xbf16>
    %230 = vector.extract_strided_slice %227 {offsets = [0, 0], sizes = [19, 32], strides = [1, 1]} : vector<22x128xbf16> to vector<19x32xbf16>
    %231 = vector.extract_strided_slice %227 {offsets = [1, 0], sizes = [19, 32], strides = [1, 1]} : vector<22x128xbf16> to vector<19x32xbf16>
    %232 = vector.extract_strided_slice %227 {offsets = [2, 0], sizes = [19, 32], strides = [1, 1]} : vector<22x128xbf16> to vector<19x32xbf16>
    %233 = vector.extract_strided_slice %227 {offsets = [3, 0], sizes = [19, 32], strides = [1, 1]} : vector<22x128xbf16> to vector<19x32xbf16>
    %234 = tpu.concatenate %230, %231, %232, %233 in 1 : vector<19x32xbf16>, vector<19x32xbf16>, vector<19x32xbf16>, vector<19x32xbf16> -> vector<19x128xbf16>
    %235 = vector.extract_strided_slice %229 {offsets = [0, 0], sizes = [19, 32], strides = [1, 1]} : vector<22x128xbf16> to vector<19x32xbf16>
    %236 = vector.extract_strided_slice %229 {offsets = [1, 0], sizes = [19, 32], strides = [1, 1]} : vector<22x128xbf16> to vector<19x32xbf16>
    %237 = vector.extract_strided_slice %229 {offsets = [2, 0], sizes = [19, 32], strides = [1, 1]} : vector<22x128xbf16> to vector<19x32xbf16>
    %238 = vector.extract_strided_slice %229 {offsets = [3, 0], sizes = [19, 32], strides = [1, 1]} : vector<22x128xbf16> to vector<19x32xbf16>
    %239 = tpu.concatenate %235, %236, %237, %238 in 1 : vector<19x32xbf16>, vector<19x32xbf16>, vector<19x32xbf16>, vector<19x32xbf16> -> vector<19x128xbf16>
    %240 = tpu.concatenate %234, %239 in 0 : vector<19x128xbf16>, vector<19x128xbf16> -> vector<38x128xbf16>
    %241 = tpu.iota {dimensions = array<i32: 0>} : vector<20x38xi32>
    %242 = tpu.iota {dimensions = array<i32: 1>} : vector<20x38xi32>
    %c0_i32_57 = arith.constant 0 : i32
    %243 = vector.broadcast %c0_i32_57 : i32 to vector<20x38xi32>
    %244 = arith.cmpi sge, %241, %243 : vector<20x38xi32>
    %c10_i32 = arith.constant 10 : i32
    %245 = vector.broadcast %c10_i32 : i32 to vector<20x38xi32>
    %246 = arith.cmpi slt, %241, %245 : vector<20x38xi32>
    %247 = arith.andi %244, %246 : vector<20x38xi1>
    %c0_i32_58 = arith.constant 0 : i32
    %248 = vector.broadcast %c0_i32_58 : i32 to vector<20x38xi32>
    %249 = arith.subi %241, %248 : vector<20x38xi32>
    %c2_i32_59 = arith.constant 2 : i32
    %250 = vector.broadcast %c2_i32_59 : i32 to vector<20x38xi32>
    %251 = arith.muli %250, %249 : vector<20x38xi32>
    %c0_i32_60 = arith.constant 0 : i32
    %252 = vector.broadcast %c0_i32_60 : i32 to vector<20x38xi32>
    %253 = arith.addi %251, %252 : vector<20x38xi32>
    %254 = arith.cmpi eq, %242, %253 : vector<20x38xi32>
    %255 = arith.andi %247, %254 : vector<20x38xi1>
    %c10_i32_61 = arith.constant 10 : i32
    %256 = vector.broadcast %c10_i32_61 : i32 to vector<20x38xi32>
    %257 = arith.cmpi sge, %241, %256 : vector<20x38xi32>
    %c20_i32_62 = arith.constant 20 : i32
    %258 = vector.broadcast %c20_i32_62 : i32 to vector<20x38xi32>
    %259 = arith.cmpi slt, %241, %258 : vector<20x38xi32>
    %260 = arith.andi %257, %259 : vector<20x38xi1>
    %c10_i32_63 = arith.constant 10 : i32
    %261 = vector.broadcast %c10_i32_63 : i32 to vector<20x38xi32>
    %262 = arith.subi %241, %261 : vector<20x38xi32>
    %c2_i32_64 = arith.constant 2 : i32
    %263 = vector.broadcast %c2_i32_64 : i32 to vector<20x38xi32>
    %264 = arith.muli %263, %262 : vector<20x38xi32>
    %c19_i32 = arith.constant 19 : i32
    %265 = vector.broadcast %c19_i32 : i32 to vector<20x38xi32>
    %266 = arith.addi %264, %265 : vector<20x38xi32>
    %267 = arith.cmpi eq, %242, %266 : vector<20x38xi32>
    %268 = arith.andi %260, %267 : vector<20x38xi1>
    %269 = arith.ori %255, %268 : vector<20x38xi1>
    %cst_65 = arith.constant 1.000000e+00 : f32
    %cst_66 = arith.constant 0.000000e+00 : f32
    %270 = vector.broadcast %cst_65 : f32 to vector<20x38xf32>
    %271 = vector.broadcast %cst_66 : f32 to vector<20x38xf32>
    %272 = arith.select %269, %270, %271 : vector<20x38xi1>, vector<20x38xf32>
    %273 = arith.truncf %272 : vector<20x38xf32> to vector<20x38xbf16>
    %cst_67 = arith.constant dense<0.000000e+00> : vector<20x128xf32>
    %274 = tpu.matmul %273, %240, %cst_67 {dimension_numbers = #tpu.dot_dimension_numbers<[1], [0], [0], [1], [0, 0, 1, 1], [], []>} : vector<20x38xbf16>, vector<38x128xbf16>, vector<20x128xf32> -> vector<20x128xf32>
    %275 = arith.truncf %274 : vector<20x128xf32> to vector<20x128xbf16>
    %cst_68 = arith.constant dense<0.000000e+00> : vector<20x128xf32>
    %276 = tpu.matmul %275, %224, %cst_68 {dimension_numbers = #tpu.dot_dimension_numbers<[1], [0], [0], [1], [0, 0, 1, 1], [], []>} : vector<20x128xbf16>, vector<128x128xbf16>, vector<20x128xf32> -> vector<20x128xf32>
    %277 = vector.extract_strided_slice %0 {offsets = [3, 0], sizes = [1, 128], strides = [1, 1]} : vector<10x128xf32> to vector<1x128xf32>
    %278 = vector.broadcast %277 : vector<1x128xf32> to vector<20x128xf32>
    %279 = arith.addf %276, %278 : vector<20x128xf32>
    %cst_69 = arith.constant dense<0.000000e+00> : vector<128xf32>
    %280 = vector.multi_reduction <add>, %279, %cst_69 [0] : vector<20x128xf32> to vector<128xf32>
    %281 = vector.shape_cast %280 : vector<128xf32> to vector<1x128xf32>
    %cst_70 = arith.constant 2.000000e+01 : f32
    %282 = vector.broadcast %cst_70 : f32 to vector<1x128xf32>
    %283 = arith.divf %281, %282 : vector<1x128xf32>
    %284 = vector.broadcast %283 : vector<1x128xf32> to vector<20x128xf32>
    %285 = arith.subf %279, %284 : vector<20x128xf32>
    %286 = arith.mulf %285, %285 : vector<20x128xf32>
    %cst_71 = arith.constant dense<0.000000e+00> : vector<128xf32>
    %287 = vector.multi_reduction <add>, %286, %cst_71 [0] : vector<20x128xf32> to vector<128xf32>
    %288 = vector.shape_cast %287 : vector<128xf32> to vector<1x128xf32>
    %cst_72 = arith.constant 2.000000e+01 : f32
    %289 = vector.broadcast %cst_72 : f32 to vector<1x128xf32>
    %290 = arith.divf %288, %289 : vector<1x128xf32>
    %cst_73 = arith.constant 9.99999974E-6 : f32
    %291 = vector.broadcast %cst_73 : f32 to vector<1x128xf32>
    %292 = arith.addf %290, %291 : vector<1x128xf32>
    %293 = math.rsqrt %292 : vector<1x128xf32>
    %294 = vector.broadcast %293 : vector<1x128xf32> to vector<20x128xf32>
    %295 = arith.mulf %285, %294 : vector<20x128xf32>
    %296 = vector.extract_strided_slice %1 {offsets = [3, 0], sizes = [1, 128], strides = [1, 1]} : vector<10x128xf32> to vector<1x128xf32>
    %297 = vector.broadcast %296 : vector<1x128xf32> to vector<20x128xf32>
    %298 = arith.mulf %295, %297 : vector<20x128xf32>
    %299 = vector.extract_strided_slice %2 {offsets = [3, 0], sizes = [1, 128], strides = [1, 1]} : vector<10x128xf32> to vector<1x128xf32>
    %300 = vector.broadcast %299 : vector<1x128xf32> to vector<20x128xf32>
    %301 = arith.addf %298, %300 : vector<20x128xf32>
    %cst_74 = arith.constant 0.000000e+00 : f32
    %302 = vector.broadcast %cst_74 : f32 to vector<20x128xf32>
    %303 = arith.cmpf ogt, %301, %302 : vector<20x128xf32>
    %cst_75 = arith.constant 0.00999999977 : f32
    %304 = vector.broadcast %cst_75 : f32 to vector<20x128xf32>
    %305 = arith.mulf %304, %301 : vector<20x128xf32>
    %306 = arith.select %303, %301, %305 : vector<20x128xi1>, vector<20x128xf32>
    %307 = arith.truncf %306 : vector<20x128xf32> to vector<20x128xbf16>
    %c368 = arith.constant 368 : index
    %c0_76 = arith.constant 0 : index
    %308 = vector.load %arg1[%c368, %c0_76] : memref<1728x128xbf16, #tpu.memory_space<vmem>>, vector<640x128xbf16>
    %309 = vector.extract_strided_slice %307 {offsets = [0, 0], sizes = [10, 128], strides = [1, 1]} : vector<20x128xbf16> to vector<10x128xbf16>
    %310 = vector.extract_strided_slice %307 {offsets = [10, 0], sizes = [10, 128], strides = [1, 1]} : vector<20x128xbf16> to vector<10x128xbf16>
    %311 = vector.extract_strided_slice %309 {offsets = [0, 0], sizes = [1, 64], strides = [1, 1]} : vector<10x128xbf16> to vector<1x64xbf16>
    %312 = vector.extract_strided_slice %309 {offsets = [1, 0], sizes = [1, 64], strides = [1, 1]} : vector<10x128xbf16> to vector<1x64xbf16>
    %313 = vector.extract_strided_slice %309 {offsets = [2, 0], sizes = [1, 64], strides = [1, 1]} : vector<10x128xbf16> to vector<1x64xbf16>
    %314 = vector.extract_strided_slice %309 {offsets = [3, 0], sizes = [1, 64], strides = [1, 1]} : vector<10x128xbf16> to vector<1x64xbf16>
    %315 = vector.extract_strided_slice %309 {offsets = [4, 0], sizes = [1, 64], strides = [1, 1]} : vector<10x128xbf16> to vector<1x64xbf16>
    %316 = vector.extract_strided_slice %309 {offsets = [5, 0], sizes = [1, 64], strides = [1, 1]} : vector<10x128xbf16> to vector<1x64xbf16>
    %317 = vector.extract_strided_slice %309 {offsets = [6, 0], sizes = [1, 64], strides = [1, 1]} : vector<10x128xbf16> to vector<1x64xbf16>
    %318 = vector.extract_strided_slice %309 {offsets = [7, 0], sizes = [1, 64], strides = [1, 1]} : vector<10x128xbf16> to vector<1x64xbf16>
    %319 = vector.extract_strided_slice %309 {offsets = [8, 0], sizes = [1, 64], strides = [1, 1]} : vector<10x128xbf16> to vector<1x64xbf16>
    %320 = vector.extract_strided_slice %309 {offsets = [9, 0], sizes = [1, 64], strides = [1, 1]} : vector<10x128xbf16> to vector<1x64xbf16>
    %321 = tpu.concatenate %311, %312, %313, %314, %315, %316, %317, %318, %319, %320 in 1 : vector<1x64xbf16>, vector<1x64xbf16>, vector<1x64xbf16>, vector<1x64xbf16>, vector<1x64xbf16>, vector<1x64xbf16>, vector<1x64xbf16>, vector<1x64xbf16>, vector<1x64xbf16>, vector<1x64xbf16> -> vector<1x640xbf16>
    %322 = vector.extract_strided_slice %310 {offsets = [0, 0], sizes = [1, 64], strides = [1, 1]} : vector<10x128xbf16> to vector<1x64xbf16>
    %323 = vector.extract_strided_slice %310 {offsets = [1, 0], sizes = [1, 64], strides = [1, 1]} : vector<10x128xbf16> to vector<1x64xbf16>
    %324 = vector.extract_strided_slice %310 {offsets = [2, 0], sizes = [1, 64], strides = [1, 1]} : vector<10x128xbf16> to vector<1x64xbf16>
    %325 = vector.extract_strided_slice %310 {offsets = [3, 0], sizes = [1, 64], strides = [1, 1]} : vector<10x128xbf16> to vector<1x64xbf16>
    %326 = vector.extract_strided_slice %310 {offsets = [4, 0], sizes = [1, 64], strides = [1, 1]} : vector<10x128xbf16> to vector<1x64xbf16>
    %327 = vector.extract_strided_slice %310 {offsets = [5, 0], sizes = [1, 64], strides = [1, 1]} : vector<10x128xbf16> to vector<1x64xbf16>
    %328 = vector.extract_strided_slice %310 {offsets = [6, 0], sizes = [1, 64], strides = [1, 1]} : vector<10x128xbf16> to vector<1x64xbf16>
    %329 = vector.extract_strided_slice %310 {offsets = [7, 0], sizes = [1, 64], strides = [1, 1]} : vector<10x128xbf16> to vector<1x64xbf16>
    %330 = vector.extract_strided_slice %310 {offsets = [8, 0], sizes = [1, 64], strides = [1, 1]} : vector<10x128xbf16> to vector<1x64xbf16>
    %331 = vector.extract_strided_slice %310 {offsets = [9, 0], sizes = [1, 64], strides = [1, 1]} : vector<10x128xbf16> to vector<1x64xbf16>
    %332 = tpu.concatenate %322, %323, %324, %325, %326, %327, %328, %329, %330, %331 in 1 : vector<1x64xbf16>, vector<1x64xbf16>, vector<1x64xbf16>, vector<1x64xbf16>, vector<1x64xbf16>, vector<1x64xbf16>, vector<1x64xbf16>, vector<1x64xbf16>, vector<1x64xbf16>, vector<1x64xbf16> -> vector<1x640xbf16>
    %333 = tpu.concatenate %321, %332 in 0 : vector<1x640xbf16>, vector<1x640xbf16> -> vector<2x640xbf16>
    %cst_77 = arith.constant dense<0.000000e+00> : vector<2x128xf32>
    %334 = tpu.matmul %333, %308, %cst_77 {dimension_numbers = #tpu.dot_dimension_numbers<[1], [0], [0], [1], [0, 0, 1, 1], [], []>} : vector<2x640xbf16>, vector<640x128xbf16>, vector<2x128xf32> -> vector<2x128xf32>
    %335 = vector.extract_strided_slice %0 {offsets = [4, 0], sizes = [1, 128], strides = [1, 1]} : vector<10x128xf32> to vector<1x128xf32>
    %336 = vector.broadcast %335 : vector<1x128xf32> to vector<2x128xf32>
    %337 = arith.addf %334, %336 : vector<2x128xf32>
    %338 = arith.truncf %337 : vector<2x128xf32> to vector<2x128xbf16>
    %c1008 = arith.constant 1008 : index
    %c0_78 = arith.constant 0 : index
    %339 = vector.load %arg1[%c1008, %c0_78] : memref<1728x128xbf16, #tpu.memory_space<vmem>>, vector<160x128xbf16>
    %cst_79 = arith.constant 0.000000e+00 : bf16
    %340 = vector.broadcast %cst_79 : bf16 to vector<9x128xbf16>
    %341 = vector.extract_strided_slice %338 {offsets = [0, 0], sizes = [1, 128], strides = [1, 1]} : vector<2x128xbf16> to vector<1x128xbf16>
    %342 = tpu.concatenate %340, %341, %340 in 0 : vector<9x128xbf16>, vector<1x128xbf16>, vector<9x128xbf16> -> vector<19x128xbf16>
    %343 = vector.extract_strided_slice %338 {offsets = [1, 0], sizes = [1, 128], strides = [1, 1]} : vector<2x128xbf16> to vector<1x128xbf16>
    %344 = tpu.concatenate %340, %343, %340 in 0 : vector<9x128xbf16>, vector<1x128xbf16>, vector<9x128xbf16> -> vector<19x128xbf16>
    %345 = vector.extract_strided_slice %342 {offsets = [0, 0], sizes = [10, 16], strides = [1, 1]} : vector<19x128xbf16> to vector<10x16xbf16>
    %346 = vector.extract_strided_slice %342 {offsets = [1, 0], sizes = [10, 16], strides = [1, 1]} : vector<19x128xbf16> to vector<10x16xbf16>
    %347 = vector.extract_strided_slice %342 {offsets = [2, 0], sizes = [10, 16], strides = [1, 1]} : vector<19x128xbf16> to vector<10x16xbf16>
    %348 = vector.extract_strided_slice %342 {offsets = [3, 0], sizes = [10, 16], strides = [1, 1]} : vector<19x128xbf16> to vector<10x16xbf16>
    %349 = vector.extract_strided_slice %342 {offsets = [4, 0], sizes = [10, 16], strides = [1, 1]} : vector<19x128xbf16> to vector<10x16xbf16>
    %350 = vector.extract_strided_slice %342 {offsets = [5, 0], sizes = [10, 16], strides = [1, 1]} : vector<19x128xbf16> to vector<10x16xbf16>
    %351 = vector.extract_strided_slice %342 {offsets = [6, 0], sizes = [10, 16], strides = [1, 1]} : vector<19x128xbf16> to vector<10x16xbf16>
    %352 = vector.extract_strided_slice %342 {offsets = [7, 0], sizes = [10, 16], strides = [1, 1]} : vector<19x128xbf16> to vector<10x16xbf16>
    %353 = vector.extract_strided_slice %342 {offsets = [8, 0], sizes = [10, 16], strides = [1, 1]} : vector<19x128xbf16> to vector<10x16xbf16>
    %354 = vector.extract_strided_slice %342 {offsets = [9, 0], sizes = [10, 16], strides = [1, 1]} : vector<19x128xbf16> to vector<10x16xbf16>
    %355 = tpu.concatenate %345, %346, %347, %348, %349, %350, %351, %352, %353, %354 in 1 : vector<10x16xbf16>, vector<10x16xbf16>, vector<10x16xbf16>, vector<10x16xbf16>, vector<10x16xbf16>, vector<10x16xbf16>, vector<10x16xbf16>, vector<10x16xbf16>, vector<10x16xbf16>, vector<10x16xbf16> -> vector<10x160xbf16>
    %356 = vector.extract_strided_slice %344 {offsets = [0, 0], sizes = [10, 16], strides = [1, 1]} : vector<19x128xbf16> to vector<10x16xbf16>
    %357 = vector.extract_strided_slice %344 {offsets = [1, 0], sizes = [10, 16], strides = [1, 1]} : vector<19x128xbf16> to vector<10x16xbf16>
    %358 = vector.extract_strided_slice %344 {offsets = [2, 0], sizes = [10, 16], strides = [1, 1]} : vector<19x128xbf16> to vector<10x16xbf16>
    %359 = vector.extract_strided_slice %344 {offsets = [3, 0], sizes = [10, 16], strides = [1, 1]} : vector<19x128xbf16> to vector<10x16xbf16>
    %360 = vector.extract_strided_slice %344 {offsets = [4, 0], sizes = [10, 16], strides = [1, 1]} : vector<19x128xbf16> to vector<10x16xbf16>
    %361 = vector.extract_strided_slice %344 {offsets = [5, 0], sizes = [10, 16], strides = [1, 1]} : vector<19x128xbf16> to vector<10x16xbf16>
    %362 = vector.extract_strided_slice %344 {offsets = [6, 0], sizes = [10, 16], strides = [1, 1]} : vector<19x128xbf16> to vector<10x16xbf16>
    %363 = vector.extract_strided_slice %344 {offsets = [7, 0], sizes = [10, 16], strides = [1, 1]} : vector<19x128xbf16> to vector<10x16xbf16>
    %364 = vector.extract_strided_slice %344 {offsets = [8, 0], sizes = [10, 16], strides = [1, 1]} : vector<19x128xbf16> to vector<10x16xbf16>
    %365 = vector.extract_strided_slice %344 {offsets = [9, 0], sizes = [10, 16], strides = [1, 1]} : vector<19x128xbf16> to vector<10x16xbf16>
    %366 = tpu.concatenate %356, %357, %358, %359, %360, %361, %362, %363, %364, %365 in 1 : vector<10x16xbf16>, vector<10x16xbf16>, vector<10x16xbf16>, vector<10x16xbf16>, vector<10x16xbf16>, vector<10x16xbf16>, vector<10x16xbf16>, vector<10x16xbf16>, vector<10x16xbf16>, vector<10x16xbf16> -> vector<10x160xbf16>
    %367 = tpu.concatenate %355, %366 in 0 : vector<10x160xbf16>, vector<10x160xbf16> -> vector<20x160xbf16>
    %cst_80 = arith.constant dense<0.000000e+00> : vector<20x128xf32>
    %368 = tpu.matmul %367, %339, %cst_80 {dimension_numbers = #tpu.dot_dimension_numbers<[1], [0], [0], [1], [0, 0, 1, 1], [], []>} : vector<20x160xbf16>, vector<160x128xbf16>, vector<20x128xf32> -> vector<20x128xf32>
    %369 = vector.extract_strided_slice %0 {offsets = [5, 0], sizes = [1, 128], strides = [1, 1]} : vector<10x128xf32> to vector<1x128xf32>
    %370 = vector.broadcast %369 : vector<1x128xf32> to vector<20x128xf32>
    %371 = arith.addf %368, %370 : vector<20x128xf32>
    %cst_81 = arith.constant dense<0.000000e+00> : vector<128xf32>
    %372 = vector.multi_reduction <add>, %371, %cst_81 [0] : vector<20x128xf32> to vector<128xf32>
    %373 = vector.shape_cast %372 : vector<128xf32> to vector<1x128xf32>
    %cst_82 = arith.constant 2.000000e+01 : f32
    %374 = vector.broadcast %cst_82 : f32 to vector<1x128xf32>
    %375 = arith.divf %373, %374 : vector<1x128xf32>
    %376 = vector.broadcast %375 : vector<1x128xf32> to vector<20x128xf32>
    %377 = arith.subf %371, %376 : vector<20x128xf32>
    %378 = arith.mulf %377, %377 : vector<20x128xf32>
    %cst_83 = arith.constant dense<0.000000e+00> : vector<128xf32>
    %379 = vector.multi_reduction <add>, %378, %cst_83 [0] : vector<20x128xf32> to vector<128xf32>
    %380 = vector.shape_cast %379 : vector<128xf32> to vector<1x128xf32>
    %cst_84 = arith.constant 2.000000e+01 : f32
    %381 = vector.broadcast %cst_84 : f32 to vector<1x128xf32>
    %382 = arith.divf %380, %381 : vector<1x128xf32>
    %cst_85 = arith.constant 9.99999974E-6 : f32
    %383 = vector.broadcast %cst_85 : f32 to vector<1x128xf32>
    %384 = arith.addf %382, %383 : vector<1x128xf32>
    %385 = math.rsqrt %384 : vector<1x128xf32>
    %386 = vector.broadcast %385 : vector<1x128xf32> to vector<20x128xf32>
    %387 = arith.mulf %377, %386 : vector<20x128xf32>
    %388 = vector.extract_strided_slice %1 {offsets = [5, 0], sizes = [1, 128], strides = [1, 1]} : vector<10x128xf32> to vector<1x128xf32>
    %389 = vector.broadcast %388 : vector<1x128xf32> to vector<20x128xf32>
    %390 = arith.mulf %387, %389 : vector<20x128xf32>
    %391 = vector.extract_strided_slice %2 {offsets = [5, 0], sizes = [1, 128], strides = [1, 1]} : vector<10x128xf32> to vector<1x128xf32>
    %392 = vector.broadcast %391 : vector<1x128xf32> to vector<20x128xf32>
    %393 = arith.addf %390, %392 : vector<20x128xf32>
    %cst_86 = arith.constant 0.000000e+00 : f32
    %394 = vector.broadcast %cst_86 : f32 to vector<20x128xf32>
    %395 = arith.maximumf %393, %394 : vector<20x128xf32>
    %396 = arith.truncf %395 : vector<20x128xf32> to vector<20x128xbf16>
    %c1168 = arith.constant 1168 : index
    %c0_87 = arith.constant 0 : index
    %397 = vector.load %arg1[%c1168, %c0_87] : memref<1728x128xbf16, #tpu.memory_space<vmem>>, vector<256x128xbf16>
    %398 = tpu.iota {dimensions = array<i32: 0>} : vector<46x20xi32>
    %399 = tpu.iota {dimensions = array<i32: 1>} : vector<46x20xi32>
    %c0_i32_88 = arith.constant 0 : i32
    %400 = vector.broadcast %c0_i32_88 : i32 to vector<46x20xi32>
    %401 = arith.cmpi sge, %399, %400 : vector<46x20xi32>
    %c10_i32_89 = arith.constant 10 : i32
    %402 = vector.broadcast %c10_i32_89 : i32 to vector<46x20xi32>
    %403 = arith.cmpi slt, %399, %402 : vector<46x20xi32>
    %404 = arith.andi %401, %403 : vector<46x20xi1>
    %c0_i32_90 = arith.constant 0 : i32
    %405 = vector.broadcast %c0_i32_90 : i32 to vector<46x20xi32>
    %406 = arith.subi %399, %405 : vector<46x20xi32>
    %c2_i32_91 = arith.constant 2 : i32
    %407 = vector.broadcast %c2_i32_91 : i32 to vector<46x20xi32>
    %408 = arith.muli %407, %406 : vector<46x20xi32>
    %c2_i32_92 = arith.constant 2 : i32
    %409 = vector.broadcast %c2_i32_92 : i32 to vector<46x20xi32>
    %410 = arith.addi %408, %409 : vector<46x20xi32>
    %c0_i32_93 = arith.constant 0 : i32
    %411 = vector.broadcast %c0_i32_93 : i32 to vector<46x20xi32>
    %412 = arith.addi %410, %411 : vector<46x20xi32>
    %413 = arith.cmpi eq, %398, %412 : vector<46x20xi32>
    %414 = arith.andi %404, %413 : vector<46x20xi1>
    %c10_i32_94 = arith.constant 10 : i32
    %415 = vector.broadcast %c10_i32_94 : i32 to vector<46x20xi32>
    %416 = arith.cmpi sge, %399, %415 : vector<46x20xi32>
    %c20_i32_95 = arith.constant 20 : i32
    %417 = vector.broadcast %c20_i32_95 : i32 to vector<46x20xi32>
    %418 = arith.cmpi slt, %399, %417 : vector<46x20xi32>
    %419 = arith.andi %416, %418 : vector<46x20xi1>
    %c10_i32_96 = arith.constant 10 : i32
    %420 = vector.broadcast %c10_i32_96 : i32 to vector<46x20xi32>
    %421 = arith.subi %399, %420 : vector<46x20xi32>
    %c2_i32_97 = arith.constant 2 : i32
    %422 = vector.broadcast %c2_i32_97 : i32 to vector<46x20xi32>
    %423 = arith.muli %422, %421 : vector<46x20xi32>
    %c2_i32_98 = arith.constant 2 : i32
    %424 = vector.broadcast %c2_i32_98 : i32 to vector<46x20xi32>
    %425 = arith.addi %423, %424 : vector<46x20xi32>
    %c23_i32 = arith.constant 23 : i32
    %426 = vector.broadcast %c23_i32 : i32 to vector<46x20xi32>
    %427 = arith.addi %425, %426 : vector<46x20xi32>
    %428 = arith.cmpi eq, %398, %427 : vector<46x20xi32>
    %429 = arith.andi %419, %428 : vector<46x20xi1>
    %430 = arith.ori %414, %429 : vector<46x20xi1>
    %cst_99 = arith.constant 1.000000e+00 : f32
    %cst_100 = arith.constant 0.000000e+00 : f32
    %431 = vector.broadcast %cst_99 : f32 to vector<46x20xf32>
    %432 = vector.broadcast %cst_100 : f32 to vector<46x20xf32>
    %433 = arith.select %430, %431, %432 : vector<46x20xi1>, vector<46x20xf32>
    %434 = arith.truncf %433 : vector<46x20xf32> to vector<46x20xbf16>
    %cst_101 = arith.constant dense<0.000000e+00> : vector<46x128xf32>
    %435 = tpu.matmul %434, %396, %cst_101 {dimension_numbers = #tpu.dot_dimension_numbers<[1], [0], [0], [1], [0, 0, 1, 1], [], []>} : vector<46x20xbf16>, vector<20x128xbf16>, vector<46x128xf32> -> vector<46x128xf32>
    %436 = arith.truncf %435 : vector<46x128xf32> to vector<46x128xbf16>
    %437 = vector.extract_strided_slice %436 {offsets = [0, 0], sizes = [23, 128], strides = [1, 1]} : vector<46x128xbf16> to vector<23x128xbf16>
    %438 = vector.extract_strided_slice %436 {offsets = [23, 0], sizes = [23, 128], strides = [1, 1]} : vector<46x128xbf16> to vector<23x128xbf16>
    %439 = vector.extract_strided_slice %437 {offsets = [0, 0], sizes = [20, 64], strides = [1, 1]} : vector<23x128xbf16> to vector<20x64xbf16>
    %440 = vector.extract_strided_slice %437 {offsets = [1, 0], sizes = [20, 64], strides = [1, 1]} : vector<23x128xbf16> to vector<20x64xbf16>
    %441 = vector.extract_strided_slice %437 {offsets = [2, 0], sizes = [20, 64], strides = [1, 1]} : vector<23x128xbf16> to vector<20x64xbf16>
    %442 = vector.extract_strided_slice %437 {offsets = [3, 0], sizes = [20, 64], strides = [1, 1]} : vector<23x128xbf16> to vector<20x64xbf16>
    %443 = tpu.concatenate %439, %440, %441, %442 in 1 : vector<20x64xbf16>, vector<20x64xbf16>, vector<20x64xbf16>, vector<20x64xbf16> -> vector<20x256xbf16>
    %444 = vector.extract_strided_slice %438 {offsets = [0, 0], sizes = [20, 64], strides = [1, 1]} : vector<23x128xbf16> to vector<20x64xbf16>
    %445 = vector.extract_strided_slice %438 {offsets = [1, 0], sizes = [20, 64], strides = [1, 1]} : vector<23x128xbf16> to vector<20x64xbf16>
    %446 = vector.extract_strided_slice %438 {offsets = [2, 0], sizes = [20, 64], strides = [1, 1]} : vector<23x128xbf16> to vector<20x64xbf16>
    %447 = vector.extract_strided_slice %438 {offsets = [3, 0], sizes = [20, 64], strides = [1, 1]} : vector<23x128xbf16> to vector<20x64xbf16>
    %448 = tpu.concatenate %444, %445, %446, %447 in 1 : vector<20x64xbf16>, vector<20x64xbf16>, vector<20x64xbf16>, vector<20x64xbf16> -> vector<20x256xbf16>
    %449 = tpu.concatenate %443, %448 in 0 : vector<20x256xbf16>, vector<20x256xbf16> -> vector<40x256xbf16>
    %cst_102 = arith.constant dense<0.000000e+00> : vector<40x128xf32>
    %450 = tpu.matmul %449, %397, %cst_102 {dimension_numbers = #tpu.dot_dimension_numbers<[1], [0], [0], [1], [0, 0, 1, 1], [], []>} : vector<40x256xbf16>, vector<256x128xbf16>, vector<40x128xf32> -> vector<40x128xf32>
    %451 = vector.extract_strided_slice %0 {offsets = [6, 0], sizes = [1, 128], strides = [1, 1]} : vector<10x128xf32> to vector<1x128xf32>
    %452 = vector.broadcast %451 : vector<1x128xf32> to vector<40x128xf32>
    %453 = arith.addf %450, %452 : vector<40x128xf32>
    %cst_103 = arith.constant dense<0.000000e+00> : vector<128xf32>
    %454 = vector.multi_reduction <add>, %453, %cst_103 [0] : vector<40x128xf32> to vector<128xf32>
    %455 = vector.shape_cast %454 : vector<128xf32> to vector<1x128xf32>
    %cst_104 = arith.constant 4.000000e+01 : f32
    %456 = vector.broadcast %cst_104 : f32 to vector<1x128xf32>
    %457 = arith.divf %455, %456 : vector<1x128xf32>
    %458 = vector.broadcast %457 : vector<1x128xf32> to vector<40x128xf32>
    %459 = arith.subf %453, %458 : vector<40x128xf32>
    %460 = arith.mulf %459, %459 : vector<40x128xf32>
    %cst_105 = arith.constant dense<0.000000e+00> : vector<128xf32>
    %461 = vector.multi_reduction <add>, %460, %cst_105 [0] : vector<40x128xf32> to vector<128xf32>
    %462 = vector.shape_cast %461 : vector<128xf32> to vector<1x128xf32>
    %cst_106 = arith.constant 4.000000e+01 : f32
    %463 = vector.broadcast %cst_106 : f32 to vector<1x128xf32>
    %464 = arith.divf %462, %463 : vector<1x128xf32>
    %cst_107 = arith.constant 9.99999974E-6 : f32
    %465 = vector.broadcast %cst_107 : f32 to vector<1x128xf32>
    %466 = arith.addf %464, %465 : vector<1x128xf32>
    %467 = math.rsqrt %466 : vector<1x128xf32>
    %468 = vector.broadcast %467 : vector<1x128xf32> to vector<40x128xf32>
    %469 = arith.mulf %459, %468 : vector<40x128xf32>
    %470 = vector.extract_strided_slice %1 {offsets = [6, 0], sizes = [1, 128], strides = [1, 1]} : vector<10x128xf32> to vector<1x128xf32>
    %471 = vector.broadcast %470 : vector<1x128xf32> to vector<40x128xf32>
    %472 = arith.mulf %469, %471 : vector<40x128xf32>
    %473 = vector.extract_strided_slice %2 {offsets = [6, 0], sizes = [1, 128], strides = [1, 1]} : vector<10x128xf32> to vector<1x128xf32>
    %474 = vector.broadcast %473 : vector<1x128xf32> to vector<40x128xf32>
    %475 = arith.addf %472, %474 : vector<40x128xf32>
    %cst_108 = arith.constant 0.000000e+00 : f32
    %476 = vector.broadcast %cst_108 : f32 to vector<40x128xf32>
    %477 = arith.maximumf %475, %476 : vector<40x128xf32>
    %478 = arith.truncf %477 : vector<40x128xf32> to vector<40x128xbf16>
    %c1424 = arith.constant 1424 : index
    %c0_109 = arith.constant 0 : index
    %479 = vector.load %arg1[%c1424, %c0_109] : memref<1728x128xbf16, #tpu.memory_space<vmem>>, vector<128x128xbf16>
    %480 = tpu.iota {dimensions = array<i32: 0>} : vector<86x40xi32>
    %481 = tpu.iota {dimensions = array<i32: 1>} : vector<86x40xi32>
    %c0_i32_110 = arith.constant 0 : i32
    %482 = vector.broadcast %c0_i32_110 : i32 to vector<86x40xi32>
    %483 = arith.cmpi sge, %481, %482 : vector<86x40xi32>
    %c20_i32_111 = arith.constant 20 : i32
    %484 = vector.broadcast %c20_i32_111 : i32 to vector<86x40xi32>
    %485 = arith.cmpi slt, %481, %484 : vector<86x40xi32>
    %486 = arith.andi %483, %485 : vector<86x40xi1>
    %c0_i32_112 = arith.constant 0 : i32
    %487 = vector.broadcast %c0_i32_112 : i32 to vector<86x40xi32>
    %488 = arith.subi %481, %487 : vector<86x40xi32>
    %c2_i32_113 = arith.constant 2 : i32
    %489 = vector.broadcast %c2_i32_113 : i32 to vector<86x40xi32>
    %490 = arith.muli %489, %488 : vector<86x40xi32>
    %c2_i32_114 = arith.constant 2 : i32
    %491 = vector.broadcast %c2_i32_114 : i32 to vector<86x40xi32>
    %492 = arith.addi %490, %491 : vector<86x40xi32>
    %c0_i32_115 = arith.constant 0 : i32
    %493 = vector.broadcast %c0_i32_115 : i32 to vector<86x40xi32>
    %494 = arith.addi %492, %493 : vector<86x40xi32>
    %495 = arith.cmpi eq, %480, %494 : vector<86x40xi32>
    %496 = arith.andi %486, %495 : vector<86x40xi1>
    %c20_i32_116 = arith.constant 20 : i32
    %497 = vector.broadcast %c20_i32_116 : i32 to vector<86x40xi32>
    %498 = arith.cmpi sge, %481, %497 : vector<86x40xi32>
    %c40_i32_117 = arith.constant 40 : i32
    %499 = vector.broadcast %c40_i32_117 : i32 to vector<86x40xi32>
    %500 = arith.cmpi slt, %481, %499 : vector<86x40xi32>
    %501 = arith.andi %498, %500 : vector<86x40xi1>
    %c20_i32_118 = arith.constant 20 : i32
    %502 = vector.broadcast %c20_i32_118 : i32 to vector<86x40xi32>
    %503 = arith.subi %481, %502 : vector<86x40xi32>
    %c2_i32_119 = arith.constant 2 : i32
    %504 = vector.broadcast %c2_i32_119 : i32 to vector<86x40xi32>
    %505 = arith.muli %504, %503 : vector<86x40xi32>
    %c2_i32_120 = arith.constant 2 : i32
    %506 = vector.broadcast %c2_i32_120 : i32 to vector<86x40xi32>
    %507 = arith.addi %505, %506 : vector<86x40xi32>
    %c43_i32 = arith.constant 43 : i32
    %508 = vector.broadcast %c43_i32 : i32 to vector<86x40xi32>
    %509 = arith.addi %507, %508 : vector<86x40xi32>
    %510 = arith.cmpi eq, %480, %509 : vector<86x40xi32>
    %511 = arith.andi %501, %510 : vector<86x40xi1>
    %512 = arith.ori %496, %511 : vector<86x40xi1>
    %cst_121 = arith.constant 1.000000e+00 : f32
    %cst_122 = arith.constant 0.000000e+00 : f32
    %513 = vector.broadcast %cst_121 : f32 to vector<86x40xf32>
    %514 = vector.broadcast %cst_122 : f32 to vector<86x40xf32>
    %515 = arith.select %512, %513, %514 : vector<86x40xi1>, vector<86x40xf32>
    %516 = arith.truncf %515 : vector<86x40xf32> to vector<86x40xbf16>
    %cst_123 = arith.constant dense<0.000000e+00> : vector<86x128xf32>
    %517 = tpu.matmul %516, %478, %cst_123 {dimension_numbers = #tpu.dot_dimension_numbers<[1], [0], [0], [1], [0, 0, 1, 1], [], []>} : vector<86x40xbf16>, vector<40x128xbf16>, vector<86x128xf32> -> vector<86x128xf32>
    %518 = arith.truncf %517 : vector<86x128xf32> to vector<86x128xbf16>
    %519 = vector.extract_strided_slice %518 {offsets = [0, 0], sizes = [43, 128], strides = [1, 1]} : vector<86x128xbf16> to vector<43x128xbf16>
    %520 = vector.extract_strided_slice %518 {offsets = [43, 0], sizes = [43, 128], strides = [1, 1]} : vector<86x128xbf16> to vector<43x128xbf16>
    %521 = vector.extract_strided_slice %519 {offsets = [0, 0], sizes = [40, 32], strides = [1, 1]} : vector<43x128xbf16> to vector<40x32xbf16>
    %522 = vector.extract_strided_slice %519 {offsets = [1, 0], sizes = [40, 32], strides = [1, 1]} : vector<43x128xbf16> to vector<40x32xbf16>
    %523 = vector.extract_strided_slice %519 {offsets = [2, 0], sizes = [40, 32], strides = [1, 1]} : vector<43x128xbf16> to vector<40x32xbf16>
    %524 = vector.extract_strided_slice %519 {offsets = [3, 0], sizes = [40, 32], strides = [1, 1]} : vector<43x128xbf16> to vector<40x32xbf16>
    %525 = tpu.concatenate %521, %522, %523, %524 in 1 : vector<40x32xbf16>, vector<40x32xbf16>, vector<40x32xbf16>, vector<40x32xbf16> -> vector<40x128xbf16>
    %526 = vector.extract_strided_slice %520 {offsets = [0, 0], sizes = [40, 32], strides = [1, 1]} : vector<43x128xbf16> to vector<40x32xbf16>
    %527 = vector.extract_strided_slice %520 {offsets = [1, 0], sizes = [40, 32], strides = [1, 1]} : vector<43x128xbf16> to vector<40x32xbf16>
    %528 = vector.extract_strided_slice %520 {offsets = [2, 0], sizes = [40, 32], strides = [1, 1]} : vector<43x128xbf16> to vector<40x32xbf16>
    %529 = vector.extract_strided_slice %520 {offsets = [3, 0], sizes = [40, 32], strides = [1, 1]} : vector<43x128xbf16> to vector<40x32xbf16>
    %530 = tpu.concatenate %526, %527, %528, %529 in 1 : vector<40x32xbf16>, vector<40x32xbf16>, vector<40x32xbf16>, vector<40x32xbf16> -> vector<40x128xbf16>
    %531 = tpu.concatenate %525, %530 in 0 : vector<40x128xbf16>, vector<40x128xbf16> -> vector<80x128xbf16>
    %cst_124 = arith.constant dense<0.000000e+00> : vector<80x128xf32>
    %532 = tpu.matmul %531, %479, %cst_124 {dimension_numbers = #tpu.dot_dimension_numbers<[1], [0], [0], [1], [0, 0, 1, 1], [], []>} : vector<80x128xbf16>, vector<128x128xbf16>, vector<80x128xf32> -> vector<80x128xf32>
    %533 = vector.extract_strided_slice %0 {offsets = [7, 0], sizes = [1, 128], strides = [1, 1]} : vector<10x128xf32> to vector<1x128xf32>
    %534 = vector.broadcast %533 : vector<1x128xf32> to vector<80x128xf32>
    %535 = arith.addf %532, %534 : vector<80x128xf32>
    %cst_125 = arith.constant dense<0.000000e+00> : vector<128xf32>
    %536 = vector.multi_reduction <add>, %535, %cst_125 [0] : vector<80x128xf32> to vector<128xf32>
    %537 = vector.shape_cast %536 : vector<128xf32> to vector<1x128xf32>
    %cst_126 = arith.constant 8.000000e+01 : f32
    %538 = vector.broadcast %cst_126 : f32 to vector<1x128xf32>
    %539 = arith.divf %537, %538 : vector<1x128xf32>
    %540 = vector.broadcast %539 : vector<1x128xf32> to vector<80x128xf32>
    %541 = arith.subf %535, %540 : vector<80x128xf32>
    %542 = arith.mulf %541, %541 : vector<80x128xf32>
    %cst_127 = arith.constant dense<0.000000e+00> : vector<128xf32>
    %543 = vector.multi_reduction <add>, %542, %cst_127 [0] : vector<80x128xf32> to vector<128xf32>
    %544 = vector.shape_cast %543 : vector<128xf32> to vector<1x128xf32>
    %cst_128 = arith.constant 8.000000e+01 : f32
    %545 = vector.broadcast %cst_128 : f32 to vector<1x128xf32>
    %546 = arith.divf %544, %545 : vector<1x128xf32>
    %cst_129 = arith.constant 9.99999974E-6 : f32
    %547 = vector.broadcast %cst_129 : f32 to vector<1x128xf32>
    %548 = arith.addf %546, %547 : vector<1x128xf32>
    %549 = math.rsqrt %548 : vector<1x128xf32>
    %550 = vector.broadcast %549 : vector<1x128xf32> to vector<80x128xf32>
    %551 = arith.mulf %541, %550 : vector<80x128xf32>
    %552 = vector.extract_strided_slice %1 {offsets = [7, 0], sizes = [1, 128], strides = [1, 1]} : vector<10x128xf32> to vector<1x128xf32>
    %553 = vector.broadcast %552 : vector<1x128xf32> to vector<80x128xf32>
    %554 = arith.mulf %551, %553 : vector<80x128xf32>
    %555 = vector.extract_strided_slice %2 {offsets = [7, 0], sizes = [1, 128], strides = [1, 1]} : vector<10x128xf32> to vector<1x128xf32>
    %556 = vector.broadcast %555 : vector<1x128xf32> to vector<80x128xf32>
    %557 = arith.addf %554, %556 : vector<80x128xf32>
    %cst_130 = arith.constant 0.000000e+00 : f32
    %558 = vector.broadcast %cst_130 : f32 to vector<80x128xf32>
    %559 = arith.maximumf %557, %558 : vector<80x128xf32>
    %560 = arith.truncf %559 : vector<80x128xf32> to vector<80x128xbf16>
    %c1552 = arith.constant 1552 : index
    %c0_131 = arith.constant 0 : index
    %561 = vector.load %arg1[%c1552, %c0_131] : memref<1728x128xbf16, #tpu.memory_space<vmem>>, vector<64x128xbf16>
    %562 = tpu.iota {dimensions = array<i32: 0>} : vector<166x80xi32>
    %563 = tpu.iota {dimensions = array<i32: 1>} : vector<166x80xi32>
    %c0_i32_132 = arith.constant 0 : i32
    %564 = vector.broadcast %c0_i32_132 : i32 to vector<166x80xi32>
    %565 = arith.cmpi sge, %563, %564 : vector<166x80xi32>
    %c40_i32_133 = arith.constant 40 : i32
    %566 = vector.broadcast %c40_i32_133 : i32 to vector<166x80xi32>
    %567 = arith.cmpi slt, %563, %566 : vector<166x80xi32>
    %568 = arith.andi %565, %567 : vector<166x80xi1>
    %c0_i32_134 = arith.constant 0 : i32
    %569 = vector.broadcast %c0_i32_134 : i32 to vector<166x80xi32>
    %570 = arith.subi %563, %569 : vector<166x80xi32>
    %c2_i32_135 = arith.constant 2 : i32
    %571 = vector.broadcast %c2_i32_135 : i32 to vector<166x80xi32>
    %572 = arith.muli %571, %570 : vector<166x80xi32>
    %c2_i32_136 = arith.constant 2 : i32
    %573 = vector.broadcast %c2_i32_136 : i32 to vector<166x80xi32>
    %574 = arith.addi %572, %573 : vector<166x80xi32>
    %c0_i32_137 = arith.constant 0 : i32
    %575 = vector.broadcast %c0_i32_137 : i32 to vector<166x80xi32>
    %576 = arith.addi %574, %575 : vector<166x80xi32>
    %577 = arith.cmpi eq, %562, %576 : vector<166x80xi32>
    %578 = arith.andi %568, %577 : vector<166x80xi1>
    %c40_i32_138 = arith.constant 40 : i32
    %579 = vector.broadcast %c40_i32_138 : i32 to vector<166x80xi32>
    %580 = arith.cmpi sge, %563, %579 : vector<166x80xi32>
    %c80_i32_139 = arith.constant 80 : i32
    %581 = vector.broadcast %c80_i32_139 : i32 to vector<166x80xi32>
    %582 = arith.cmpi slt, %563, %581 : vector<166x80xi32>
    %583 = arith.andi %580, %582 : vector<166x80xi1>
    %c40_i32_140 = arith.constant 40 : i32
    %584 = vector.broadcast %c40_i32_140 : i32 to vector<166x80xi32>
    %585 = arith.subi %563, %584 : vector<166x80xi32>
    %c2_i32_141 = arith.constant 2 : i32
    %586 = vector.broadcast %c2_i32_141 : i32 to vector<166x80xi32>
    %587 = arith.muli %586, %585 : vector<166x80xi32>
    %c2_i32_142 = arith.constant 2 : i32
    %588 = vector.broadcast %c2_i32_142 : i32 to vector<166x80xi32>
    %589 = arith.addi %587, %588 : vector<166x80xi32>
    %c83_i32 = arith.constant 83 : i32
    %590 = vector.broadcast %c83_i32 : i32 to vector<166x80xi32>
    %591 = arith.addi %589, %590 : vector<166x80xi32>
    %592 = arith.cmpi eq, %562, %591 : vector<166x80xi32>
    %593 = arith.andi %583, %592 : vector<166x80xi1>
    %594 = arith.ori %578, %593 : vector<166x80xi1>
    %cst_143 = arith.constant 1.000000e+00 : f32
    %cst_144 = arith.constant 0.000000e+00 : f32
    %595 = vector.broadcast %cst_143 : f32 to vector<166x80xf32>
    %596 = vector.broadcast %cst_144 : f32 to vector<166x80xf32>
    %597 = arith.select %594, %595, %596 : vector<166x80xi1>, vector<166x80xf32>
    %598 = arith.truncf %597 : vector<166x80xf32> to vector<166x80xbf16>
    %cst_145 = arith.constant dense<0.000000e+00> : vector<166x128xf32>
    %599 = tpu.matmul %598, %560, %cst_145 {dimension_numbers = #tpu.dot_dimension_numbers<[1], [0], [0], [1], [0, 0, 1, 1], [], []>} : vector<166x80xbf16>, vector<80x128xbf16>, vector<166x128xf32> -> vector<166x128xf32>
    %600 = arith.truncf %599 : vector<166x128xf32> to vector<166x128xbf16>
    %601 = vector.extract_strided_slice %600 {offsets = [0, 0], sizes = [83, 128], strides = [1, 1]} : vector<166x128xbf16> to vector<83x128xbf16>
    %602 = vector.extract_strided_slice %600 {offsets = [83, 0], sizes = [83, 128], strides = [1, 1]} : vector<166x128xbf16> to vector<83x128xbf16>
    %603 = vector.extract_strided_slice %601 {offsets = [0, 0], sizes = [80, 16], strides = [1, 1]} : vector<83x128xbf16> to vector<80x16xbf16>
    %604 = vector.extract_strided_slice %601 {offsets = [1, 0], sizes = [80, 16], strides = [1, 1]} : vector<83x128xbf16> to vector<80x16xbf16>
    %605 = vector.extract_strided_slice %601 {offsets = [2, 0], sizes = [80, 16], strides = [1, 1]} : vector<83x128xbf16> to vector<80x16xbf16>
    %606 = vector.extract_strided_slice %601 {offsets = [3, 0], sizes = [80, 16], strides = [1, 1]} : vector<83x128xbf16> to vector<80x16xbf16>
    %607 = tpu.concatenate %603, %604, %605, %606 in 1 : vector<80x16xbf16>, vector<80x16xbf16>, vector<80x16xbf16>, vector<80x16xbf16> -> vector<80x64xbf16>
    %608 = vector.extract_strided_slice %602 {offsets = [0, 0], sizes = [80, 16], strides = [1, 1]} : vector<83x128xbf16> to vector<80x16xbf16>
    %609 = vector.extract_strided_slice %602 {offsets = [1, 0], sizes = [80, 16], strides = [1, 1]} : vector<83x128xbf16> to vector<80x16xbf16>
    %610 = vector.extract_strided_slice %602 {offsets = [2, 0], sizes = [80, 16], strides = [1, 1]} : vector<83x128xbf16> to vector<80x16xbf16>
    %611 = vector.extract_strided_slice %602 {offsets = [3, 0], sizes = [80, 16], strides = [1, 1]} : vector<83x128xbf16> to vector<80x16xbf16>
    %612 = tpu.concatenate %608, %609, %610, %611 in 1 : vector<80x16xbf16>, vector<80x16xbf16>, vector<80x16xbf16>, vector<80x16xbf16> -> vector<80x64xbf16>
    %613 = tpu.concatenate %607, %612 in 0 : vector<80x64xbf16>, vector<80x64xbf16> -> vector<160x64xbf16>
    %cst_146 = arith.constant dense<0.000000e+00> : vector<160x128xf32>
    %614 = tpu.matmul %613, %561, %cst_146 {dimension_numbers = #tpu.dot_dimension_numbers<[1], [0], [0], [1], [0, 0, 1, 1], [], []>} : vector<160x64xbf16>, vector<64x128xbf16>, vector<160x128xf32> -> vector<160x128xf32>
    %615 = vector.extract_strided_slice %0 {offsets = [8, 0], sizes = [1, 128], strides = [1, 1]} : vector<10x128xf32> to vector<1x128xf32>
    %616 = vector.broadcast %615 : vector<1x128xf32> to vector<160x128xf32>
    %617 = arith.addf %614, %616 : vector<160x128xf32>
    %cst_147 = arith.constant dense<0.000000e+00> : vector<128xf32>
    %618 = vector.multi_reduction <add>, %617, %cst_147 [0] : vector<160x128xf32> to vector<128xf32>
    %619 = vector.shape_cast %618 : vector<128xf32> to vector<1x128xf32>
    %cst_148 = arith.constant 1.600000e+02 : f32
    %620 = vector.broadcast %cst_148 : f32 to vector<1x128xf32>
    %621 = arith.divf %619, %620 : vector<1x128xf32>
    %622 = vector.broadcast %621 : vector<1x128xf32> to vector<160x128xf32>
    %623 = arith.subf %617, %622 : vector<160x128xf32>
    %624 = arith.mulf %623, %623 : vector<160x128xf32>
    %cst_149 = arith.constant dense<0.000000e+00> : vector<128xf32>
    %625 = vector.multi_reduction <add>, %624, %cst_149 [0] : vector<160x128xf32> to vector<128xf32>
    %626 = vector.shape_cast %625 : vector<128xf32> to vector<1x128xf32>
    %cst_150 = arith.constant 1.600000e+02 : f32
    %627 = vector.broadcast %cst_150 : f32 to vector<1x128xf32>
    %628 = arith.divf %626, %627 : vector<1x128xf32>
    %cst_151 = arith.constant 9.99999974E-6 : f32
    %629 = vector.broadcast %cst_151 : f32 to vector<1x128xf32>
    %630 = arith.addf %628, %629 : vector<1x128xf32>
    %631 = math.rsqrt %630 : vector<1x128xf32>
    %632 = vector.broadcast %631 : vector<1x128xf32> to vector<160x128xf32>
    %633 = arith.mulf %623, %632 : vector<160x128xf32>
    %634 = vector.extract_strided_slice %1 {offsets = [8, 0], sizes = [1, 128], strides = [1, 1]} : vector<10x128xf32> to vector<1x128xf32>
    %635 = vector.broadcast %634 : vector<1x128xf32> to vector<160x128xf32>
    %636 = arith.mulf %633, %635 : vector<160x128xf32>
    %637 = vector.extract_strided_slice %2 {offsets = [8, 0], sizes = [1, 128], strides = [1, 1]} : vector<10x128xf32> to vector<1x128xf32>
    %638 = vector.broadcast %637 : vector<1x128xf32> to vector<160x128xf32>
    %639 = arith.addf %636, %638 : vector<160x128xf32>
    %cst_152 = arith.constant 0.000000e+00 : f32
    %640 = vector.broadcast %cst_152 : f32 to vector<160x128xf32>
    %641 = arith.maximumf %639, %640 : vector<160x128xf32>
    %642 = arith.truncf %641 : vector<160x128xf32> to vector<160x128xbf16>
    %c1616 = arith.constant 1616 : index
    %c0_153 = arith.constant 0 : index
    %643 = vector.load %arg1[%c1616, %c0_153] : memref<1728x128xbf16, #tpu.memory_space<vmem>>, vector<112x128xbf16>
    %cst_154 = arith.constant 0.000000e+00 : bf16
    %644 = vector.broadcast %cst_154 : bf16 to vector<6x128xbf16>
    %645 = vector.extract_strided_slice %642 {offsets = [0, 0], sizes = [80, 128], strides = [1, 1]} : vector<160x128xbf16> to vector<80x128xbf16>
    %646 = tpu.concatenate %644, %645, %644 in 0 : vector<6x128xbf16>, vector<80x128xbf16>, vector<6x128xbf16> -> vector<92x128xbf16>
    %647 = vector.extract_strided_slice %642 {offsets = [80, 0], sizes = [80, 128], strides = [1, 1]} : vector<160x128xbf16> to vector<80x128xbf16>
    %648 = tpu.concatenate %644, %647, %644 in 0 : vector<6x128xbf16>, vector<80x128xbf16>, vector<6x128xbf16> -> vector<92x128xbf16>
    %649 = vector.extract_strided_slice %646 {offsets = [0, 0], sizes = [86, 16], strides = [1, 1]} : vector<92x128xbf16> to vector<86x16xbf16>
    %650 = vector.extract_strided_slice %646 {offsets = [1, 0], sizes = [86, 16], strides = [1, 1]} : vector<92x128xbf16> to vector<86x16xbf16>
    %651 = vector.extract_strided_slice %646 {offsets = [2, 0], sizes = [86, 16], strides = [1, 1]} : vector<92x128xbf16> to vector<86x16xbf16>
    %652 = vector.extract_strided_slice %646 {offsets = [3, 0], sizes = [86, 16], strides = [1, 1]} : vector<92x128xbf16> to vector<86x16xbf16>
    %653 = vector.extract_strided_slice %646 {offsets = [4, 0], sizes = [86, 16], strides = [1, 1]} : vector<92x128xbf16> to vector<86x16xbf16>
    %654 = vector.extract_strided_slice %646 {offsets = [5, 0], sizes = [86, 16], strides = [1, 1]} : vector<92x128xbf16> to vector<86x16xbf16>
    %655 = vector.extract_strided_slice %646 {offsets = [6, 0], sizes = [86, 16], strides = [1, 1]} : vector<92x128xbf16> to vector<86x16xbf16>
    %656 = tpu.concatenate %649, %650, %651, %652, %653, %654, %655 in 1 : vector<86x16xbf16>, vector<86x16xbf16>, vector<86x16xbf16>, vector<86x16xbf16>, vector<86x16xbf16>, vector<86x16xbf16>, vector<86x16xbf16> -> vector<86x112xbf16>
    %657 = vector.extract_strided_slice %648 {offsets = [0, 0], sizes = [86, 16], strides = [1, 1]} : vector<92x128xbf16> to vector<86x16xbf16>
    %658 = vector.extract_strided_slice %648 {offsets = [1, 0], sizes = [86, 16], strides = [1, 1]} : vector<92x128xbf16> to vector<86x16xbf16>
    %659 = vector.extract_strided_slice %648 {offsets = [2, 0], sizes = [86, 16], strides = [1, 1]} : vector<92x128xbf16> to vector<86x16xbf16>
    %660 = vector.extract_strided_slice %648 {offsets = [3, 0], sizes = [86, 16], strides = [1, 1]} : vector<92x128xbf16> to vector<86x16xbf16>
    %661 = vector.extract_strided_slice %648 {offsets = [4, 0], sizes = [86, 16], strides = [1, 1]} : vector<92x128xbf16> to vector<86x16xbf16>
    %662 = vector.extract_strided_slice %648 {offsets = [5, 0], sizes = [86, 16], strides = [1, 1]} : vector<92x128xbf16> to vector<86x16xbf16>
    %663 = vector.extract_strided_slice %648 {offsets = [6, 0], sizes = [86, 16], strides = [1, 1]} : vector<92x128xbf16> to vector<86x16xbf16>
    %664 = tpu.concatenate %657, %658, %659, %660, %661, %662, %663 in 1 : vector<86x16xbf16>, vector<86x16xbf16>, vector<86x16xbf16>, vector<86x16xbf16>, vector<86x16xbf16>, vector<86x16xbf16>, vector<86x16xbf16> -> vector<86x112xbf16>
    %665 = tpu.concatenate %656, %664 in 0 : vector<86x112xbf16>, vector<86x112xbf16> -> vector<172x112xbf16>
    %cst_155 = arith.constant dense<0.000000e+00> : vector<172x128xf32>
    %666 = tpu.matmul %665, %643, %cst_155 {dimension_numbers = #tpu.dot_dimension_numbers<[1], [0], [0], [1], [0, 0, 1, 1], [], []>} : vector<172x112xbf16>, vector<112x128xbf16>, vector<172x128xf32> -> vector<172x128xf32>
    %667 = vector.extract_strided_slice %0 {offsets = [9, 0], sizes = [1, 128], strides = [1, 1]} : vector<10x128xf32> to vector<1x128xf32>
    %668 = vector.broadcast %667 : vector<1x128xf32> to vector<172x128xf32>
    %669 = arith.addf %666, %668 : vector<172x128xf32>
    %670 = math.tanh %669 : vector<172x128xf32>
    %c0_156 = arith.constant 0 : index
    %c0_157 = arith.constant 0 : index
    %671 = vector.load %arg5[%c0_156, %c0_157] : memref<172x128xf32, #tpu.memory_space<vmem>>, vector<172x128xf32>
    tpu.vector_store %arg5[%c0_156, %c0_157], %670 {strides = array<i32>} : memref<172x128xf32, #tpu.memory_space<vmem>>, vector<172x128xf32>,
    return
  }
}

</mosaic_0001>

<llo_original>
// kernel: autoencoder_forward.1
$region0: #{autoencoder_forward.1}
  #allocation0 [shape = 'u32[]', space=smem, size = 0x4, offset = 0x4, fixed_abs, tag = 'smem constant byte address 0x4 - core index']
  #allocation1 [shape = 'u32[144,128]{1,0:T(1,128)}', space=vmem, size = 0x12000, scoped, tag = 'internal scratch']
  %s0 = inlined_call_operand.vmem [shape: bf16[172,128], index: 0, kind: input, shape index: {}]
  %s1 = inlined_call_operand.vmem [shape: bf16[1728,128], index: 1, kind: input, shape index: {}]
  %s2 = inlined_call_operand.vmem [shape: f32[10,128], index: 2, kind: input, shape index: {}]
  %s3 = inlined_call_operand.vmem [shape: f32[10,128], index: 3, kind: input, shape index: {}]
  %s4 = inlined_call_operand.vmem [shape: f32[10,128], index: 4, kind: input, shape index: {}]
  %s5 = inlined_call_operand.vmem [shape: f32[172,128], index: 5, kind: output, shape index: {}]
  %s6 = sld [smem:[#allocation0]]
  $region30: #{autoencoder_forward.1} parent=0
    _
  %s8 = ssub.s32 1, %s6
  %s9 = scalar_select 0, %s8, %s6
  // Predicated region
  $region2: #{autoencoder_forward.1} parent=0 // pred_check
    _
  $region3: #{autoencoder_forward.1} parent=0 // pred_check_branch
    %11 = sbr.rel (0) target = $region5
  $region4: #{autoencoder_forward.1} parent=0 // pred_region
    _
  $region5: #{autoencoder_forward.1} parent=0 // pred_fallthru
    _
  // Predicated region
  $region6: #{autoencoder_forward.1} parent=0 // pred_check
    _
  $region7: #{autoencoder_forward.1} parent=0 // pred_check_branch
    %13 = sbr.rel (0) target = $region9
  $region8: #{autoencoder_forward.1} parent=0 // pred_region
    _
  $region9: #{autoencoder_forward.1} parent=0 // pred_fallthru
    _
  // Predicated region
  $region10: #{autoencoder_forward.1} parent=0 // pred_check
    _
  $region11: #{autoencoder_forward.1} parent=0 // pred_check_branch
    %15 = sbr.rel (0) target = $region13
  $region12: #{autoencoder_forward.1} parent=0 // pred_region
    _
  $region13: #{autoencoder_forward.1} parent=0 // pred_fallthru
    _
  // Predicated region
  $region14: #{autoencoder_forward.1} parent=0 // pred_check
    _
  $region15: #{autoencoder_forward.1} parent=0 // pred_check_branch
    %17 = sbr.rel (0) target = $region17
  $region16: #{autoencoder_forward.1} parent=0 // pred_region
    _
  $region17: #{autoencoder_forward.1} parent=0 // pred_fallthru
    _
  // Predicated region
  $region18: #{autoencoder_forward.1} parent=0 // pred_check
    _
  $region19: #{autoencoder_forward.1} parent=0 // pred_check_branch
    %19 = sbr.rel (0) target = $region21
  $region20: #{autoencoder_forward.1} parent=0 // pred_region
    _
  $region21: #{autoencoder_forward.1} parent=0 // pred_fallthru
    _
  %v21 = vld [vmem:[%s2] sm:$0xff]
  %v22 = vld [vmem:[%s2 + $0x8] sm:$0x3]
  %v23 = vld [vmem:[%s3] sm:$0xff]
  %v24 = vld [vmem:[%s3 + $0x8] sm:$0x3]
  %v25 = vld [vmem:[%s4] sm:$0xff]
  %v26 = vld [vmem:[%s4 + $0x8] sm:$0x3]
  %v27 = vld [vmem:[%s0] sm:$0xf]
  %v28 = vld [vmem:[%s0 + $0x4] sm:$0xf]
  %v29 = vld [vmem:[%s0 + $0x8] sm:$0xf]
  %v30 = vld [vmem:[%s0 + $0xc] sm:$0xf]
  %v31 = vld [vmem:[%s0 + $0x10] sm:$0xf]
  %v32 = vld [vmem:[%s0 + $0x14] sm:$0xf]
  %v33 = vld [vmem:[%s0 + $0x18] sm:$0xf]
  %v34 = vld [vmem:[%s0 + $0x1c] sm:$0xf]
  %v35 = vld [vmem:[%s0 + $0x20] sm:$0xf]
  %v36 = vld [vmem:[%s0 + $0x24] sm:$0xf]
  %v37 = vld [vmem:[%s0 + $0x28] sm:$0xf]
  %v38 = vld [vmem:[%s0 + $0x2c] sm:$0xf]
  %v39 = vld [vmem:[%s0 + $0x30] sm:$0xf]
  %v40 = vld [vmem:[%s0 + $0x34] sm:$0xf]
  %v41 = vld [vmem:[%s0 + $0x38] sm:$0xf]
  %v42 = vld [vmem:[%s0 + $0x3c] sm:$0xf]
  %v43 = vld [vmem:[%s0 + $0x40] sm:$0xf]
  %v44 = vld [vmem:[%s0 + $0x44] sm:$0xf]
  %v45 = vld [vmem:[%s0 + $0x48] sm:$0xf]
  %v46 = vld [vmem:[%s0 + $0x4c] sm:$0xf]
  %v47 = vld [vmem:[%s0 + $0x50] sm:$0xf]
  %v48 = vld [vmem:[%s0 + $0x54] sm:$0x3]
  %v49 = vld [vmem:[%s1] sm:$0xf]
  %v50 = vld [vmem:[%s1 + $0x4] sm:$0xf]
  %v51 = vld [vmem:[%s1 + $0x8] sm:$0xf]
  %v52 = vld [vmem:[%s1 + $0xc] sm:$0xf]
  %v53 = vld [vmem:[%s1 + $0x10] sm:$0xf]
  %v54 = vld [vmem:[%s1 + $0x14] sm:$0xf]
  %v55 = vld [vmem:[%s1 + $0x18] sm:$0xf]
  %v56 = vld [vmem:[%s1 + $0x1c] sm:$0xf]
  %v57 = vld [vmem:[%s1 + $0x20] sm:$0xf]
  %v58 = vld [vmem:[%s1 + $0x24] sm:$0xf]
  %v59 = vld [vmem:[%s1 + $0x28] sm:$0xf]
  %v60 = vld [vmem:[%s1 + $0x2c] sm:$0xf]
  %v61 = vld [vmem:[%s1 + $0x30] sm:$0xf]
  %v62 = vld [vmem:[%s1 + $0x34] sm:$0xf]
  %v73 = vunpack.c.l.b16 %v27
  %v74 = vunpack.c.l.b16 %v28
  %v75 = vunpack.c.l.b16 %v29
  %v76 = vunpack.c.l.b16 %v30
  %v77 = vunpack.c.l.b16 %v31
  %v78 = vunpack.c.l.b16 %v32
  %v79 = vunpack.c.l.b16 %v33
  %v80 = vunpack.c.l.b16 %v34
  %v81 = vunpack.c.l.b16 %v35
  %v82 = vunpack.c.l.b16 %v36
  %v83 = vpack.c.b16 %v74, %v73
  %v84 = vpack.c.b16 %v76, %v75
  %v85 = vpack.c.b16 %v78, %v77
  %v86 = vpack.c.b16 %v80, %v79
  %v87 = vpack.c.b16 %v82, %v81
  %v89 = vunpack.c.l.b16 %v37
  %v90 = vpack.c.b16 %v89, %v89
  %vm91 = vsmask.f32 7424
  %v93 = vshrl.u32 %v83, 16
  %v95 = vshll.u32 %v83, 16
  %v97 = vrot.slane %v95, 1
  %v98 = vor.u32 %v93, %v97
  %v100 = vshll.u32 %v84, 16
  %v102 = vrot.slane %v100, 1
  %v103 = vsel %vm91, %v98, %v102
  %v104 = vshrl.u32 %v84, 16
  %v106 = vor.u32 %v104, %v102
  %v108 = vshll.u32 %v85, 16
  %v110 = vrot.slane %v108, 1
  %v111 = vsel %vm91, %v106, %v110
  %v112 = vshrl.u32 %v85, 16
  %v114 = vor.u32 %v112, %v110
  %v116 = vshll.u32 %v86, 16
  %v118 = vrot.slane %v116, 1
  %v119 = vsel %vm91, %v114, %v118
  %v120 = vshrl.u32 %v86, 16
  %v122 = vor.u32 %v120, %v118
  %v124 = vshll.u32 %v87, 16
  %v126 = vrot.slane %v124, 1
  %v127 = vsel %vm91, %v122, %v126
  %v128 = vshrl.u32 %v87, 16
  %v130 = vor.u32 %v128, %v126
  %v132 = vshll.u32 %v90, 16
  %v134 = vrot.slane %v132, 1
  %v135 = vsel %vm91, %v130, %v134
  %136 = vrot.lane.b32.xlu0 %v103, 16
  %v137 = vpop.permute.xlu0 %136
  %138 = vrot.lane.b32.xlu0 %v111, 16
  %v139 = vpop.permute.xlu0 %138
  %140 = vrot.lane.b32.xlu0 %v119, 16
  %v141 = vpop.permute.xlu0 %140
  %142 = vrot.lane.b32.xlu0 %v127, 16
  %v143 = vpop.permute.xlu0 %142
  %144 = vrot.lane.b32.xlu0 %v135, 16
  %v145 = vpop.permute.xlu0 %144
  %vm146 = vcmask 1046528
  %v147 = vrot.slane %v83, 1
  %v148 = vrot.slane %v84, 1
  %v149 = vsel %vm146, %v147, %v148
  %v150 = vrot.slane %v85, 1
  %v151 = vsel %vm146, %v148, %v150
  %v152 = vrot.slane %v86, 1
  %v153 = vsel %vm146, %v150, %v152
  %v154 = vrot.slane %v87, 1
  %v155 = vsel %vm146, %v152, %v154
  %v156 = vrot.slane %v90, 1
  %v157 = vsel %vm146, %v154, %v156
  %158 = vrot.lane.b32.xlu0 %v149, 32
  %v159 = vpop.permute.xlu0 %158
  %160 = vrot.lane.b32.xlu0 %v151, 32
  %v161 = vpop.permute.xlu0 %160
  %162 = vrot.lane.b32.xlu0 %v153, 32
  %v163 = vpop.permute.xlu0 %162
  %164 = vrot.lane.b32.xlu0 %v155, 32
  %v165 = vpop.permute.xlu0 %164
  %166 = vrot.lane.b32.xlu0 %v157, 32
  %v167 = vpop.permute.xlu0 %166
  %vm168 = vsmask.f32 6400
  %v169 = vrot.slane %v93, 1
  %v170 = vrot.slane %v95, 2
  %v171 = vor.u32 %v169, %v170
  %v172 = vrot.slane %v104, 1
  %v173 = vrot.slane %v100, 2
  %v174 = vor.u32 %v172, %v173
  %v175 = vsel %vm168, %v171, %v174
  %v176 = vrot.slane %v112, 1
  %v177 = vrot.slane %v108, 2
  %v178 = vor.u32 %v176, %v177
  %v179 = vsel %vm168, %v174, %v178
  %v180 = vrot.slane %v120, 1
  %v181 = vrot.slane %v116, 2
  %v182 = vor.u32 %v180, %v181
  %v183 = vsel %vm168, %v178, %v182
  %v184 = vrot.slane %v128, 1
  %v185 = vrot.slane %v124, 2
  %v186 = vor.u32 %v184, %v185
  %v187 = vsel %vm168, %v182, %v186
  %v188 = vshrl.u32 %v90, 16
  %v190 = vrot.slane %v188, 1
  %v191 = vrot.slane %v132, 2
  %v192 = vor.u32 %v190, %v191
  %v193 = vsel %vm168, %v186, %v192
  %194 = vrot.lane.b32.xlu0 %v175, 48
  %v195 = vpop.permute.xlu0 %194
  %196 = vrot.lane.b32.xlu0 %v179, 48
  %v197 = vpop.permute.xlu0 %196
  %198 = vrot.lane.b32.xlu0 %v183, 48
  %v199 = vpop.permute.xlu0 %198
  %200 = vrot.lane.b32.xlu0 %v187, 48
  %v201 = vpop.permute.xlu0 %200
  %202 = vrot.lane.b32.xlu0 %v193, 48
  %v203 = vpop.permute.xlu0 %202
  %vm204 = vcmask 1045504
  %v205 = vrot.slane %v83, 2
  %v206 = vrot.slane %v84, 2
  %v207 = vsel %vm204, %v205, %v206
  %v208 = vrot.slane %v85, 2
  %v209 = vsel %vm204, %v206, %v208
  %v210 = vrot.slane %v86, 2
  %v211 = vsel %vm204, %v208, %v210
  %v212 = vrot.slane %v87, 2
  %v213 = vsel %vm204, %v210, %v212
  %v214 = vrot.slane %v90, 2
  %v215 = vsel %vm204, %v212, %v214
  %216 = vrot.lane.b32.xlu0 %v207, 64
  %v217 = vpop.permute.xlu0 %216
  %218 = vrot.lane.b32.xlu0 %v209, 64
  %v219 = vpop.permute.xlu0 %218
  %220 = vrot.lane.b32.xlu0 %v211, 64
  %v221 = vpop.permute.xlu0 %220
  %222 = vrot.lane.b32.xlu0 %v213, 64
  %v223 = vpop.permute.xlu0 %222
  %224 = vrot.lane.b32.xlu0 %v215, 64
  %v225 = vpop.permute.xlu0 %224
  %vm226 = vsmask.f32 5376
  %v227 = vrot.slane %v93, 2
  %v228 = vrot.slane %v95, 3
  %v229 = vor.u32 %v227, %v228
  %v230 = vrot.slane %v104, 2
  %v231 = vrot.slane %v100, 3
  %v232 = vor.u32 %v230, %v231
  %v233 = vsel %vm226, %v229, %v232
  %v234 = vrot.slane %v112, 2
  %v235 = vrot.slane %v108, 3
  %v236 = vor.u32 %v234, %v235
  %v237 = vsel %vm226, %v232, %v236
  %v238 = vrot.slane %v120, 2
  %v239 = vrot.slane %v116, 3
  %v240 = vor.u32 %v238, %v239
  %v241 = vsel %vm226, %v236, %v240
  %v242 = vrot.slane %v128, 2
  %v243 = vrot.slane %v124, 3
  %v244 = vor.u32 %v242, %v243
  %v245 = vsel %vm226, %v240, %v244
  %v246 = vrot.slane %v188, 2
  %v247 = vrot.slane %v132, 3
  %v248 = vor.u32 %v246, %v247
  %v249 = vsel %vm226, %v244, %v248
  %250 = vrot.lane.b32.xlu0 %v233, 80
  %v251 = vpop.permute.xlu0 %250
  %252 = vrot.lane.b32.xlu0 %v237, 80
  %v253 = vpop.permute.xlu0 %252
  %254 = vrot.lane.b32.xlu0 %v241, 80
  %v255 = vpop.permute.xlu0 %254
  %256 = vrot.lane.b32.xlu0 %v245, 80
  %v257 = vpop.permute.xlu0 %256
  %258 = vrot.lane.b32.xlu0 %v249, 80
  %v259 = vpop.permute.xlu0 %258
  %vm260 = vcmask 1044480
  %v261 = vrot.slane %v83, 3
  %v262 = vrot.slane %v84, 3
  %v263 = vsel %vm260, %v261, %v262
  %v264 = vrot.slane %v85, 3
  %v265 = vsel %vm260, %v262, %v264
  %v266 = vrot.slane %v86, 3
  %v267 = vsel %vm260, %v264, %v266
  %v268 = vrot.slane %v87, 3
  %v269 = vsel %vm260, %v266, %v268
  %v270 = vrot.slane %v90, 3
  %v271 = vsel %vm260, %v268, %v270
  %272 = vrot.lane.b32.xlu0 %v263, 96
  %v273 = vpop.permute.xlu0 %272
  %274 = vrot.lane.b32.xlu0 %v265, 96
  %v275 = vpop.permute.xlu0 %274
  %276 = vrot.lane.b32.xlu0 %v267, 96
  %v277 = vpop.permute.xlu0 %276
  %278 = vrot.lane.b32.xlu0 %v269, 96
  %v279 = vpop.permute.xlu0 %278
  %280 = vrot.lane.b32.xlu0 %v271, 96
  %v281 = vpop.permute.xlu0 %280
  %vm282 = vcmask 130048
  %v284 = vsel %vm282, %v83, %v137
  %v286 = vsel %vm282, %v84, %v139
  %v288 = vsel %vm282, %v85, %v141
  %v290 = vsel %vm282, %v86, %v143
  %v292 = vsel %vm282, %v87, %v145
  %vm293 = vcmask 261120
  %v295 = vsel %vm293, %v284, %v159
  %v297 = vsel %vm293, %v286, %v161
  %v299 = vsel %vm293, %v288, %v163
  %v301 = vsel %vm293, %v290, %v165
  %v303 = vsel %vm293, %v292, %v167
  %vm304 = vcmask 392192
  %v306 = vsel %vm304, %v295, %v195
  %v308 = vsel %vm304, %v297, %v197
  %v310 = vsel %vm304, %v299, %v199
  %v312 = vsel %vm304, %v301, %v201
  %v314 = vsel %vm304, %v303, %v203
  %vm315 = vcmask 523264
  %v317 = vsel %vm315, %v306, %v217
  %v319 = vsel %vm315, %v308, %v219
  %v321 = vsel %vm315, %v310, %v221
  %v323 = vsel %vm315, %v312, %v223
  %v325 = vsel %vm315, %v314, %v225
  %vm326 = vcmask 654336
  %v328 = vsel %vm326, %v317, %v251
  %v330 = vsel %vm326, %v319, %v253
  %v332 = vsel %vm326, %v321, %v255
  %v334 = vsel %vm326, %v323, %v257
  %v336 = vsel %vm326, %v325, %v259
  %vm337 = vcmask 785408
  %v339 = vsel %vm337, %v328, %v273
  %v341 = vsel %vm337, %v330, %v275
  %v343 = vsel %vm337, %v332, %v277
  %v345 = vsel %vm337, %v334, %v279
  %v347 = vsel %vm337, %v336, %v281
  %v358 = vunpack.c.l.b16 %v38
  %v359 = vunpack.c.l.b16 %v39
  %v360 = vunpack.c.l.b16 %v40
  %v361 = vunpack.c.l.b16 %v41
  %v362 = vunpack.c.l.b16 %v42
  %v363 = vunpack.c.l.b16 %v43
  %v364 = vunpack.c.l.b16 %v44
  %v365 = vunpack.c.l.b16 %v45
  %v366 = vunpack.c.l.b16 %v46
  %v367 = vunpack.c.l.b16 %v47
  %v368 = vpack.c.b16 %v358, %v89
  %v369 = vpack.c.b16 %v360, %v359
  %v370 = vpack.c.b16 %v362, %v361
  %v371 = vpack.c.b16 %v364, %v363
  %v372 = vpack.c.b16 %v366, %v365
  %v373 = vpack.c.b16 %v367, %v367
  %v375 = vshrl.u32 %v368, 16
  %v377 = vshll.u32 %v368, 16
  %v379 = vrot.slane %v377, 1
  %v380 = vor.u32 %v375, %v379
  %v382 = vshll.u32 %v369, 16
  %v384 = vrot.slane %v382, 1
  %v385 = vsel %vm91, %v380, %v384
  %v386 = vshrl.u32 %v369, 16
  %v388 = vor.u32 %v386, %v384
  %v390 = vshll.u32 %v370, 16
  %v392 = vrot.slane %v390, 1
  %v393 = vsel %vm91, %v388, %v392
  %v394 = vshrl.u32 %v370, 16
  %v396 = vor.u32 %v394, %v392
  %v398 = vshll.u32 %v371, 16
  %v400 = vrot.slane %v398, 1
  %v401 = vsel %vm91, %v396, %v400
  %v402 = vshrl.u32 %v371, 16
  %v404 = vor.u32 %v402, %v400
  %v406 = vshll.u32 %v372, 16
  %v408 = vrot.slane %v406, 1
  %v409 = vsel %vm91, %v404, %v408
  %v410 = vshrl.u32 %v372, 16
  %v412 = vor.u32 %v410, %v408
  %v414 = vshll.u32 %v373, 16
  %v416 = vrot.slane %v414, 1
  %v417 = vsel %vm91, %v412, %v416
  %v418 = vshrl.u32 %v373, 16
  %v420 = vor.u32 %v418, %v416
  %421 = vrot.lane.b32.xlu0 %v385, 16
  %v422 = vpop.permute.xlu0 %421
  %423 = vrot.lane.b32.xlu0 %v393, 16
  %v424 = vpop.permute.xlu0 %423
  %425 = vrot.lane.b32.xlu0 %v401, 16
  %v426 = vpop.permute.xlu0 %425
  %427 = vrot.lane.b32.xlu0 %v409, 16
  %v428 = vpop.permute.xlu0 %427
  %429 = vrot.lane.b32.xlu0 %v417, 16
  %v430 = vpop.permute.xlu0 %429
  %431 = vrot.lane.b32.xlu0 %v420, 16
  %v432 = vpop.permute.xlu0 %431
  %v433 = vpack.c.b16 %v359, %v358
  %v434 = vpack.c.b16 %v361, %v360
  %v435 = vpack.c.b16 %v363, %v362
  %v436 = vpack.c.b16 %v365, %v364
  %v437 = vpack.c.b16 %v367, %v366
  %vm438 = vcmask 1042432
  %v439 = vrot.slane %v433, 5
  %v440 = vrot.slane %v434, 5
  %v441 = vsel %vm438, %v439, %v440
  %v442 = vrot.slane %v435, 5
  %v443 = vsel %vm438, %v440, %v442
  %v444 = vrot.slane %v436, 5
  %v445 = vsel %vm438, %v442, %v444
  %v446 = vrot.slane %v437, 5
  %v447 = vsel %vm438, %v444, %v446
  %448 = vrot.lane.b32.xlu0 %v439, 32
  %v449 = vpop.permute.xlu0 %448
  %450 = vrot.lane.b32.xlu0 %v441, 32
  %v451 = vpop.permute.xlu0 %450
  %452 = vrot.lane.b32.xlu0 %v443, 32
  %v453 = vpop.permute.xlu0 %452
  %454 = vrot.lane.b32.xlu0 %v445, 32
  %v455 = vpop.permute.xlu0 %454
  %456 = vrot.lane.b32.xlu0 %v447, 32
  %v457 = vpop.permute.xlu0 %456
  %458 = vrot.lane.b32.xlu0 %v446, 32
  %v459 = vpop.permute.xlu0 %458
  %v461 = vunpack.c.l.b16 %v48
  %v462 = vpack.c.b16 %v461, %v461
  %vm463 = vsmask.f32 2304
  %v465 = vshrl.u32 %v433, 16
  %v467 = vrot.slane %v465, 5
  %v468 = vshll.u32 %v433, 16
  %v470 = vrot.slane %v468, 6
  %v471 = vor.u32 %v467, %v470
  %v473 = vshrl.u32 %v434, 16
  %v475 = vrot.slane %v473, 5
  %v476 = vshll.u32 %v434, 16
  %v478 = vrot.slane %v476, 6
  %v479 = vor.u32 %v475, %v478
  %v480 = vsel %vm463, %v471, %v479
  %v482 = vshrl.u32 %v435, 16
  %v484 = vrot.slane %v482, 5
  %v485 = vshll.u32 %v435, 16
  %v487 = vrot.slane %v485, 6
  %v488 = vor.u32 %v484, %v487
  %v489 = vsel %vm463, %v479, %v488
  %v491 = vshrl.u32 %v436, 16
  %v493 = vrot.slane %v491, 5
  %v494 = vshll.u32 %v436, 16
  %v496 = vrot.slane %v494, 6
  %v497 = vor.u32 %v493, %v496
  %v498 = vsel %vm463, %v488, %v497
  %v500 = vshrl.u32 %v437, 16
  %v502 = vrot.slane %v500, 5
  %v503 = vshll.u32 %v437, 16
  %v505 = vrot.slane %v503, 6
  %v506 = vor.u32 %v502, %v505
  %v507 = vsel %vm463, %v497, %v506
  %v509 = vshll.u32 %v462, 16
  %v511 = vrot.slane %v509, 6
  %v512 = vsel %vm463, %v506, %v511
  %513 = vrot.lane.b32.xlu0 %v471, 48
  %v514 = vpop.permute.xlu0 %513
  %515 = vrot.lane.b32.xlu0 %v480, 48
  %v516 = vpop.permute.xlu0 %515
  %517 = vrot.lane.b32.xlu0 %v489, 48
  %v518 = vpop.permute.xlu0 %517
  %519 = vrot.lane.b32.xlu0 %v498, 48
  %v520 = vpop.permute.xlu0 %519
  %521 = vrot.lane.b32.xlu0 %v507, 48
  %v522 = vpop.permute.xlu0 %521
  %523 = vrot.lane.b32.xlu0 %v512, 48
  %v524 = vpop.permute.xlu0 %523
  %vm525 = vcmask 1041408
  %v526 = vrot.slane %v433, 6
  %v527 = vrot.slane %v434, 6
  %v528 = vsel %vm525, %v526, %v527
  %v529 = vrot.slane %v435, 6
  %v530 = vsel %vm525, %v527, %v529
  %v531 = vrot.slane %v436, 6
  %v532 = vsel %vm525, %v529, %v531
  %v533 = vrot.slane %v437, 6
  %v534 = vsel %vm525, %v531, %v533
  %v535 = vrot.slane %v462, 6
  %v536 = vsel %vm525, %v533, %v535
  %537 = vrot.lane.b32.xlu0 %v526, 64
  %v538 = vpop.permute.xlu0 %537
  %539 = vrot.lane.b32.xlu0 %v528, 64
  %v540 = vpop.permute.xlu0 %539
  %541 = vrot.lane.b32.xlu0 %v530, 64
  %v542 = vpop.permute.xlu0 %541
  %543 = vrot.lane.b32.xlu0 %v532, 64
  %v544 = vpop.permute.xlu0 %543
  %545 = vrot.lane.b32.xlu0 %v534, 64
  %v546 = vpop.permute.xlu0 %545
  %547 = vrot.lane.b32.xlu0 %v536, 64
  %v548 = vpop.permute.xlu0 %547
  %vm549 = vsmask.f32 1280
  %v550 = vrot.slane %v465, 6
  %v551 = vrot.slane %v468, 7
  %v552 = vor.u32 %v550, %v551
  %v553 = vrot.slane %v473, 6
  %v554 = vrot.slane %v476, 7
  %v555 = vor.u32 %v553, %v554
  %v556 = vsel %vm549, %v552, %v555
  %v557 = vrot.slane %v482, 6
  %v558 = vrot.slane %v485, 7
  %v559 = vor.u32 %v557, %v558
  %v560 = vsel %vm549, %v555, %v559
  %v561 = vrot.slane %v491, 6
  %v562 = vrot.slane %v494, 7
  %v563 = vor.u32 %v561, %v562
  %v564 = vsel %vm549, %v559, %v563
  %v565 = vrot.slane %v500, 6
  %v566 = vrot.slane %v503, 7
  %v567 = vor.u32 %v565, %v566
  %v568 = vsel %vm549, %v563, %v567
  %v569 = vshrl.u32 %v462, 16
  %v571 = vrot.slane %v569, 6
  %v572 = vrot.slane %v509, 7
  %v573 = vor.u32 %v571, %v572
  %v574 = vsel %vm549, %v567, %v573
  %575 = vrot.lane.b32.xlu0 %v552, 80
  %v576 = vpop.permute.xlu0 %575
  %577 = vrot.lane.b32.xlu0 %v556, 80
  %v578 = vpop.permute.xlu0 %577
  %579 = vrot.lane.b32.xlu0 %v560, 80
  %v580 = vpop.permute.xlu0 %579
  %581 = vrot.lane.b32.xlu0 %v564, 80
  %v582 = vpop.permute.xlu0 %581
  %583 = vrot.lane.b32.xlu0 %v568, 80
  %v584 = vpop.permute.xlu0 %583
  %585 = vrot.lane.b32.xlu0 %v574, 80
  %v586 = vpop.permute.xlu0 %585
  %vm587 = vcmask 1040384
  %v588 = vrot.slane %v433, 7
  %v589 = vrot.slane %v434, 7
  %v590 = vsel %vm587, %v588, %v589
  %v591 = vrot.slane %v435, 7
  %v592 = vsel %vm587, %v589, %v591
  %v593 = vrot.slane %v436, 7
  %v594 = vsel %vm587, %v591, %v593
  %v595 = vrot.slane %v437, 7
  %v596 = vsel %vm587, %v593, %v595
  %v597 = vrot.slane %v462, 7
  %v598 = vsel %vm587, %v595, %v597
  %599 = vrot.lane.b32.xlu0 %v588, 96
  %v600 = vpop.permute.xlu0 %599
  %601 = vrot.lane.b32.xlu0 %v590, 96
  %v602 = vpop.permute.xlu0 %601
  %603 = vrot.lane.b32.xlu0 %v592, 96
  %v604 = vpop.permute.xlu0 %603
  %605 = vrot.lane.b32.xlu0 %v594, 96
  %v606 = vpop.permute.xlu0 %605
  %607 = vrot.lane.b32.xlu0 %v596, 96
  %v608 = vpop.permute.xlu0 %607
  %609 = vrot.lane.b32.xlu0 %v598, 96
  %v610 = vpop.permute.xlu0 %609
  %v612 = vsel %vm282, %v368, %v422
  %v614 = vsel %vm282, %v369, %v424
  %v616 = vsel %vm282, %v370, %v426
  %v618 = vsel %vm282, %v371, %v428
  %v620 = vsel %vm282, %v372, %v430
  %v622 = vsel %vm282, %v373, %v432
  %v624 = vsel %vm293, %v612, %v449
  %v626 = vsel %vm293, %v614, %v451
  %v628 = vsel %vm293, %v616, %v453
  %v630 = vsel %vm293, %v618, %v455
  %v632 = vsel %vm293, %v620, %v457
  %v634 = vsel %vm293, %v622, %v459
  %v636 = vsel %vm304, %v624, %v514
  %v638 = vsel %vm304, %v626, %v516
  %v640 = vsel %vm304, %v628, %v518
  %v642 = vsel %vm304, %v630, %v520
  %v644 = vsel %vm304, %v632, %v522
  %v646 = vsel %vm304, %v634, %v524
  %v648 = vsel %vm315, %v636, %v538
  %v650 = vsel %vm315, %v638, %v540
  %v652 = vsel %vm315, %v640, %v542
  %v654 = vsel %vm315, %v642, %v544
  %v656 = vsel %vm315, %v644, %v546
  %v658 = vsel %vm315, %v646, %v548
  %v660 = vsel %vm326, %v648, %v576
  %v662 = vsel %vm326, %v650, %v578
  %v664 = vsel %vm326, %v652, %v580
  %v666 = vsel %vm326, %v654, %v582
  %v668 = vsel %vm326, %v656, %v584
  %v670 = vsel %vm326, %v658, %v586
  %v672 = vsel %vm337, %v660, %v600
  %v674 = vsel %vm337, %v662, %v602
  %v676 = vsel %vm337, %v664, %v604
  %v678 = vsel %vm337, %v666, %v606
  %v680 = vsel %vm337, %v668, %v608
  %v682 = vsel %vm337, %v670, %v610
  %v689 = vrot.slane %v672, 3
  %v690 = vrot.slane %v674, 3
  %v691 = vsel %vm260, %v689, %v690
  %v692 = vrot.slane %v676, 3
  %v693 = vsel %vm260, %v690, %v692
  %v694 = vrot.slane %v678, 3
  %v695 = vsel %vm260, %v692, %v694
  %v696 = vrot.slane %v680, 3
  %v697 = vsel %vm260, %v694, %v696
  %v698 = vrot.slane %v682, 3
  %v699 = vsel %vm260, %v696, %v698
  %v700 = vlaneseq
  %v701 = vshrl.u32 %v700, 7
  %v702 = vsub.s32 0, %v701
  %v703 = vrot.slane %v21, %v702
  %v718 = vunpack.c.l.b16 %v49
  %v719 = vunpack.c.l.b16 %v50
  %v720 = vunpack.c.l.b16 %v51
  %v721 = vunpack.c.l.b16 %v52
  %v722 = vunpack.c.l.b16 %v53
  %v723 = vunpack.c.l.b16 %v54
  %v724 = vunpack.c.l.b16 %v55
  %v725 = vunpack.c.l.b16 %v56
  %v726 = vunpack.c.l.b16 %v57
  %v727 = vunpack.c.l.b16 %v58
  %v728 = vunpack.c.l.b16 %v59
  %v729 = vunpack.c.l.b16 %v60
  %v730 = vunpack.c.l.b16 %v61
  %v731 = vunpack.c.l.b16 %v62
  %v732 = vpack.c.b16 %v719, %v718
  %v733 = vpack.c.b16 %v721, %v720
  %v734 = vpack.c.b16 %v723, %v722
  %v735 = vpack.c.b16 %v725, %v724
  %v736 = vpack.c.b16 %v727, %v726
  %v737 = vpack.c.b16 %v729, %v728
  %v738 = vpack.c.b16 %v731, %v730
  %vm746 = vcmask 916480
  %v747 = vsel %vm746, %v339, 0
  %v749 = vsel %vm746, %v341, 0
  %v751 = vsel %vm746, %v343, 0
  %v753 = vsel %vm746, %v345, 0
  %v755 = vsel %vm746, %v347, 0
  %v758 = vsel %vm746, %v691, 0
  %v761 = vsel %vm746, %v693, 0
  %v764 = vsel %vm746, %v695, 0
  %v767 = vsel %vm746, %v697, 0
  %v770 = vsel %vm746, %v699, 0
  %772 = vmatprep.subr.bf16.mxu0 0
  %773 = vmatpush1.bf16.msra.mxu0 %v732
  %774 = vmatprep.subr.bf16.mxu0 0
  %775 = vmatpush1.bf16.msra.mxu0 %v733
  %776 = vmatprep.subr.bf16.mxu0 0
  %777 = vmatpush1.bf16.msra.mxu0 %v734
  %778 = vmatprep.subr.bf16.mxu0 0
  %779 = vmatpush1.bf16.msra.mxu0 %v735
  %780 = vmatprep.subr.bf16.mxu0 0
  %781 = vmatpush1.bf16.msra.mxu0 %v736
  %782 = vmatprep.subr.bf16.mxu0 0
  %783 = vmatpush1.bf16.msra.mxu0 %v737
  %784 = vmatprep.subr.bf16.mxu0 0
  %785 = vmatpush1.bf16.msra.mxu0 %v738
  %786 = vmatprep.subr.bf16.mxu0 0
  %787 = vmatpush1.bf16.msra.mxu0 0
  %788 = vmatprep.subr.bf16.mxu0 0
  %789 = vmatpush1.bf16.msra.mxu0 0
  %790 = vmatprep.subr.bf16.mxu0 0
  %791 = vmatpush1.bf16.msra.mxu0 0
  %792 = vmatprep.subr.bf16.mxu0 0
  %793 = vmatpush1.bf16.msra.mxu0 0
  %794 = vmatprep.subr.bf16.mxu0 0
  %795 = vmatpush1.bf16.msra.mxu0 0
  %796 = vmatprep.subr.bf16.mxu0 0
  %797 = vmatpush1.bf16.msra.mxu0 0
  %798 = vmatprep.subr.bf16.mxu0 0
  %799 = vmatpush1.bf16.msra.mxu0 0
  %800 = vmatprep.subr.bf16.mxu0 0
  %801 = vmatpush1.bf16.msra.mxu0 0
  %802 = vmatprep.subr.bf16.mxu0 0
  %803 = vmatpush1.bf16.msra.mxu0 0
  %804 = vmatprep.mubr.bf16.mxu0 0
  %805 = vmatmul.mubr.bf16.gmra.mrb[0].mxu0 %v747
  %v806 = vpop.f32.mrb[0].mxu0
  %v807 = vadd.f32 %v703, %v806
  %v808 = vpop.f32.mrb[0].mxu0
  %v809 = vpop.f32.mrb[0].mxu0
  %v810 = vadd.f32 %v703, %v809
  %v811 = vpop.f32.mrb[0].mxu0
  %812 = vmatprep.mubr.bf16.mxu0 0
  %813 = vmatmul.mubr.bf16.gmra.mrb[0].mxu0 %v749
  %v814 = vpop.f32.mrb[0].mxu0
  %v815 = vadd.f32 %v703, %v814
  %v816 = vpop.f32.mrb[0].mxu0
  %v817 = vpop.f32.mrb[0].mxu0
  %v818 = vadd.f32 %v703, %v817
  %v819 = vpop.f32.mrb[0].mxu0
  %820 = vmatprep.mubr.bf16.mxu0 0
  %821 = vmatmul.mubr.bf16.gmra.mrb[0].mxu0 %v751
  %v822 = vpop.f32.mrb[0].mxu0
  %v823 = vadd.f32 %v703, %v822
  %v824 = vpop.f32.mrb[0].mxu0
  %v825 = vpop.f32.mrb[0].mxu0
  %v826 = vadd.f32 %v703, %v825
  %v827 = vpop.f32.mrb[0].mxu0
  %828 = vmatprep.mubr.bf16.mxu0 0
  %829 = vmatmul.mubr.bf16.gmra.mrb[0].mxu0 %v753
  %v830 = vpop.f32.mrb[0].mxu0
  %v831 = vadd.f32 %v703, %v830
  %v832 = vpop.f32.mrb[0].mxu0
  %v833 = vpop.f32.mrb[0].mxu0
  %v834 = vadd.f32 %v703, %v833
  %v835 = vpop.f32.mrb[0].mxu0
  %836 = vmatprep.mubr.bf16.mxu0 0
  %837 = vmatmul.mubr.bf16.gmra.mrb[0].mxu0 %v755
  %v838 = vpop.f32.mrb[0].mxu0
  %v839 = vadd.f32 %v703, %v838
  %v840 = vpop.f32.mrb[0].mxu0
  %v841 = vpop.f32.mrb[0].mxu0
  %v842 = vadd.f32 %v703, %v841
  %v843 = vpop.f32.mrb[0].mxu0
  %844 = vmatprep.mubr.bf16.mxu0 0
  %845 = vmatmul.mubr.bf16.gmra.mrb[0].mxu0 %v758
  %v846 = vpop.f32.mrb[0].mxu0
  %v847 = vadd.f32 %v703, %v846
  %v848 = vpop.f32.mrb[0].mxu0
  %v849 = vpop.f32.mrb[0].mxu0
  %v850 = vadd.f32 %v703, %v849
  %v851 = vpop.f32.mrb[0].mxu0
  %852 = vmatprep.mubr.bf16.mxu0 0
  %853 = vmatmul.mubr.bf16.gmra.mrb[0].mxu0 %v761
  %v854 = vpop.f32.mrb[0].mxu0
  %v855 = vadd.f32 %v703, %v854
  %v856 = vpop.f32.mrb[0].mxu0
  %v857 = vpop.f32.mrb[0].mxu0
  %v858 = vadd.f32 %v703, %v857
  %v859 = vpop.f32.mrb[0].mxu0
  %860 = vmatprep.mubr.bf16.mxu0 0
  %861 = vmatmul.mubr.bf16.gmra.mrb[0].mxu0 %v764
  %v862 = vpop.f32.mrb[0].mxu0
  %v863 = vadd.f32 %v703, %v862
  %v864 = vpop.f32.mrb[0].mxu0
  %v865 = vpop.f32.mrb[0].mxu0
  %v866 = vadd.f32 %v703, %v865
  %v867 = vpop.f32.mrb[0].mxu0
  %868 = vmatprep.mubr.bf16.mxu0 0
  %869 = vmatmul.mubr.bf16.gmra.mrb[0].mxu0 %v767
  %v870 = vpop.f32.mrb[0].mxu0
  %v871 = vadd.f32 %v703, %v870
  %v872 = vpop.f32.mrb[0].mxu0
  %v873 = vpop.f32.mrb[0].mxu0
  %v874 = vadd.f32 %v703, %v873
  %v875 = vpop.f32.mrb[0].mxu0
  %876 = vmatprep.mubr.bf16.mxu0 0
  %877 = vmatmul.mubr.bf16.gmra.mrb[0].mxu0 %v770
  %v878 = vpop.f32.mrb[0].mxu0
  %v879 = vadd.f32 %v703, %v878
  %v880 = vpop.f32.mrb[0].mxu0
  %v881 = vpop.f32.mrb[0].mxu0
  %v882 = vadd.f32 %v703, %v881
  %v883 = vpop.f32.mrb[0].mxu0
  %884 = vdwg.mxu0
  %v885 = vadd.f32 %v807, %v810
  %v886 = vadd.f32 %v885, %v815
  %v887 = vadd.f32 %v886, %v818
  %v888 = vadd.f32 %v887, %v823
  %v889 = vadd.f32 %v888, %v826
  %v890 = vadd.f32 %v889, %v831
  %v891 = vadd.f32 %v890, %v834
  %v892 = vadd.f32 %v891, %v839
  %v893 = vadd.f32 %v892, %v842
  %v894 = vadd.f32 %v893, %v847
  %v895 = vadd.f32 %v894, %v850
  %v896 = vadd.f32 %v895, %v855
  %v897 = vadd.f32 %v896, %v858
  %v898 = vadd.f32 %v897, %v863
  %v899 = vadd.f32 %v898, %v866
  %v900 = vadd.f32 %v899, %v871
  %v901 = vadd.f32 %v900, %v874
  %v902 = vadd.f32 %v901, %v879
  %v903 = vadd.f32 %v902, %v882
  %v904 = vrot.slane %v903, 4
  %v905 = vadd.f32 %v903, %v904
  %v906 = vrot.slane %v905, 2
  %v907 = vadd.f32 %v905, %v906
  %v908 = vrot.slane %v907, 1
  %v909 = vadd.f32 %v907, %v908
  %v910 = vrcp.pop 160.0
  %v911 = vmul.f32 %v909, %v910
  %v912 = vsub.f32 %v807, %v911
  %v913 = vsub.f32 %v810, %v911
  %v914 = vsub.f32 %v815, %v911
  %v915 = vsub.f32 %v818, %v911
  %v916 = vsub.f32 %v823, %v911
  %v917 = vsub.f32 %v826, %v911
  %v918 = vsub.f32 %v831, %v911
  %v919 = vsub.f32 %v834, %v911
  %v920 = vsub.f32 %v839, %v911
  %v921 = vsub.f32 %v842, %v911
  %v922 = vsub.f32 %v847, %v911
  %v923 = vsub.f32 %v850, %v911
  %v924 = vsub.f32 %v855, %v911
  %v925 = vsub.f32 %v858, %v911
  %v926 = vsub.f32 %v863, %v911
  %v927 = vsub.f32 %v866, %v911
  %v928 = vsub.f32 %v871, %v911
  %v929 = vsub.f32 %v874, %v911
  %v930 = vsub.f32 %v879, %v911
  %v931 = vsub.f32 %v882, %v911
  %v932 = vmul.f32 %v912, %v912
  %v933 = vmul.f32 %v913, %v913
  %v934 = vmul.f32 %v914, %v914
  %v935 = vmul.f32 %v915, %v915
  %v936 = vmul.f32 %v916, %v916
  %v937 = vmul.f32 %v917, %v917
  %v938 = vmul.f32 %v918, %v918
  %v939 = vmul.f32 %v919, %v919
  %v940 = vmul.f32 %v920, %v920
  %v941 = vmul.f32 %v921, %v921
  %v942 = vmul.f32 %v922, %v922
  %v943 = vmul.f32 %v923, %v923
  %v944 = vmul.f32 %v924, %v924
  %v945 = vmul.f32 %v925, %v925
  %v946 = vmul.f32 %v926, %v926
  %v947 = vmul.f32 %v927, %v927
  %v948 = vmul.f32 %v928, %v928
  %v949 = vmul.f32 %v929, %v929
  %v950 = vmul.f32 %v930, %v930
  %v951 = vmul.f32 %v931, %v931
  %v952 = vadd.f32 %v932, %v933
  %v953 = vadd.f32 %v952, %v934
  %v954 = vadd.f32 %v953, %v935
  %v955 = vadd.f32 %v954, %v936
  %v956 = vadd.f32 %v955, %v937
  %v957 = vadd.f32 %v956, %v938
  %v958 = vadd.f32 %v957, %v939
  %v959 = vadd.f32 %v958, %v940
  %v960 = vadd.f32 %v959, %v941
  %v961 = vadd.f32 %v960, %v942
  %v962 = vadd.f32 %v961, %v943
  %v963 = vadd.f32 %v962, %v944
  %v964 = vadd.f32 %v963, %v945
  %v965 = vadd.f32 %v964, %v946
  %v966 = vadd.f32 %v965, %v947
  %v967 = vadd.f32 %v966, %v948
  %v968 = vadd.f32 %v967, %v949
  %v969 = vadd.f32 %v968, %v950
  %v970 = vadd.f32 %v969, %v951
  %v971 = vrot.slane %v970, 4
  %v972 = vadd.f32 %v970, %v971
  %v973 = vrot.slane %v972, 2
  %v974 = vadd.f32 %v972, %v973
  %v975 = vrot.slane %v974, 1
  %v976 = vadd.f32 %v974, %v975
  %v977 = vmul.f32 %v976, %v910
  %v978 = vadd.f32 %v977, 1e-05
  %v979 = vrsqrt.pop %v978
  %v980 = vmul.f32 %v912, %v979
  %v981 = vmul.f32 %v913, %v979
  %v982 = vmul.f32 %v914, %v979
  %v983 = vmul.f32 %v915, %v979
  %v984 = vmul.f32 %v916, %v979
  %v985 = vmul.f32 %v917, %v979
  %v986 = vmul.f32 %v918, %v979
  %v987 = vmul.f32 %v919, %v979
  %v988 = vmul.f32 %v920, %v979
  %v989 = vmul.f32 %v921, %v979
  %v990 = vmul.f32 %v922, %v979
  %v991 = vmul.f32 %v923, %v979
  %v992 = vmul.f32 %v924, %v979
  %v993 = vmul.f32 %v925, %v979
  %v994 = vmul.f32 %v926, %v979
  %v995 = vmul.f32 %v927, %v979
  %v996 = vmul.f32 %v928, %v979
  %v997 = vmul.f32 %v929, %v979
  %v998 = vmul.f32 %v930, %v979
  %v999 = vmul.f32 %v931, %v979
  %v1000 = vlaneseq
  %v1001 = vshrl.u32 %v1000, 7
  %v1002 = vsub.s32 0, %v1001
  %v1003 = vrot.slane %v23, %v1002
  %v1004 = vmul.f32 %v980, %v1003
  %v1005 = vmul.f32 %v981, %v1003
  %v1006 = vmul.f32 %v982, %v1003
  %v1007 = vmul.f32 %v983, %v1003
  %v1008 = vmul.f32 %v984, %v1003
  %v1009 = vmul.f32 %v985, %v1003
  %v1010 = vmul.f32 %v986, %v1003
  %v1011 = vmul.f32 %v987, %v1003
  %v1012 = vmul.f32 %v988, %v1003
  %v1013 = vmul.f32 %v989, %v1003
  %v1014 = vmul.f32 %v990, %v1003
  %v1015 = vmul.f32 %v991, %v1003
  %v1016 = vmul.f32 %v992, %v1003
  %v1017 = vmul.f32 %v993, %v1003
  %v1018 = vmul.f32 %v994, %v1003
  %v1019 = vmul.f32 %v995, %v1003
  %v1020 = vmul.f32 %v996, %v1003
  %v1021 = vmul.f32 %v997, %v1003
  %v1022 = vmul.f32 %v998, %v1003
  %v1023 = vmul.f32 %v999, %v1003
  %v1024 = vlaneseq
  %v1025 = vshrl.u32 %v1024, 7
  %v1026 = vsub.s32 0, %v1025
  %v1027 = vrot.slane %v25, %v1026
  %v1028 = vadd.f32 %v1004, %v1027
  %v1029 = vadd.f32 %v1005, %v1027
  %v1030 = vadd.f32 %v1006, %v1027
  %v1031 = vadd.f32 %v1007, %v1027
  %v1032 = vadd.f32 %v1008, %v1027
  %v1033 = vadd.f32 %v1009, %v1027
  %v1034 = vadd.f32 %v1010, %v1027
  %v1035 = vadd.f32 %v1011, %v1027
  %v1036 = vadd.f32 %v1012, %v1027
  %v1037 = vadd.f32 %v1013, %v1027
  %v1038 = vadd.f32 %v1014, %v1027
  %v1039 = vadd.f32 %v1015, %v1027
  %v1040 = vadd.f32 %v1016, %v1027
  %v1041 = vadd.f32 %v1017, %v1027
  %v1042 = vadd.f32 %v1018, %v1027
  %v1043 = vadd.f32 %v1019, %v1027
  %v1044 = vadd.f32 %v1020, %v1027
  %v1045 = vadd.f32 %v1021, %v1027
  %v1046 = vadd.f32 %v1022, %v1027
  %v1047 = vadd.f32 %v1023, %v1027
  %vm1048 = vcmp.gt.f32.partialorder %v1028, 0.0
  %vm1049 = vcmp.gt.f32.partialorder %v1029, 0.0
  %vm1050 = vcmp.gt.f32.partialorder %v1030, 0.0
  %vm1051 = vcmp.gt.f32.partialorder %v1031, 0.0
  %vm1052 = vcmp.gt.f32.partialorder %v1032, 0.0
  %vm1053 = vcmp.gt.f32.partialorder %v1033, 0.0
  %vm1054 = vcmp.gt.f32.partialorder %v1034, 0.0
  %vm1055 = vcmp.gt.f32.partialorder %v1035, 0.0
  %vm1056 = vcmp.gt.f32.partialorder %v1036, 0.0
  %vm1057 = vcmp.gt.f32.partialorder %v1037, 0.0
  %vm1058 = vcmp.gt.f32.partialorder %v1038, 0.0
  %vm1059 = vcmp.gt.f32.partialorder %v1039, 0.0
  %vm1060 = vcmp.gt.f32.partialorder %v1040, 0.0
  %vm1061 = vcmp.gt.f32.partialorder %v1041, 0.0
  %vm1062 = vcmp.gt.f32.partialorder %v1042, 0.0
  %vm1063 = vcmp.gt.f32.partialorder %v1043, 0.0
  %vm1064 = vcmp.gt.f32.partialorder %v1044, 0.0
  %vm1065 = vcmp.gt.f32.partialorder %v1045, 0.0
  %vm1066 = vcmp.gt.f32.partialorder %v1046, 0.0
  %vm1067 = vcmp.gt.f32.partialorder %v1047, 0.0
  %v1068 = vmul.f32 %v1028, 0.01
  %v1069 = vmul.f32 %v1029, 0.01
  %v1070 = vmul.f32 %v1030, 0.01
  %v1071 = vmul.f32 %v1031, 0.01
  %v1072 = vmul.f32 %v1032, 0.01
  %v1073 = vmul.f32 %v1033, 0.01
  %v1074 = vmul.f32 %v1034, 0.01
  %v1075 = vmul.f32 %v1035, 0.01
  %v1076 = vmul.f32 %v1036, 0.01
  %v1077 = vmul.f32 %v1037, 0.01
  %v1078 = vmul.f32 %v1038, 0.01
  %v1079 = vmul.f32 %v1039, 0.01
  %v1080 = vmul.f32 %v1040, 0.01
  %v1081 = vmul.f32 %v1041, 0.01
  %v1082 = vmul.f32 %v1042, 0.01
  %v1083 = vmul.f32 %v1043, 0.01
  %v1084 = vmul.f32 %v1044, 0.01
  %v1085 = vmul.f32 %v1045, 0.01
  %v1086 = vmul.f32 %v1046, 0.01
  %v1087 = vmul.f32 %v1047, 0.01
  %v1088 = vsel %vm1048, %v1028, %v1068
  %v1089 = vsel %vm1049, %v1029, %v1069
  %v1090 = vsel %vm1050, %v1030, %v1070
  %v1091 = vsel %vm1051, %v1031, %v1071
  %v1092 = vsel %vm1052, %v1032, %v1072
  %v1093 = vsel %vm1053, %v1033, %v1073
  %v1094 = vsel %vm1054, %v1034, %v1074
  %v1095 = vsel %vm1055, %v1035, %v1075
  %v1096 = vsel %vm1056, %v1036, %v1076
  %v1097 = vsel %vm1057, %v1037, %v1077
  %v1098 = vsel %vm1058, %v1038, %v1078
  %v1099 = vsel %vm1059, %v1039, %v1079
  %v1100 = vsel %vm1060, %v1040, %v1080
  %v1101 = vsel %vm1061, %v1041, %v1081
  %v1102 = vsel %vm1062, %v1042, %v1082
  %v1103 = vsel %vm1063, %v1043, %v1083
  %v1104 = vsel %vm1064, %v1044, %v1084
  %v1105 = vsel %vm1065, %v1045, %v1085
  %v1106 = vsel %vm1066, %v1046, %v1086
  %v1107 = vsel %vm1067, %v1047, %v1087
  %v1108 = vpack.c.bf16 %v1089, %v1088
  %v1109 = vpack.c.bf16 %v1091, %v1090
  %v1110 = vpack.c.bf16 %v1093, %v1092
  %v1111 = vpack.c.bf16 %v1095, %v1094
  %v1112 = vpack.c.bf16 %v1097, %v1096
  %v1113 = vpack.c.bf16 %v1099, %v1098
  %v1114 = vpack.c.bf16 %v1101, %v1100
  %v1115 = vpack.c.bf16 %v1103, %v1102
  %v1116 = vpack.c.bf16 %v1105, %v1104
  %v1117 = vpack.c.bf16 %v1107, %v1106
  %v1118 = vld [vmem:[%s1 + $0x38] sm:$0xf]
  %v1119 = vld [vmem:[%s1 + $0x3c] sm:$0xf]
  %v1120 = vld [vmem:[%s1 + $0x40] sm:$0xf]
  %v1121 = vld [vmem:[%s1 + $0x44] sm:$0xf]
  %v1122 = vld [vmem:[%s1 + $0x48] sm:$0xf]
  %v1123 = vld [vmem:[%s1 + $0x4c] sm:$0xf]
  %v1124 = vld [vmem:[%s1 + $0x50] sm:$0xf]
  %v1125 = vld [vmem:[%s1 + $0x54] sm:$0xf]
  %vm1126 = vsmask.f32 256
  %v1128 = vshrl.u32 %v1108, 16
  %v1130 = vrot.slane %v1128, 7
  %v1131 = vshll.u32 %v1108, 16
  %v1133 = vor.u32 %v1130, %v1131
  %v1135 = vshrl.u32 %v1109, 16
  %v1137 = vrot.slane %v1135, 7
  %v1138 = vshll.u32 %v1109, 16
  %v1140 = vor.u32 %v1137, %v1138
  %v1141 = vsel %vm1126, %v1130, %v1140
  %v1143 = vshrl.u32 %v1110, 16
  %v1145 = vrot.slane %v1143, 7
  %v1146 = vshll.u32 %v1110, 16
  %v1148 = vor.u32 %v1145, %v1146
  %v1149 = vsel %vm1126, %v1137, %v1148
  %v1151 = vshrl.u32 %v1111, 16
  %v1153 = vrot.slane %v1151, 7
  %v1154 = vshll.u32 %v1111, 16
  %v1156 = vor.u32 %v1153, %v1154
  %v1157 = vsel %vm1126, %v1145, %v1156
  %v1159 = vshrl.u32 %v1112, 16
  %v1161 = vrot.slane %v1159, 7
  %v1162 = vshll.u32 %v1112, 16
  %v1164 = vor.u32 %v1161, %v1162
  %v1165 = vsel %vm1126, %v1153, %v1164
  %vm1168 = vmand %vm587, %vm1126
  %v1169 = vsel %vm1168, 0, %v1133
  %v1170 = vsel %vm1168, %v1161, 0
  %v1172 = vshrl.u32 %v1113, 16
  %v1174 = vrot.slane %v1172, 7
  %v1175 = vshll.u32 %v1113, 16
  %v1177 = vor.u32 %v1174, %v1175
  %v1179 = vshrl.u32 %v1114, 16
  %v1181 = vrot.slane %v1179, 7
  %v1182 = vshll.u32 %v1114, 16
  %v1184 = vor.u32 %v1181, %v1182
  %v1185 = vsel %vm1126, %v1174, %v1184
  %v1187 = vshrl.u32 %v1115, 16
  %v1189 = vrot.slane %v1187, 7
  %v1190 = vshll.u32 %v1115, 16
  %v1192 = vor.u32 %v1189, %v1190
  %v1193 = vsel %vm1126, %v1181, %v1192
  %v1195 = vshrl.u32 %v1116, 16
  %v1197 = vrot.slane %v1195, 7
  %v1198 = vshll.u32 %v1116, 16
  %v1200 = vor.u32 %v1197, %v1198
  %v1201 = vsel %vm1126, %v1189, %v1200
  %v1203 = vshrl.u32 %v1117, 16
  %v1205 = vrot.slane %v1203, 7
  %v1206 = vshll.u32 %v1117, 16
  %v1208 = vor.u32 %v1205, %v1206
  %v1209 = vsel %vm1126, %v1197, %v1208
  %v1212 = vsel %vm1168, 0, %v1177
  %v1213 = vsel %vm1168, %v1205, 0
  %v1215 = vshrl.u32 %v1169, 16
  %v1217 = vshll.u32 %v1169, 16
  %v1219 = vrot.slane %v1217, 1
  %v1220 = vor.u32 %v1215, %v1219
  %v1222 = vshll.u32 %v1141, 16
  %v1224 = vrot.slane %v1222, 1
  %v1225 = vsel %vm91, %v1220, %v1224
  %v1226 = vshrl.u32 %v1141, 16
  %v1228 = vor.u32 %v1226, %v1224
  %v1230 = vshll.u32 %v1149, 16
  %v1232 = vrot.slane %v1230, 1
  %v1233 = vsel %vm91, %v1228, %v1232
  %v1234 = vshrl.u32 %v1149, 16
  %v1236 = vor.u32 %v1234, %v1232
  %v1238 = vshll.u32 %v1157, 16
  %v1240 = vrot.slane %v1238, 1
  %v1241 = vsel %vm91, %v1236, %v1240
  %v1242 = vshrl.u32 %v1157, 16
  %v1244 = vor.u32 %v1242, %v1240
  %v1246 = vshll.u32 %v1165, 16
  %v1248 = vrot.slane %v1246, 1
  %v1249 = vsel %vm91, %v1244, %v1248
  %v1250 = vshrl.u32 %v1165, 16
  %v1252 = vor.u32 %v1250, %v1248
  %1253 = vrot.lane.b32.xlu0 %v1225, 16
  %v1254 = vpop.permute.xlu0 %1253
  %1255 = vrot.lane.b32.xlu0 %v1233, 16
  %v1256 = vpop.permute.xlu0 %1255
  %1257 = vrot.lane.b32.xlu0 %v1241, 16
  %v1258 = vpop.permute.xlu0 %1257
  %1259 = vrot.lane.b32.xlu0 %v1249, 16
  %v1260 = vpop.permute.xlu0 %1259
  %1261 = vrot.lane.b32.xlu0 %v1252, 16
  %v1262 = vpop.permute.xlu0 %1261
  %v1265 = vrot.slane %v1169, 1
  %v1266 = vrot.slane %v1141, 1
  %v1267 = vsel %vm146, %v1265, %v1266
  %v1268 = vrot.slane %v1149, 1
  %v1269 = vsel %vm146, %v1266, %v1268
  %v1270 = vrot.slane %v1157, 1
  %v1271 = vsel %vm146, %v1268, %v1270
  %v1272 = vrot.slane %v1165, 1
  %v1273 = vsel %vm146, %v1270, %v1272
  %v1274 = vrot.slane %v1170, 1
  %v1275 = vsel %vm146, %v1272, %v1274
  %1276 = vrot.lane.b32.xlu0 %v1267, 32
  %v1277 = vpop.permute.xlu0 %1276
  %1278 = vrot.lane.b32.xlu0 %v1269, 32
  %v1279 = vpop.permute.xlu0 %1278
  %1280 = vrot.lane.b32.xlu0 %v1271, 32
  %v1281 = vpop.permute.xlu0 %1280
  %1282 = vrot.lane.b32.xlu0 %v1273, 32
  %v1283 = vpop.permute.xlu0 %1282
  %1284 = vrot.lane.b32.xlu0 %v1275, 32
  %v1285 = vpop.permute.xlu0 %1284
  %v1286 = vrot.slane %v1215, 1
  %v1287 = vrot.slane %v1217, 2
  %v1288 = vor.u32 %v1286, %v1287
  %v1289 = vrot.slane %v1226, 1
  %v1290 = vrot.slane %v1222, 2
  %v1291 = vor.u32 %v1289, %v1290
  %v1292 = vsel %vm168, %v1288, %v1291
  %v1293 = vrot.slane %v1234, 1
  %v1294 = vrot.slane %v1230, 2
  %v1295 = vor.u32 %v1293, %v1294
  %v1296 = vsel %vm168, %v1291, %v1295
  %v1297 = vrot.slane %v1242, 1
  %v1298 = vrot.slane %v1238, 2
  %v1299 = vor.u32 %v1297, %v1298
  %v1300 = vsel %vm168, %v1295, %v1299
  %v1301 = vrot.slane %v1250, 1
  %v1302 = vrot.slane %v1246, 2
  %v1303 = vor.u32 %v1301, %v1302
  %v1304 = vsel %vm168, %v1299, %v1303
  %v1306 = vshrl.u32 %v1170, 16
  %v1308 = vrot.slane %v1306, 1
  %v1309 = vshll.u32 %v1170, 16
  %v1311 = vrot.slane %v1309, 2
  %v1312 = vor.u32 %v1308, %v1311
  %v1313 = vsel %vm168, %v1303, %v1312
  %1314 = vrot.lane.b32.xlu0 %v1292, 48
  %v1315 = vpop.permute.xlu0 %1314
  %1316 = vrot.lane.b32.xlu0 %v1296, 48
  %v1317 = vpop.permute.xlu0 %1316
  %1318 = vrot.lane.b32.xlu0 %v1300, 48
  %v1319 = vpop.permute.xlu0 %1318
  %1320 = vrot.lane.b32.xlu0 %v1304, 48
  %v1321 = vpop.permute.xlu0 %1320
  %1322 = vrot.lane.b32.xlu0 %v1313, 48
  %v1323 = vpop.permute.xlu0 %1322
  %v1325 = vsel %vm282, %v1169, %v1254
  %v1327 = vsel %vm282, %v1141, %v1256
  %v1329 = vsel %vm282, %v1149, %v1258
  %v1331 = vsel %vm282, %v1157, %v1260
  %v1333 = vsel %vm282, %v1165, %v1262
  %v1335 = vsel %vm293, %v1325, %v1277
  %v1337 = vsel %vm293, %v1327, %v1279
  %v1339 = vsel %vm293, %v1329, %v1281
  %v1341 = vsel %vm293, %v1331, %v1283
  %v1343 = vsel %vm293, %v1333, %v1285
  %v1345 = vsel %vm304, %v1335, %v1315
  %v1348 = vsel %vm304, %v1337, %v1317
  %v1351 = vsel %vm304, %v1339, %v1319
  %v1354 = vsel %vm304, %v1341, %v1321
  %v1357 = vsel %vm304, %v1343, %v1323
  %v1360 = vshrl.u32 %v1212, 16
  %v1362 = vshll.u32 %v1212, 16
  %v1364 = vrot.slane %v1362, 1
  %v1365 = vor.u32 %v1360, %v1364
  %v1367 = vshll.u32 %v1185, 16
  %v1369 = vrot.slane %v1367, 1
  %v1370 = vsel %vm91, %v1365, %v1369
  %v1371 = vshrl.u32 %v1185, 16
  %v1373 = vor.u32 %v1371, %v1369
  %v1375 = vshll.u32 %v1193, 16
  %v1377 = vrot.slane %v1375, 1
  %v1378 = vsel %vm91, %v1373, %v1377
  %v1379 = vshrl.u32 %v1193, 16
  %v1381 = vor.u32 %v1379, %v1377
  %v1383 = vshll.u32 %v1201, 16
  %v1385 = vrot.slane %v1383, 1
  %v1386 = vsel %vm91, %v1381, %v1385
  %v1387 = vshrl.u32 %v1201, 16
  %v1389 = vor.u32 %v1387, %v1385
  %v1391 = vshll.u32 %v1209, 16
  %v1393 = vrot.slane %v1391, 1
  %v1394 = vsel %vm91, %v1389, %v1393
  %v1395 = vshrl.u32 %v1209, 16
  %v1397 = vor.u32 %v1395, %v1393
  %1398 = vrot.lane.b32.xlu0 %v1370, 16
  %v1399 = vpop.permute.xlu0 %1398
  %1400 = vrot.lane.b32.xlu0 %v1378, 16
  %v1401 = vpop.permute.xlu0 %1400
  %1402 = vrot.lane.b32.xlu0 %v1386, 16
  %v1403 = vpop.permute.xlu0 %1402
  %1404 = vrot.lane.b32.xlu0 %v1394, 16
  %v1405 = vpop.permute.xlu0 %1404
  %1406 = vrot.lane.b32.xlu0 %v1397, 16
  %v1407 = vpop.permute.xlu0 %1406
  %v1410 = vrot.slane %v1212, 1
  %v1411 = vrot.slane %v1185, 1
  %v1412 = vsel %vm146, %v1410, %v1411
  %v1413 = vrot.slane %v1193, 1
  %v1414 = vsel %vm146, %v1411, %v1413
  %v1415 = vrot.slane %v1201, 1
  %v1416 = vsel %vm146, %v1413, %v1415
  %v1417 = vrot.slane %v1209, 1
  %v1418 = vsel %vm146, %v1415, %v1417
  %v1419 = vrot.slane %v1213, 1
  %v1420 = vsel %vm146, %v1417, %v1419
  %1421 = vrot.lane.b32.xlu0 %v1412, 32
  %v1422 = vpop.permute.xlu0 %1421
  %1423 = vrot.lane.b32.xlu0 %v1414, 32
  %v1424 = vpop.permute.xlu0 %1423
  %1425 = vrot.lane.b32.xlu0 %v1416, 32
  %v1426 = vpop.permute.xlu0 %1425
  %1427 = vrot.lane.b32.xlu0 %v1418, 32
  %v1428 = vpop.permute.xlu0 %1427
  %1429 = vrot.lane.b32.xlu0 %v1420, 32
  %v1430 = vpop.permute.xlu0 %1429
  %v1431 = vrot.slane %v1360, 1
  %v1432 = vrot.slane %v1362, 2
  %v1433 = vor.u32 %v1431, %v1432
  %v1434 = vrot.slane %v1371, 1
  %v1435 = vrot.slane %v1367, 2
  %v1436 = vor.u32 %v1434, %v1435
  %v1437 = vsel %vm168, %v1433, %v1436
  %v1438 = vrot.slane %v1379, 1
  %v1439 = vrot.slane %v1375, 2
  %v1440 = vor.u32 %v1438, %v1439
  %v1441 = vsel %vm168, %v1436, %v1440
  %v1442 = vrot.slane %v1387, 1
  %v1443 = vrot.slane %v1383, 2
  %v1444 = vor.u32 %v1442, %v1443
  %v1445 = vsel %vm168, %v1440, %v1444
  %v1446 = vrot.slane %v1395, 1
  %v1447 = vrot.slane %v1391, 2
  %v1448 = vor.u32 %v1446, %v1447
  %v1449 = vsel %vm168, %v1444, %v1448
  %v1451 = vshrl.u32 %v1213, 16
  %v1453 = vrot.slane %v1451, 1
  %v1454 = vshll.u32 %v1213, 16
  %v1456 = vrot.slane %v1454, 2
  %v1457 = vor.u32 %v1453, %v1456
  %v1458 = vsel %vm168, %v1448, %v1457
  %1459 = vrot.lane.b32.xlu0 %v1437, 48
  %v1460 = vpop.permute.xlu0 %1459
  %1461 = vrot.lane.b32.xlu0 %v1441, 48
  %v1462 = vpop.permute.xlu0 %1461
  %1463 = vrot.lane.b32.xlu0 %v1445, 48
  %v1464 = vpop.permute.xlu0 %1463
  %1465 = vrot.lane.b32.xlu0 %v1449, 48
  %v1466 = vpop.permute.xlu0 %1465
  %1467 = vrot.lane.b32.xlu0 %v1458, 48
  %v1468 = vpop.permute.xlu0 %1467
  %v1470 = vsel %vm282, %v1212, %v1399
  %v1472 = vsel %vm282, %v1185, %v1401
  %v1474 = vsel %vm282, %v1193, %v1403
  %v1476 = vsel %vm282, %v1201, %v1405
  %v1478 = vsel %vm282, %v1209, %v1407
  %v1480 = vsel %vm293, %v1470, %v1422
  %v1482 = vsel %vm293, %v1472, %v1424
  %v1484 = vsel %vm293, %v1474, %v1426
  %v1486 = vsel %vm293, %v1476, %v1428
  %v1488 = vsel %vm293, %v1478, %v1430
  %v1490 = vsel %vm304, %v1480, %v1460
  %v1492 = vsel %vm304, %v1482, %v1462
  %v1494 = vsel %vm304, %v1484, %v1464
  %v1496 = vsel %vm304, %v1486, %v1466
  %v1498 = vsel %vm304, %v1488, %v1468
  %v1499 = vshll.u32 %v1490, 16
  %v1501 = vrot.slane %v1499, 1
  %v1502 = vshrl.u32 %v1490, 16
  %v1504 = vor.u32 %v1502, %v1501
  %v1505 = vshll.u32 %v1492, 16
  %v1507 = vrot.slane %v1505, 1
  %v1508 = vsel %vm91, %v1504, %v1507
  %v1509 = vshrl.u32 %v1492, 16
  %v1511 = vor.u32 %v1509, %v1507
  %v1512 = vshll.u32 %v1494, 16
  %v1514 = vrot.slane %v1512, 1
  %v1515 = vsel %vm91, %v1511, %v1514
  %v1516 = vshrl.u32 %v1494, 16
  %v1518 = vor.u32 %v1516, %v1514
  %v1519 = vshll.u32 %v1496, 16
  %v1521 = vrot.slane %v1519, 1
  %v1522 = vsel %vm91, %v1518, %v1521
  %v1523 = vshrl.u32 %v1496, 16
  %v1525 = vor.u32 %v1523, %v1521
  %v1526 = vshll.u32 %v1498, 16
  %v1528 = vrot.slane %v1526, 1
  %v1529 = vsel %vm91, %v1525, %v1528
  %v1530 = vshrl.u32 %v1498, 16
  %v1532 = vor.u32 %v1530, %v1528
  %vm1538 = vcmask 1047552
  %vm1539 = vmand %vm1538, %vm91
  %v1540 = vsel %vm1539, %v1357, %v1501
  %v1541 = vlaneseq
  %v1542 = vshrl.u32 %v1541, 7
  %v1543 = vadd.s32 %v1542, 8
  %v1544 = vadd.s32 %v1542, 16
  %v1545 = vadd.s32 %v1542, 24
  %v1546 = vadd.s32 %v1542, 32
  %v1547 = vadd.s32 %v1542, 40
  %v1548 = vadd.s32 %v1542, 48
  %v1549 = vadd.s32 %v1542, 56
  %v1550 = vadd.s32 %v1542, 64
  %v1551 = vadd.s32 %v1542, 72
  %v1552 = vlaneseq
  %v1553 = vand.u32 %v1552, 127
  %v1554 = vadd.s32 %v1553, 128
  %vm1555 = vcmp.ge.s32.totalorder %v1542, 0
  %vm1556 = vcmp.ge.s32.totalorder %v1543, 0
  %vm1557 = vcmp.ge.s32.totalorder %v1544, 0
  %vm1558 = vcmp.ge.s32.totalorder %v1545, 0
  %vm1559 = vcmp.ge.s32.totalorder %v1546, 0
  %vm1560 = vcmp.ge.s32.totalorder %v1547, 0
  %vm1561 = vcmp.ge.s32.totalorder %v1548, 0
  %vm1562 = vcmp.ge.s32.totalorder %v1549, 0
  %vm1563 = vcmp.ge.s32.totalorder %v1550, 0
  %vm1564 = vcmp.ge.s32.totalorder %v1551, 0
  %vm1565 = vcmp.lt.s32.totalorder %v1542, 40
  %vm1566 = vcmp.lt.s32.totalorder %v1543, 40
  %vm1567 = vcmp.lt.s32.totalorder %v1544, 40
  %vm1568 = vcmp.lt.s32.totalorder %v1545, 40
  %vm1569 = vcmp.lt.s32.totalorder %v1546, 40
  %vm1570 = vcmp.lt.s32.totalorder %v1547, 40
  %vm1571 = vcmp.lt.s32.totalorder %v1548, 40
  %vm1572 = vcmp.lt.s32.totalorder %v1549, 40
  %vm1573 = vcmp.lt.s32.totalorder %v1550, 40
  %vm1574 = vcmp.lt.s32.totalorder %v1551, 40
  %vm1575 = vmand %vm1555, %vm1565
  %vm1576 = vmand %vm1556, %vm1566
  %vm1577 = vmand %vm1557, %vm1567
  %vm1578 = vmand %vm1558, %vm1568
  %vm1579 = vmand %vm1559, %vm1569
  %vm1580 = vmand %vm1560, %vm1570
  %vm1581 = vmand %vm1561, %vm1571
  %vm1582 = vmand %vm1562, %vm1572
  %vm1583 = vmand %vm1563, %vm1573
  %vm1584 = vmand %vm1564, %vm1574
  %v1585 = vmul.u32 %v1542, 2
  %v1586 = vmul.u32 %v1543, 2
  %v1587 = vmul.u32 %v1544, 2
  %v1588 = vmul.u32 %v1545, 2
  %v1589 = vmul.u32 %v1546, 2
  %v1590 = vmul.u32 %v1547, 2
  %v1591 = vmul.u32 %v1548, 2
  %v1592 = vmul.u32 %v1549, 2
  %v1593 = vmul.u32 %v1550, 2
  %v1594 = vmul.u32 %v1551, 2
  %vm1595 = vcmp.eq.s32.totalorder %v1553, %v1585
  %vm1596 = vcmp.eq.s32.totalorder %v1554, %v1585
  %vm1597 = vcmp.eq.s32.totalorder %v1553, %v1586
  %vm1598 = vcmp.eq.s32.totalorder %v1554, %v1586
  %vm1599 = vcmp.eq.s32.totalorder %v1553, %v1587
  %vm1600 = vcmp.eq.s32.totalorder %v1554, %v1587
  %vm1601 = vcmp.eq.s32.totalorder %v1553, %v1588
  %vm1602 = vcmp.eq.s32.totalorder %v1554, %v1588
  %vm1603 = vcmp.eq.s32.totalorder %v1553, %v1589
  %vm1604 = vcmp.eq.s32.totalorder %v1554, %v1589
  %vm1605 = vcmp.eq.s32.totalorder %v1553, %v1590
  %vm1606 = vcmp.eq.s32.totalorder %v1554, %v1590
  %vm1607 = vcmp.eq.s32.totalorder %v1553, %v1591
  %vm1608 = vcmp.eq.s32.totalorder %v1554, %v1591
  %vm1609 = vcmp.eq.s32.totalorder %v1553, %v1592
  %vm1610 = vcmp.eq.s32.totalorder %v1554, %v1592
  %vm1611 = vcmp.eq.s32.totalorder %v1553, %v1593
  %vm1612 = vcmp.eq.s32.totalorder %v1554, %v1593
  %vm1613 = vcmp.eq.s32.totalorder %v1553, %v1594
  %vm1614 = vcmp.eq.s32.totalorder %v1554, %v1594
  %vm1615 = vmand %vm1575, %vm1595
  %vm1616 = vmand %vm1575, %vm1596
  %vm1617 = vmand %vm1576, %vm1597
  %vm1618 = vmand %vm1576, %vm1598
  %vm1619 = vmand %vm1577, %vm1599
  %vm1620 = vmand %vm1577, %vm1600
  %vm1621 = vmand %vm1578, %vm1601
  %vm1622 = vmand %vm1578, %vm1602
  %vm1623 = vmand %vm1579, %vm1603
  %vm1624 = vmand %vm1579, %vm1604
  %vm1625 = vmand %vm1580, %vm1605
  %vm1626 = vmand %vm1580, %vm1606
  %vm1627 = vmand %vm1581, %vm1607
  %vm1628 = vmand %vm1581, %vm1608
  %vm1629 = vmand %vm1582, %vm1609
  %vm1630 = vmand %vm1582, %vm1610
  %vm1631 = vmand %vm1583, %vm1611
  %vm1632 = vmand %vm1583, %vm1612
  %vm1633 = vmand %vm1584, %vm1613
  %vm1634 = vmand %vm1584, %vm1614
  %vm1635 = vcmp.ge.s32.totalorder %v1542, 40
  %vm1636 = vcmp.ge.s32.totalorder %v1543, 40
  %vm1637 = vcmp.ge.s32.totalorder %v1544, 40
  %vm1638 = vcmp.ge.s32.totalorder %v1545, 40
  %vm1639 = vcmp.ge.s32.totalorder %v1546, 40
  %vm1640 = vcmp.ge.s32.totalorder %v1547, 40
  %vm1641 = vcmp.ge.s32.totalorder %v1548, 40
  %vm1642 = vcmp.ge.s32.totalorder %v1549, 40
  %vm1643 = vcmp.ge.s32.totalorder %v1550, 40
  %vm1644 = vcmp.ge.s32.totalorder %v1551, 40
  %vm1645 = vcmp.lt.s32.totalorder %v1542, 80
  %vm1646 = vcmp.lt.s32.totalorder %v1543, 80
  %vm1647 = vcmp.lt.s32.totalorder %v1544, 80
  %vm1648 = vcmp.lt.s32.totalorder %v1545, 80
  %vm1649 = vcmp.lt.s32.totalorder %v1546, 80
  %vm1650 = vcmp.lt.s32.totalorder %v1547, 80
  %vm1651 = vcmp.lt.s32.totalorder %v1548, 80
  %vm1652 = vcmp.lt.s32.totalorder %v1549, 80
  %vm1653 = vcmp.lt.s32.totalorder %v1550, 80
  %vm1654 = vcmp.lt.s32.totalorder %v1551, 80
  %vm1655 = vmand %vm1635, %vm1645
  %vm1656 = vmand %vm1636, %vm1646
  %vm1657 = vmand %vm1637, %vm1647
  %vm1658 = vmand %vm1638, %vm1648
  %vm1659 = vmand %vm1639, %vm1649
  %vm1660 = vmand %vm1640, %vm1650
  %vm1661 = vmand %vm1641, %vm1651
  %vm1662 = vmand %vm1642, %vm1652
  %vm1663 = vmand %vm1643, %vm1653
  %vm1664 = vmand %vm1644, %vm1654
  %v1665 = vsub.s32 %v1542, 40
  %v1666 = vsub.s32 %v1543, 40
  %v1667 = vsub.s32 %v1544, 40
  %v1668 = vsub.s32 %v1545, 40
  %v1669 = vsub.s32 %v1546, 40
  %v1670 = vsub.s32 %v1548, 40
  %v1671 = vsub.s32 %v1549, 40
  %v1672 = vsub.s32 %v1550, 40
  %v1673 = vsub.s32 %v1551, 40
  %v1674 = vmul.u32 %v1665, 2
  %v1675 = vmul.u32 %v1666, 2
  %v1676 = vmul.u32 %v1667, 2
  %v1677 = vmul.u32 %v1668, 2
  %v1678 = vmul.u32 %v1669, 2
  %v1679 = vmul.u32 %v1670, 2
  %v1680 = vmul.u32 %v1671, 2
  %v1681 = vmul.u32 %v1672, 2
  %v1682 = vmul.u32 %v1673, 2
  %v1683 = vadd.s32 %v1674, 79
  %v1684 = vadd.s32 %v1675, 79
  %v1685 = vadd.s32 %v1676, 79
  %v1686 = vadd.s32 %v1677, 79
  %v1687 = vadd.s32 %v1678, 79
  %v1688 = vadd.s32 %v1585, 79
  %v1689 = vadd.s32 %v1679, 79
  %v1690 = vadd.s32 %v1680, 79
  %v1691 = vadd.s32 %v1681, 79
  %v1692 = vadd.s32 %v1682, 79
  %vm1693 = vcmp.eq.s32.totalorder %v1553, %v1683
  %vm1694 = vcmp.eq.s32.totalorder %v1554, %v1683
  %vm1695 = vcmp.eq.s32.totalorder %v1553, %v1684
  %vm1696 = vcmp.eq.s32.totalorder %v1554, %v1684
  %vm1697 = vcmp.eq.s32.totalorder %v1553, %v1685
  %vm1698 = vcmp.eq.s32.totalorder %v1554, %v1685
  %vm1699 = vcmp.eq.s32.totalorder %v1553, %v1686
  %vm1700 = vcmp.eq.s32.totalorder %v1554, %v1686
  %vm1701 = vcmp.eq.s32.totalorder %v1553, %v1687
  %vm1702 = vcmp.eq.s32.totalorder %v1554, %v1687
  %vm1703 = vcmp.eq.s32.totalorder %v1553, %v1688
  %vm1704 = vcmp.eq.s32.totalorder %v1554, %v1688
  %vm1705 = vcmp.eq.s32.totalorder %v1553, %v1689
  %vm1706 = vcmp.eq.s32.totalorder %v1554, %v1689
  %vm1707 = vcmp.eq.s32.totalorder %v1553, %v1690
  %vm1708 = vcmp.eq.s32.totalorder %v1554, %v1690
  %vm1709 = vcmp.eq.s32.totalorder %v1553, %v1691
  %vm1710 = vcmp.eq.s32.totalorder %v1554, %v1691
  %vm1711 = vcmp.eq.s32.totalorder %v1553, %v1692
  %vm1712 = vcmp.eq.s32.totalorder %v1554, %v1692
  %vm1713 = vmand %vm1655, %vm1693
  %vm1714 = vmand %vm1655, %vm1694
  %vm1715 = vmand %vm1656, %vm1695
  %vm1716 = vmand %vm1656, %vm1696
  %vm1717 = vmand %vm1657, %vm1697
  %vm1718 = vmand %vm1657, %vm1698
  %vm1719 = vmand %vm1658, %vm1699
  %vm1720 = vmand %vm1658, %vm1700
  %vm1721 = vmand %vm1659, %vm1701
  %vm1722 = vmand %vm1659, %vm1702
  %vm1723 = vmand %vm1660, %vm1703
  %vm1724 = vmand %vm1660, %vm1704
  %vm1725 = vmand %vm1661, %vm1705
  %vm1726 = vmand %vm1661, %vm1706
  %vm1727 = vmand %vm1662, %vm1707
  %vm1728 = vmand %vm1662, %vm1708
  %vm1729 = vmand %vm1663, %vm1709
  %vm1730 = vmand %vm1663, %vm1710
  %vm1731 = vmand %vm1664, %vm1711
  %vm1732 = vmand %vm1664, %vm1712
  %vm1733 = vmor %vm1615, %vm1713
  %vm1734 = vmor %vm1616, %vm1714
  %vm1735 = vmor %vm1617, %vm1715
  %vm1736 = vmor %vm1618, %vm1716
  %vm1737 = vmor %vm1619, %vm1717
  %vm1738 = vmor %vm1620, %vm1718
  %vm1739 = vmor %vm1621, %vm1719
  %vm1740 = vmor %vm1622, %vm1720
  %vm1741 = vmor %vm1623, %vm1721
  %vm1742 = vmor %vm1624, %vm1722
  %vm1743 = vmor %vm1625, %vm1723
  %vm1744 = vmor %vm1626, %vm1724
  %vm1745 = vmor %vm1627, %vm1725
  %vm1746 = vmor %vm1628, %vm1726
  %vm1747 = vmor %vm1629, %vm1727
  %vm1748 = vmor %vm1630, %vm1728
  %vm1749 = vmor %vm1631, %vm1729
  %vm1750 = vmor %vm1632, %vm1730
  %vm1751 = vmor %vm1633, %vm1731
  %vm1752 = vmor %vm1634, %vm1732
  %v1753 = vsel %vm1733, 1.0, 0.0
  %v1754 = vsel %vm1734, 1.0, 0.0
  %v1755 = vsel %vm1735, 1.0, 0.0
  %v1756 = vsel %vm1736, 1.0, 0.0
  %v1757 = vsel %vm1737, 1.0, 0.0
  %v1758 = vsel %vm1738, 1.0, 0.0
  %v1759 = vsel %vm1739, 1.0, 0.0
  %v1760 = vsel %vm1740, 1.0, 0.0
  %v1761 = vsel %vm1741, 1.0, 0.0
  %v1762 = vsel %vm1742, 1.0, 0.0
  %v1763 = vsel %vm1743, 1.0, 0.0
  %v1764 = vsel %vm1744, 1.0, 0.0
  %v1765 = vsel %vm1745, 1.0, 0.0
  %v1766 = vsel %vm1746, 1.0, 0.0
  %v1767 = vsel %vm1747, 1.0, 0.0
  %v1768 = vsel %vm1748, 1.0, 0.0
  %v1769 = vsel %vm1749, 1.0, 0.0
  %v1770 = vsel %vm1750, 1.0, 0.0
  %v1771 = vsel %vm1751, 1.0, 0.0
  %v1772 = vsel %vm1752, 1.0, 0.0
  %v1773 = vpack.c.bf16 %v1755, %v1753
  %v1774 = vpack.c.bf16 %v1756, %v1754
  %v1775 = vpack.c.bf16 %v1759, %v1757
  %v1776 = vpack.c.bf16 %v1760, %v1758
  %v1777 = vpack.c.bf16 %v1763, %v1761
  %v1778 = vpack.c.bf16 %v1764, %v1762
  %v1779 = vpack.c.bf16 %v1767, %v1765
  %v1780 = vpack.c.bf16 %v1768, %v1766
  %v1781 = vpack.c.bf16 %v1771, %v1769
  %v1782 = vpack.c.bf16 %v1772, %v1770
  %vm1783 = vcmask 244736
  %v1785 = vsel %vm1783, %v1774, 0
  %v1788 = vsel %vm1783, %v1776, 0
  %v1791 = vsel %vm1783, %v1778, 0
  %v1794 = vsel %vm1783, %v1780, 0
  %v1797 = vsel %vm1783, %v1782, 0
  %vm1799 = vcmask 1046528
  %v1801 = vsel %vm1799, %v1532, 0
  %1803 = vmatprep.subr.bf16.mxu0 0
  %1804 = vmatpush1.bf16.msra.mxu0 %v1345
  %1805 = vmatprep.subr.bf16.mxu0 0
  %1806 = vmatpush1.bf16.msra.mxu0 %v1348
  %1807 = vmatprep.subr.bf16.mxu0 0
  %1808 = vmatpush1.bf16.msra.mxu0 %v1351
  %1809 = vmatprep.subr.bf16.mxu0 0
  %1810 = vmatpush1.bf16.msra.mxu0 %v1354
  %1811 = vmatprep.subr.bf16.mxu0 0
  %1812 = vmatpush1.bf16.msra.mxu0 %v1540
  %1813 = vmatprep.subr.bf16.mxu0 0
  %1814 = vmatpush1.bf16.msra.mxu0 %v1508
  %1815 = vmatprep.subr.bf16.mxu0 0
  %1816 = vmatpush1.bf16.msra.mxu0 %v1515
  %1817 = vmatprep.subr.bf16.mxu0 0
  %1818 = vmatpush1.bf16.msra.mxu0 %v1522
  %1819 = vmatprep.subr.bf16.mxu0 0
  %1820 = vmatpush1.bf16.msra.mxu0 %v1529
  %1821 = vmatprep.subr.bf16.mxu0 0
  %1822 = vmatpush1.bf16.msra.mxu0 %v1801
  %1823 = vmatprep.subr.bf16.mxu0 0
  %1824 = vmatpush1.bf16.msra.mxu0 0
  %1825 = vmatprep.subr.bf16.mxu0 0
  %1826 = vmatpush1.bf16.msra.mxu0 0
  %1827 = vmatprep.subr.bf16.mxu0 0
  %1828 = vmatpush1.bf16.msra.mxu0 0
  %1829 = vmatprep.subr.bf16.mxu0 0
  %1830 = vmatpush1.bf16.msra.mxu0 0
  %1831 = vmatprep.subr.bf16.mxu0 0
  %1832 = vmatpush1.bf16.msra.mxu0 0
  %1833 = vmatprep.subr.bf16.mxu0 0
  %1834 = vmatpush1.bf16.msra.mxu0 0
  %1835 = vmatprep.mubr.bf16.mxu0 %v1785
  %1836 = vmatmul.mubr.bf16.gmra.mrb[0].mxu0 %v1773
  %v1837 = vpop.f32.mrb[0].mxu0
  %v1838 = vadd.f32 0.0, %v1837
  %v1839 = vpop.f32.mrb[0].mxu0
  %v1840 = vpop.f32.mrb[0].mxu0
  %v1841 = vadd.f32 0.0, %v1840
  %v1842 = vpop.f32.mrb[0].mxu0
  %1843 = vmatprep.mubr.bf16.mxu0 %v1788
  %1844 = vmatmul.mubr.bf16.gmra.mrb[0].mxu0 %v1775
  %v1845 = vpop.f32.mrb[0].mxu0
  %v1846 = vadd.f32 0.0, %v1845
  %v1847 = vpop.f32.mrb[0].mxu0
  %v1848 = vpop.f32.mrb[0].mxu0
  %v1849 = vadd.f32 0.0, %v1848
  %v1850 = vpop.f32.mrb[0].mxu0
  %1851 = vmatprep.mubr.bf16.mxu0 %v1791
  %1852 = vmatmul.mubr.bf16.gmra.mrb[0].mxu0 %v1777
  %v1853 = vpop.f32.mrb[0].mxu0
  %v1854 = vadd.f32 0.0, %v1853
  %v1855 = vpop.f32.mrb[0].mxu0
  %v1856 = vpop.f32.mrb[0].mxu0
  %v1857 = vadd.f32 0.0, %v1856
  %v1858 = vpop.f32.mrb[0].mxu0
  %1859 = vmatprep.mubr.bf16.mxu0 %v1794
  %1860 = vmatmul.mubr.bf16.gmra.mrb[0].mxu0 %v1779
  %v1861 = vpop.f32.mrb[0].mxu0
  %v1862 = vadd.f32 0.0, %v1861
  %v1863 = vpop.f32.mrb[0].mxu0
  %v1864 = vpop.f32.mrb[0].mxu0
  %v1865 = vadd.f32 0.0, %v1864
  %v1866 = vpop.f32.mrb[0].mxu0
  %1867 = vmatprep.mubr.bf16.mxu0 %v1797
  %1868 = vmatmul.mubr.bf16.gmra.mrb[0].mxu0 %v1781
  %v1869 = vpop.f32.mrb[0].mxu0
  %v1870 = vadd.f32 0.0, %v1869
  %v1871 = vpop.f32.mrb[0].mxu0
  %v1872 = vpop.f32.mrb[0].mxu0
  %v1873 = vadd.f32 0.0, %v1872
  %v1874 = vpop.f32.mrb[0].mxu0
  %1875 = vdwg.mxu0
  %v1876 = vpack.c.bf16 %v1841, %v1838
  %v1877 = vpack.c.bf16 %v1849, %v1846
  %v1878 = vpack.c.bf16 %v1857, %v1854
  %v1879 = vpack.c.bf16 %v1865, %v1862
  %v1880 = vpack.c.bf16 %v1873, %v1870
  %v1881 = vlaneseq
  %v1882 = vshrl.u32 %v1881, 7
  %v1883 = vsub.s32 1, %v1882
  %v1884 = vrot.slane %v21, %v1883
  %v1893 = vunpack.c.l.b16 %v1118
  %v1894 = vunpack.c.l.b16 %v1119
  %v1895 = vunpack.c.l.b16 %v1120
  %v1896 = vunpack.c.l.b16 %v1121
  %v1897 = vunpack.c.l.b16 %v1122
  %v1898 = vunpack.c.l.b16 %v1123
  %v1899 = vunpack.c.l.b16 %v1124
  %v1900 = vunpack.c.l.b16 %v1125
  %v1901 = vpack.c.b16 %v1894, %v1893
  %v1902 = vpack.c.b16 %v1896, %v1895
  %v1903 = vpack.c.b16 %v1898, %v1897
  %v1904 = vpack.c.b16 %v1900, %v1899
  %v1910 = vsel %vm315, %v1876, 0
  %v1913 = vsel %vm315, %v1877, 0
  %v1916 = vsel %vm315, %v1878, 0
  %v1919 = vsel %vm315, %v1879, 0
  %v1922 = vsel %vm315, %v1880, 0
  %1924 = vmatprep.subr.bf16.mxu0 0
  %1925 = vmatpush1.bf16.msra.mxu0 %v1901
  %1926 = vmatprep.subr.bf16.mxu0 0
  %1927 = vmatpush1.bf16.msra.mxu0 %v1902
  %1928 = vmatprep.subr.bf16.mxu0 0
  %1929 = vmatpush1.bf16.msra.mxu0 %v1903
  %1930 = vmatprep.subr.bf16.mxu0 0
  %1931 = vmatpush1.bf16.msra.mxu0 %v1904
  %1932 = vmatprep.subr.bf16.mxu0 0
  %1933 = vmatpush1.bf16.msra.mxu0 0
  %1934 = vmatprep.subr.bf16.mxu0 0
  %1935 = vmatpush1.bf16.msra.mxu0 0
  %1936 = vmatprep.subr.bf16.mxu0 0
  %1937 = vmatpush1.bf16.msra.mxu0 0
  %1938 = vmatprep.subr.bf16.mxu0 0
  %1939 = vmatpush1.bf16.msra.mxu0 0
  %1940 = vmatprep.subr.bf16.mxu0 0
  %1941 = vmatpush1.bf16.msra.mxu0 0
  %1942 = vmatprep.subr.bf16.mxu0 0
  %1943 = vmatpush1.bf16.msra.mxu0 0
  %1944 = vmatprep.subr.bf16.mxu0 0
  %1945 = vmatpush1.bf16.msra.mxu0 0
  %1946 = vmatprep.subr.bf16.mxu0 0
  %1947 = vmatpush1.bf16.msra.mxu0 0
  %1948 = vmatprep.subr.bf16.mxu0 0
  %1949 = vmatpush1.bf16.msra.mxu0 0
  %1950 = vmatprep.subr.bf16.mxu0 0
  %1951 = vmatpush1.bf16.msra.mxu0 0
  %1952 = vmatprep.subr.bf16.mxu0 0
  %1953 = vmatpush1.bf16.msra.mxu0 0
  %1954 = vmatprep.subr.bf16.mxu0 0
  %1955 = vmatpush1.bf16.msra.mxu0 0
  %1956 = vmatprep.mubr.bf16.mxu0 0
  %1957 = vmatmul.mubr.bf16.gmra.mrb[0].mxu0 %v1910
  %v1958 = vpop.f32.mrb[0].mxu0
  %v1959 = vadd.f32 %v1884, %v1958
  %v1960 = vpop.f32.mrb[0].mxu0
  %v1961 = vpop.f32.mrb[0].mxu0
  %v1962 = vadd.f32 %v1884, %v1961
  %v1963 = vpop.f32.mrb[0].mxu0
  %1964 = vmatprep.mubr.bf16.mxu0 0
  %1965 = vmatmul.mubr.bf16.gmra.mrb[0].mxu0 %v1913
  %v1966 = vpop.f32.mrb[0].mxu0
  %v1967 = vadd.f32 %v1884, %v1966
  %v1968 = vpop.f32.mrb[0].mxu0
  %v1969 = vpop.f32.mrb[0].mxu0
  %v1970 = vadd.f32 %v1884, %v1969
  %v1971 = vpop.f32.mrb[0].mxu0
  %1972 = vmatprep.mubr.bf16.mxu0 0
  %1973 = vmatmul.mubr.bf16.gmra.mrb[0].mxu0 %v1916
  %v1974 = vpop.f32.mrb[0].mxu0
  %v1975 = vadd.f32 %v1884, %v1974
  %v1976 = vpop.f32.mrb[0].mxu0
  %v1977 = vpop.f32.mrb[0].mxu0
  %v1978 = vadd.f32 %v1884, %v1977
  %v1979 = vpop.f32.mrb[0].mxu0
  %1980 = vmatprep.mubr.bf16.mxu0 0
  %1981 = vmatmul.mubr.bf16.gmra.mrb[0].mxu0 %v1919
  %v1982 = vpop.f32.mrb[0].mxu0
  %v1983 = vadd.f32 %v1884, %v1982
  %v1984 = vpop.f32.mrb[0].mxu0
  %v1985 = vpop.f32.mrb[0].mxu0
  %v1986 = vadd.f32 %v1884, %v1985
  %v1987 = vpop.f32.mrb[0].mxu0
  %1988 = vmatprep.mubr.bf16.mxu0 0
  %1989 = vmatmul.mubr.bf16.gmra.mrb[0].mxu0 %v1922
  %v1990 = vpop.f32.mrb[0].mxu0
  %v1991 = vadd.f32 %v1884, %v1990
  %v1992 = vpop.f32.mrb[0].mxu0
  %v1993 = vpop.f32.mrb[0].mxu0
  %v1994 = vadd.f32 %v1884, %v1993
  %v1995 = vpop.f32.mrb[0].mxu0
  %1996 = vdwg.mxu0
  %v1997 = vadd.f32 %v1959, %v1962
  %v1998 = vadd.f32 %v1997, %v1967
  %v1999 = vadd.f32 %v1998, %v1970
  %v2000 = vadd.f32 %v1999, %v1975
  %v2001 = vadd.f32 %v2000, %v1978
  %v2002 = vadd.f32 %v2001, %v1983
  %v2003 = vadd.f32 %v2002, %v1986
  %v2004 = vadd.f32 %v2003, %v1991
  %v2005 = vadd.f32 %v2004, %v1994
  %v2006 = vrot.slane %v2005, 4
  %v2007 = vadd.f32 %v2005, %v2006
  %v2008 = vrot.slane %v2007, 2
  %v2009 = vadd.f32 %v2007, %v2008
  %v2010 = vrot.slane %v2009, 1
  %v2011 = vadd.f32 %v2009, %v2010
  %v2012 = vrcp.pop 80.0
  %v2013 = vmul.f32 %v2011, %v2012
  %v2014 = vsub.f32 %v1959, %v2013
  %v2015 = vsub.f32 %v1962, %v2013
  %v2016 = vsub.f32 %v1967, %v2013
  %v2017 = vsub.f32 %v1970, %v2013
  %v2018 = vsub.f32 %v1975, %v2013
  %v2019 = vsub.f32 %v1978, %v2013
  %v2020 = vsub.f32 %v1983, %v2013
  %v2021 = vsub.f32 %v1986, %v2013
  %v2022 = vsub.f32 %v1991, %v2013
  %v2023 = vsub.f32 %v1994, %v2013
  %v2024 = vmul.f32 %v2014, %v2014
  %v2025 = vmul.f32 %v2015, %v2015
  %v2026 = vmul.f32 %v2016, %v2016
  %v2027 = vmul.f32 %v2017, %v2017
  %v2028 = vmul.f32 %v2018, %v2018
  %v2029 = vmul.f32 %v2019, %v2019
  %v2030 = vmul.f32 %v2020, %v2020
  %v2031 = vmul.f32 %v2021, %v2021
  %v2032 = vmul.f32 %v2022, %v2022
  %v2033 = vmul.f32 %v2023, %v2023
  %v2034 = vadd.f32 %v2024, %v2025
  %v2035 = vadd.f32 %v2034, %v2026
  %v2036 = vadd.f32 %v2035, %v2027
  %v2037 = vadd.f32 %v2036, %v2028
  %v2038 = vadd.f32 %v2037, %v2029
  %v2039 = vadd.f32 %v2038, %v2030
  %v2040 = vadd.f32 %v2039, %v2031
  %v2041 = vadd.f32 %v2040, %v2032
  %v2042 = vadd.f32 %v2041, %v2033
  %v2043 = vrot.slane %v2042, 4
  %v2044 = vadd.f32 %v2042, %v2043
  %v2045 = vrot.slane %v2044, 2
  %v2046 = vadd.f32 %v2044, %v2045
  %v2047 = vrot.slane %v2046, 1
  %v2048 = vadd.f32 %v2046, %v2047
  %v2049 = vmul.f32 %v2048, %v2012
  %v2050 = vadd.f32 %v2049, 1e-05
  %v2051 = vrsqrt.pop %v2050
  %v2052 = vmul.f32 %v2014, %v2051
  %v2053 = vmul.f32 %v2015, %v2051
  %v2054 = vmul.f32 %v2016, %v2051
  %v2055 = vmul.f32 %v2017, %v2051
  %v2056 = vmul.f32 %v2018, %v2051
  %v2057 = vmul.f32 %v2019, %v2051
  %v2058 = vmul.f32 %v2020, %v2051
  %v2059 = vmul.f32 %v2021, %v2051
  %v2060 = vmul.f32 %v2022, %v2051
  %v2061 = vmul.f32 %v2023, %v2051
  %v2062 = vlaneseq
  %v2063 = vshrl.u32 %v2062, 7
  %v2064 = vsub.s32 1, %v2063
  %v2065 = vrot.slane %v23, %v2064
  %v2066 = vmul.f32 %v2052, %v2065
  %v2067 = vmul.f32 %v2053, %v2065
  %v2068 = vmul.f32 %v2054, %v2065
  %v2069 = vmul.f32 %v2055, %v2065
  %v2070 = vmul.f32 %v2056, %v2065
  %v2071 = vmul.f32 %v2057, %v2065
  %v2072 = vmul.f32 %v2058, %v2065
  %v2073 = vmul.f32 %v2059, %v2065
  %v2074 = vmul.f32 %v2060, %v2065
  %v2075 = vmul.f32 %v2061, %v2065
  %v2076 = vlaneseq
  %v2077 = vshrl.u32 %v2076, 7
  %v2078 = vsub.s32 1, %v2077
  %v2079 = vrot.slane %v25, %v2078
  %v2080 = vadd.f32 %v2066, %v2079
  %v2081 = vadd.f32 %v2067, %v2079
  %v2082 = vadd.f32 %v2068, %v2079
  %v2083 = vadd.f32 %v2069, %v2079
  %v2084 = vadd.f32 %v2070, %v2079
  %v2085 = vadd.f32 %v2071, %v2079
  %v2086 = vadd.f32 %v2072, %v2079
  %v2087 = vadd.f32 %v2073, %v2079
  %v2088 = vadd.f32 %v2074, %v2079
  %v2089 = vadd.f32 %v2075, %v2079
  %vm2090 = vcmp.gt.f32.partialorder %v2080, 0.0
  %vm2091 = vcmp.gt.f32.partialorder %v2081, 0.0
  %vm2092 = vcmp.gt.f32.partialorder %v2082, 0.0
  %vm2093 = vcmp.gt.f32.partialorder %v2083, 0.0
  %vm2094 = vcmp.gt.f32.partialorder %v2084, 0.0
  %vm2095 = vcmp.gt.f32.partialorder %v2085, 0.0
  %vm2096 = vcmp.gt.f32.partialorder %v2086, 0.0
  %vm2097 = vcmp.gt.f32.partialorder %v2087, 0.0
  %vm2098 = vcmp.gt.f32.partialorder %v2088, 0.0
  %vm2099 = vcmp.gt.f32.partialorder %v2089, 0.0
  %v2100 = vmul.f32 %v2080, 0.01
  %v2101 = vmul.f32 %v2081, 0.01
  %v2102 = vmul.f32 %v2082, 0.01
  %v2103 = vmul.f32 %v2083, 0.01
  %v2104 = vmul.f32 %v2084, 0.01
  %v2105 = vmul.f32 %v2085, 0.01
  %v2106 = vmul.f32 %v2086, 0.01
  %v2107 = vmul.f32 %v2087, 0.01
  %v2108 = vmul.f32 %v2088, 0.01
  %v2109 = vmul.f32 %v2089, 0.01
  %v2110 = vsel %vm2090, %v2080, %v2100
  %v2111 = vsel %vm2091, %v2081, %v2101
  %v2112 = vsel %vm2092, %v2082, %v2102
  %v2113 = vsel %vm2093, %v2083, %v2103
  %v2114 = vsel %vm2094, %v2084, %v2104
  %v2115 = vsel %vm2095, %v2085, %v2105
  %v2116 = vsel %vm2096, %v2086, %v2106
  %v2117 = vsel %vm2097, %v2087, %v2107
  %v2118 = vsel %vm2098, %v2088, %v2108
  %v2119 = vsel %vm2099, %v2089, %v2109
  %v2120 = vpack.c.bf16 %v2111, %v2110
  %v2121 = vpack.c.bf16 %v2113, %v2112
  %v2122 = vpack.c.bf16 %v2115, %v2114
  %v2123 = vpack.c.bf16 %v2117, %v2116
  %v2124 = vpack.c.bf16 %v2119, %v2118
  %v2125 = vld [vmem:[%s1 + $0x58] sm:$0xf]
  %v2126 = vld [vmem:[%s1 + $0x5c] sm:$0xf]
  %v2127 = vld [vmem:[%s1 + $0x60] sm:$0xf]
  %v2128 = vld [vmem:[%s1 + $0x64] sm:$0xf]
  %v2129 = vld [vmem:[%s1 + $0x68] sm:$0xf]
  %v2130 = vld [vmem:[%s1 + $0x6c] sm:$0xf]
  %v2131 = vld [vmem:[%s1 + $0x70] sm:$0xf]
  %v2132 = vld [vmem:[%s1 + $0x74] sm:$0xf]
  %v2134 = vshrl.u32 %v2120, 16
  %v2136 = vrot.slane %v2134, 7
  %v2137 = vshll.u32 %v2120, 16
  %v2139 = vor.u32 %v2136, %v2137
  %v2141 = vshrl.u32 %v2121, 16
  %v2143 = vrot.slane %v2141, 7
  %v2144 = vshll.u32 %v2121, 16
  %v2146 = vor.u32 %v2143, %v2144
  %v2147 = vsel %vm1126, %v2136, %v2146
  %v2149 = vshrl.u32 %v2122, 16
  %v2151 = vrot.slane %v2149, 7
  %v2152 = vshll.u32 %v2122, 16
  %v2154 = vor.u32 %v2151, %v2152
  %v2155 = vsel %vm1126, %v2143, %v2154
  %v2158 = vsel %vm1168, 0, %v2139
  %vm2159 = vsmask.f32 4352
  %vm2160 = vmand %vm260, %vm2159
  %v2161 = vsel %vm2160, %v2155, 0
  %v2162 = vrot.slane %v2149, 3
  %v2163 = vrot.slane %v2152, 4
  %v2164 = vor.u32 %v2162, %v2163
  %v2166 = vshrl.u32 %v2123, 16
  %v2168 = vrot.slane %v2166, 3
  %v2169 = vshll.u32 %v2123, 16
  %v2171 = vrot.slane %v2169, 4
  %v2172 = vor.u32 %v2168, %v2171
  %v2173 = vsel %vm2159, %v2164, %v2172
  %v2175 = vshrl.u32 %v2124, 16
  %v2177 = vrot.slane %v2175, 3
  %v2178 = vshll.u32 %v2124, 16
  %v2180 = vrot.slane %v2178, 4
  %v2181 = vor.u32 %v2177, %v2180
  %v2182 = vsel %vm2159, %v2172, %v2181
  %v2185 = vsel %vm1168, 0, %v2173
  %v2186 = vsel %vm2160, %v2181, 0
  %v2188 = vshrl.u32 %v2158, 16
  %v2190 = vshll.u32 %v2158, 16
  %v2192 = vrot.slane %v2190, 1
  %v2193 = vor.u32 %v2188, %v2192
  %v2195 = vshll.u32 %v2147, 16
  %v2197 = vrot.slane %v2195, 1
  %v2198 = vsel %vm91, %v2193, %v2197
  %v2199 = vshrl.u32 %v2147, 16
  %v2201 = vor.u32 %v2199, %v2197
  %v2203 = vshll.u32 %v2161, 16
  %v2205 = vrot.slane %v2203, 1
  %v2206 = vsel %vm91, %v2201, %v2205
  %v2207 = vshrl.u32 %v2161, 16
  %v2209 = vor.u32 %v2207, %v2205
  %2210 = vrot.lane.b32.xlu0 %v2198, 16
  %v2211 = vpop.permute.xlu0 %2210
  %2212 = vrot.lane.b32.xlu0 %v2206, 16
  %v2213 = vpop.permute.xlu0 %2212
  %2214 = vrot.lane.b32.xlu0 %v2209, 16
  %v2215 = vpop.permute.xlu0 %2214
  %v2218 = vrot.slane %v2158, 1
  %v2219 = vrot.slane %v2147, 1
  %v2220 = vsel %vm146, %v2218, %v2219
  %v2221 = vrot.slane %v2161, 1
  %v2222 = vsel %vm146, %v2219, %v2221
  %2223 = vrot.lane.b32.xlu0 %v2220, 32
  %v2224 = vpop.permute.xlu0 %2223
  %2225 = vrot.lane.b32.xlu0 %v2222, 32
  %v2226 = vpop.permute.xlu0 %2225
  %2227 = vrot.lane.b32.xlu0 %v2221, 32
  %v2228 = vpop.permute.xlu0 %2227
  %v2229 = vrot.slane %v2188, 1
  %v2230 = vrot.slane %v2190, 2
  %v2231 = vor.u32 %v2229, %v2230
  %v2232 = vrot.slane %v2199, 1
  %v2233 = vrot.slane %v2195, 2
  %v2234 = vor.u32 %v2232, %v2233
  %v2235 = vsel %vm168, %v2231, %v2234
  %v2236 = vrot.slane %v2207, 1
  %v2237 = vrot.slane %v2203, 2
  %v2238 = vor.u32 %v2236, %v2237
  %v2239 = vsel %vm168, %v2234, %v2238
  %2240 = vrot.lane.b32.xlu0 %v2235, 48
  %v2241 = vpop.permute.xlu0 %2240
  %2242 = vrot.lane.b32.xlu0 %v2239, 48
  %v2243 = vpop.permute.xlu0 %2242
  %2244 = vrot.lane.b32.xlu0 %v2238, 48
  %v2245 = vpop.permute.xlu0 %2244
  %v2247 = vsel %vm282, %v2158, %v2211
  %v2249 = vsel %vm282, %v2147, %v2213
  %v2251 = vsel %vm282, %v2161, %v2215
  %v2253 = vsel %vm293, %v2247, %v2224
  %v2255 = vsel %vm293, %v2249, %v2226
  %v2257 = vsel %vm293, %v2251, %v2228
  %v2259 = vsel %vm304, %v2253, %v2241
  %v2262 = vsel %vm304, %v2255, %v2243
  %v2265 = vsel %vm304, %v2257, %v2245
  %v2268 = vshrl.u32 %v2185, 16
  %v2270 = vshll.u32 %v2185, 16
  %v2272 = vrot.slane %v2270, 1
  %v2273 = vor.u32 %v2268, %v2272
  %v2275 = vshll.u32 %v2182, 16
  %v2277 = vrot.slane %v2275, 1
  %v2278 = vsel %vm91, %v2273, %v2277
  %v2279 = vshrl.u32 %v2182, 16
  %v2281 = vor.u32 %v2279, %v2277
  %v2283 = vshll.u32 %v2186, 16
  %v2285 = vrot.slane %v2283, 1
  %v2286 = vsel %vm91, %v2281, %v2285
  %v2287 = vshrl.u32 %v2186, 16
  %v2289 = vor.u32 %v2287, %v2285
  %2290 = vrot.lane.b32.xlu0 %v2278, 16
  %v2291 = vpop.permute.xlu0 %2290
  %2292 = vrot.lane.b32.xlu0 %v2286, 16
  %v2293 = vpop.permute.xlu0 %2292
  %2294 = vrot.lane.b32.xlu0 %v2289, 16
  %v2295 = vpop.permute.xlu0 %2294
  %v2298 = vrot.slane %v2185, 1
  %v2299 = vrot.slane %v2182, 1
  %v2300 = vsel %vm146, %v2298, %v2299
  %v2301 = vrot.slane %v2186, 1
  %v2302 = vsel %vm146, %v2299, %v2301
  %2303 = vrot.lane.b32.xlu0 %v2300, 32
  %v2304 = vpop.permute.xlu0 %2303
  %2305 = vrot.lane.b32.xlu0 %v2302, 32
  %v2306 = vpop.permute.xlu0 %2305
  %2307 = vrot.lane.b32.xlu0 %v2301, 32
  %v2308 = vpop.permute.xlu0 %2307
  %v2309 = vrot.slane %v2268, 1
  %v2310 = vrot.slane %v2270, 2
  %v2311 = vor.u32 %v2309, %v2310
  %v2312 = vrot.slane %v2279, 1
  %v2313 = vrot.slane %v2275, 2
  %v2314 = vor.u32 %v2312, %v2313
  %v2315 = vsel %vm168, %v2311, %v2314
  %v2316 = vrot.slane %v2287, 1
  %v2317 = vrot.slane %v2283, 2
  %v2318 = vor.u32 %v2316, %v2317
  %v2319 = vsel %vm168, %v2314, %v2318
  %2320 = vrot.lane.b32.xlu0 %v2315, 48
  %v2321 = vpop.permute.xlu0 %2320
  %2322 = vrot.lane.b32.xlu0 %v2319, 48
  %v2323 = vpop.permute.xlu0 %2322
  %2324 = vrot.lane.b32.xlu0 %v2318, 48
  %v2325 = vpop.permute.xlu0 %2324
  %v2327 = vsel %vm282, %v2185, %v2291
  %v2329 = vsel %vm282, %v2182, %v2293
  %v2331 = vsel %vm282, %v2186, %v2295
  %v2333 = vsel %vm293, %v2327, %v2304
  %v2335 = vsel %vm293, %v2329, %v2306
  %v2337 = vsel %vm293, %v2331, %v2308
  %v2339 = vsel %vm304, %v2333, %v2321
  %v2341 = vsel %vm304, %v2335, %v2323
  %v2343 = vsel %vm304, %v2337, %v2325
  %vm2344 = vsmask.f32 3328
  %v2345 = vshrl.u32 %v2339, 16
  %v2347 = vrot.slane %v2345, 4
  %v2348 = vshll.u32 %v2339, 16
  %v2350 = vrot.slane %v2348, 5
  %v2351 = vor.u32 %v2347, %v2350
  %v2352 = vshrl.u32 %v2341, 16
  %v2354 = vrot.slane %v2352, 4
  %v2355 = vshll.u32 %v2341, 16
  %v2357 = vrot.slane %v2355, 5
  %v2358 = vor.u32 %v2354, %v2357
  %v2359 = vsel %vm2344, %v2351, %v2358
  %v2360 = vshrl.u32 %v2343, 16
  %v2362 = vrot.slane %v2360, 4
  %v2363 = vshll.u32 %v2343, 16
  %v2365 = vrot.slane %v2363, 5
  %v2366 = vor.u32 %v2362, %v2365
  %v2367 = vsel %vm2344, %v2358, %v2366
  %vm2370 = vcmask 1043456
  %vm2371 = vmand %vm2370, %vm2344
  %v2372 = vsel %vm2371, %v2265, %v2351
  %vm2373 = vcmp.lt.s32.totalorder %v1542, 20
  %vm2374 = vcmp.lt.s32.totalorder %v1543, 20
  %vm2375 = vcmp.lt.s32.totalorder %v1544, 20
  %vm2376 = vcmp.lt.s32.totalorder %v1545, 20
  %vm2377 = vcmp.lt.s32.totalorder %v1546, 20
  %vm2378 = vmand %vm1555, %vm2373
  %vm2379 = vmand %vm1556, %vm2374
  %vm2380 = vmand %vm1557, %vm2375
  %vm2381 = vmand %vm1558, %vm2376
  %vm2382 = vmand %vm1559, %vm2377
  %vm2383 = vmand %vm2378, %vm1595
  %vm2384 = vmand %vm2379, %vm1597
  %vm2385 = vmand %vm2380, %vm1599
  %vm2386 = vmand %vm2381, %vm1601
  %vm2387 = vmand %vm2382, %vm1603
  %vm2388 = vcmp.ge.s32.totalorder %v1542, 20
  %vm2389 = vcmp.ge.s32.totalorder %v1543, 20
  %vm2390 = vcmp.ge.s32.totalorder %v1544, 20
  %vm2391 = vcmp.ge.s32.totalorder %v1545, 20
  %vm2392 = vcmp.ge.s32.totalorder %v1546, 20
  %vm2393 = vmand %vm2388, %vm1565
  %vm2394 = vmand %vm2389, %vm1566
  %vm2395 = vmand %vm2390, %vm1567
  %vm2396 = vmand %vm2391, %vm1568
  %vm2397 = vmand %vm2392, %vm1569
  %v2398 = vsub.s32 %v1542, 20
  %v2399 = vsub.s32 %v1543, 20
  %v2400 = vsub.s32 %v1544, 20
  %v2401 = vsub.s32 %v1545, 20
  %v2402 = vsub.s32 %v1546, 20
  %v2403 = vmul.u32 %v2398, 2
  %v2404 = vmul.u32 %v2399, 2
  %v2405 = vmul.u32 %v2400, 2
  %v2406 = vmul.u32 %v2401, 2
  %v2407 = vmul.u32 %v2402, 2
  %v2408 = vadd.s32 %v2403, 39
  %v2409 = vadd.s32 %v2404, 39
  %v2410 = vadd.s32 %v2405, 39
  %v2411 = vadd.s32 %v2406, 39
  %v2412 = vadd.s32 %v2407, 39
  %vm2413 = vcmp.eq.s32.totalorder %v1553, %v2408
  %vm2414 = vcmp.eq.s32.totalorder %v1553, %v2409
  %vm2415 = vcmp.eq.s32.totalorder %v1553, %v2410
  %vm2416 = vcmp.eq.s32.totalorder %v1553, %v2411
  %vm2417 = vcmp.eq.s32.totalorder %v1553, %v2412
  %vm2418 = vmand %vm2393, %vm2413
  %vm2419 = vmand %vm2394, %vm2414
  %vm2420 = vmand %vm2395, %vm2415
  %vm2421 = vmand %vm2396, %vm2416
  %vm2422 = vmand %vm2397, %vm2417
  %vm2423 = vmor %vm2383, %vm2418
  %vm2424 = vmor %vm2384, %vm2419
  %vm2425 = vmor %vm2385, %vm2420
  %vm2426 = vmor %vm2386, %vm2421
  %vm2427 = vmor %vm2387, %vm2422
  %v2428 = vsel %vm2423, 1.0, 0.0
  %v2429 = vsel %vm2424, 1.0, 0.0
  %v2430 = vsel %vm2425, 1.0, 0.0
  %v2431 = vsel %vm2426, 1.0, 0.0
  %v2432 = vsel %vm2427, 1.0, 0.0
  %v2433 = vpack.c.bf16 %v2429, %v2428
  %v2434 = vpack.c.bf16 %v2431, %v2430
  %v2435 = vpack.c.bf16 %v2432, %v2432
  %vm2436 = vcmask 637952
  %v2438 = vsel %vm2436, %v2433, 0
  %v2441 = vsel %vm2436, %v2434, 0
  %v2444 = vsel %vm2436, %v2435, 0
  %v2447 = vsel %vm1799, %v2367, 0
  %2449 = vmatprep.subr.bf16.mxu0 0
  %2450 = vmatpush1.bf16.msra.mxu0 %v2259
  %2451 = vmatprep.subr.bf16.mxu0 0
  %2452 = vmatpush1.bf16.msra.mxu0 %v2262
  %2453 = vmatprep.subr.bf16.mxu0 0
  %2454 = vmatpush1.bf16.msra.mxu0 %v2372
  %2455 = vmatprep.subr.bf16.mxu0 0
  %2456 = vmatpush1.bf16.msra.mxu0 %v2359
  %2457 = vmatprep.subr.bf16.mxu0 0
  %2458 = vmatpush1.bf16.msra.mxu0 %v2447
  %2459 = vmatprep.subr.bf16.mxu0 0
  %2460 = vmatpush1.bf16.msra.mxu0 0
  %2461 = vmatprep.subr.bf16.mxu0 0
  %2462 = vmatpush1.bf16.msra.mxu0 0
  %2463 = vmatprep.subr.bf16.mxu0 0
  %2464 = vmatpush1.bf16.msra.mxu0 0
  %2465 = vmatprep.subr.bf16.mxu0 0
  %2466 = vmatpush1.bf16.msra.mxu0 0
  %2467 = vmatprep.subr.bf16.mxu0 0
  %2468 = vmatpush1.bf16.msra.mxu0 0
  %2469 = vmatprep.subr.bf16.mxu0 0
  %2470 = vmatpush1.bf16.msra.mxu0 0
  %2471 = vmatprep.subr.bf16.mxu0 0
  %2472 = vmatpush1.bf16.msra.mxu0 0
  %2473 = vmatprep.subr.bf16.mxu0 0
  %2474 = vmatpush1.bf16.msra.mxu0 0
  %2475 = vmatprep.subr.bf16.mxu0 0
  %2476 = vmatpush1.bf16.msra.mxu0 0
  %2477 = vmatprep.subr.bf16.mxu0 0
  %2478 = vmatpush1.bf16.msra.mxu0 0
  %2479 = vmatprep.subr.bf16.mxu0 0
  %2480 = vmatpush1.bf16.msra.mxu0 0
  %2481 = vmatprep.mubr.bf16.mxu0 0
  %2482 = vmatmul.mubr.bf16.gmra.mrb[0].mxu0 %v2438
  %v2483 = vpop.f32.mrb[0].mxu0
  %v2484 = vadd.f32 0.0, %v2483
  %v2485 = vpop.f32.mrb[0].mxu0
  %v2486 = vpop.f32.mrb[0].mxu0
  %v2487 = vadd.f32 0.0, %v2486
  %v2488 = vpop.f32.mrb[0].mxu0
  %2489 = vmatprep.mubr.bf16.mxu0 0
  %2490 = vmatmul.mubr.bf16.gmra.mrb[0].mxu0 %v2441
  %v2491 = vpop.f32.mrb[0].mxu0
  %v2492 = vadd.f32 0.0, %v2491
  %v2493 = vpop.f32.mrb[0].mxu0
  %v2494 = vpop.f32.mrb[0].mxu0
  %v2495 = vadd.f32 0.0, %v2494
  %v2496 = vpop.f32.mrb[0].mxu0
  %2497 = vmatprep.mubr.bf16.mxu0 0
  %2498 = vmatmul.mubr.bf16.gmra.mrb[0].mxu0 %v2444
  %v2499 = vpop.f32.mrb[0].mxu0
  %v2500 = vadd.f32 0.0, %v2499
  %v2501 = vpop.f32.mrb[0].mxu0
  %v2502 = vpop.f32.mrb[0].mxu0
  %v2503 = vpop.f32.mrb[0].mxu0
  %2504 = vdwg.mxu0
  %v2505 = vpack.c.bf16 %v2487, %v2484
  %v2506 = vpack.c.bf16 %v2495, %v2492
  %v2507 = vpack.c.bf16 %v2500, %v2500
  %v2508 = vlaneseq
  %v2509 = vshrl.u32 %v2508, 7
  %v2510 = vsub.s32 2, %v2509
  %v2511 = vrot.slane %v21, %v2510
  %v2520 = vunpack.c.l.b16 %v2125
  %v2521 = vunpack.c.l.b16 %v2126
  %v2522 = vunpack.c.l.b16 %v2127
  %v2523 = vunpack.c.l.b16 %v2128
  %v2524 = vunpack.c.l.b16 %v2129
  %v2525 = vunpack.c.l.b16 %v2130
  %v2526 = vunpack.c.l.b16 %v2131
  %v2527 = vunpack.c.l.b16 %v2132
  %v2528 = vpack.c.b16 %v2521, %v2520
  %v2529 = vpack.c.b16 %v2523, %v2522
  %v2530 = vpack.c.b16 %v2525, %v2524
  %v2531 = vpack.c.b16 %v2527, %v2526
  %v2537 = vsel %vm315, %v2505, 0
  %v2540 = vsel %vm315, %v2506, 0
  %v2543 = vsel %vm315, %v2507, 0
  %2545 = vmatprep.subr.bf16.mxu0 0
  %2546 = vmatpush1.bf16.msra.mxu0 %v2528
  %2547 = vmatprep.subr.bf16.mxu0 0
  %2548 = vmatpush1.bf16.msra.mxu0 %v2529
  %2549 = vmatprep.subr.bf16.mxu0 0
  %2550 = vmatpush1.bf16.msra.mxu0 %v2530
  %2551 = vmatprep.subr.bf16.mxu0 0
  %2552 = vmatpush1.bf16.msra.mxu0 %v2531
  %2553 = vmatprep.subr.bf16.mxu0 0
  %2554 = vmatpush1.bf16.msra.mxu0 0
  %2555 = vmatprep.subr.bf16.mxu0 0
  %2556 = vmatpush1.bf16.msra.mxu0 0
  %2557 = vmatprep.subr.bf16.mxu0 0
  %2558 = vmatpush1.bf16.msra.mxu0 0
  %2559 = vmatprep.subr.bf16.mxu0 0
  %2560 = vmatpush1.bf16.msra.mxu0 0
  %2561 = vmatprep.subr.bf16.mxu0 0
  %2562 = vmatpush1.bf16.msra.mxu0 0
  %2563 = vmatprep.subr.bf16.mxu0 0
  %2564 = vmatpush1.bf16.msra.mxu0 0
  %2565 = vmatprep.subr.bf16.mxu0 0
  %2566 = vmatpush1.bf16.msra.mxu0 0
  %2567 = vmatprep.subr.bf16.mxu0 0
  %2568 = vmatpush1.bf16.msra.mxu0 0
  %2569 = vmatprep.subr.bf16.mxu0 0
  %2570 = vmatpush1.bf16.msra.mxu0 0
  %2571 = vmatprep.subr.bf16.mxu0 0
  %2572 = vmatpush1.bf16.msra.mxu0 0
  %2573 = vmatprep.subr.bf16.mxu0 0
  %2574 = vmatpush1.bf16.msra.mxu0 0
  %2575 = vmatprep.subr.bf16.mxu0 0
  %2576 = vmatpush1.bf16.msra.mxu0 0
  %2577 = vmatprep.mubr.bf16.mxu0 0
  %2578 = vmatmul.mubr.bf16.gmra.mrb[0].mxu0 %v2537
  %v2579 = vpop.f32.mrb[0].mxu0
  %v2580 = vadd.f32 %v2511, %v2579
  %v2581 = vpop.f32.mrb[0].mxu0
  %v2582 = vpop.f32.mrb[0].mxu0
  %v2583 = vadd.f32 %v2511, %v2582
  %v2584 = vpop.f32.mrb[0].mxu0
  %2585 = vmatprep.mubr.bf16.mxu0 0
  %2586 = vmatmul.mubr.bf16.gmra.mrb[0].mxu0 %v2540
  %v2587 = vpop.f32.mrb[0].mxu0
  %v2588 = vadd.f32 %v2511, %v2587
  %v2589 = vpop.f32.mrb[0].mxu0
  %v2590 = vpop.f32.mrb[0].mxu0
  %v2591 = vadd.f32 %v2511, %v2590
  %v2592 = vpop.f32.mrb[0].mxu0
  %2593 = vmatprep.mubr.bf16.mxu0 0
  %2594 = vmatmul.mubr.bf16.gmra.mrb[0].mxu0 %v2543
  %v2595 = vpop.f32.mrb[0].mxu0
  %v2596 = vadd.f32 %v2511, %v2595
  %v2597 = vpop.f32.mrb[0].mxu0
  %v2598 = vpop.f32.mrb[0].mxu0
  %v2599 = vpop.f32.mrb[0].mxu0
  %2600 = vdwg.mxu0
  %v2601 = vadd.f32 %v2580, %v2583
  %v2602 = vadd.f32 %v2601, %v2588
  %v2603 = vadd.f32 %v2602, %v2591
  %v2604 = vadd.f32 %v2603, %v2596
  %v2605 = vrot.slane %v2604, 4
  %v2606 = vadd.f32 %v2604, %v2605
  %v2607 = vrot.slane %v2606, 2
  %v2608 = vadd.f32 %v2606, %v2607
  %v2609 = vrot.slane %v2608, 1
  %v2610 = vadd.f32 %v2608, %v2609
  %v2611 = vrcp.pop 40.0
  %v2612 = vmul.f32 %v2610, %v2611
  %v2613 = vsub.f32 %v2580, %v2612
  %v2614 = vsub.f32 %v2583, %v2612
  %v2615 = vsub.f32 %v2588, %v2612
  %v2616 = vsub.f32 %v2591, %v2612
  %v2617 = vsub.f32 %v2596, %v2612
  %v2618 = vmul.f32 %v2613, %v2613
  %v2619 = vmul.f32 %v2614, %v2614
  %v2620 = vmul.f32 %v2615, %v2615
  %v2621 = vmul.f32 %v2616, %v2616
  %v2622 = vmul.f32 %v2617, %v2617
  %v2623 = vadd.f32 %v2618, %v2619
  %v2624 = vadd.f32 %v2623, %v2620
  %v2625 = vadd.f32 %v2624, %v2621
  %v2626 = vadd.f32 %v2625, %v2622
  %v2627 = vrot.slane %v2626, 4
  %v2628 = vadd.f32 %v2626, %v2627
  %v2629 = vrot.slane %v2628, 2
  %v2630 = vadd.f32 %v2628, %v2629
  %v2631 = vrot.slane %v2630, 1
  %v2632 = vadd.f32 %v2630, %v2631
  %v2633 = vmul.f32 %v2632, %v2611
  %v2634 = vadd.f32 %v2633, 1e-05
  %v2635 = vrsqrt.pop %v2634
  %v2636 = vmul.f32 %v2613, %v2635
  %v2637 = vmul.f32 %v2614, %v2635
  %v2638 = vmul.f32 %v2615, %v2635
  %v2639 = vmul.f32 %v2616, %v2635
  %v2640 = vmul.f32 %v2617, %v2635
  %v2641 = vlaneseq
  %v2642 = vshrl.u32 %v2641, 7
  %v2643 = vsub.s32 2, %v2642
  %v2644 = vrot.slane %v23, %v2643
  %v2645 = vmul.f32 %v2636, %v2644
  %v2646 = vmul.f32 %v2637, %v2644
  %v2647 = vmul.f32 %v2638, %v2644
  %v2648 = vmul.f32 %v2639, %v2644
  %v2649 = vmul.f32 %v2640, %v2644
  %v2650 = vlaneseq
  %v2651 = vshrl.u32 %v2650, 7
  %v2652 = vsub.s32 2, %v2651
  %v2653 = vrot.slane %v25, %v2652
  %v2654 = vadd.f32 %v2645, %v2653
  %v2655 = vadd.f32 %v2646, %v2653
  %v2656 = vadd.f32 %v2647, %v2653
  %v2657 = vadd.f32 %v2648, %v2653
  %v2658 = vadd.f32 %v2649, %v2653
  %vm2659 = vcmp.gt.f32.partialorder %v2654, 0.0
  %vm2660 = vcmp.gt.f32.partialorder %v2655, 0.0
  %vm2661 = vcmp.gt.f32.partialorder %v2656, 0.0
  %vm2662 = vcmp.gt.f32.partialorder %v2657, 0.0
  %vm2663 = vcmp.gt.f32.partialorder %v2658, 0.0
  %v2664 = vmul.f32 %v2654, 0.01
  %v2665 = vmul.f32 %v2655, 0.01
  %v2666 = vmul.f32 %v2656, 0.01
  %v2667 = vmul.f32 %v2657, 0.01
  %v2668 = vmul.f32 %v2658, 0.01
  %v2669 = vsel %vm2659, %v2654, %v2664
  %v2670 = vsel %vm2660, %v2655, %v2665
  %v2671 = vsel %vm2661, %v2656, %v2666
  %v2672 = vsel %vm2662, %v2657, %v2667
  %v2673 = vsel %vm2663, %v2658, %v2668
  %v2674 = vpack.c.bf16 %v2670, %v2669
  %v2675 = vpack.c.bf16 %v2672, %v2671
  %v2676 = vpack.c.bf16 %v2673, %v2673
  %v2677 = vld [vmem:[%s1 + $0x78] sm:$0xf]
  %v2678 = vld [vmem:[%s1 + $0x7c] sm:$0xf]
  %v2679 = vld [vmem:[%s1 + $0x80] sm:$0xf]
  %v2680 = vld [vmem:[%s1 + $0x84] sm:$0xf]
  %v2681 = vld [vmem:[%s1 + $0x88] sm:$0xf]
  %v2682 = vld [vmem:[%s1 + $0x8c] sm:$0xf]
  %v2683 = vld [vmem:[%s1 + $0x90] sm:$0xf]
  %v2684 = vld [vmem:[%s1 + $0x94] sm:$0xf]
  %v2685 = vld [vmem:[%s1 + $0x98] sm:$0xf]
  %v2686 = vld [vmem:[%s1 + $0x9c] sm:$0xf]
  %v2687 = vld [vmem:[%s1 + $0xa0] sm:$0xf]
  %v2688 = vld [vmem:[%s1 + $0xa4] sm:$0xf]
  %v2689 = vld [vmem:[%s1 + $0xa8] sm:$0xf]
  %v2690 = vld [vmem:[%s1 + $0xac] sm:$0xf]
  %v2691 = vld [vmem:[%s1 + $0xb0] sm:$0xf]
  %v2692 = vld [vmem:[%s1 + $0xb4] sm:$0xf]
  %v2694 = vshrl.u32 %v2674, 16
  %v2696 = vrot.slane %v2694, 7
  %v2697 = vshll.u32 %v2674, 16
  %v2699 = vor.u32 %v2696, %v2697
  %v2701 = vshrl.u32 %v2675, 16
  %v2703 = vrot.slane %v2701, 7
  %v2704 = vshll.u32 %v2675, 16
  %v2706 = vor.u32 %v2703, %v2704
  %v2707 = vsel %vm1126, %v2696, %v2706
  %v2710 = vsel %vm1168, 0, %v2699
  %vm2711 = vmand %vm438, %vm463
  %v2712 = vsel %vm2711, %v2707, 0
  %v2713 = vrot.slane %v2701, 1
  %v2714 = vrot.slane %v2704, 2
  %v2715 = vor.u32 %v2713, %v2714
  %v2717 = vshrl.u32 %v2676, 16
  %v2719 = vrot.slane %v2717, 1
  %v2720 = vshll.u32 %v2676, 16
  %v2722 = vrot.slane %v2720, 2
  %v2723 = vor.u32 %v2719, %v2722
  %v2724 = vsel %vm168, %v2715, %v2723
  %v2727 = vsel %vm1168, 0, %v2724
  %v2728 = vsel %vm2711, %v2723, 0
  %v2730 = vshrl.u32 %v2710, 16
  %v2732 = vshll.u32 %v2710, 16
  %v2734 = vrot.slane %v2732, 1
  %v2735 = vor.u32 %v2730, %v2734
  %v2737 = vshll.u32 %v2712, 16
  %v2739 = vrot.slane %v2737, 1
  %v2740 = vsel %vm91, %v2735, %v2739
  %v2741 = vshrl.u32 %v2712, 16
  %v2743 = vor.u32 %v2741, %v2739
  %2744 = vrot.lane.b32.xlu0 %v2740, 32
  %v2745 = vpop.permute.xlu0 %2744
  %2746 = vrot.lane.b32.xlu0 %v2743, 32
  %v2747 = vpop.permute.xlu0 %2746
  %v2750 = vrot.slane %v2710, 1
  %v2751 = vrot.slane %v2712, 1
  %v2752 = vsel %vm146, %v2750, %v2751
  %2753 = vrot.lane.b32.xlu0 %v2752, 64
  %v2754 = vpop.permute.xlu0 %2753
  %2755 = vrot.lane.b32.xlu0 %v2751, 64
  %v2756 = vpop.permute.xlu0 %2755
  %v2757 = vrot.slane %v2730, 1
  %v2758 = vrot.slane %v2732, 2
  %v2759 = vor.u32 %v2757, %v2758
  %v2760 = vrot.slane %v2741, 1
  %v2761 = vrot.slane %v2737, 2
  %v2762 = vor.u32 %v2760, %v2761
  %v2763 = vsel %vm168, %v2759, %v2762
  %2764 = vrot.lane.b32.xlu0 %v2763, 96
  %v2765 = vpop.permute.xlu0 %2764
  %2766 = vrot.lane.b32.xlu0 %v2762, 96
  %v2767 = vpop.permute.xlu0 %2766
  %v2769 = vsel %vm293, %v2710, %v2745
  %v2771 = vsel %vm293, %v2712, %v2747
  %v2773 = vsel %vm315, %v2769, %v2754
  %v2775 = vsel %vm315, %v2771, %v2756
  %v2777 = vsel %vm337, %v2773, %v2765
  %v2780 = vsel %vm337, %v2775, %v2767
  %v2783 = vshrl.u32 %v2727, 16
  %v2785 = vshll.u32 %v2727, 16
  %v2787 = vrot.slane %v2785, 1
  %v2788 = vor.u32 %v2783, %v2787
  %v2790 = vshll.u32 %v2728, 16
  %v2792 = vrot.slane %v2790, 1
  %v2793 = vsel %vm91, %v2788, %v2792
  %v2794 = vshrl.u32 %v2728, 16
  %v2796 = vor.u32 %v2794, %v2792
  %2797 = vrot.lane.b32.xlu0 %v2793, 32
  %v2798 = vpop.permute.xlu0 %2797
  %2799 = vrot.lane.b32.xlu0 %v2796, 32
  %v2800 = vpop.permute.xlu0 %2799
  %v2803 = vrot.slane %v2727, 1
  %v2804 = vrot.slane %v2728, 1
  %v2805 = vsel %vm146, %v2803, %v2804
  %2806 = vrot.lane.b32.xlu0 %v2805, 64
  %v2807 = vpop.permute.xlu0 %2806
  %2808 = vrot.lane.b32.xlu0 %v2804, 64
  %v2809 = vpop.permute.xlu0 %2808
  %v2810 = vrot.slane %v2783, 1
  %v2811 = vrot.slane %v2785, 2
  %v2812 = vor.u32 %v2810, %v2811
  %v2813 = vrot.slane %v2794, 1
  %v2814 = vrot.slane %v2790, 2
  %v2815 = vor.u32 %v2813, %v2814
  %v2816 = vsel %vm168, %v2812, %v2815
  %2817 = vrot.lane.b32.xlu0 %v2816, 96
  %v2818 = vpop.permute.xlu0 %2817
  %2819 = vrot.lane.b32.xlu0 %v2815, 96
  %v2820 = vpop.permute.xlu0 %2819
  %v2822 = vsel %vm293, %v2727, %v2798
  %v2824 = vsel %vm293, %v2728, %v2800
  %v2826 = vsel %vm315, %v2822, %v2807
  %v2828 = vsel %vm315, %v2824, %v2809
  %v2830 = vsel %vm337, %v2826, %v2818
  %v2832 = vsel %vm337, %v2828, %v2820
  %v2833 = vshrl.u32 %v2830, 16
  %v2835 = vrot.slane %v2833, 6
  %v2836 = vshll.u32 %v2830, 16
  %v2838 = vrot.slane %v2836, 7
  %v2839 = vor.u32 %v2835, %v2838
  %v2840 = vshrl.u32 %v2832, 16
  %v2842 = vrot.slane %v2840, 6
  %v2843 = vshll.u32 %v2832, 16
  %v2845 = vrot.slane %v2843, 7
  %v2846 = vor.u32 %v2842, %v2845
  %v2847 = vsel %vm549, %v2839, %v2846
  %vm2849 = vmand %vm525, %vm549
  %v2850 = vsel %vm2849, %v2780, %v2839
  %vm2851 = vcmp.lt.s32.totalorder %v1542, 10
  %vm2852 = vcmp.lt.s32.totalorder %v1543, 10
  %vm2853 = vcmp.lt.s32.totalorder %v1544, 10
  %vm2854 = vmand %vm1555, %vm2851
  %vm2855 = vmand %vm1556, %vm2852
  %vm2856 = vmand %vm1557, %vm2853
  %vm2857 = vmand %vm2854, %vm1595
  %vm2858 = vmand %vm2855, %vm1597
  %vm2859 = vmand %vm2856, %vm1599
  %vm2860 = vcmp.ge.s32.totalorder %v1542, 10
  %vm2861 = vcmp.ge.s32.totalorder %v1543, 10
  %vm2862 = vcmp.ge.s32.totalorder %v1544, 10
  %vm2863 = vmand %vm2860, %vm2373
  %vm2864 = vmand %vm2861, %vm2374
  %vm2865 = vmand %vm2862, %vm2375
  %v2866 = vsub.s32 %v1542, 10
  %v2867 = vsub.s32 %v1543, 10
  %v2868 = vsub.s32 %v1544, 10
  %v2869 = vmul.u32 %v2866, 2
  %v2870 = vmul.u32 %v2867, 2
  %v2871 = vmul.u32 %v2868, 2
  %v2872 = vadd.s32 %v2869, 19
  %v2873 = vadd.s32 %v2870, 19
  %v2874 = vadd.s32 %v2871, 19
  %vm2875 = vcmp.eq.s32.totalorder %v1553, %v2872
  %vm2876 = vcmp.eq.s32.totalorder %v1553, %v2873
  %vm2877 = vcmp.eq.s32.totalorder %v1553, %v2874
  %vm2878 = vmand %vm2863, %vm2875
  %vm2879 = vmand %vm2864, %vm2876
  %vm2880 = vmand %vm2865, %vm2877
  %vm2881 = vmor %vm2857, %vm2878
  %vm2882 = vmor %vm2858, %vm2879
  %vm2883 = vmor %vm2859, %vm2880
  %v2884 = vsel %vm2881, 1.0, 0.0
  %v2885 = vsel %vm2882, 1.0, 0.0
  %v2886 = vsel %vm2883, 1.0, 0.0
  %v2887 = vpack.c.bf16 %v2885, %v2884
  %v2888 = vpack.c.bf16 %v2886, %v2886
  %vm2889 = vcmask 310272
  %v2891 = vsel %vm2889, %v2887, 0
  %v2894 = vsel %vm2889, %v2888, 0
  %vm2896 = vcmask 1042432
  %v2898 = vsel %vm2896, %v2847, 0
  %2900 = vmatprep.subr.bf16.mxu0 0
  %2901 = vmatpush1.bf16.msra.mxu0 %v2777
  %2902 = vmatprep.subr.bf16.mxu0 0
  %2903 = vmatpush1.bf16.msra.mxu0 %v2850
  %2904 = vmatprep.subr.bf16.mxu0 0
  %2905 = vmatpush1.bf16.msra.mxu0 %v2898
  %2906 = vmatprep.subr.bf16.mxu0 0
  %2907 = vmatpush1.bf16.msra.mxu0 0
  %2908 = vmatprep.subr.bf16.mxu0 0
  %2909 = vmatpush1.bf16.msra.mxu0 0
  %2910 = vmatprep.subr.bf16.mxu0 0
  %2911 = vmatpush1.bf16.msra.mxu0 0
  %2912 = vmatprep.subr.bf16.mxu0 0
  %2913 = vmatpush1.bf16.msra.mxu0 0
  %2914 = vmatprep.subr.bf16.mxu0 0
  %2915 = vmatpush1.bf16.msra.mxu0 0
  %2916 = vmatprep.subr.bf16.mxu0 0
  %2917 = vmatpush1.bf16.msra.mxu0 0
  %2918 = vmatprep.subr.bf16.mxu0 0
  %2919 = vmatpush1.bf16.msra.mxu0 0
  %2920 = vmatprep.subr.bf16.mxu0 0
  %2921 = vmatpush1.bf16.msra.mxu0 0
  %2922 = vmatprep.subr.bf16.mxu0 0
  %2923 = vmatpush1.bf16.msra.mxu0 0
  %2924 = vmatprep.subr.bf16.mxu0 0
  %2925 = vmatpush1.bf16.msra.mxu0 0
  %2926 = vmatprep.subr.bf16.mxu0 0
  %2927 = vmatpush1.bf16.msra.mxu0 0
  %2928 = vmatprep.subr.bf16.mxu0 0
  %2929 = vmatpush1.bf16.msra.mxu0 0
  %2930 = vmatprep.subr.bf16.mxu0 0
  %2931 = vmatpush1.bf16.msra.mxu0 0
  %2932 = vmatprep.mubr.bf16.mxu0 0
  %2933 = vmatmul.mubr.bf16.gmra.mrb[0].mxu0 %v2891
  %v2934 = vpop.f32.mrb[0].mxu0
  %v2935 = vadd.f32 0.0, %v2934
  %v2936 = vpop.f32.mrb[0].mxu0
  %v2937 = vpop.f32.mrb[0].mxu0
  %v2938 = vadd.f32 0.0, %v2937
  %v2939 = vpop.f32.mrb[0].mxu0
  %2940 = vmatprep.mubr.bf16.mxu0 0
  %2941 = vmatmul.mubr.bf16.gmra.mrb[0].mxu0 %v2894
  %v2942 = vpop.f32.mrb[0].mxu0
  %v2943 = vadd.f32 0.0, %v2942
  %v2944 = vpop.f32.mrb[0].mxu0
  %v2945 = vpop.f32.mrb[0].mxu0
  %v2946 = vpop.f32.mrb[0].mxu0
  %2947 = vdwg.mxu0
  %v2948 = vpack.c.bf16 %v2938, %v2935
  %v2949 = vpack.c.bf16 %v2943, %v2943
  %v2950 = vlaneseq
  %v2951 = vshrl.u32 %v2950, 7
  %v2952 = vsub.s32 3, %v2951
  %v2953 = vrot.slane %v21, %v2952
  %v2970 = vunpack.c.l.b16 %v2677
  %v2971 = vunpack.c.l.b16 %v2678
  %v2972 = vunpack.c.l.b16 %v2679
  %v2973 = vunpack.c.l.b16 %v2680
  %v2974 = vunpack.c.l.b16 %v2681
  %v2975 = vunpack.c.l.b16 %v2682
  %v2976 = vunpack.c.l.b16 %v2683
  %v2977 = vunpack.c.l.b16 %v2684
  %v2978 = vunpack.c.l.b16 %v2685
  %v2979 = vunpack.c.l.b16 %v2686
  %v2980 = vunpack.c.l.b16 %v2687
  %v2981 = vunpack.c.l.b16 %v2688
  %v2982 = vunpack.c.l.b16 %v2689
  %v2983 = vunpack.c.l.b16 %v2690
  %v2984 = vunpack.c.l.b16 %v2691
  %v2985 = vunpack.c.l.b16 %v2692
  %v2986 = vpack.c.b16 %v2971, %v2970
  %v2987 = vpack.c.b16 %v2973, %v2972
  %v2988 = vpack.c.b16 %v2975, %v2974
  %v2989 = vpack.c.b16 %v2977, %v2976
  %v2990 = vpack.c.b16 %v2979, %v2978
  %v2991 = vpack.c.b16 %v2981, %v2980
  %v2992 = vpack.c.b16 %v2983, %v2982
  %v2993 = vpack.c.b16 %v2985, %v2984
  %3002 = vmatprep.subr.bf16.mxu0 0
  %3003 = vmatpush1.bf16.msra.mxu0 %v2986
  %3004 = vmatprep.subr.bf16.mxu0 0
  %3005 = vmatpush1.bf16.msra.mxu0 %v2987
  %3006 = vmatprep.subr.bf16.mxu0 0
  %3007 = vmatpush1.bf16.msra.mxu0 %v2988
  %3008 = vmatprep.subr.bf16.mxu0 0
  %3009 = vmatpush1.bf16.msra.mxu0 %v2989
  %3010 = vmatprep.subr.bf16.mxu0 0
  %3011 = vmatpush1.bf16.msra.mxu0 %v2990
  %3012 = vmatprep.subr.bf16.mxu0 0
  %3013 = vmatpush1.bf16.msra.mxu0 %v2991
  %3014 = vmatprep.subr.bf16.mxu0 0
  %3015 = vmatpush1.bf16.msra.mxu0 %v2992
  %3016 = vmatprep.subr.bf16.mxu0 0
  %3017 = vmatpush1.bf16.msra.mxu0 %v2993
  %3018 = vmatprep.subr.bf16.mxu0 0
  %3019 = vmatpush1.bf16.msra.mxu0 0
  %3020 = vmatprep.subr.bf16.mxu0 0
  %3021 = vmatpush1.bf16.msra.mxu0 0
  %3022 = vmatprep.subr.bf16.mxu0 0
  %3023 = vmatpush1.bf16.msra.mxu0 0
  %3024 = vmatprep.subr.bf16.mxu0 0
  %3025 = vmatpush1.bf16.msra.mxu0 0
  %3026 = vmatprep.subr.bf16.mxu0 0
  %3027 = vmatpush1.bf16.msra.mxu0 0
  %3028 = vmatprep.subr.bf16.mxu0 0
  %3029 = vmatpush1.bf16.msra.mxu0 0
  %3030 = vmatprep.subr.bf16.mxu0 0
  %3031 = vmatpush1.bf16.msra.mxu0 0
  %3032 = vmatprep.subr.bf16.mxu0 0
  %3033 = vmatpush1.bf16.msra.mxu0 0
  %3034 = vmatprep.mubr.bf16.mxu0 0
  %3035 = vmatmul.mubr.bf16.gmra.mrb[0].mxu0 %v2948
  %v3036 = vpop.f32.mrb[0].mxu0
  %v3037 = vadd.f32 %v2953, %v3036
  %v3038 = vpop.f32.mrb[0].mxu0
  %v3039 = vpop.f32.mrb[0].mxu0
  %v3040 = vadd.f32 %v2953, %v3039
  %v3041 = vpop.f32.mrb[0].mxu0
  %3042 = vmatprep.mubr.bf16.mxu0 0
  %3043 = vmatmul.mubr.bf16.gmra.mrb[0].mxu0 %v2949
  %v3044 = vpop.f32.mrb[0].mxu0
  %v3045 = vadd.f32 %v2953, %v3044
  %v3046 = vpop.f32.mrb[0].mxu0
  %v3047 = vpop.f32.mrb[0].mxu0
  %v3048 = vpop.f32.mrb[0].mxu0
  %3049 = vdwg.mxu0
  %v3050 = vadd.f32 %v3037, %v3040
  %vm3051 = vcmask 1043456
  %v3052 = vsel %vm3051, %v3045, 0.0
  %v3053 = vadd.f32 %v3050, %v3052
  %v3054 = vrot.slane %v3053, 4
  %v3055 = vadd.f32 %v3053, %v3054
  %v3056 = vrot.slane %v3055, 2
  %v3057 = vadd.f32 %v3055, %v3056
  %v3058 = vrot.slane %v3057, 1
  %v3059 = vadd.f32 %v3057, %v3058
  %v3060 = vrcp.pop 20.0
  %v3061 = vmul.f32 %v3059, %v3060
  %v3062 = vsub.f32 %v3037, %v3061
  %v3063 = vsub.f32 %v3040, %v3061
  %v3064 = vsub.f32 %v3045, %v3061
  %v3065 = vmul.f32 %v3062, %v3062
  %v3066 = vmul.f32 %v3063, %v3063
  %v3067 = vmul.f32 %v3064, %v3064
  %v3068 = vadd.f32 %v3065, %v3066
  %v3069 = vsel %vm3051, %v3067, 0.0
  %v3070 = vadd.f32 %v3068, %v3069
  %v3071 = vrot.slane %v3070, 4
  %v3072 = vadd.f32 %v3070, %v3071
  %v3073 = vrot.slane %v3072, 2
  %v3074 = vadd.f32 %v3072, %v3073
  %v3075 = vrot.slane %v3074, 1
  %v3076 = vadd.f32 %v3074, %v3075
  %v3077 = vmul.f32 %v3076, %v3060
  %v3078 = vadd.f32 %v3077, 1e-05
  %v3079 = vrsqrt.pop %v3078
  %v3080 = vmul.f32 %v3062, %v3079
  %v3081 = vmul.f32 %v3063, %v3079
  %v3082 = vmul.f32 %v3064, %v3079
  %v3083 = vlaneseq
  %v3084 = vshrl.u32 %v3083, 7
  %v3085 = vsub.s32 3, %v3084
  %v3086 = vrot.slane %v23, %v3085
  %v3087 = vmul.f32 %v3080, %v3086
  %v3088 = vmul.f32 %v3081, %v3086
  %v3089 = vmul.f32 %v3082, %v3086
  %v3090 = vlaneseq
  %v3091 = vshrl.u32 %v3090, 7
  %v3092 = vsub.s32 3, %v3091
  %v3093 = vrot.slane %v25, %v3092
  %v3094 = vadd.f32 %v3087, %v3093
  %v3095 = vadd.f32 %v3088, %v3093
  %v3096 = vadd.f32 %v3089, %v3093
  %vm3097 = vcmp.gt.f32.partialorder %v3094, 0.0
  %vm3098 = vcmp.gt.f32.partialorder %v3095, 0.0
  %vm3099 = vcmp.gt.f32.partialorder %v3096, 0.0
  %v3100 = vmul.f32 %v3094, 0.01
  %v3101 = vmul.f32 %v3095, 0.01
  %v3102 = vmul.f32 %v3096, 0.01
  %v3103 = vsel %vm3097, %v3094, %v3100
  %v3104 = vsel %vm3098, %v3095, %v3101
  %v3105 = vsel %vm3099, %v3096, %v3102
  %v3106 = vpack.c.bf16 %v3104, %v3103
  %v3107 = vpack.c.bf16 %v3105, %v3105
  %v3108 = vld [vmem:[%s1 + $0xb8] sm:$0xf]
  %v3109 = vld [vmem:[%s1 + $0xbc] sm:$0xf]
  %v3110 = vld [vmem:[%s1 + $0xc0] sm:$0xf]
  %v3111 = vld [vmem:[%s1 + $0xc4] sm:$0xf]
  %v3112 = vld [vmem:[%s1 + $0xc8] sm:$0xf]
  %v3113 = vld [vmem:[%s1 + $0xcc] sm:$0xf]
  %v3114 = vld [vmem:[%s1 + $0xd0] sm:$0xf]
  %v3115 = vld [vmem:[%s1 + $0xd4] sm:$0xf]
  %v3116 = vld [vmem:[%s1 + $0xd8] sm:$0xf]
  %v3117 = vld [vmem:[%s1 + $0xdc] sm:$0xf]
  %v3118 = vld [vmem:[%s1 + $0xe0] sm:$0xf]
  %v3119 = vld [vmem:[%s1 + $0xe4] sm:$0xf]
  %v3120 = vld [vmem:[%s1 + $0xe8] sm:$0xf]
  %v3121 = vld [vmem:[%s1 + $0xec] sm:$0xf]
  %v3122 = vld [vmem:[%s1 + $0xf0] sm:$0xf]
  %v3123 = vld [vmem:[%s1 + $0xf4] sm:$0xf]
  %v3124 = vld [vmem:[%s1 + $0xf8] sm:$0xf]
  %v3125 = vld [vmem:[%s1 + $0xfc] sm:$0xf]
  %v3126 = vld [vmem:[%s1 + $0x100] sm:$0xf]
  %v3127 = vld [vmem:[%s1 + $0x104] sm:$0xf]
  %v3128 = vld [vmem:[%s1 + $0x108] sm:$0xf]
  %v3129 = vld [vmem:[%s1 + $0x10c] sm:$0xf]
  %v3130 = vld [vmem:[%s1 + $0x110] sm:$0xf]
  %v3131 = vld [vmem:[%s1 + $0x114] sm:$0xf]
  %v3132 = vld [vmem:[%s1 + $0x118] sm:$0xf]
  %v3133 = vld [vmem:[%s1 + $0x11c] sm:$0xf]
  %v3134 = vld [vmem:[%s1 + $0x120] sm:$0xf]
  %v3135 = vld [vmem:[%s1 + $0x124] sm:$0xf]
  %v3136 = vld [vmem:[%s1 + $0x128] sm:$0xf]
  %v3137 = vld [vmem:[%s1 + $0x12c] sm:$0xf]
  %v3138 = vld [vmem:[%s1 + $0x130] sm:$0xf]
  %v3139 = vld [vmem:[%s1 + $0x134] sm:$0xf]
  %v3140 = vld [vmem:[%s1 + $0x138] sm:$0xf]
  %v3141 = vld [vmem:[%s1 + $0x13c] sm:$0xf]
  %v3142 = vld [vmem:[%s1 + $0x140] sm:$0xf]
  %v3143 = vld [vmem:[%s1 + $0x144] sm:$0xf]
  %v3144 = vld [vmem:[%s1 + $0x148] sm:$0xf]
  %v3145 = vld [vmem:[%s1 + $0x14c] sm:$0xf]
  %v3146 = vld [vmem:[%s1 + $0x150] sm:$0xf]
  %v3147 = vld [vmem:[%s1 + $0x154] sm:$0xf]
  %v3148 = vld [vmem:[%s1 + $0x158] sm:$0xf]
  %v3149 = vld [vmem:[%s1 + $0x15c] sm:$0xf]
  %v3150 = vld [vmem:[%s1 + $0x160] sm:$0xf]
  %v3151 = vld [vmem:[%s1 + $0x164] sm:$0xf]
  %v3152 = vld [vmem:[%s1 + $0x168] sm:$0xf]
  %v3153 = vld [vmem:[%s1 + $0x16c] sm:$0xf]
  %v3154 = vld [vmem:[%s1 + $0x170] sm:$0xf]
  %v3155 = vld [vmem:[%s1 + $0x174] sm:$0xf]
  %v3156 = vld [vmem:[%s1 + $0x178] sm:$0xf]
  %v3157 = vld [vmem:[%s1 + $0x17c] sm:$0xf]
  %v3158 = vld [vmem:[%s1 + $0x180] sm:$0xf]
  %v3159 = vld [vmem:[%s1 + $0x184] sm:$0xf]
  %v3160 = vld [vmem:[%s1 + $0x188] sm:$0xf]
  %v3161 = vld [vmem:[%s1 + $0x18c] sm:$0xf]
  %v3162 = vld [vmem:[%s1 + $0x190] sm:$0xf]
  %v3163 = vld [vmem:[%s1 + $0x194] sm:$0xf]
  %v3164 = vld [vmem:[%s1 + $0x198] sm:$0xf]
  %v3165 = vld [vmem:[%s1 + $0x19c] sm:$0xf]
  %v3166 = vld [vmem:[%s1 + $0x1a0] sm:$0xf]
  %v3167 = vld [vmem:[%s1 + $0x1a4] sm:$0xf]
  %v3168 = vld [vmem:[%s1 + $0x1a8] sm:$0xf]
  %v3169 = vld [vmem:[%s1 + $0x1ac] sm:$0xf]
  %v3170 = vld [vmem:[%s1 + $0x1b0] sm:$0xf]
  %v3171 = vld [vmem:[%s1 + $0x1b4] sm:$0xf]
  %v3172 = vld [vmem:[%s1 + $0x1b8] sm:$0xf]
  %v3173 = vld [vmem:[%s1 + $0x1bc] sm:$0xf]
  %v3174 = vld [vmem:[%s1 + $0x1c0] sm:$0xf]
  %v3175 = vld [vmem:[%s1 + $0x1c4] sm:$0xf]
  %v3176 = vld [vmem:[%s1 + $0x1c8] sm:$0xf]
  %v3177 = vld [vmem:[%s1 + $0x1cc] sm:$0xf]
  %v3178 = vld [vmem:[%s1 + $0x1d0] sm:$0xf]
  %v3179 = vld [vmem:[%s1 + $0x1d4] sm:$0xf]
  %v3180 = vld [vmem:[%s1 + $0x1d8] sm:$0xf]
  %v3181 = vld [vmem:[%s1 + $0x1dc] sm:$0xf]
  %v3182 = vld [vmem:[%s1 + $0x1e0] sm:$0xf]
  %v3183 = vld [vmem:[%s1 + $0x1e4] sm:$0xf]
  %v3184 = vld [vmem:[%s1 + $0x1e8] sm:$0xf]
  %v3185 = vld [vmem:[%s1 + $0x1ec] sm:$0xf]
  %v3186 = vld [vmem:[%s1 + $0x1f0] sm:$0xf]
  %v3187 = vld [vmem:[%s1 + $0x1f4] sm:$0xf]
  %v3189 = vshrl.u32 %v3106, 16
  %3191 = vrot.lane.b32.xlu0 %v3189, 64
  %v3192 = vpop.permute.xlu0 %3191
  %v3194 = vrot.slane %v3106, 1
  %v3195 = vrot.slane %v3189, 1
  %3196 = vrot.lane.b32.xlu0 %v3195, 64
  %v3197 = vpop.permute.xlu0 %3196
  %v3198 = vrot.slane %v3106, 2
  %v3199 = vrot.slane %v3189, 2
  %3200 = vrot.lane.b32.xlu0 %v3199, 64
  %v3201 = vpop.permute.xlu0 %3200
  %v3202 = vrot.slane %v3106, 3
  %v3203 = vrot.slane %v3189, 3
  %3204 = vrot.lane.b32.xlu0 %v3203, 64
  %v3205 = vpop.permute.xlu0 %3204
  %v3206 = vrot.slane %v3106, 4
  %v3207 = vrot.slane %v3189, 4
  %3208 = vrot.lane.b32.xlu0 %v3207, 64
  %v3209 = vpop.permute.xlu0 %3208
  %v3211 = vsel %vm315, %v3106, %v3192
  %v3215 = vsel %vm315, %v3194, %v3197
  %v3219 = vsel %vm315, %v3198, %v3201
  %v3223 = vsel %vm315, %v3202, %v3205
  %v3227 = vsel %vm315, %v3206, %v3209
  %v3230 = vrot.slane %v3107, 3
  %v3232 = vshrl.u32 %v3107, 16
  %v3234 = vrot.slane %v3232, 3
  %3235 = vrot.lane.b32.xlu0 %v3234, 64
  %v3236 = vpop.permute.xlu0 %3235
  %v3237 = vrot.slane %v3107, 4
  %v3238 = vrot.slane %v3232, 4
  %3239 = vrot.lane.b32.xlu0 %v3238, 64
  %v3240 = vpop.permute.xlu0 %3239
  %v3243 = vsel %vm315, %v3230, %v3236
  %v3246 = vsel %vm315, %v3237, %v3240
  %v3247 = vshll.u32 %v3211, 16
  %v3249 = vrot.slane %v3247, 5
  %v3250 = vshll.u32 %v3215, 16
  %v3252 = vrot.slane %v3250, 5
  %v3253 = vshll.u32 %v3219, 16
  %v3255 = vrot.slane %v3253, 5
  %v3256 = vshll.u32 %v3243, 16
  %v3258 = vrot.slane %v3256, 5
  %v3259 = vshll.u32 %v3246, 16
  %v3261 = vrot.slane %v3259, 5
  %v3267 = vsel %vm1168, %v3211, %v3249
  %v3268 = vsel %vm1168, %v3215, %v3252
  %v3269 = vsel %vm1168, %v3219, %v3255
  %v3270 = vsel %vm1168, %v3223, %v3258
  %v3271 = vsel %vm1168, %v3227, %v3261
  %v3272 = vlaneseq
  %v3273 = vshrl.u32 %v3272, 7
  %v3274 = vsub.s32 4, %v3273
  %v3275 = vrot.slane %v21, %v3274
  %v3356 = vunpack.c.l.b16 %v3108
  %v3357 = vunpack.c.l.b16 %v3109
  %v3358 = vunpack.c.l.b16 %v3110
  %v3359 = vunpack.c.l.b16 %v3111
  %v3360 = vunpack.c.l.b16 %v3112
  %v3361 = vunpack.c.l.b16 %v3113
  %v3362 = vunpack.c.l.b16 %v3114
  %v3363 = vunpack.c.l.b16 %v3115
  %v3364 = vunpack.c.l.b16 %v3116
  %v3365 = vunpack.c.l.b16 %v3117
  %v3366 = vunpack.c.l.b16 %v3118
  %v3367 = vunpack.c.l.b16 %v3119
  %v3368 = vunpack.c.l.b16 %v3120
  %v3369 = vunpack.c.l.b16 %v3121
  %v3370 = vunpack.c.l.b16 %v3122
  %v3371 = vunpack.c.l.b16 %v3123
  %v3372 = vunpack.c.l.b16 %v3124
  %v3373 = vunpack.c.l.b16 %v3125
  %v3374 = vunpack.c.l.b16 %v3126
  %v3375 = vunpack.c.l.b16 %v3127
  %v3376 = vunpack.c.l.b16 %v3128
  %v3377 = vunpack.c.l.b16 %v3129
  %v3378 = vunpack.c.l.b16 %v3130
  %v3379 = vunpack.c.l.b16 %v3131
  %v3380 = vunpack.c.l.b16 %v3132
  %v3381 = vunpack.c.l.b16 %v3133
  %v3382 = vunpack.c.l.b16 %v3134
  %v3383 = vunpack.c.l.b16 %v3135
  %v3384 = vunpack.c.l.b16 %v3136
  %v3385 = vunpack.c.l.b16 %v3137
  %v3386 = vunpack.c.l.b16 %v3138
  %v3387 = vunpack.c.l.b16 %v3139
  %v3388 = vunpack.c.l.b16 %v3140
  %v3389 = vunpack.c.l.b16 %v3141
  %v3390 = vunpack.c.l.b16 %v3142
  %v3391 = vunpack.c.l.b16 %v3143
  %v3392 = vunpack.c.l.b16 %v3144
  %v3393 = vunpack.c.l.b16 %v3145
  %v3394 = vunpack.c.l.b16 %v3146
  %v3395 = vunpack.c.l.b16 %v3147
  %v3396 = vunpack.c.l.b16 %v3148
  %v3397 = vunpack.c.l.b16 %v3149
  %v3398 = vunpack.c.l.b16 %v3150
  %v3399 = vunpack.c.l.b16 %v3151
  %v3400 = vunpack.c.l.b16 %v3152
  %v3401 = vunpack.c.l.b16 %v3153
  %v3402 = vunpack.c.l.b16 %v3154
  %v3403 = vunpack.c.l.b16 %v3155
  %v3404 = vunpack.c.l.b16 %v3156
  %v3405 = vunpack.c.l.b16 %v3157
  %v3406 = vunpack.c.l.b16 %v3158
  %v3407 = vunpack.c.l.b16 %v3159
  %v3408 = vunpack.c.l.b16 %v3160
  %v3409 = vunpack.c.l.b16 %v3161
  %v3410 = vunpack.c.l.b16 %v3162
  %v3411 = vunpack.c.l.b16 %v3163
  %v3412 = vunpack.c.l.b16 %v3164
  %v3413 = vunpack.c.l.b16 %v3165
  %v3414 = vunpack.c.l.b16 %v3166
  %v3415 = vunpack.c.l.b16 %v3167
  %v3416 = vunpack.c.l.b16 %v3168
  %v3417 = vunpack.c.l.b16 %v3169
  %v3418 = vunpack.c.l.b16 %v3170
  %v3419 = vunpack.c.l.b16 %v3171
  %v3420 = vunpack.c.l.b16 %v3172
  %v3421 = vunpack.c.l.b16 %v3173
  %v3422 = vunpack.c.l.b16 %v3174
  %v3423 = vunpack.c.l.b16 %v3175
  %v3424 = vunpack.c.l.b16 %v3176
  %v3425 = vunpack.c.l.b16 %v3177
  %v3426 = vunpack.c.l.b16 %v3178
  %v3427 = vunpack.c.l.b16 %v3179
  %v3428 = vunpack.c.l.b16 %v3180
  %v3429 = vunpack.c.l.b16 %v3181
  %v3430 = vunpack.c.l.b16 %v3182
  %v3431 = vunpack.c.l.b16 %v3183
  %v3432 = vunpack.c.l.b16 %v3184
  %v3433 = vunpack.c.l.b16 %v3185
  %v3434 = vunpack.c.l.b16 %v3186
  %v3435 = vunpack.c.l.b16 %v3187
  %v3436 = vpack.c.b16 %v3357, %v3356
  %v3437 = vpack.c.b16 %v3359, %v3358
  %v3438 = vpack.c.b16 %v3361, %v3360
  %v3439 = vpack.c.b16 %v3363, %v3362
  %v3440 = vpack.c.b16 %v3365, %v3364
  %v3441 = vpack.c.b16 %v3367, %v3366
  %v3442 = vpack.c.b16 %v3369, %v3368
  %v3443 = vpack.c.b16 %v3371, %v3370
  %v3444 = vpack.c.b16 %v3373, %v3372
  %v3445 = vpack.c.b16 %v3375, %v3374
  %v3446 = vpack.c.b16 %v3377, %v3376
  %v3447 = vpack.c.b16 %v3379, %v3378
  %v3448 = vpack.c.b16 %v3381, %v3380
  %v3449 = vpack.c.b16 %v3383, %v3382
  %v3450 = vpack.c.b16 %v3385, %v3384
  %v3451 = vpack.c.b16 %v3387, %v3386
  %v3452 = vpack.c.b16 %v3389, %v3388
  %v3453 = vpack.c.b16 %v3391, %v3390
  %v3454 = vpack.c.b16 %v3393, %v3392
  %v3455 = vpack.c.b16 %v3395, %v3394
  %v3456 = vpack.c.b16 %v3397, %v3396
  %v3457 = vpack.c.b16 %v3399, %v3398
  %v3458 = vpack.c.b16 %v3401, %v3400
  %v3459 = vpack.c.b16 %v3403, %v3402
  %v3460 = vpack.c.b16 %v3405, %v3404
  %v3461 = vpack.c.b16 %v3407, %v3406
  %v3462 = vpack.c.b16 %v3409, %v3408
  %v3463 = vpack.c.b16 %v3411, %v3410
  %v3464 = vpack.c.b16 %v3413, %v3412
  %v3465 = vpack.c.b16 %v3415, %v3414
  %v3466 = vpack.c.b16 %v3417, %v3416
  %v3467 = vpack.c.b16 %v3419, %v3418
  %v3468 = vpack.c.b16 %v3421, %v3420
  %v3469 = vpack.c.b16 %v3423, %v3422
  %v3470 = vpack.c.b16 %v3425, %v3424
  %v3471 = vpack.c.b16 %v3427, %v3426
  %v3472 = vpack.c.b16 %v3429, %v3428
  %v3473 = vpack.c.b16 %v3431, %v3430
  %v3474 = vpack.c.b16 %v3433, %v3432
  %v3475 = vpack.c.b16 %v3435, %v3434
  %3516 = vmatprep.subr.bf16.mxu0 0
  %3517 = vmatpush1.bf16.msra.mxu0 %v3436
  %3518 = vmatprep.subr.bf16.mxu0 0
  %3519 = vmatpush1.bf16.msra.mxu0 %v3437
  %3520 = vmatprep.subr.bf16.mxu0 0
  %3521 = vmatpush1.bf16.msra.mxu0 %v3438
  %3522 = vmatprep.subr.bf16.mxu0 0
  %3523 = vmatpush1.bf16.msra.mxu0 %v3439
  %3524 = vmatprep.subr.bf16.mxu0 0
  %3525 = vmatpush1.bf16.msra.mxu0 %v3440
  %3526 = vmatprep.subr.bf16.mxu0 0
  %3527 = vmatpush1.bf16.msra.mxu0 %v3441
  %3528 = vmatprep.subr.bf16.mxu0 0
  %3529 = vmatpush1.bf16.msra.mxu0 %v3442
  %3530 = vmatprep.subr.bf16.mxu0 0
  %3531 = vmatpush1.bf16.msra.mxu0 %v3443
  %3532 = vmatprep.subr.bf16.mxu0 0
  %3533 = vmatpush1.bf16.msra.mxu0 %v3444
  %3534 = vmatprep.subr.bf16.mxu0 0
  %3535 = vmatpush1.bf16.msra.mxu0 %v3445
  %3536 = vmatprep.subr.bf16.mxu0 0
  %3537 = vmatpush1.bf16.msra.mxu0 %v3446
  %3538 = vmatprep.subr.bf16.mxu0 0
  %3539 = vmatpush1.bf16.msra.mxu0 %v3447
  %3540 = vmatprep.subr.bf16.mxu0 0
  %3541 = vmatpush1.bf16.msra.mxu0 %v3448
  %3542 = vmatprep.subr.bf16.mxu0 0
  %3543 = vmatpush1.bf16.msra.mxu0 %v3449
  %3544 = vmatprep.subr.bf16.mxu0 0
  %3545 = vmatpush1.bf16.msra.mxu0 %v3450
  %3546 = vmatprep.subr.bf16.mxu0 0
  %3547 = vmatpush1.bf16.msra.mxu0 %v3451
  %3548 = vmatprep.mubr.bf16.mxu0 %v3268
  %3549 = vmatmul.mubr.bf16.gmra.mrb[0].mxu0 %v3267
  %v3550 = vpop.f32.mrb[0].mxu0
  %v3551 = vadd.f32 %v3275, %v3550
  %v3552 = vpop.f32.mrb[0].mxu0
  %v3553 = vpop.f32.mrb[0].mxu0
  %v3554 = vpop.f32.mrb[0].mxu0
  %3555 = vdwg.mxu0
  %3556 = vmatprep.subr.bf16.mxu0 0
  %3557 = vmatpush1.bf16.msra.mxu0 %v3452
  %3558 = vmatprep.subr.bf16.mxu0 0
  %3559 = vmatpush1.bf16.msra.mxu0 %v3453
  %3560 = vmatprep.subr.bf16.mxu0 0
  %3561 = vmatpush1.bf16.msra.mxu0 %v3454
  %3562 = vmatprep.subr.bf16.mxu0 0
  %3563 = vmatpush1.bf16.msra.mxu0 %v3455
  %3564 = vmatprep.subr.bf16.mxu0 0
  %3565 = vmatpush1.bf16.msra.mxu0 %v3456
  %3566 = vmatprep.subr.bf16.mxu0 0
  %3567 = vmatpush1.bf16.msra.mxu0 %v3457
  %3568 = vmatprep.subr.bf16.mxu0 0
  %3569 = vmatpush1.bf16.msra.mxu0 %v3458
  %3570 = vmatprep.subr.bf16.mxu0 0
  %3571 = vmatpush1.bf16.msra.mxu0 %v3459
  %3572 = vmatprep.subr.bf16.mxu0 0
  %3573 = vmatpush1.bf16.msra.mxu0 %v3460
  %3574 = vmatprep.subr.bf16.mxu0 0
  %3575 = vmatpush1.bf16.msra.mxu0 %v3461
  %3576 = vmatprep.subr.bf16.mxu0 0
  %3577 = vmatpush1.bf16.msra.mxu0 %v3462
  %3578 = vmatprep.subr.bf16.mxu0 0
  %3579 = vmatpush1.bf16.msra.mxu0 %v3463
  %3580 = vmatprep.subr.bf16.mxu0 0
  %3581 = vmatpush1.bf16.msra.mxu0 %v3464
  %3582 = vmatprep.subr.bf16.mxu0 0
  %3583 = vmatpush1.bf16.msra.mxu0 %v3465
  %3584 = vmatprep.subr.bf16.mxu0 0
  %3585 = vmatpush1.bf16.msra.mxu0 %v3466
  %3586 = vmatprep.subr.bf16.mxu0 0
  %3587 = vmatpush1.bf16.msra.mxu0 %v3467
  %3588 = vmatprep.mubr.bf16.mxu0 %v3270
  %3589 = vmatmul.mubr.bf16.gmra.mrb[0].mxu0 %v3269
  %v3590 = vpop.f32.mrb[0].mxu0
  %v3591 = vadd.f32 %v3551, %v3590
  %v3592 = vpop.f32.mrb[0].mxu0
  %v3593 = vpop.f32.mrb[0].mxu0
  %v3594 = vpop.f32.mrb[0].mxu0
  %3595 = vdwg.mxu0
  %3596 = vmatprep.subr.bf16.mxu0 0
  %3597 = vmatpush1.bf16.msra.mxu0 %v3468
  %3598 = vmatprep.subr.bf16.mxu0 0
  %3599 = vmatpush1.bf16.msra.mxu0 %v3469
  %3600 = vmatprep.subr.bf16.mxu0 0
  %3601 = vmatpush1.bf16.msra.mxu0 %v3470
  %3602 = vmatprep.subr.bf16.mxu0 0
  %3603 = vmatpush1.bf16.msra.mxu0 %v3471
  %3604 = vmatprep.subr.bf16.mxu0 0
  %3605 = vmatpush1.bf16.msra.mxu0 %v3472
  %3606 = vmatprep.subr.bf16.mxu0 0
  %3607 = vmatpush1.bf16.msra.mxu0 %v3473
  %3608 = vmatprep.subr.bf16.mxu0 0
  %3609 = vmatpush1.bf16.msra.mxu0 %v3474
  %3610 = vmatprep.subr.bf16.mxu0 0
  %3611 = vmatpush1.bf16.msra.mxu0 %v3475
  %3612 = vmatprep.subr.bf16.mxu0 0
  %3613 = vmatpush1.bf16.msra.mxu0 0
  %3614 = vmatprep.subr.bf16.mxu0 0
  %3615 = vmatpush1.bf16.msra.mxu0 0
  %3616 = vmatprep.subr.bf16.mxu0 0
  %3617 = vmatpush1.bf16.msra.mxu0 0
  %3618 = vmatprep.subr.bf16.mxu0 0
  %3619 = vmatpush1.bf16.msra.mxu0 0
  %3620 = vmatprep.subr.bf16.mxu0 0
  %3621 = vmatpush1.bf16.msra.mxu0 0
  %3622 = vmatprep.subr.bf16.mxu0 0
  %3623 = vmatpush1.bf16.msra.mxu0 0
  %3624 = vmatprep.subr.bf16.mxu0 0
  %3625 = vmatpush1.bf16.msra.mxu0 0
  %3626 = vmatprep.subr.bf16.mxu0 0
  %3627 = vmatpush1.bf16.msra.mxu0 0
  %3628 = vmatprep.mubr.bf16.mxu0 0
  %3629 = vmatmul.mubr.bf16.gmra.mrb[0].mxu0 %v3271
  %v3630 = vpop.f32.mrb[0].mxu0
  %v3631 = vadd.f32 %v3591, %v3630
  %v3632 = vpop.f32.mrb[0].mxu0
  %v3633 = vpop.f32.mrb[0].mxu0
  %v3634 = vpop.f32.mrb[0].mxu0
  %3635 = vdwg.mxu0
  %v3636 = vpack.c.bf16 %v3631, %v3631
  %v3637 = vld [vmem:[%s1 + $0x1f8] sm:$0xf]
  %v3638 = vld [vmem:[%s1 + $0x1fc] sm:$0xf]
  %v3639 = vld [vmem:[%s1 + $0x200] sm:$0xf]
  %v3640 = vld [vmem:[%s1 + $0x204] sm:$0xf]
  %v3641 = vld [vmem:[%s1 + $0x208] sm:$0xf]
  %v3642 = vld [vmem:[%s1 + $0x20c] sm:$0xf]
  %v3643 = vld [vmem:[%s1 + $0x210] sm:$0xf]
  %v3644 = vld [vmem:[%s1 + $0x214] sm:$0xf]
  %v3645 = vld [vmem:[%s1 + $0x218] sm:$0xf]
  %v3646 = vld [vmem:[%s1 + $0x21c] sm:$0xf]
  %v3647 = vld [vmem:[%s1 + $0x220] sm:$0xf]
  %v3648 = vld [vmem:[%s1 + $0x224] sm:$0xf]
  %v3649 = vld [vmem:[%s1 + $0x228] sm:$0xf]
  %v3650 = vld [vmem:[%s1 + $0x22c] sm:$0xf]
  %v3651 = vld [vmem:[%s1 + $0x230] sm:$0xf]
  %v3652 = vld [vmem:[%s1 + $0x234] sm:$0xf]
  %v3653 = vld [vmem:[%s1 + $0x238] sm:$0xf]
  %v3654 = vld [vmem:[%s1 + $0x23c] sm:$0xf]
  %v3655 = vld [vmem:[%s1 + $0x240] sm:$0xf]
  %v3656 = vld [vmem:[%s1 + $0x244] sm:$0xf]
  %v3658 = vshll.u32 %v3636, 16
  %v3660 = vrot.slane %v3658, 4
  %v3662 = vsel %vm2160, 0, %v3660
  %vm3663 = vcmask 1044480
  %v3666 = vsel %vm3663, %v3662, 0
  %v3668 = vrot.slane %v3636, 4
  %v3670 = vsel %vm2160, 0, %v3668
  %v3672 = vsel %vm3663, %v3670, 0
  %v3673 = vshrl.u32 %v3666, 16
  %v3675 = vshll.u32 %v3666, 16
  %v3677 = vrot.slane %v3675, 1
  %v3678 = vor.u32 %v3673, %v3677
  %3679 = vrot.lane.b32.xlu0 %v3678, 16
  %v3680 = vpop.permute.xlu0 %3679
  %v3682 = vrot.slane %v3666, 1
  %3683 = vrot.lane.b32.xlu0 %v3682, 32
  %v3684 = vpop.permute.xlu0 %3683
  %v3685 = vrot.slane %v3673, 1
  %v3686 = vrot.slane %v3675, 2
  %v3687 = vor.u32 %v3685, %v3686
  %3688 = vrot.lane.b32.xlu0 %v3687, 48
  %v3689 = vpop.permute.xlu0 %3688
  %v3690 = vrot.slane %v3666, 2
  %3691 = vrot.lane.b32.xlu0 %v3690, 64
  %v3692 = vpop.permute.xlu0 %3691
  %v3693 = vrot.slane %v3673, 2
  %v3694 = vrot.slane %v3675, 3
  %v3695 = vor.u32 %v3693, %v3694
  %3696 = vrot.lane.b32.xlu0 %v3695, 80
  %v3697 = vpop.permute.xlu0 %3696
  %v3698 = vrot.slane %v3666, 3
  %3699 = vrot.lane.b32.xlu0 %v3698, 96
  %v3700 = vpop.permute.xlu0 %3699
  %v3701 = vrot.slane %v3673, 3
  %v3702 = vrot.slane %v3675, 4
  %v3703 = vor.u32 %v3701, %v3702
  %v3704 = vshll.u32 0, 16
  %v3706 = vrot.slane %v3704, 4
  %v3707 = vsel %vm2159, %v3703, %v3706
  %3708 = vrot.lane.b32.xlu0 %v3707, 112
  %v3709 = vpop.permute.xlu0 %3708
  %v3711 = vrot.slane %v3666, 4
  %v3712 = vrot.slane 0, 4
  %v3713 = vsel %vm2370, %v3711, %v3712
  %v3714 = vrot.slane %v3673, 4
  %v3715 = vrot.slane %v3675, 5
  %v3716 = vor.u32 %v3714, %v3715
  %v3717 = vshrl.u32 0, 16
  %v3719 = vrot.slane %v3717, 4
  %v3720 = vrot.slane %v3704, 5
  %v3721 = vor.u32 %v3719, %v3720
  %v3722 = vsel %vm2344, %v3716, %v3721
  %3723 = vrot.lane.b32.xlu0 %v3722, 16
  %v3724 = vpop.permute.xlu0 %3723
  %v3726 = vsel %vm282, %v3666, %v3680
  %v3728 = vsel %vm293, %v3726, %v3684
  %v3730 = vsel %vm304, %v3728, %v3689
  %v3732 = vsel %vm315, %v3730, %v3692
  %v3734 = vsel %vm326, %v3732, %v3697
  %v3736 = vsel %vm337, %v3734, %v3700
  %v3738 = vsel %vm746, %v3736, %v3709
  %v3741 = vsel %vm282, %v3713, %v3724
  %v3742 = vshrl.u32 %v3672, 16
  %v3744 = vshll.u32 %v3672, 16
  %v3746 = vrot.slane %v3744, 1
  %v3747 = vor.u32 %v3742, %v3746
  %3748 = vrot.lane.b32.xlu0 %v3747, 16
  %v3749 = vpop.permute.xlu0 %3748
  %v3751 = vrot.slane %v3672, 1
  %3752 = vrot.lane.b32.xlu0 %v3751, 32
  %v3753 = vpop.permute.xlu0 %3752
  %v3754 = vrot.slane %v3742, 1
  %v3755 = vrot.slane %v3744, 2
  %v3756 = vor.u32 %v3754, %v3755
  %3757 = vrot.lane.b32.xlu0 %v3756, 48
  %v3758 = vpop.permute.xlu0 %3757
  %v3759 = vrot.slane %v3672, 2
  %3760 = vrot.lane.b32.xlu0 %v3759, 64
  %v3761 = vpop.permute.xlu0 %3760
  %v3762 = vrot.slane %v3742, 2
  %v3763 = vrot.slane %v3744, 3
  %v3764 = vor.u32 %v3762, %v3763
  %3765 = vrot.lane.b32.xlu0 %v3764, 80
  %v3766 = vpop.permute.xlu0 %3765
  %v3767 = vrot.slane %v3672, 3
  %3768 = vrot.lane.b32.xlu0 %v3767, 96
  %v3769 = vpop.permute.xlu0 %3768
  %v3770 = vrot.slane %v3742, 3
  %v3771 = vrot.slane %v3744, 4
  %v3772 = vor.u32 %v3770, %v3771
  %v3773 = vsel %vm2159, %v3772, %v3706
  %3774 = vrot.lane.b32.xlu0 %v3773, 112
  %v3775 = vpop.permute.xlu0 %3774
  %v3776 = vrot.slane %v3672, 4
  %v3777 = vsel %vm2370, %v3776, %v3712
  %v3778 = vrot.slane %v3742, 4
  %v3779 = vrot.slane %v3744, 5
  %v3780 = vor.u32 %v3778, %v3779
  %v3781 = vsel %vm2344, %v3780, %v3721
  %3782 = vrot.lane.b32.xlu0 %v3781, 16
  %v3783 = vpop.permute.xlu0 %3782
  %v3785 = vsel %vm282, %v3672, %v3749
  %v3787 = vsel %vm293, %v3785, %v3753
  %v3789 = vsel %vm304, %v3787, %v3758
  %v3791 = vsel %vm315, %v3789, %v3761
  %v3793 = vsel %vm326, %v3791, %v3766
  %v3795 = vsel %vm337, %v3793, %v3769
  %v3797 = vsel %vm746, %v3795, %v3775
  %v3800 = vsel %vm282, %v3777, %v3783
  %v3803 = vrot.slane %v3797, 3
  %v3804 = vrot.slane %v3800, 3
  %v3807 = vsel %vm3663, %v3738, %v3803
  %v3810 = vsel %vm3663, %v3741, %v3804
  %v3811 = vlaneseq
  %v3812 = vshrl.u32 %v3811, 7
  %v3813 = vsub.s32 5, %v3812
  %v3814 = vrot.slane %v21, %v3813
  %v3835 = vunpack.c.l.b16 %v3637
  %v3836 = vunpack.c.l.b16 %v3638
  %v3837 = vunpack.c.l.b16 %v3639
  %v3838 = vunpack.c.l.b16 %v3640
  %v3839 = vunpack.c.l.b16 %v3641
  %v3840 = vunpack.c.l.b16 %v3642
  %v3841 = vunpack.c.l.b16 %v3643
  %v3842 = vunpack.c.l.b16 %v3644
  %v3843 = vunpack.c.l.b16 %v3645
  %v3844 = vunpack.c.l.b16 %v3646
  %v3845 = vunpack.c.l.b16 %v3647
  %v3846 = vunpack.c.l.b16 %v3648
  %v3847 = vunpack.c.l.b16 %v3649
  %v3848 = vunpack.c.l.b16 %v3650
  %v3849 = vunpack.c.l.b16 %v3651
  %v3850 = vunpack.c.l.b16 %v3652
  %v3851 = vunpack.c.l.b16 %v3653
  %v3852 = vunpack.c.l.b16 %v3654
  %v3853 = vunpack.c.l.b16 %v3655
  %v3854 = vunpack.c.l.b16 %v3656
  %v3855 = vpack.c.b16 %v3836, %v3835
  %v3856 = vpack.c.b16 %v3838, %v3837
  %v3857 = vpack.c.b16 %v3840, %v3839
  %v3858 = vpack.c.b16 %v3842, %v3841
  %v3859 = vpack.c.b16 %v3844, %v3843
  %v3860 = vpack.c.b16 %v3846, %v3845
  %v3861 = vpack.c.b16 %v3848, %v3847
  %v3862 = vpack.c.b16 %v3850, %v3849
  %v3863 = vpack.c.b16 %v3852, %v3851
  %v3864 = vpack.c.b16 %v3854, %v3853
  %v3875 = vsel %vm293, %v3810, 0
  %v3877 = vsel %vm293, %v3804, 0
  %3879 = vmatprep.subr.bf16.mxu0 0
  %3880 = vmatpush1.bf16.msra.mxu0 %v3855
  %3881 = vmatprep.subr.bf16.mxu0 0
  %3882 = vmatpush1.bf16.msra.mxu0 %v3856
  %3883 = vmatprep.subr.bf16.mxu0 0
  %3884 = vmatpush1.bf16.msra.mxu0 %v3857
  %3885 = vmatprep.subr.bf16.mxu0 0
  %3886 = vmatpush1.bf16.msra.mxu0 %v3858
  %3887 = vmatprep.subr.bf16.mxu0 0
  %3888 = vmatpush1.bf16.msra.mxu0 %v3859
  %3889 = vmatprep.subr.bf16.mxu0 0
  %3890 = vmatpush1.bf16.msra.mxu0 %v3860
  %3891 = vmatprep.subr.bf16.mxu0 0
  %3892 = vmatpush1.bf16.msra.mxu0 %v3861
  %3893 = vmatprep.subr.bf16.mxu0 0
  %3894 = vmatpush1.bf16.msra.mxu0 %v3862
  %3895 = vmatprep.subr.bf16.mxu0 0
  %3896 = vmatpush1.bf16.msra.mxu0 %v3863
  %3897 = vmatprep.subr.bf16.mxu0 0
  %3898 = vmatpush1.bf16.msra.mxu0 %v3864
  %3899 = vmatprep.subr.bf16.mxu0 0
  %3900 = vmatpush1.bf16.msra.mxu0 0
  %3901 = vmatprep.subr.bf16.mxu0 0
  %3902 = vmatpush1.bf16.msra.mxu0 0
  %3903 = vmatprep.subr.bf16.mxu0 0
  %3904 = vmatpush1.bf16.msra.mxu0 0
  %3905 = vmatprep.subr.bf16.mxu0 0
  %3906 = vmatpush1.bf16.msra.mxu0 0
  %3907 = vmatprep.subr.bf16.mxu0 0
  %3908 = vmatpush1.bf16.msra.mxu0 0
  %3909 = vmatprep.subr.bf16.mxu0 0
  %3910 = vmatpush1.bf16.msra.mxu0 0
  %3911 = vmatprep.mubr.bf16.mxu0 %v3875
  %3912 = vmatmul.mubr.bf16.gmra.mrb[0].mxu0 %v3807
  %v3913 = vpop.f32.mrb[0].mxu0
  %v3914 = vadd.f32 %v3814, %v3913
  %v3915 = vpop.f32.mrb[0].mxu0
  %v3916 = vpop.f32.mrb[0].mxu0
  %v3917 = vadd.f32 %v3814, %v3916
  %v3918 = vpop.f32.mrb[0].mxu0
  %3919 = vmatprep.mubr.bf16.mxu0 %v3877
  %3920 = vmatmul.mubr.bf16.gmra.mrb[0].mxu0 %v3803
  %v3921 = vpop.f32.mrb[0].mxu0
  %v3922 = vadd.f32 %v3814, %v3921
  %v3923 = vpop.f32.mrb[0].mxu0
  %v3924 = vpop.f32.mrb[0].mxu0
  %v3925 = vpop.f32.mrb[0].mxu0
  %3926 = vdwg.mxu0
  %v3927 = vadd.f32 %v3914, %v3917
  %v3928 = vsel %vm3051, %v3922, 0.0
  %v3929 = vadd.f32 %v3927, %v3928
  %v3930 = vrot.slane %v3929, 4
  %v3931 = vadd.f32 %v3929, %v3930
  %v3932 = vrot.slane %v3931, 2
  %v3933 = vadd.f32 %v3931, %v3932
  %v3934 = vrot.slane %v3933, 1
  %v3935 = vadd.f32 %v3933, %v3934
  %v3936 = vmul.f32 %v3935, %v3060
  %v3937 = vsub.f32 %v3914, %v3936
  %v3938 = vsub.f32 %v3917, %v3936
  %v3939 = vsub.f32 %v3922, %v3936
  %v3940 = vmul.f32 %v3937, %v3937
  %v3941 = vmul.f32 %v3938, %v3938
  %v3942 = vmul.f32 %v3939, %v3939
  %v3943 = vadd.f32 %v3940, %v3941
  %v3944 = vsel %vm3051, %v3942, 0.0
  %v3945 = vadd.f32 %v3943, %v3944
  %v3946 = vrot.slane %v3945, 4
  %v3947 = vadd.f32 %v3945, %v3946
  %v3948 = vrot.slane %v3947, 2
  %v3949 = vadd.f32 %v3947, %v3948
  %v3950 = vrot.slane %v3949, 1
  %v3951 = vadd.f32 %v3949, %v3950
  %v3952 = vmul.f32 %v3951, %v3060
  %v3953 = vadd.f32 %v3952, 1e-05
  %v3954 = vrsqrt.pop %v3953
  %v3955 = vmul.f32 %v3937, %v3954
  %v3956 = vmul.f32 %v3938, %v3954
  %v3957 = vmul.f32 %v3939, %v3954
  %v3958 = vlaneseq
  %v3959 = vshrl.u32 %v3958, 7
  %v3960 = vsub.s32 5, %v3959
  %v3961 = vrot.slane %v23, %v3960
  %v3962 = vmul.f32 %v3955, %v3961
  %v3963 = vmul.f32 %v3956, %v3961
  %v3964 = vmul.f32 %v3957, %v3961
  %v3965 = vlaneseq
  %v3966 = vshrl.u32 %v3965, 7
  %v3967 = vsub.s32 5, %v3966
  %v3968 = vrot.slane %v25, %v3967
  %v3969 = vadd.f32 %v3962, %v3968
  %v3970 = vadd.f32 %v3963, %v3968
  %v3971 = vadd.f32 %v3964, %v3968
  %v3972 = vmax.f32 %v3969, 0.0
  %v3973 = vmax.f32 %v3970, 0.0
  %v3974 = vmax.f32 %v3971, 0.0
  %v3975 = vpack.c.bf16 %v3973, %v3972
  %v3976 = vpack.c.bf16 %v3974, %v3974
  %v3977 = vld [vmem:[%s1 + $0x248] sm:$0xf]
  %v3978 = vld [vmem:[%s1 + $0x24c] sm:$0xf]
  %v3979 = vld [vmem:[%s1 + $0x250] sm:$0xf]
  %v3980 = vld [vmem:[%s1 + $0x254] sm:$0xf]
  %v3981 = vld [vmem:[%s1 + $0x258] sm:$0xf]
  %v3982 = vld [vmem:[%s1 + $0x25c] sm:$0xf]
  %v3983 = vld [vmem:[%s1 + $0x260] sm:$0xf]
  %v3984 = vld [vmem:[%s1 + $0x264] sm:$0xf]
  %v3985 = vld [vmem:[%s1 + $0x268] sm:$0xf]
  %v3986 = vld [vmem:[%s1 + $0x26c] sm:$0xf]
  %v3987 = vld [vmem:[%s1 + $0x270] sm:$0xf]
  %v3988 = vld [vmem:[%s1 + $0x274] sm:$0xf]
  %v3989 = vld [vmem:[%s1 + $0x278] sm:$0xf]
  %v3990 = vld [vmem:[%s1 + $0x27c] sm:$0xf]
  %v3991 = vld [vmem:[%s1 + $0x280] sm:$0xf]
  %v3992 = vld [vmem:[%s1 + $0x284] sm:$0xf]
  %v3993 = vld [vmem:[%s1 + $0x288] sm:$0xf]
  %v3994 = vld [vmem:[%s1 + $0x28c] sm:$0xf]
  %v3995 = vld [vmem:[%s1 + $0x290] sm:$0xf]
  %v3996 = vld [vmem:[%s1 + $0x294] sm:$0xf]
  %v3997 = vld [vmem:[%s1 + $0x298] sm:$0xf]
  %v3998 = vld [vmem:[%s1 + $0x29c] sm:$0xf]
  %v3999 = vld [vmem:[%s1 + $0x2a0] sm:$0xf]
  %v4000 = vld [vmem:[%s1 + $0x2a4] sm:$0xf]
  %v4001 = vld [vmem:[%s1 + $0x2a8] sm:$0xf]
  %v4002 = vld [vmem:[%s1 + $0x2ac] sm:$0xf]
  %v4003 = vld [vmem:[%s1 + $0x2b0] sm:$0xf]
  %v4004 = vld [vmem:[%s1 + $0x2b4] sm:$0xf]
  %v4005 = vld [vmem:[%s1 + $0x2b8] sm:$0xf]
  %v4006 = vld [vmem:[%s1 + $0x2bc] sm:$0xf]
  %v4007 = vld [vmem:[%s1 + $0x2c0] sm:$0xf]
  %v4008 = vld [vmem:[%s1 + $0x2c4] sm:$0xf]
  %vm4009 = vcmp.ge.s32.totalorder %v1553, 0
  %vm4010 = vcmp.lt.s32.totalorder %v1553, 10
  %vm4011 = vmand %vm4009, %vm4010
  %v4012 = vmul.u32 %v1553, 2
  %v4013 = vadd.s32 %v4012, 2
  %vm4014 = vcmp.eq.s32.totalorder %v1542, %v4013
  %vm4015 = vcmp.eq.s32.totalorder %v1543, %v4013
  %vm4016 = vcmp.eq.s32.totalorder %v1544, %v4013
  %vm4017 = vcmp.eq.s32.totalorder %v1545, %v4013
  %vm4018 = vcmp.eq.s32.totalorder %v1546, %v4013
  %vm4019 = vcmp.eq.s32.totalorder %v1547, %v4013
  %vm4020 = vmand %vm4011, %vm4014
  %vm4021 = vmand %vm4011, %vm4015
  %vm4022 = vmand %vm4011, %vm4016
  %vm4023 = vmand %vm4011, %vm4017
  %vm4024 = vmand %vm4011, %vm4018
  %vm4025 = vmand %vm4011, %vm4019
  %vm4026 = vcmp.ge.s32.totalorder %v1553, 10
  %vm4027 = vcmp.lt.s32.totalorder %v1553, 20
  %vm4028 = vmand %vm4026, %vm4027
  %v4029 = vsub.s32 %v1553, 10
  %v4030 = vmul.u32 %v4029, 2
  %v4031 = vadd.s32 %v4030, 2
  %v4032 = vadd.s32 %v4031, 23
  %vm4033 = vcmp.eq.s32.totalorder %v1542, %v4032
  %vm4034 = vcmp.eq.s32.totalorder %v1543, %v4032
  %vm4035 = vcmp.eq.s32.totalorder %v1544, %v4032
  %vm4036 = vcmp.eq.s32.totalorder %v1545, %v4032
  %vm4037 = vcmp.eq.s32.totalorder %v1546, %v4032
  %vm4038 = vcmp.eq.s32.totalorder %v1547, %v4032
  %vm4039 = vmand %vm4028, %vm4033
  %vm4040 = vmand %vm4028, %vm4034
  %vm4041 = vmand %vm4028, %vm4035
  %vm4042 = vmand %vm4028, %vm4036
  %vm4043 = vmand %vm4028, %vm4037
  %vm4044 = vmand %vm4028, %vm4038
  %vm4045 = vmor %vm4020, %vm4039
  %vm4046 = vmor %vm4021, %vm4040
  %vm4047 = vmor %vm4022, %vm4041
  %vm4048 = vmor %vm4023, %vm4042
  %vm4049 = vmor %vm4024, %vm4043
  %vm4050 = vmor %vm4025, %vm4044
  %v4051 = vsel %vm4045, 1.0, 0.0
  %v4052 = vsel %vm4046, 1.0, 0.0
  %v4053 = vsel %vm4047, 1.0, 0.0
  %v4054 = vsel %vm4048, 1.0, 0.0
  %v4055 = vsel %vm4049, 1.0, 0.0
  %v4056 = vsel %vm4050, 1.0, 0.0
  %v4057 = vpack.c.bf16 %v4052, %v4051
  %v4058 = vpack.c.bf16 %v4054, %v4053
  %v4059 = vpack.c.bf16 %v4056, %v4055
  %vm4060 = vcmask 162816
  %v4062 = vsel %vm4060, %v4057, 0
  %v4065 = vsel %vm4060, %v4058, 0
  %v4068 = vsel %vm4060, %v4059, 0
  %vm4070 = vcmask 1041408
  %v4072 = vsel %vm4070, %v3976, 0
  %4074 = vmatprep.subr.bf16.mxu0 0
  %4075 = vmatpush1.bf16.msra.mxu0 %v3975
  %4076 = vmatprep.subr.bf16.mxu0 0
  %4077 = vmatpush1.bf16.msra.mxu0 %v4072
  %4078 = vmatprep.subr.bf16.mxu0 0
  %4079 = vmatpush1.bf16.msra.mxu0 0
  %4080 = vmatprep.subr.bf16.mxu0 0
  %4081 = vmatpush1.bf16.msra.mxu0 0
  %4082 = vmatprep.subr.bf16.mxu0 0
  %4083 = vmatpush1.bf16.msra.mxu0 0
  %4084 = vmatprep.subr.bf16.mxu0 0
  %4085 = vmatpush1.bf16.msra.mxu0 0
  %4086 = vmatprep.subr.bf16.mxu0 0
  %4087 = vmatpush1.bf16.msra.mxu0 0
  %4088 = vmatprep.subr.bf16.mxu0 0
  %4089 = vmatpush1.bf16.msra.mxu0 0
  %4090 = vmatprep.subr.bf16.mxu0 0
  %4091 = vmatpush1.bf16.msra.mxu0 0
  %4092 = vmatprep.subr.bf16.mxu0 0
  %4093 = vmatpush1.bf16.msra.mxu0 0
  %4094 = vmatprep.subr.bf16.mxu0 0
  %4095 = vmatpush1.bf16.msra.mxu0 0
  %4096 = vmatprep.subr.bf16.mxu0 0
  %4097 = vmatpush1.bf16.msra.mxu0 0
  %4098 = vmatprep.subr.bf16.mxu0 0
  %4099 = vmatpush1.bf16.msra.mxu0 0
  %4100 = vmatprep.subr.bf16.mxu0 0
  %4101 = vmatpush1.bf16.msra.mxu0 0
  %4102 = vmatprep.subr.bf16.mxu0 0
  %4103 = vmatpush1.bf16.msra.mxu0 0
  %4104 = vmatprep.subr.bf16.mxu0 0
  %4105 = vmatpush1.bf16.msra.mxu0 0
  %4106 = vmatprep.mubr.bf16.mxu0 0
  %4107 = vmatmul.mubr.bf16.gmra.mrb[0].mxu0 %v4062
  %v4108 = vpop.f32.mrb[0].mxu0
  %v4109 = vadd.f32 0.0, %v4108
  %v4110 = vpop.f32.mrb[0].mxu0
  %v4111 = vpop.f32.mrb[0].mxu0
  %v4112 = vadd.f32 0.0, %v4111
  %v4113 = vpop.f32.mrb[0].mxu0
  %4114 = vmatprep.mubr.bf16.mxu0 0
  %4115 = vmatmul.mubr.bf16.gmra.mrb[0].mxu0 %v4065
  %v4116 = vpop.f32.mrb[0].mxu0
  %v4117 = vadd.f32 0.0, %v4116
  %v4118 = vpop.f32.mrb[0].mxu0
  %v4119 = vpop.f32.mrb[0].mxu0
  %v4120 = vadd.f32 0.0, %v4119
  %v4121 = vpop.f32.mrb[0].mxu0
  %4122 = vmatprep.mubr.bf16.mxu0 0
  %4123 = vmatmul.mubr.bf16.gmra.mrb[0].mxu0 %v4068
  %v4124 = vpop.f32.mrb[0].mxu0
  %v4125 = vadd.f32 0.0, %v4124
  %v4126 = vpop.f32.mrb[0].mxu0
  %v4127 = vpop.f32.mrb[0].mxu0
  %v4128 = vadd.f32 0.0, %v4127
  %v4129 = vpop.f32.mrb[0].mxu0
  %4130 = vdwg.mxu0
  %v4131 = vpack.c.bf16 %v4112, %v4109
  %v4132 = vpack.c.bf16 %v4120, %v4117
  %v4133 = vpack.c.bf16 %v4128, %v4125
  %v4135 = vshrl.u32 %v4131, 16
  %v4137 = vshll.u32 %v4131, 16
  %v4139 = vrot.slane %v4137, 1
  %v4140 = vor.u32 %v4135, %v4139
  %v4142 = vshll.u32 %v4132, 16
  %v4144 = vrot.slane %v4142, 1
  %v4145 = vsel %vm91, %v4140, %v4144
  %v4146 = vshrl.u32 %v4132, 16
  %v4148 = vor.u32 %v4146, %v4144
  %4149 = vrot.lane.b32.xlu0 %v4145, 64
  %v4150 = vpop.permute.xlu0 %4149
  %4151 = vrot.lane.b32.xlu0 %v4148, 64
  %v4152 = vpop.permute.xlu0 %4151
  %v4155 = vrot.slane %v4131, 1
  %v4156 = vrot.slane %v4132, 1
  %v4157 = vsel %vm146, %v4155, %v4156
  %v4158 = vrot.slane %v4135, 1
  %v4159 = vrot.slane %v4137, 2
  %v4160 = vor.u32 %v4158, %v4159
  %v4161 = vrot.slane %v4146, 1
  %v4162 = vrot.slane %v4142, 2
  %v4163 = vor.u32 %v4161, %v4162
  %v4164 = vsel %vm168, %v4160, %v4163
  %4165 = vrot.lane.b32.xlu0 %v4164, 64
  %v4166 = vpop.permute.xlu0 %4165
  %4167 = vrot.lane.b32.xlu0 %v4163, 64
  %v4168 = vpop.permute.xlu0 %4167
  %v4170 = vsel %vm315, %v4131, %v4150
  %v4173 = vsel %vm315, %v4132, %v4152
  %v4176 = vsel %vm315, %v4157, %v4166
  %v4180 = vsel %vm315, %v4156, %v4168
  %v4182 = vshll.u32 %v4133, 16
  %v4184 = vrot.slane %v4182, 1
  %v4185 = vsel %vm91, %v4148, %v4184
  %v4186 = vshrl.u32 %v4133, 16
  %v4188 = vor.u32 %v4186, %v4184
  %4189 = vrot.lane.b32.xlu0 %v4185, 64
  %v4190 = vpop.permute.xlu0 %4189
  %4191 = vrot.lane.b32.xlu0 %v4188, 64
  %v4192 = vpop.permute.xlu0 %4191
  %v4194 = vrot.slane %v4133, 1
  %v4195 = vsel %vm146, %v4156, %v4194
  %v4196 = vrot.slane %v4186, 1
  %v4197 = vrot.slane %v4182, 2
  %v4198 = vor.u32 %v4196, %v4197
  %v4199 = vsel %vm168, %v4163, %v4198
  %4200 = vrot.lane.b32.xlu0 %v4199, 64
  %v4201 = vpop.permute.xlu0 %4200
  %4202 = vrot.lane.b32.xlu0 %v4198, 64
  %v4203 = vpop.permute.xlu0 %4202
  %v4205 = vsel %vm315, %v4132, %v4190
  %v4207 = vsel %vm315, %v4133, %v4192
  %v4210 = vsel %vm315, %v4195, %v4201
  %v4213 = vsel %vm315, %v4194, %v4203
  %v4214 = vshrl.u32 %v4205, 16
  %v4216 = vrot.slane %v4214, 1
  %v4217 = vshll.u32 %v4205, 16
  %v4219 = vrot.slane %v4217, 2
  %v4220 = vor.u32 %v4216, %v4219
  %v4221 = vshrl.u32 %v4207, 16
  %v4223 = vrot.slane %v4221, 1
  %v4224 = vshll.u32 %v4207, 16
  %v4226 = vrot.slane %v4224, 2
  %v4227 = vor.u32 %v4223, %v4226
  %v4228 = vsel %vm168, %v4220, %v4227
  %v4229 = vshrl.u32 %v4210, 16
  %v4231 = vrot.slane %v4229, 1
  %v4232 = vshll.u32 %v4210, 16
  %v4234 = vrot.slane %v4232, 2
  %v4235 = vor.u32 %v4231, %v4234
  %v4236 = vshrl.u32 %v4213, 16
  %v4238 = vrot.slane %v4236, 1
  %v4239 = vshll.u32 %v4213, 16
  %v4241 = vrot.slane %v4239, 2
  %v4242 = vor.u32 %v4238, %v4241
  %v4243 = vsel %vm168, %v4235, %v4242
  %v4247 = vsel %vm4070, %v4173, %v4228
  %v4250 = vsel %vm4070, %v4180, %v4243
  %v4252 = vlaneseq
  %v4253 = vshrl.u32 %v4252, 7
  %v4254 = vsub.s32 6, %v4253
  %v4255 = vrot.slane %v21, %v4254
  %v4288 = vunpack.c.l.b16 %v3977
  %v4289 = vunpack.c.l.b16 %v3978
  %v4290 = vunpack.c.l.b16 %v3979
  %v4291 = vunpack.c.l.b16 %v3980
  %v4292 = vunpack.c.l.b16 %v3981
  %v4293 = vunpack.c.l.b16 %v3982
  %v4294 = vunpack.c.l.b16 %v3983
  %v4295 = vunpack.c.l.b16 %v3984
  %v4296 = vunpack.c.l.b16 %v3985
  %v4297 = vunpack.c.l.b16 %v3986
  %v4298 = vunpack.c.l.b16 %v3987
  %v4299 = vunpack.c.l.b16 %v3988
  %v4300 = vunpack.c.l.b16 %v3989
  %v4301 = vunpack.c.l.b16 %v3990
  %v4302 = vunpack.c.l.b16 %v3991
  %v4303 = vunpack.c.l.b16 %v3992
  %v4304 = vunpack.c.l.b16 %v3993
  %v4305 = vunpack.c.l.b16 %v3994
  %v4306 = vunpack.c.l.b16 %v3995
  %v4307 = vunpack.c.l.b16 %v3996
  %v4308 = vunpack.c.l.b16 %v3997
  %v4309 = vunpack.c.l.b16 %v3998
  %v4310 = vunpack.c.l.b16 %v3999
  %v4311 = vunpack.c.l.b16 %v4000
  %v4312 = vunpack.c.l.b16 %v4001
  %v4313 = vunpack.c.l.b16 %v4002
  %v4314 = vunpack.c.l.b16 %v4003
  %v4315 = vunpack.c.l.b16 %v4004
  %v4316 = vunpack.c.l.b16 %v4005
  %v4317 = vunpack.c.l.b16 %v4006
  %v4318 = vunpack.c.l.b16 %v4007
  %v4319 = vunpack.c.l.b16 %v4008
  %v4320 = vpack.c.b16 %v4289, %v4288
  %v4321 = vpack.c.b16 %v4291, %v4290
  %v4322 = vpack.c.b16 %v4293, %v4292
  %v4323 = vpack.c.b16 %v4295, %v4294
  %v4324 = vpack.c.b16 %v4297, %v4296
  %v4325 = vpack.c.b16 %v4299, %v4298
  %v4326 = vpack.c.b16 %v4301, %v4300
  %v4327 = vpack.c.b16 %v4303, %v4302
  %v4328 = vpack.c.b16 %v4305, %v4304
  %v4329 = vpack.c.b16 %v4307, %v4306
  %v4330 = vpack.c.b16 %v4309, %v4308
  %v4331 = vpack.c.b16 %v4311, %v4310
  %v4332 = vpack.c.b16 %v4313, %v4312
  %v4333 = vpack.c.b16 %v4315, %v4314
  %v4334 = vpack.c.b16 %v4317, %v4316
  %v4335 = vpack.c.b16 %v4319, %v4318
  %4352 = vmatprep.subr.bf16.mxu0 0
  %4353 = vmatpush1.bf16.msra.mxu0 %v4320
  %4354 = vmatprep.subr.bf16.mxu0 0
  %4355 = vmatpush1.bf16.msra.mxu0 %v4321
  %4356 = vmatprep.subr.bf16.mxu0 0
  %4357 = vmatpush1.bf16.msra.mxu0 %v4322
  %4358 = vmatprep.subr.bf16.mxu0 0
  %4359 = vmatpush1.bf16.msra.mxu0 %v4323
  %4360 = vmatprep.subr.bf16.mxu0 0
  %4361 = vmatpush1.bf16.msra.mxu0 %v4324
  %4362 = vmatprep.subr.bf16.mxu0 0
  %4363 = vmatpush1.bf16.msra.mxu0 %v4325
  %4364 = vmatprep.subr.bf16.mxu0 0
  %4365 = vmatpush1.bf16.msra.mxu0 %v4326
  %4366 = vmatprep.subr.bf16.mxu0 0
  %4367 = vmatpush1.bf16.msra.mxu0 %v4327
  %4368 = vmatprep.subr.bf16.mxu0 0
  %4369 = vmatpush1.bf16.msra.mxu0 %v4328
  %4370 = vmatprep.subr.bf16.mxu0 0
  %4371 = vmatpush1.bf16.msra.mxu0 %v4329
  %4372 = vmatprep.subr.bf16.mxu0 0
  %4373 = vmatpush1.bf16.msra.mxu0 %v4330
  %4374 = vmatprep.subr.bf16.mxu0 0
  %4375 = vmatpush1.bf16.msra.mxu0 %v4331
  %4376 = vmatprep.subr.bf16.mxu0 0
  %4377 = vmatpush1.bf16.msra.mxu0 %v4332
  %4378 = vmatprep.subr.bf16.mxu0 0
  %4379 = vmatpush1.bf16.msra.mxu0 %v4333
  %4380 = vmatprep.subr.bf16.mxu0 0
  %4381 = vmatpush1.bf16.msra.mxu0 %v4334
  %4382 = vmatprep.subr.bf16.mxu0 0
  %4383 = vmatpush1.bf16.msra.mxu0 %v4335
  %4384 = vmatprep.mubr.bf16.mxu0 %v4176
  %4385 = vmatmul.mubr.bf16.gmra.mrb[0].mxu0 %v4170
  %v4386 = vpop.f32.mrb[0].mxu0
  %v4387 = vadd.f32 %v4255, %v4386
  %v4388 = vpop.f32.mrb[0].mxu0
  %v4389 = vpop.f32.mrb[0].mxu0
  %v4390 = vadd.f32 %v4255, %v4389
  %v4391 = vpop.f32.mrb[0].mxu0
  %4392 = vmatprep.mubr.bf16.mxu0 %v4250
  %4393 = vmatmul.mubr.bf16.gmra.mrb[0].mxu0 %v4247
  %v4394 = vpop.f32.mrb[0].mxu0
  %v4395 = vadd.f32 %v4255, %v4394
  %v4396 = vpop.f32.mrb[0].mxu0
  %v4397 = vpop.f32.mrb[0].mxu0
  %v4398 = vadd.f32 %v4255, %v4397
  %v4399 = vpop.f32.mrb[0].mxu0
  %4400 = vmatprep.mubr.bf16.mxu0 %v4242
  %4401 = vmatmul.mubr.bf16.gmra.mrb[0].mxu0 %v4227
  %v4402 = vpop.f32.mrb[0].mxu0
  %v4403 = vadd.f32 %v4255, %v4402
  %v4404 = vpop.f32.mrb[0].mxu0
  %v4405 = vpop.f32.mrb[0].mxu0
  %v4406 = vpop.f32.mrb[0].mxu0
  %4407 = vdwg.mxu0
  %v4408 = vadd.f32 %v4387, %v4390
  %v4409 = vadd.f32 %v4408, %v4395
  %v4410 = vadd.f32 %v4409, %v4398
  %v4411 = vadd.f32 %v4410, %v4403
  %v4412 = vrot.slane %v4411, 4
  %v4413 = vadd.f32 %v4411, %v4412
  %v4414 = vrot.slane %v4413, 2
  %v4415 = vadd.f32 %v4413, %v4414
  %v4416 = vrot.slane %v4415, 1
  %v4417 = vadd.f32 %v4415, %v4416
  %v4418 = vmul.f32 %v4417, %v2611
  %v4419 = vsub.f32 %v4387, %v4418
  %v4420 = vsub.f32 %v4390, %v4418
  %v4421 = vsub.f32 %v4395, %v4418
  %v4422 = vsub.f32 %v4398, %v4418
  %v4423 = vsub.f32 %v4403, %v4418
  %v4424 = vmul.f32 %v4419, %v4419
  %v4425 = vmul.f32 %v4420, %v4420
  %v4426 = vmul.f32 %v4421, %v4421
  %v4427 = vmul.f32 %v4422, %v4422
  %v4428 = vmul.f32 %v4423, %v4423
  %v4429 = vadd.f32 %v4424, %v4425
  %v4430 = vadd.f32 %v4429, %v4426
  %v4431 = vadd.f32 %v4430, %v4427
  %v4432 = vadd.f32 %v4431, %v4428
  %v4433 = vrot.slane %v4432, 4
  %v4434 = vadd.f32 %v4432, %v4433
  %v4435 = vrot.slane %v4434, 2
  %v4436 = vadd.f32 %v4434, %v4435
  %v4437 = vrot.slane %v4436, 1
  %v4438 = vadd.f32 %v4436, %v4437
  %v4439 = vmul.f32 %v4438, %v2611
  %v4440 = vadd.f32 %v4439, 1e-05
  %v4441 = vrsqrt.pop %v4440
  %v4442 = vmul.f32 %v4419, %v4441
  %v4443 = vmul.f32 %v4420, %v4441
  %v4444 = vmul.f32 %v4421, %v4441
  %v4445 = vmul.f32 %v4422, %v4441
  %v4446 = vmul.f32 %v4423, %v4441
  %v4447 = vlaneseq
  %v4448 = vshrl.u32 %v4447, 7
  %v4449 = vsub.s32 6, %v4448
  %v4450 = vrot.slane %v23, %v4449
  %v4451 = vmul.f32 %v4442, %v4450
  %v4452 = vmul.f32 %v4443, %v4450
  %v4453 = vmul.f32 %v4444, %v4450
  %v4454 = vmul.f32 %v4445, %v4450
  %v4455 = vmul.f32 %v4446, %v4450
  %v4456 = vlaneseq
  %v4457 = vshrl.u32 %v4456, 7
  %v4458 = vsub.s32 6, %v4457
  %v4459 = vrot.slane %v25, %v4458
  %v4460 = vadd.f32 %v4451, %v4459
  %v4461 = vadd.f32 %v4452, %v4459
  %v4462 = vadd.f32 %v4453, %v4459
  %v4463 = vadd.f32 %v4454, %v4459
  %v4464 = vadd.f32 %v4455, %v4459
  %v4465 = vmax.f32 %v4460, 0.0
  %v4466 = vmax.f32 %v4461, 0.0
  %v4467 = vmax.f32 %v4462, 0.0
  %v4468 = vmax.f32 %v4463, 0.0
  %v4469 = vmax.f32 %v4464, 0.0
  %v4470 = vpack.c.bf16 %v4466, %v4465
  %v4471 = vpack.c.bf16 %v4468, %v4467
  %v4472 = vpack.c.bf16 %v4469, %v4469
  %v4473 = vld [vmem:[%s1 + $0x2c8] sm:$0xf]
  %v4474 = vld [vmem:[%s1 + $0x2cc] sm:$0xf]
  %v4475 = vld [vmem:[%s1 + $0x2d0] sm:$0xf]
  %v4476 = vld [vmem:[%s1 + $0x2d4] sm:$0xf]
  %v4477 = vld [vmem:[%s1 + $0x2d8] sm:$0xf]
  %v4478 = vld [vmem:[%s1 + $0x2dc] sm:$0xf]
  %v4479 = vld [vmem:[%s1 + $0x2e0] sm:$0xf]
  %v4480 = vld [vmem:[%s1 + $0x2e4] sm:$0xf]
  %v4481 = vld [vmem:[%s1 + $0x2e8] sm:$0xf]
  %v4482 = vld [vmem:[%s1 + $0x2ec] sm:$0xf]
  %v4483 = vld [vmem:[%s1 + $0x2f0] sm:$0xf]
  %v4484 = vld [vmem:[%s1 + $0x2f4] sm:$0xf]
  %v4485 = vld [vmem:[%s1 + $0x2f8] sm:$0xf]
  %v4486 = vld [vmem:[%s1 + $0x2fc] sm:$0xf]
  %v4487 = vld [vmem:[%s1 + $0x300] sm:$0xf]
  %v4488 = vld [vmem:[%s1 + $0x304] sm:$0xf]
  %v4489 = vadd.s32 %v1542, 80
  %vm4490 = vmand %vm4009, %vm4027
  %vm4491 = vcmp.eq.s32.totalorder %v1548, %v4013
  %vm4492 = vcmp.eq.s32.totalorder %v1549, %v4013
  %vm4493 = vcmp.eq.s32.totalorder %v1550, %v4013
  %vm4494 = vcmp.eq.s32.totalorder %v1551, %v4013
  %vm4495 = vcmp.eq.s32.totalorder %v4489, %v4013
  %vm4496 = vmand %vm4490, %vm4014
  %vm4497 = vmand %vm4490, %vm4015
  %vm4498 = vmand %vm4490, %vm4016
  %vm4499 = vmand %vm4490, %vm4017
  %vm4500 = vmand %vm4490, %vm4018
  %vm4501 = vmand %vm4490, %vm4019
  %vm4502 = vmand %vm4490, %vm4491
  %vm4503 = vmand %vm4490, %vm4492
  %vm4504 = vmand %vm4490, %vm4493
  %vm4505 = vmand %vm4490, %vm4494
  %vm4506 = vmand %vm4490, %vm4495
  %vm4507 = vcmp.ge.s32.totalorder %v1553, 20
  %vm4508 = vcmp.lt.s32.totalorder %v1553, 40
  %vm4509 = vmand %vm4507, %vm4508
  %v4510 = vsub.s32 %v1553, 20
  %v4511 = vmul.u32 %v4510, 2
  %v4512 = vadd.s32 %v4511, 2
  %v4513 = vadd.s32 %v4512, 43
  %vm4514 = vcmp.eq.s32.totalorder %v1542, %v4513
  %vm4515 = vcmp.eq.s32.totalorder %v1543, %v4513
  %vm4516 = vcmp.eq.s32.totalorder %v1544, %v4513
  %vm4517 = vcmp.eq.s32.totalorder %v1545, %v4513
  %vm4518 = vcmp.eq.s32.totalorder %v1546, %v4513
  %vm4519 = vcmp.eq.s32.totalorder %v1547, %v4513
  %vm4520 = vcmp.eq.s32.totalorder %v1548, %v4513
  %vm4521 = vcmp.eq.s32.totalorder %v1549, %v4513
  %vm4522 = vcmp.eq.s32.totalorder %v1550, %v4513
  %vm4523 = vcmp.eq.s32.totalorder %v1551, %v4513
  %vm4524 = vcmp.eq.s32.totalorder %v4489, %v4513
  %vm4525 = vmand %vm4509, %vm4514
  %vm4526 = vmand %vm4509, %vm4515
  %vm4527 = vmand %vm4509, %vm4516
  %vm4528 = vmand %vm4509, %vm4517
  %vm4529 = vmand %vm4509, %vm4518
  %vm4530 = vmand %vm4509, %vm4519
  %vm4531 = vmand %vm4509, %vm4520
  %vm4532 = vmand %vm4509, %vm4521
  %vm4533 = vmand %vm4509, %vm4522
  %vm4534 = vmand %vm4509, %vm4523
  %vm4535 = vmand %vm4509, %vm4524
  %vm4536 = vmor %vm4496, %vm4525
  %vm4537 = vmor %vm4497, %vm4526
  %vm4538 = vmor %vm4498, %vm4527
  %vm4539 = vmor %vm4499, %vm4528
  %vm4540 = vmor %vm4500, %vm4529
  %vm4541 = vmor %vm4501, %vm4530
  %vm4542 = vmor %vm4502, %vm4531
  %vm4543 = vmor %vm4503, %vm4532
  %vm4544 = vmor %vm4504, %vm4533
  %vm4545 = vmor %vm4505, %vm4534
  %vm4546 = vmor %vm4506, %vm4535
  %v4547 = vsel %vm4536, 1.0, 0.0
  %v4548 = vsel %vm4537, 1.0, 0.0
  %v4549 = vsel %vm4538, 1.0, 0.0
  %v4550 = vsel %vm4539, 1.0, 0.0
  %v4551 = vsel %vm4540, 1.0, 0.0
  %v4552 = vsel %vm4541, 1.0, 0.0
  %v4553 = vsel %vm4542, 1.0, 0.0
  %v4554 = vsel %vm4543, 1.0, 0.0
  %v4555 = vsel %vm4544, 1.0, 0.0
  %v4556 = vsel %vm4545, 1.0, 0.0
  %v4557 = vsel %vm4546, 1.0, 0.0
  %v4558 = vpack.c.bf16 %v4548, %v4547
  %v4559 = vpack.c.bf16 %v4550, %v4549
  %v4560 = vpack.c.bf16 %v4552, %v4551
  %v4561 = vpack.c.bf16 %v4554, %v4553
  %v4562 = vpack.c.bf16 %v4556, %v4555
  %v4563 = vpack.c.bf16 %v4557, %v4557
  %vm4564 = vcmask 326656
  %v4566 = vsel %vm4564, %v4558, 0
  %v4569 = vsel %vm4564, %v4559, 0
  %v4572 = vsel %vm4564, %v4560, 0
  %v4575 = vsel %vm4564, %v4561, 0
  %v4578 = vsel %vm4564, %v4562, 0
  %v4581 = vsel %vm4564, %v4563, 0
  %v4584 = vsel %vm3051, %v4472, 0
  %4586 = vmatprep.subr.bf16.mxu0 0
  %4587 = vmatpush1.bf16.msra.mxu0 %v4470
  %4588 = vmatprep.subr.bf16.mxu0 0
  %4589 = vmatpush1.bf16.msra.mxu0 %v4471
  %4590 = vmatprep.subr.bf16.mxu0 0
  %4591 = vmatpush1.bf16.msra.mxu0 %v4584
  %4592 = vmatprep.subr.bf16.mxu0 0
  %4593 = vmatpush1.bf16.msra.mxu0 0
  %4594 = vmatprep.subr.bf16.mxu0 0
  %4595 = vmatpush1.bf16.msra.mxu0 0
  %4596 = vmatprep.subr.bf16.mxu0 0
  %4597 = vmatpush1.bf16.msra.mxu0 0
  %4598 = vmatprep.subr.bf16.mxu0 0
  %4599 = vmatpush1.bf16.msra.mxu0 0
  %4600 = vmatprep.subr.bf16.mxu0 0
  %4601 = vmatpush1.bf16.msra.mxu0 0
  %4602 = vmatprep.subr.bf16.mxu0 0
  %4603 = vmatpush1.bf16.msra.mxu0 0
  %4604 = vmatprep.subr.bf16.mxu0 0
  %4605 = vmatpush1.bf16.msra.mxu0 0
  %4606 = vmatprep.subr.bf16.mxu0 0
  %4607 = vmatpush1.bf16.msra.mxu0 0
  %4608 = vmatprep.subr.bf16.mxu0 0
  %4609 = vmatpush1.bf16.msra.mxu0 0
  %4610 = vmatprep.subr.bf16.mxu0 0
  %4611 = vmatpush1.bf16.msra.mxu0 0
  %4612 = vmatprep.subr.bf16.mxu0 0
  %4613 = vmatpush1.bf16.msra.mxu0 0
  %4614 = vmatprep.subr.bf16.mxu0 0
  %4615 = vmatpush1.bf16.msra.mxu0 0
  %4616 = vmatprep.subr.bf16.mxu0 0
  %4617 = vmatpush1.bf16.msra.mxu0 0
  %4618 = vmatprep.mubr.bf16.mxu0 0
  %4619 = vmatmul.mubr.bf16.gmra.mrb[0].mxu0 %v4566
  %v4620 = vpop.f32.mrb[0].mxu0
  %v4621 = vadd.f32 0.0, %v4620
  %v4622 = vpop.f32.mrb[0].mxu0
  %v4623 = vpop.f32.mrb[0].mxu0
  %v4624 = vadd.f32 0.0, %v4623
  %v4625 = vpop.f32.mrb[0].mxu0
  %4626 = vmatprep.mubr.bf16.mxu0 0
  %4627 = vmatmul.mubr.bf16.gmra.mrb[0].mxu0 %v4569
  %v4628 = vpop.f32.mrb[0].mxu0
  %v4629 = vadd.f32 0.0, %v4628
  %v4630 = vpop.f32.mrb[0].mxu0
  %v4631 = vpop.f32.mrb[0].mxu0
  %v4632 = vadd.f32 0.0, %v4631
  %v4633 = vpop.f32.mrb[0].mxu0
  %4634 = vmatprep.mubr.bf16.mxu0 0
  %4635 = vmatmul.mubr.bf16.gmra.mrb[0].mxu0 %v4572
  %v4636 = vpop.f32.mrb[0].mxu0
  %v4637 = vadd.f32 0.0, %v4636
  %v4638 = vpop.f32.mrb[0].mxu0
  %v4639 = vpop.f32.mrb[0].mxu0
  %v4640 = vadd.f32 0.0, %v4639
  %v4641 = vpop.f32.mrb[0].mxu0
  %4642 = vmatprep.mubr.bf16.mxu0 0
  %4643 = vmatmul.mubr.bf16.gmra.mrb[0].mxu0 %v4575
  %v4644 = vpop.f32.mrb[0].mxu0
  %v4645 = vadd.f32 0.0, %v4644
  %v4646 = vpop.f32.mrb[0].mxu0
  %v4647 = vpop.f32.mrb[0].mxu0
  %v4648 = vadd.f32 0.0, %v4647
  %v4649 = vpop.f32.mrb[0].mxu0
  %4650 = vmatprep.mubr.bf16.mxu0 0
  %4651 = vmatmul.mubr.bf16.gmra.mrb[0].mxu0 %v4578
  %v4652 = vpop.f32.mrb[0].mxu0
  %v4653 = vadd.f32 0.0, %v4652
  %v4654 = vpop.f32.mrb[0].mxu0
  %v4655 = vpop.f32.mrb[0].mxu0
  %v4656 = vadd.f32 0.0, %v4655
  %v4657 = vpop.f32.mrb[0].mxu0
  %4658 = vmatprep.mubr.bf16.mxu0 0
  %4659 = vmatmul.mubr.bf16.gmra.mrb[0].mxu0 %v4581
  %v4660 = vpop.f32.mrb[0].mxu0
  %v4661 = vadd.f32 0.0, %v4660
  %v4662 = vpop.f32.mrb[0].mxu0
  %v4663 = vpop.f32.mrb[0].mxu0
  %v4664 = vpop.f32.mrb[0].mxu0
  %4665 = vdwg.mxu0
  %v4666 = vpack.c.bf16 %v4624, %v4621
  %v4667 = vpack.c.bf16 %v4632, %v4629
  %v4668 = vpack.c.bf16 %v4640, %v4637
  %v4669 = vpack.c.bf16 %v4648, %v4645
  %v4670 = vpack.c.bf16 %v4656, %v4653
  %v4671 = vpack.c.bf16 %v4661, %v4661
  %v4673 = vshrl.u32 %v4666, 16
  %v4675 = vshll.u32 %v4666, 16
  %v4677 = vrot.slane %v4675, 1
  %v4678 = vor.u32 %v4673, %v4677
  %v4680 = vshll.u32 %v4667, 16
  %v4682 = vrot.slane %v4680, 1
  %v4683 = vsel %vm91, %v4678, %v4682
  %v4684 = vshrl.u32 %v4667, 16
  %v4686 = vor.u32 %v4684, %v4682
  %v4688 = vshll.u32 %v4668, 16
  %v4690 = vrot.slane %v4688, 1
  %v4691 = vsel %vm91, %v4686, %v4690
  %v4692 = vshrl.u32 %v4668, 16
  %v4694 = vor.u32 %v4692, %v4690
  %4695 = vrot.lane.b32.xlu0 %v4683, 32
  %v4696 = vpop.permute.xlu0 %4695
  %4697 = vrot.lane.b32.xlu0 %v4691, 32
  %v4698 = vpop.permute.xlu0 %4697
  %4699 = vrot.lane.b32.xlu0 %v4694, 32
  %v4700 = vpop.permute.xlu0 %4699
  %v4704 = vrot.slane %v4666, 1
  %v4705 = vrot.slane %v4667, 1
  %v4706 = vsel %vm146, %v4704, %v4705
  %v4707 = vrot.slane %v4668, 1
  %v4708 = vsel %vm146, %v4705, %v4707
  %4709 = vrot.lane.b32.xlu0 %v4706, 64
  %v4710 = vpop.permute.xlu0 %4709
  %4711 = vrot.lane.b32.xlu0 %v4708, 64
  %v4712 = vpop.permute.xlu0 %4711
  %4713 = vrot.lane.b32.xlu0 %v4707, 64
  %v4714 = vpop.permute.xlu0 %4713
  %v4715 = vrot.slane %v4673, 1
  %v4716 = vrot.slane %v4675, 2
  %v4717 = vor.u32 %v4715, %v4716
  %v4718 = vrot.slane %v4684, 1
  %v4719 = vrot.slane %v4680, 2
  %v4720 = vor.u32 %v4718, %v4719
  %v4721 = vsel %vm168, %v4717, %v4720
  %v4722 = vrot.slane %v4692, 1
  %v4723 = vrot.slane %v4688, 2
  %v4724 = vor.u32 %v4722, %v4723
  %v4725 = vsel %vm168, %v4720, %v4724
  %4726 = vrot.lane.b32.xlu0 %v4721, 96
  %v4727 = vpop.permute.xlu0 %4726
  %4728 = vrot.lane.b32.xlu0 %v4725, 96
  %v4729 = vpop.permute.xlu0 %4728
  %4730 = vrot.lane.b32.xlu0 %v4724, 96
  %v4731 = vpop.permute.xlu0 %4730
  %v4733 = vsel %vm293, %v4666, %v4696
  %v4735 = vsel %vm293, %v4667, %v4698
  %v4737 = vsel %vm293, %v4668, %v4700
  %v4739 = vsel %vm315, %v4733, %v4710
  %v4741 = vsel %vm315, %v4735, %v4712
  %v4743 = vsel %vm315, %v4737, %v4714
  %v4745 = vsel %vm337, %v4739, %v4727
  %v4748 = vsel %vm337, %v4741, %v4729
  %v4751 = vsel %vm337, %v4743, %v4731
  %v4753 = vshll.u32 %v4669, 16
  %v4755 = vrot.slane %v4753, 1
  %v4756 = vsel %vm91, %v4694, %v4755
  %v4757 = vshrl.u32 %v4669, 16
  %v4759 = vor.u32 %v4757, %v4755
  %v4761 = vshll.u32 %v4670, 16
  %v4763 = vrot.slane %v4761, 1
  %v4764 = vsel %vm91, %v4759, %v4763
  %v4765 = vshrl.u32 %v4670, 16
  %v4767 = vor.u32 %v4765, %v4763
  %v4769 = vshll.u32 %v4671, 16
  %v4771 = vrot.slane %v4769, 1
  %v4772 = vsel %vm91, %v4767, %v4771
  %v4773 = vshrl.u32 %v4671, 16
  %v4775 = vor.u32 %v4773, %v4771
  %4776 = vrot.lane.b32.xlu0 %v4756, 32
  %v4777 = vpop.permute.xlu0 %4776
  %4778 = vrot.lane.b32.xlu0 %v4764, 32
  %v4779 = vpop.permute.xlu0 %4778
  %4780 = vrot.lane.b32.xlu0 %v4772, 32
  %v4781 = vpop.permute.xlu0 %4780
  %4782 = vrot.lane.b32.xlu0 %v4775, 32
  %v4783 = vpop.permute.xlu0 %4782
  %v4787 = vrot.slane %v4669, 1
  %v4788 = vsel %vm146, %v4707, %v4787
  %v4789 = vrot.slane %v4670, 1
  %v4790 = vsel %vm146, %v4787, %v4789
  %v4791 = vrot.slane %v4671, 1
  %v4792 = vsel %vm146, %v4789, %v4791
  %4793 = vrot.lane.b32.xlu0 %v4788, 64
  %v4794 = vpop.permute.xlu0 %4793
  %4795 = vrot.lane.b32.xlu0 %v4790, 64
  %v4796 = vpop.permute.xlu0 %4795
  %4797 = vrot.lane.b32.xlu0 %v4792, 64
  %v4798 = vpop.permute.xlu0 %4797
  %4799 = vrot.lane.b32.xlu0 %v4791, 64
  %v4800 = vpop.permute.xlu0 %4799
  %v4801 = vrot.slane %v4757, 1
  %v4802 = vrot.slane %v4753, 2
  %v4803 = vor.u32 %v4801, %v4802
  %v4804 = vsel %vm168, %v4724, %v4803
  %v4805 = vrot.slane %v4765, 1
  %v4806 = vrot.slane %v4761, 2
  %v4807 = vor.u32 %v4805, %v4806
  %v4808 = vsel %vm168, %v4803, %v4807
  %v4809 = vrot.slane %v4773, 1
  %v4810 = vrot.slane %v4769, 2
  %v4811 = vor.u32 %v4809, %v4810
  %v4812 = vsel %vm168, %v4807, %v4811
  %4813 = vrot.lane.b32.xlu0 %v4804, 96
  %v4814 = vpop.permute.xlu0 %4813
  %4815 = vrot.lane.b32.xlu0 %v4808, 96
  %v4816 = vpop.permute.xlu0 %4815
  %4817 = vrot.lane.b32.xlu0 %v4812, 96
  %v4818 = vpop.permute.xlu0 %4817
  %4819 = vrot.lane.b32.xlu0 %v4811, 96
  %v4820 = vpop.permute.xlu0 %4819
  %v4822 = vsel %vm293, %v4668, %v4777
  %v4824 = vsel %vm293, %v4669, %v4779
  %v4826 = vsel %vm293, %v4670, %v4781
  %v4828 = vsel %vm293, %v4671, %v4783
  %v4830 = vsel %vm315, %v4822, %v4794
  %v4832 = vsel %vm315, %v4824, %v4796
  %v4834 = vsel %vm315, %v4826, %v4798
  %v4836 = vsel %vm315, %v4828, %v4800
  %v4838 = vsel %vm337, %v4830, %v4814
  %v4840 = vsel %vm337, %v4832, %v4816
  %v4842 = vsel %vm337, %v4834, %v4818
  %v4844 = vsel %vm337, %v4836, %v4820
  %v4845 = vshrl.u32 %v4838, 16
  %v4847 = vrot.slane %v4845, 1
  %v4848 = vshll.u32 %v4838, 16
  %v4850 = vrot.slane %v4848, 2
  %v4851 = vor.u32 %v4847, %v4850
  %v4852 = vshrl.u32 %v4840, 16
  %v4854 = vrot.slane %v4852, 1
  %v4855 = vshll.u32 %v4840, 16
  %v4857 = vrot.slane %v4855, 2
  %v4858 = vor.u32 %v4854, %v4857
  %v4859 = vsel %vm168, %v4851, %v4858
  %v4860 = vshrl.u32 %v4842, 16
  %v4862 = vrot.slane %v4860, 1
  %v4863 = vshll.u32 %v4842, 16
  %v4865 = vrot.slane %v4863, 2
  %v4866 = vor.u32 %v4862, %v4865
  %v4867 = vsel %vm168, %v4858, %v4866
  %v4868 = vshrl.u32 %v4844, 16
  %v4870 = vrot.slane %v4868, 1
  %v4871 = vshll.u32 %v4844, 16
  %v4873 = vrot.slane %v4871, 2
  %v4874 = vor.u32 %v4870, %v4873
  %v4875 = vsel %vm168, %v4866, %v4874
  %v4879 = vsel %vm3051, %v4751, %v4859
  %v4881 = vlaneseq
  %v4882 = vshrl.u32 %v4881, 7
  %v4883 = vsub.s32 7, %v4882
  %v4884 = vrot.slane %v21, %v4883
  %v4901 = vunpack.c.l.b16 %v4473
  %v4902 = vunpack.c.l.b16 %v4474
  %v4903 = vunpack.c.l.b16 %v4475
  %v4904 = vunpack.c.l.b16 %v4476
  %v4905 = vunpack.c.l.b16 %v4477
  %v4906 = vunpack.c.l.b16 %v4478
  %v4907 = vunpack.c.l.b16 %v4479
  %v4908 = vunpack.c.l.b16 %v4480
  %v4909 = vunpack.c.l.b16 %v4481
  %v4910 = vunpack.c.l.b16 %v4482
  %v4911 = vunpack.c.l.b16 %v4483
  %v4912 = vunpack.c.l.b16 %v4484
  %v4913 = vunpack.c.l.b16 %v4485
  %v4914 = vunpack.c.l.b16 %v4486
  %v4915 = vunpack.c.l.b16 %v4487
  %v4916 = vunpack.c.l.b16 %v4488
  %v4917 = vpack.c.b16 %v4902, %v4901
  %v4918 = vpack.c.b16 %v4904, %v4903
  %v4919 = vpack.c.b16 %v4906, %v4905
  %v4920 = vpack.c.b16 %v4908, %v4907
  %v4921 = vpack.c.b16 %v4910, %v4909
  %v4922 = vpack.c.b16 %v4912, %v4911
  %v4923 = vpack.c.b16 %v4914, %v4913
  %v4924 = vpack.c.b16 %v4916, %v4915
  %4933 = vmatprep.subr.bf16.mxu0 0
  %4934 = vmatpush1.bf16.msra.mxu0 %v4917
  %4935 = vmatprep.subr.bf16.mxu0 0
  %4936 = vmatpush1.bf16.msra.mxu0 %v4918
  %4937 = vmatprep.subr.bf16.mxu0 0
  %4938 = vmatpush1.bf16.msra.mxu0 %v4919
  %4939 = vmatprep.subr.bf16.mxu0 0
  %4940 = vmatpush1.bf16.msra.mxu0 %v4920
  %4941 = vmatprep.subr.bf16.mxu0 0
  %4942 = vmatpush1.bf16.msra.mxu0 %v4921
  %4943 = vmatprep.subr.bf16.mxu0 0
  %4944 = vmatpush1.bf16.msra.mxu0 %v4922
  %4945 = vmatprep.subr.bf16.mxu0 0
  %4946 = vmatpush1.bf16.msra.mxu0 %v4923
  %4947 = vmatprep.subr.bf16.mxu0 0
  %4948 = vmatpush1.bf16.msra.mxu0 %v4924
  %4949 = vmatprep.subr.bf16.mxu0 0
  %4950 = vmatpush1.bf16.msra.mxu0 0
  %4951 = vmatprep.subr.bf16.mxu0 0
  %4952 = vmatpush1.bf16.msra.mxu0 0
  %4953 = vmatprep.subr.bf16.mxu0 0
  %4954 = vmatpush1.bf16.msra.mxu0 0
  %4955 = vmatprep.subr.bf16.mxu0 0
  %4956 = vmatpush1.bf16.msra.mxu0 0
  %4957 = vmatprep.subr.bf16.mxu0 0
  %4958 = vmatpush1.bf16.msra.mxu0 0
  %4959 = vmatprep.subr.bf16.mxu0 0
  %4960 = vmatpush1.bf16.msra.mxu0 0
  %4961 = vmatprep.subr.bf16.mxu0 0
  %4962 = vmatpush1.bf16.msra.mxu0 0
  %4963 = vmatprep.subr.bf16.mxu0 0
  %4964 = vmatpush1.bf16.msra.mxu0 0
  %4965 = vmatprep.mubr.bf16.mxu0 0
  %4966 = vmatmul.mubr.bf16.gmra.mrb[0].mxu0 %v4745
  %v4967 = vpop.f32.mrb[0].mxu0
  %v4968 = vadd.f32 %v4884, %v4967
  %v4969 = vpop.f32.mrb[0].mxu0
  %v4970 = vpop.f32.mrb[0].mxu0
  %v4971 = vadd.f32 %v4884, %v4970
  %v4972 = vpop.f32.mrb[0].mxu0
  %4973 = vmatprep.mubr.bf16.mxu0 0
  %4974 = vmatmul.mubr.bf16.gmra.mrb[0].mxu0 %v4748
  %v4975 = vpop.f32.mrb[0].mxu0
  %v4976 = vadd.f32 %v4884, %v4975
  %v4977 = vpop.f32.mrb[0].mxu0
  %v4978 = vpop.f32.mrb[0].mxu0
  %v4979 = vadd.f32 %v4884, %v4978
  %v4980 = vpop.f32.mrb[0].mxu0
  %4981 = vmatprep.mubr.bf16.mxu0 0
  %4982 = vmatmul.mubr.bf16.gmra.mrb[0].mxu0 %v4879
  %v4983 = vpop.f32.mrb[0].mxu0
  %v4984 = vadd.f32 %v4884, %v4983
  %v4985 = vpop.f32.mrb[0].mxu0
  %v4986 = vpop.f32.mrb[0].mxu0
  %v4987 = vadd.f32 %v4884, %v4986
  %v4988 = vpop.f32.mrb[0].mxu0
  %4989 = vmatprep.mubr.bf16.mxu0 0
  %4990 = vmatmul.mubr.bf16.gmra.mrb[0].mxu0 %v4867
  %v4991 = vpop.f32.mrb[0].mxu0
  %v4992 = vadd.f32 %v4884, %v4991
  %v4993 = vpop.f32.mrb[0].mxu0
  %v4994 = vpop.f32.mrb[0].mxu0
  %v4995 = vadd.f32 %v4884, %v4994
  %v4996 = vpop.f32.mrb[0].mxu0
  %4997 = vmatprep.mubr.bf16.mxu0 0
  %4998 = vmatmul.mubr.bf16.gmra.mrb[0].mxu0 %v4875
  %v4999 = vpop.f32.mrb[0].mxu0
  %v5000 = vadd.f32 %v4884, %v4999
  %v5001 = vpop.f32.mrb[0].mxu0
  %v5002 = vpop.f32.mrb[0].mxu0
  %v5003 = vadd.f32 %v4884, %v5002
  %v5004 = vpop.f32.mrb[0].mxu0
  %5005 = vdwg.mxu0
  %v5006 = vadd.f32 %v4968, %v4971
  %v5007 = vadd.f32 %v5006, %v4976
  %v5008 = vadd.f32 %v5007, %v4979
  %v5009 = vadd.f32 %v5008, %v4984
  %v5010 = vadd.f32 %v5009, %v4987
  %v5011 = vadd.f32 %v5010, %v4992
  %v5012 = vadd.f32 %v5011, %v4995
  %v5013 = vadd.f32 %v5012, %v5000
  %v5014 = vadd.f32 %v5013, %v5003
  %v5015 = vrot.slane %v5014, 4
  %v5016 = vadd.f32 %v5014, %v5015
  %v5017 = vrot.slane %v5016, 2
  %v5018 = vadd.f32 %v5016, %v5017
  %v5019 = vrot.slane %v5018, 1
  %v5020 = vadd.f32 %v5018, %v5019
  %v5021 = vmul.f32 %v5020, %v2012
  %v5022 = vsub.f32 %v4968, %v5021
  %v5023 = vsub.f32 %v4971, %v5021
  %v5024 = vsub.f32 %v4976, %v5021
  %v5025 = vsub.f32 %v4979, %v5021
  %v5026 = vsub.f32 %v4984, %v5021
  %v5027 = vsub.f32 %v4987, %v5021
  %v5028 = vsub.f32 %v4992, %v5021
  %v5029 = vsub.f32 %v4995, %v5021
  %v5030 = vsub.f32 %v5000, %v5021
  %v5031 = vsub.f32 %v5003, %v5021
  %v5032 = vmul.f32 %v5022, %v5022
  %v5033 = vmul.f32 %v5023, %v5023
  %v5034 = vmul.f32 %v5024, %v5024
  %v5035 = vmul.f32 %v5025, %v5025
  %v5036 = vmul.f32 %v5026, %v5026
  %v5037 = vmul.f32 %v5027, %v5027
  %v5038 = vmul.f32 %v5028, %v5028
  %v5039 = vmul.f32 %v5029, %v5029
  %v5040 = vmul.f32 %v5030, %v5030
  %v5041 = vmul.f32 %v5031, %v5031
  %v5042 = vadd.f32 %v5032, %v5033
  %v5043 = vadd.f32 %v5042, %v5034
  %v5044 = vadd.f32 %v5043, %v5035
  %v5045 = vadd.f32 %v5044, %v5036
  %v5046 = vadd.f32 %v5045, %v5037
  %v5047 = vadd.f32 %v5046, %v5038
  %v5048 = vadd.f32 %v5047, %v5039
  %v5049 = vadd.f32 %v5048, %v5040
  %v5050 = vadd.f32 %v5049, %v5041
  %v5051 = vrot.slane %v5050, 4
  %v5052 = vadd.f32 %v5050, %v5051
  %v5053 = vrot.slane %v5052, 2
  %v5054 = vadd.f32 %v5052, %v5053
  %v5055 = vrot.slane %v5054, 1
  %v5056 = vadd.f32 %v5054, %v5055
  %v5057 = vmul.f32 %v5056, %v2012
  %v5058 = vadd.f32 %v5057, 1e-05
  %v5059 = vrsqrt.pop %v5058
  %v5060 = vmul.f32 %v5022, %v5059
  %v5061 = vmul.f32 %v5023, %v5059
  %v5062 = vmul.f32 %v5024, %v5059
  %v5063 = vmul.f32 %v5025, %v5059
  %v5064 = vmul.f32 %v5026, %v5059
  %v5065 = vmul.f32 %v5027, %v5059
  %v5066 = vmul.f32 %v5028, %v5059
  %v5067 = vmul.f32 %v5029, %v5059
  %v5068 = vmul.f32 %v5030, %v5059
  %v5069 = vmul.f32 %v5031, %v5059
  %v5070 = vlaneseq
  %v5071 = vshrl.u32 %v5070, 7
  %v5072 = vsub.s32 7, %v5071
  %v5073 = vrot.slane %v23, %v5072
  %v5074 = vmul.f32 %v5060, %v5073
  %v5075 = vmul.f32 %v5061, %v5073
  %v5076 = vmul.f32 %v5062, %v5073
  %v5077 = vmul.f32 %v5063, %v5073
  %v5078 = vmul.f32 %v5064, %v5073
  %v5079 = vmul.f32 %v5065, %v5073
  %v5080 = vmul.f32 %v5066, %v5073
  %v5081 = vmul.f32 %v5067, %v5073
  %v5082 = vmul.f32 %v5068, %v5073
  %v5083 = vmul.f32 %v5069, %v5073
  %v5084 = vlaneseq
  %v5085 = vshrl.u32 %v5084, 7
  %v5086 = vsub.s32 7, %v5085
  %v5087 = vrot.slane %v25, %v5086
  %v5088 = vadd.f32 %v5074, %v5087
  %v5089 = vadd.f32 %v5075, %v5087
  %v5090 = vadd.f32 %v5076, %v5087
  %v5091 = vadd.f32 %v5077, %v5087
  %v5092 = vadd.f32 %v5078, %v5087
  %v5093 = vadd.f32 %v5079, %v5087
  %v5094 = vadd.f32 %v5080, %v5087
  %v5095 = vadd.f32 %v5081, %v5087
  %v5096 = vadd.f32 %v5082, %v5087
  %v5097 = vadd.f32 %v5083, %v5087
  %v5098 = vmax.f32 %v5088, 0.0
  %v5099 = vmax.f32 %v5089, 0.0
  %v5100 = vmax.f32 %v5090, 0.0
  %v5101 = vmax.f32 %v5091, 0.0
  %v5102 = vmax.f32 %v5092, 0.0
  %v5103 = vmax.f32 %v5093, 0.0
  %v5104 = vmax.f32 %v5094, 0.0
  %v5105 = vmax.f32 %v5095, 0.0
  %v5106 = vmax.f32 %v5096, 0.0
  %v5107 = vmax.f32 %v5097, 0.0
  %v5108 = vpack.c.bf16 %v5099, %v5098
  %v5109 = vpack.c.bf16 %v5101, %v5100
  %v5110 = vpack.c.bf16 %v5103, %v5102
  %v5111 = vpack.c.bf16 %v5105, %v5104
  %v5112 = vpack.c.bf16 %v5107, %v5106
  %v5113 = vld [vmem:[%s1 + $0x308] sm:$0xf]
  %v5114 = vld [vmem:[%s1 + $0x30c] sm:$0xf]
  %v5115 = vld [vmem:[%s1 + $0x310] sm:$0xf]
  %v5116 = vld [vmem:[%s1 + $0x314] sm:$0xf]
  %v5117 = vld [vmem:[%s1 + $0x318] sm:$0xf]
  %v5118 = vld [vmem:[%s1 + $0x31c] sm:$0xf]
  %v5119 = vld [vmem:[%s1 + $0x320] sm:$0xf]
  %v5120 = vld [vmem:[%s1 + $0x324] sm:$0xf]
  %v5121 = vadd.s32 %v1542, 88
  %v5122 = vadd.s32 %v1542, 96
  %v5123 = vadd.s32 %v1542, 104
  %v5124 = vadd.s32 %v1542, 112
  %v5125 = vadd.s32 %v1542, 120
  %v5126 = vadd.s32 %v1542, 128
  %v5127 = vadd.s32 %v1542, 136
  %v5128 = vadd.s32 %v1542, 144
  %v5129 = vadd.s32 %v1542, 152
  %v5130 = vadd.s32 %v1542, 160
  %vm5131 = vmand %vm4009, %vm4508
  %vm5132 = vcmp.eq.s32.totalorder %v5121, %v4013
  %vm5133 = vcmp.eq.s32.totalorder %v5122, %v4013
  %vm5134 = vcmp.eq.s32.totalorder %v5123, %v4013
  %vm5135 = vcmp.eq.s32.totalorder %v5124, %v4013
  %vm5136 = vcmp.eq.s32.totalorder %v5125, %v4013
  %vm5137 = vcmp.eq.s32.totalorder %v5126, %v4013
  %vm5138 = vcmp.eq.s32.totalorder %v5127, %v4013
  %vm5139 = vcmp.eq.s32.totalorder %v5128, %v4013
  %vm5140 = vcmp.eq.s32.totalorder %v5129, %v4013
  %vm5141 = vcmp.eq.s32.totalorder %v5130, %v4013
  %vm5142 = vmand %vm5131, %vm4014
  %vm5143 = vmand %vm5131, %vm4015
  %vm5144 = vmand %vm5131, %vm4016
  %vm5145 = vmand %vm5131, %vm4017
  %vm5146 = vmand %vm5131, %vm4018
  %vm5147 = vmand %vm5131, %vm4019
  %vm5148 = vmand %vm5131, %vm4491
  %vm5149 = vmand %vm5131, %vm4492
  %vm5150 = vmand %vm5131, %vm4493
  %vm5151 = vmand %vm5131, %vm4494
  %vm5152 = vmand %vm5131, %vm4495
  %vm5153 = vmand %vm5131, %vm5132
  %vm5154 = vmand %vm5131, %vm5133
  %vm5155 = vmand %vm5131, %vm5134
  %vm5156 = vmand %vm5131, %vm5135
  %vm5157 = vmand %vm5131, %vm5136
  %vm5158 = vmand %vm5131, %vm5137
  %vm5159 = vmand %vm5131, %vm5138
  %vm5160 = vmand %vm5131, %vm5139
  %vm5161 = vmand %vm5131, %vm5140
  %vm5162 = vmand %vm5131, %vm5141
  %vm5163 = vcmp.ge.s32.totalorder %v1553, 40
  %vm5164 = vcmp.lt.s32.totalorder %v1553, 80
  %vm5165 = vmand %vm5163, %vm5164
  %v5166 = vsub.s32 %v1553, 40
  %v5167 = vmul.u32 %v5166, 2
  %v5168 = vadd.s32 %v5167, 2
  %v5169 = vadd.s32 %v5168, 83
  %vm5170 = vcmp.eq.s32.totalorder %v1542, %v5169
  %vm5171 = vcmp.eq.s32.totalorder %v1543, %v5169
  %vm5172 = vcmp.eq.s32.totalorder %v1544, %v5169
  %vm5173 = vcmp.eq.s32.totalorder %v1545, %v5169
  %vm5174 = vcmp.eq.s32.totalorder %v1546, %v5169
  %vm5175 = vcmp.eq.s32.totalorder %v1547, %v5169
  %vm5176 = vcmp.eq.s32.totalorder %v1548, %v5169
  %vm5177 = vcmp.eq.s32.totalorder %v1549, %v5169
  %vm5178 = vcmp.eq.s32.totalorder %v1550, %v5169
  %vm5179 = vcmp.eq.s32.totalorder %v1551, %v5169
  %vm5180 = vcmp.eq.s32.totalorder %v4489, %v5169
  %vm5181 = vcmp.eq.s32.totalorder %v5121, %v5169
  %vm5182 = vcmp.eq.s32.totalorder %v5122, %v5169
  %vm5183 = vcmp.eq.s32.totalorder %v5123, %v5169
  %vm5184 = vcmp.eq.s32.totalorder %v5124, %v5169
  %vm5185 = vcmp.eq.s32.totalorder %v5125, %v5169
  %vm5186 = vcmp.eq.s32.totalorder %v5126, %v5169
  %vm5187 = vcmp.eq.s32.totalorder %v5127, %v5169
  %vm5188 = vcmp.eq.s32.totalorder %v5128, %v5169
  %vm5189 = vcmp.eq.s32.totalorder %v5129, %v5169
  %vm5190 = vcmp.eq.s32.totalorder %v5130, %v5169
  %vm5191 = vmand %vm5165, %vm5170
  %vm5192 = vmand %vm5165, %vm5171
  %vm5193 = vmand %vm5165, %vm5172
  %vm5194 = vmand %vm5165, %vm5173
  %vm5195 = vmand %vm5165, %vm5174
  %vm5196 = vmand %vm5165, %vm5175
  %vm5197 = vmand %vm5165, %vm5176
  %vm5198 = vmand %vm5165, %vm5177
  %vm5199 = vmand %vm5165, %vm5178
  %vm5200 = vmand %vm5165, %vm5179
  %vm5201 = vmand %vm5165, %vm5180
  %vm5202 = vmand %vm5165, %vm5181
  %vm5203 = vmand %vm5165, %vm5182
  %vm5204 = vmand %vm5165, %vm5183
  %vm5205 = vmand %vm5165, %vm5184
  %vm5206 = vmand %vm5165, %vm5185
  %vm5207 = vmand %vm5165, %vm5186
  %vm5208 = vmand %vm5165, %vm5187
  %vm5209 = vmand %vm5165, %vm5188
  %vm5210 = vmand %vm5165, %vm5189
  %vm5211 = vmand %vm5165, %vm5190
  %vm5212 = vmor %vm5142, %vm5191
  %vm5213 = vmor %vm5143, %vm5192
  %vm5214 = vmor %vm5144, %vm5193
  %vm5215 = vmor %vm5145, %vm5194
  %vm5216 = vmor %vm5146, %vm5195
  %vm5217 = vmor %vm5147, %vm5196
  %vm5218 = vmor %vm5148, %vm5197
  %vm5219 = vmor %vm5149, %vm5198
  %vm5220 = vmor %vm5150, %vm5199
  %vm5221 = vmor %vm5151, %vm5200
  %vm5222 = vmor %vm5152, %vm5201
  %vm5223 = vmor %vm5153, %vm5202
  %vm5224 = vmor %vm5154, %vm5203
  %vm5225 = vmor %vm5155, %vm5204
  %vm5226 = vmor %vm5156, %vm5205
  %vm5227 = vmor %vm5157, %vm5206
  %vm5228 = vmor %vm5158, %vm5207
  %vm5229 = vmor %vm5159, %vm5208
  %vm5230 = vmor %vm5160, %vm5209
  %vm5231 = vmor %vm5161, %vm5210
  %vm5232 = vmor %vm5162, %vm5211
  %v5233 = vsel %vm5212, 1.0, 0.0
  %v5234 = vsel %vm5213, 1.0, 0.0
  %v5235 = vsel %vm5214, 1.0, 0.0
  %v5236 = vsel %vm5215, 1.0, 0.0
  %v5237 = vsel %vm5216, 1.0, 0.0
  %v5238 = vsel %vm5217, 1.0, 0.0
  %v5239 = vsel %vm5218, 1.0, 0.0
  %v5240 = vsel %vm5219, 1.0, 0.0
  %v5241 = vsel %vm5220, 1.0, 0.0
  %v5242 = vsel %vm5221, 1.0, 0.0
  %v5243 = vsel %vm5222, 1.0, 0.0
  %v5244 = vsel %vm5223, 1.0, 0.0
  %v5245 = vsel %vm5224, 1.0, 0.0
  %v5246 = vsel %vm5225, 1.0, 0.0
  %v5247 = vsel %vm5226, 1.0, 0.0
  %v5248 = vsel %vm5227, 1.0, 0.0
  %v5249 = vsel %vm5228, 1.0, 0.0
  %v5250 = vsel %vm5229, 1.0, 0.0
  %v5251 = vsel %vm5230, 1.0, 0.0
  %v5252 = vsel %vm5231, 1.0, 0.0
  %v5253 = vsel %vm5232, 1.0, 0.0
  %v5254 = vpack.c.bf16 %v5234, %v5233
  %v5255 = vpack.c.bf16 %v5236, %v5235
  %v5256 = vpack.c.bf16 %v5238, %v5237
  %v5257 = vpack.c.bf16 %v5240, %v5239
  %v5258 = vpack.c.bf16 %v5242, %v5241
  %v5259 = vpack.c.bf16 %v5244, %v5243
  %v5260 = vpack.c.bf16 %v5246, %v5245
  %v5261 = vpack.c.bf16 %v5248, %v5247
  %v5262 = vpack.c.bf16 %v5250, %v5249
  %v5263 = vpack.c.bf16 %v5252, %v5251
  %v5264 = vpack.c.bf16 %v5253, %v5253
  %v5266 = vsel %vm326, %v5254, 0
  %v5269 = vsel %vm326, %v5255, 0
  %v5272 = vsel %vm326, %v5256, 0
  %v5275 = vsel %vm326, %v5257, 0
  %v5278 = vsel %vm326, %v5258, 0
  %v5281 = vsel %vm326, %v5259, 0
  %v5284 = vsel %vm326, %v5260, 0
  %v5287 = vsel %vm326, %v5261, 0
  %v5290 = vsel %vm326, %v5262, 0
  %v5293 = vsel %vm326, %v5263, 0
  %v5296 = vsel %vm326, %v5264, 0
  %5298 = vmatprep.subr.bf16.mxu0 0
  %5299 = vmatpush1.bf16.msra.mxu0 %v5108
  %5300 = vmatprep.subr.bf16.mxu0 0
  %5301 = vmatpush1.bf16.msra.mxu0 %v5109
  %5302 = vmatprep.subr.bf16.mxu0 0
  %5303 = vmatpush1.bf16.msra.mxu0 %v5110
  %5304 = vmatprep.subr.bf16.mxu0 0
  %5305 = vmatpush1.bf16.msra.mxu0 %v5111
  %5306 = vmatprep.subr.bf16.mxu0 0
  %5307 = vmatpush1.bf16.msra.mxu0 %v5112
  %5308 = vmatprep.subr.bf16.mxu0 0
  %5309 = vmatpush1.bf16.msra.mxu0 0
  %5310 = vmatprep.subr.bf16.mxu0 0
  %5311 = vmatpush1.bf16.msra.mxu0 0
  %5312 = vmatprep.subr.bf16.mxu0 0
  %5313 = vmatpush1.bf16.msra.mxu0 0
  %5314 = vmatprep.subr.bf16.mxu0 0
  %5315 = vmatpush1.bf16.msra.mxu0 0
  %5316 = vmatprep.subr.bf16.mxu0 0
  %5317 = vmatpush1.bf16.msra.mxu0 0
  %5318 = vmatprep.subr.bf16.mxu0 0
  %5319 = vmatpush1.bf16.msra.mxu0 0
  %5320 = vmatprep.subr.bf16.mxu0 0
  %5321 = vmatpush1.bf16.msra.mxu0 0
  %5322 = vmatprep.subr.bf16.mxu0 0
  %5323 = vmatpush1.bf16.msra.mxu0 0
  %5324 = vmatprep.subr.bf16.mxu0 0
  %5325 = vmatpush1.bf16.msra.mxu0 0
  %5326 = vmatprep.subr.bf16.mxu0 0
  %5327 = vmatpush1.bf16.msra.mxu0 0
  %5328 = vmatprep.subr.bf16.mxu0 0
  %5329 = vmatpush1.bf16.msra.mxu0 0
  %5330 = vmatprep.mubr.bf16.mxu0 0
  %5331 = vmatmul.mubr.bf16.gmra.mrb[0].mxu0 %v5266
  %v5332 = vpop.f32.mrb[0].mxu0
  %v5333 = vadd.f32 0.0, %v5332
  %v5334 = vpop.f32.mrb[0].mxu0
  %v5335 = vpop.f32.mrb[0].mxu0
  %v5336 = vadd.f32 0.0, %v5335
  %v5337 = vpop.f32.mrb[0].mxu0
  %5338 = vmatprep.mubr.bf16.mxu0 0
  %5339 = vmatmul.mubr.bf16.gmra.mrb[0].mxu0 %v5269
  %v5340 = vpop.f32.mrb[0].mxu0
  %v5341 = vadd.f32 0.0, %v5340
  %v5342 = vpop.f32.mrb[0].mxu0
  %v5343 = vpop.f32.mrb[0].mxu0
  %v5344 = vadd.f32 0.0, %v5343
  %v5345 = vpop.f32.mrb[0].mxu0
  %5346 = vmatprep.mubr.bf16.mxu0 0
  %5347 = vmatmul.mubr.bf16.gmra.mrb[0].mxu0 %v5272
  %v5348 = vpop.f32.mrb[0].mxu0
  %v5349 = vadd.f32 0.0, %v5348
  %v5350 = vpop.f32.mrb[0].mxu0
  %v5351 = vpop.f32.mrb[0].mxu0
  %v5352 = vadd.f32 0.0, %v5351
  %v5353 = vpop.f32.mrb[0].mxu0
  %5354 = vmatprep.mubr.bf16.mxu0 0
  %5355 = vmatmul.mubr.bf16.gmra.mrb[0].mxu0 %v5275
  %v5356 = vpop.f32.mrb[0].mxu0
  %v5357 = vadd.f32 0.0, %v5356
  %v5358 = vpop.f32.mrb[0].mxu0
  %v5359 = vpop.f32.mrb[0].mxu0
  %v5360 = vadd.f32 0.0, %v5359
  %v5361 = vpop.f32.mrb[0].mxu0
  %5362 = vmatprep.mubr.bf16.mxu0 0
  %5363 = vmatmul.mubr.bf16.gmra.mrb[0].mxu0 %v5278
  %v5364 = vpop.f32.mrb[0].mxu0
  %v5365 = vadd.f32 0.0, %v5364
  %v5366 = vpop.f32.mrb[0].mxu0
  %v5367 = vpop.f32.mrb[0].mxu0
  %v5368 = vadd.f32 0.0, %v5367
  %v5369 = vpop.f32.mrb[0].mxu0
  %5370 = vmatprep.mubr.bf16.mxu0 0
  %5371 = vmatmul.mubr.bf16.gmra.mrb[0].mxu0 %v5281
  %v5372 = vpop.f32.mrb[0].mxu0
  %v5373 = vadd.f32 0.0, %v5372
  %v5374 = vpop.f32.mrb[0].mxu0
  %v5375 = vpop.f32.mrb[0].mxu0
  %v5376 = vadd.f32 0.0, %v5375
  %v5377 = vpop.f32.mrb[0].mxu0
  %5378 = vmatprep.mubr.bf16.mxu0 0
  %5379 = vmatmul.mubr.bf16.gmra.mrb[0].mxu0 %v5284
  %v5380 = vpop.f32.mrb[0].mxu0
  %v5381 = vadd.f32 0.0, %v5380
  %v5382 = vpop.f32.mrb[0].mxu0
  %v5383 = vpop.f32.mrb[0].mxu0
  %v5384 = vadd.f32 0.0, %v5383
  %v5385 = vpop.f32.mrb[0].mxu0
  %5386 = vmatprep.mubr.bf16.mxu0 0
  %5387 = vmatmul.mubr.bf16.gmra.mrb[0].mxu0 %v5287
  %v5388 = vpop.f32.mrb[0].mxu0
  %v5389 = vadd.f32 0.0, %v5388
  %v5390 = vpop.f32.mrb[0].mxu0
  %v5391 = vpop.f32.mrb[0].mxu0
  %v5392 = vadd.f32 0.0, %v5391
  %v5393 = vpop.f32.mrb[0].mxu0
  %5394 = vmatprep.mubr.bf16.mxu0 0
  %5395 = vmatmul.mubr.bf16.gmra.mrb[0].mxu0 %v5290
  %v5396 = vpop.f32.mrb[0].mxu0
  %v5397 = vadd.f32 0.0, %v5396
  %v5398 = vpop.f32.mrb[0].mxu0
  %v5399 = vpop.f32.mrb[0].mxu0
  %v5400 = vadd.f32 0.0, %v5399
  %v5401 = vpop.f32.mrb[0].mxu0
  %5402 = vmatprep.mubr.bf16.mxu0 0
  %5403 = vmatmul.mubr.bf16.gmra.mrb[0].mxu0 %v5293
  %v5404 = vpop.f32.mrb[0].mxu0
  %v5405 = vadd.f32 0.0, %v5404
  %v5406 = vpop.f32.mrb[0].mxu0
  %v5407 = vpop.f32.mrb[0].mxu0
  %v5408 = vadd.f32 0.0, %v5407
  %v5409 = vpop.f32.mrb[0].mxu0
  %5410 = vmatprep.mubr.bf16.mxu0 0
  %5411 = vmatmul.mubr.bf16.gmra.mrb[0].mxu0 %v5296
  %v5412 = vpop.f32.mrb[0].mxu0
  %v5413 = vadd.f32 0.0, %v5412
  %v5414 = vpop.f32.mrb[0].mxu0
  %v5415 = vpop.f32.mrb[0].mxu0
  %v5416 = vpop.f32.mrb[0].mxu0
  %5417 = vdwg.mxu0
  %v5418 = vpack.c.bf16 %v5336, %v5333
  %v5419 = vpack.c.bf16 %v5344, %v5341
  %v5420 = vpack.c.bf16 %v5352, %v5349
  %v5421 = vpack.c.bf16 %v5360, %v5357
  %v5422 = vpack.c.bf16 %v5368, %v5365
  %v5423 = vpack.c.bf16 %v5376, %v5373
  %v5424 = vpack.c.bf16 %v5384, %v5381
  %v5425 = vpack.c.bf16 %v5392, %v5389
  %v5426 = vpack.c.bf16 %v5400, %v5397
  %v5427 = vpack.c.bf16 %v5408, %v5405
  %v5428 = vpack.c.bf16 %v5413, %v5413
  %v5430 = vshrl.u32 %v5418, 16
  %v5432 = vshll.u32 %v5418, 16
  %v5434 = vrot.slane %v5432, 1
  %v5435 = vor.u32 %v5430, %v5434
  %v5437 = vshll.u32 %v5419, 16
  %v5439 = vrot.slane %v5437, 1
  %v5440 = vsel %vm91, %v5435, %v5439
  %v5441 = vshrl.u32 %v5419, 16
  %v5443 = vor.u32 %v5441, %v5439
  %v5445 = vshll.u32 %v5420, 16
  %v5447 = vrot.slane %v5445, 1
  %v5448 = vsel %vm91, %v5443, %v5447
  %v5449 = vshrl.u32 %v5420, 16
  %v5451 = vor.u32 %v5449, %v5447
  %v5453 = vshll.u32 %v5421, 16
  %v5455 = vrot.slane %v5453, 1
  %v5456 = vsel %vm91, %v5451, %v5455
  %v5457 = vshrl.u32 %v5421, 16
  %v5459 = vor.u32 %v5457, %v5455
  %v5461 = vshll.u32 %v5422, 16
  %v5463 = vrot.slane %v5461, 1
  %v5464 = vsel %vm91, %v5459, %v5463
  %v5465 = vshrl.u32 %v5422, 16
  %v5467 = vor.u32 %v5465, %v5463
  %v5469 = vshll.u32 %v5423, 16
  %v5471 = vrot.slane %v5469, 1
  %v5472 = vsel %vm91, %v5467, %v5471
  %5473 = vrot.lane.b32.xlu0 %v5440, 16
  %v5474 = vpop.permute.xlu0 %5473
  %5475 = vrot.lane.b32.xlu0 %v5448, 16
  %v5476 = vpop.permute.xlu0 %5475
  %5477 = vrot.lane.b32.xlu0 %v5456, 16
  %v5478 = vpop.permute.xlu0 %5477
  %5479 = vrot.lane.b32.xlu0 %v5464, 16
  %v5480 = vpop.permute.xlu0 %5479
  %5481 = vrot.lane.b32.xlu0 %v5472, 16
  %v5482 = vpop.permute.xlu0 %5481
  %v5489 = vrot.slane %v5418, 1
  %v5490 = vrot.slane %v5419, 1
  %v5491 = vsel %vm146, %v5489, %v5490
  %v5492 = vrot.slane %v5420, 1
  %v5493 = vsel %vm146, %v5490, %v5492
  %v5494 = vrot.slane %v5421, 1
  %v5495 = vsel %vm146, %v5492, %v5494
  %v5496 = vrot.slane %v5422, 1
  %v5497 = vsel %vm146, %v5494, %v5496
  %v5498 = vrot.slane %v5423, 1
  %v5499 = vsel %vm146, %v5496, %v5498
  %5500 = vrot.lane.b32.xlu0 %v5491, 32
  %v5501 = vpop.permute.xlu0 %5500
  %5502 = vrot.lane.b32.xlu0 %v5493, 32
  %v5503 = vpop.permute.xlu0 %5502
  %5504 = vrot.lane.b32.xlu0 %v5495, 32
  %v5505 = vpop.permute.xlu0 %5504
  %5506 = vrot.lane.b32.xlu0 %v5497, 32
  %v5507 = vpop.permute.xlu0 %5506
  %5508 = vrot.lane.b32.xlu0 %v5499, 32
  %v5509 = vpop.permute.xlu0 %5508
  %v5510 = vrot.slane %v5430, 1
  %v5511 = vrot.slane %v5432, 2
  %v5512 = vor.u32 %v5510, %v5511
  %v5513 = vrot.slane %v5441, 1
  %v5514 = vrot.slane %v5437, 2
  %v5515 = vor.u32 %v5513, %v5514
  %v5516 = vsel %vm168, %v5512, %v5515
  %v5517 = vrot.slane %v5449, 1
  %v5518 = vrot.slane %v5445, 2
  %v5519 = vor.u32 %v5517, %v5518
  %v5520 = vsel %vm168, %v5515, %v5519
  %v5521 = vrot.slane %v5457, 1
  %v5522 = vrot.slane %v5453, 2
  %v5523 = vor.u32 %v5521, %v5522
  %v5524 = vsel %vm168, %v5519, %v5523
  %v5525 = vrot.slane %v5465, 1
  %v5526 = vrot.slane %v5461, 2
  %v5527 = vor.u32 %v5525, %v5526
  %v5528 = vsel %vm168, %v5523, %v5527
  %v5529 = vshrl.u32 %v5423, 16
  %v5531 = vrot.slane %v5529, 1
  %v5532 = vrot.slane %v5469, 2
  %v5533 = vor.u32 %v5531, %v5532
  %v5534 = vsel %vm168, %v5527, %v5533
  %5535 = vrot.lane.b32.xlu0 %v5516, 48
  %v5536 = vpop.permute.xlu0 %5535
  %5537 = vrot.lane.b32.xlu0 %v5520, 48
  %v5538 = vpop.permute.xlu0 %5537
  %5539 = vrot.lane.b32.xlu0 %v5524, 48
  %v5540 = vpop.permute.xlu0 %5539
  %5541 = vrot.lane.b32.xlu0 %v5528, 48
  %v5542 = vpop.permute.xlu0 %5541
  %5543 = vrot.lane.b32.xlu0 %v5534, 48
  %v5544 = vpop.permute.xlu0 %5543
  %v5546 = vsel %vm282, %v5418, %v5474
  %v5548 = vsel %vm282, %v5419, %v5476
  %v5550 = vsel %vm282, %v5420, %v5478
  %v5552 = vsel %vm282, %v5421, %v5480
  %v5554 = vsel %vm282, %v5422, %v5482
  %v5556 = vsel %vm293, %v5546, %v5501
  %v5558 = vsel %vm293, %v5548, %v5503
  %v5560 = vsel %vm293, %v5550, %v5505
  %v5562 = vsel %vm293, %v5552, %v5507
  %v5564 = vsel %vm293, %v5554, %v5509
  %v5566 = vsel %vm304, %v5556, %v5536
  %v5568 = vsel %vm304, %v5558, %v5538
  %v5570 = vsel %vm304, %v5560, %v5540
  %v5572 = vsel %vm304, %v5562, %v5542
  %v5574 = vsel %vm304, %v5564, %v5544
  %v5575 = vor.u32 %v5529, %v5471
  %v5577 = vshll.u32 %v5424, 16
  %v5579 = vrot.slane %v5577, 1
  %v5580 = vsel %vm91, %v5575, %v5579
  %v5581 = vshrl.u32 %v5424, 16
  %v5583 = vor.u32 %v5581, %v5579
  %v5585 = vshll.u32 %v5425, 16
  %v5587 = vrot.slane %v5585, 1
  %v5588 = vsel %vm91, %v5583, %v5587
  %v5589 = vshrl.u32 %v5425, 16
  %v5591 = vor.u32 %v5589, %v5587
  %v5593 = vshll.u32 %v5426, 16
  %v5595 = vrot.slane %v5593, 1
  %v5596 = vsel %vm91, %v5591, %v5595
  %v5597 = vshrl.u32 %v5426, 16
  %v5599 = vor.u32 %v5597, %v5595
  %v5601 = vshll.u32 %v5427, 16
  %v5603 = vrot.slane %v5601, 1
  %v5604 = vsel %vm91, %v5599, %v5603
  %v5605 = vshrl.u32 %v5427, 16
  %v5607 = vor.u32 %v5605, %v5603
  %v5609 = vshll.u32 %v5428, 16
  %v5611 = vrot.slane %v5609, 1
  %v5612 = vsel %vm91, %v5607, %v5611
  %v5613 = vshrl.u32 %v5428, 16
  %v5615 = vor.u32 %v5613, %v5611
  %5616 = vrot.lane.b32.xlu0 %v5580, 16
  %v5617 = vpop.permute.xlu0 %5616
  %5618 = vrot.lane.b32.xlu0 %v5588, 16
  %v5619 = vpop.permute.xlu0 %5618
  %5620 = vrot.lane.b32.xlu0 %v5596, 16
  %v5621 = vpop.permute.xlu0 %5620
  %5622 = vrot.lane.b32.xlu0 %v5604, 16
  %v5623 = vpop.permute.xlu0 %5622
  %5624 = vrot.lane.b32.xlu0 %v5612, 16
  %v5625 = vpop.permute.xlu0 %5624
  %5626 = vrot.lane.b32.xlu0 %v5615, 16
  %v5627 = vpop.permute.xlu0 %5626
  %v5633 = vrot.slane %v5424, 1
  %v5634 = vsel %vm146, %v5498, %v5633
  %v5635 = vrot.slane %v5425, 1
  %v5636 = vsel %vm146, %v5633, %v5635
  %v5637 = vrot.slane %v5426, 1
  %v5638 = vsel %vm146, %v5635, %v5637
  %v5639 = vrot.slane %v5427, 1
  %v5640 = vsel %vm146, %v5637, %v5639
  %v5641 = vrot.slane %v5428, 1
  %v5642 = vsel %vm146, %v5639, %v5641
  %5643 = vrot.lane.b32.xlu0 %v5634, 32
  %v5644 = vpop.permute.xlu0 %5643
  %5645 = vrot.lane.b32.xlu0 %v5636, 32
  %v5646 = vpop.permute.xlu0 %5645
  %5647 = vrot.lane.b32.xlu0 %v5638, 32
  %v5648 = vpop.permute.xlu0 %5647
  %5649 = vrot.lane.b32.xlu0 %v5640, 32
  %v5650 = vpop.permute.xlu0 %5649
  %5651 = vrot.lane.b32.xlu0 %v5642, 32
  %v5652 = vpop.permute.xlu0 %5651
  %5653 = vrot.lane.b32.xlu0 %v5641, 32
  %v5654 = vpop.permute.xlu0 %5653
  %v5655 = vrot.slane %v5581, 1
  %v5656 = vrot.slane %v5577, 2
  %v5657 = vor.u32 %v5655, %v5656
  %v5658 = vsel %vm168, %v5533, %v5657
  %v5659 = vrot.slane %v5589, 1
  %v5660 = vrot.slane %v5585, 2
  %v5661 = vor.u32 %v5659, %v5660
  %v5662 = vsel %vm168, %v5657, %v5661
  %v5663 = vrot.slane %v5597, 1
  %v5664 = vrot.slane %v5593, 2
  %v5665 = vor.u32 %v5663, %v5664
  %v5666 = vsel %vm168, %v5661, %v5665
  %v5667 = vrot.slane %v5605, 1
  %v5668 = vrot.slane %v5601, 2
  %v5669 = vor.u32 %v5667, %v5668
  %v5670 = vsel %vm168, %v5665, %v5669
  %v5671 = vrot.slane %v5613, 1
  %v5672 = vrot.slane %v5609, 2
  %v5673 = vor.u32 %v5671, %v5672
  %v5674 = vsel %vm168, %v5669, %v5673
  %5675 = vrot.lane.b32.xlu0 %v5658, 48
  %v5676 = vpop.permute.xlu0 %5675
  %5677 = vrot.lane.b32.xlu0 %v5662, 48
  %v5678 = vpop.permute.xlu0 %5677
  %5679 = vrot.lane.b32.xlu0 %v5666, 48
  %v5680 = vpop.permute.xlu0 %5679
  %5681 = vrot.lane.b32.xlu0 %v5670, 48
  %v5682 = vpop.permute.xlu0 %5681
  %5683 = vrot.lane.b32.xlu0 %v5674, 48
  %v5684 = vpop.permute.xlu0 %5683
  %5685 = vrot.lane.b32.xlu0 %v5673, 48
  %v5686 = vpop.permute.xlu0 %5685
  %v5688 = vsel %vm282, %v5423, %v5617
  %v5690 = vsel %vm282, %v5424, %v5619
  %v5692 = vsel %vm282, %v5425, %v5621
  %v5694 = vsel %vm282, %v5426, %v5623
  %v5696 = vsel %vm282, %v5427, %v5625
  %v5698 = vsel %vm282, %v5428, %v5627
  %v5700 = vsel %vm293, %v5688, %v5644
  %v5702 = vsel %vm293, %v5690, %v5646
  %v5704 = vsel %vm293, %v5692, %v5648
  %v5706 = vsel %vm293, %v5694, %v5650
  %v5708 = vsel %vm293, %v5696, %v5652
  %v5710 = vsel %vm293, %v5698, %v5654
  %v5712 = vsel %vm304, %v5700, %v5676
  %v5714 = vsel %vm304, %v5702, %v5678
  %v5716 = vsel %vm304, %v5704, %v5680
  %v5718 = vsel %vm304, %v5706, %v5682
  %v5720 = vsel %vm304, %v5708, %v5684
  %v5722 = vsel %vm304, %v5710, %v5686
  %v5723 = vshrl.u32 %v5712, 16
  %v5725 = vrot.slane %v5723, 1
  %v5726 = vshll.u32 %v5712, 16
  %v5728 = vrot.slane %v5726, 2
  %v5729 = vor.u32 %v5725, %v5728
  %v5730 = vshrl.u32 %v5714, 16
  %v5732 = vrot.slane %v5730, 1
  %v5733 = vshll.u32 %v5714, 16
  %v5735 = vrot.slane %v5733, 2
  %v5736 = vor.u32 %v5732, %v5735
  %v5737 = vsel %vm168, %v5729, %v5736
  %v5738 = vshrl.u32 %v5716, 16
  %v5740 = vrot.slane %v5738, 1
  %v5741 = vshll.u32 %v5716, 16
  %v5743 = vrot.slane %v5741, 2
  %v5744 = vor.u32 %v5740, %v5743
  %v5745 = vsel %vm168, %v5736, %v5744
  %v5746 = vshrl.u32 %v5718, 16
  %v5748 = vrot.slane %v5746, 1
  %v5749 = vshll.u32 %v5718, 16
  %v5751 = vrot.slane %v5749, 2
  %v5752 = vor.u32 %v5748, %v5751
  %v5753 = vsel %vm168, %v5744, %v5752
  %v5754 = vshrl.u32 %v5720, 16
  %v5756 = vrot.slane %v5754, 1
  %v5757 = vshll.u32 %v5720, 16
  %v5759 = vrot.slane %v5757, 2
  %v5760 = vor.u32 %v5756, %v5759
  %v5761 = vsel %vm168, %v5752, %v5760
  %v5762 = vshrl.u32 %v5722, 16
  %v5764 = vrot.slane %v5762, 1
  %v5765 = vshll.u32 %v5722, 16
  %v5767 = vrot.slane %v5765, 2
  %v5768 = vor.u32 %v5764, %v5767
  %v5769 = vsel %vm168, %v5760, %v5768
  %v5770 = vlaneseq
  %v5771 = vshrl.u32 %v5770, 7
  %v5772 = vsub.s32 0, %v5771
  %v5773 = vrot.slane %v22, %v5772
  %v5782 = vunpack.c.l.b16 %v5113
  %v5783 = vunpack.c.l.b16 %v5114
  %v5784 = vunpack.c.l.b16 %v5115
  %v5785 = vunpack.c.l.b16 %v5116
  %v5786 = vunpack.c.l.b16 %v5117
  %v5787 = vunpack.c.l.b16 %v5118
  %v5788 = vunpack.c.l.b16 %v5119
  %v5789 = vunpack.c.l.b16 %v5120
  %v5790 = vpack.c.b16 %v5783, %v5782
  %v5791 = vpack.c.b16 %v5785, %v5784
  %v5792 = vpack.c.b16 %v5787, %v5786
  %v5793 = vpack.c.b16 %v5789, %v5788
  %v5798 = vsel %vm315, %v5566, 0
  %v5800 = vsel %vm315, %v5568, 0
  %v5802 = vsel %vm315, %v5570, 0
  %v5804 = vsel %vm315, %v5572, 0
  %v5806 = vsel %vm315, %v5574, 0
  %v5809 = vsel %vm315, %v5737, 0
  %v5812 = vsel %vm315, %v5745, 0
  %v5815 = vsel %vm315, %v5753, 0
  %v5818 = vsel %vm315, %v5761, 0
  %v5821 = vsel %vm315, %v5769, 0
  %5823 = vmatprep.subr.bf16.mxu0 0
  %5824 = vmatpush1.bf16.msra.mxu0 %v5790
  %5825 = vmatprep.subr.bf16.mxu0 0
  %5826 = vmatpush1.bf16.msra.mxu0 %v5791
  %5827 = vmatprep.subr.bf16.mxu0 0
  %5828 = vmatpush1.bf16.msra.mxu0 %v5792
  %5829 = vmatprep.subr.bf16.mxu0 0
  %5830 = vmatpush1.bf16.msra.mxu0 %v5793
  %5831 = vmatprep.subr.bf16.mxu0 0
  %5832 = vmatpush1.bf16.msra.mxu0 0
  %5833 = vmatprep.subr.bf16.mxu0 0
  %5834 = vmatpush1.bf16.msra.mxu0 0
  %5835 = vmatprep.subr.bf16.mxu0 0
  %5836 = vmatpush1.bf16.msra.mxu0 0
  %5837 = vmatprep.subr.bf16.mxu0 0
  %5838 = vmatpush1.bf16.msra.mxu0 0
  %5839 = vmatprep.subr.bf16.mxu0 0
  %5840 = vmatpush1.bf16.msra.mxu0 0
  %5841 = vmatprep.subr.bf16.mxu0 0
  %5842 = vmatpush1.bf16.msra.mxu0 0
  %5843 = vmatprep.subr.bf16.mxu0 0
  %5844 = vmatpush1.bf16.msra.mxu0 0
  %5845 = vmatprep.subr.bf16.mxu0 0
  %5846 = vmatpush1.bf16.msra.mxu0 0
  %5847 = vmatprep.subr.bf16.mxu0 0
  %5848 = vmatpush1.bf16.msra.mxu0 0
  %5849 = vmatprep.subr.bf16.mxu0 0
  %5850 = vmatpush1.bf16.msra.mxu0 0
  %5851 = vmatprep.subr.bf16.mxu0 0
  %5852 = vmatpush1.bf16.msra.mxu0 0
  %5853 = vmatprep.subr.bf16.mxu0 0
  %5854 = vmatpush1.bf16.msra.mxu0 0
  %5855 = vmatprep.mubr.bf16.mxu0 0
  %5856 = vmatmul.mubr.bf16.gmra.mrb[0].mxu0 %v5798
  %v5857 = vpop.f32.mrb[0].mxu0
  %v5858 = vadd.f32 %v5773, %v5857
  %v5859 = vpop.f32.mrb[0].mxu0
  %v5860 = vpop.f32.mrb[0].mxu0
  %v5861 = vadd.f32 %v5773, %v5860
  %v5862 = vpop.f32.mrb[0].mxu0
  %5863 = vmatprep.mubr.bf16.mxu0 0
  %5864 = vmatmul.mubr.bf16.gmra.mrb[0].mxu0 %v5800
  %v5865 = vpop.f32.mrb[0].mxu0
  %v5866 = vadd.f32 %v5773, %v5865
  %v5867 = vpop.f32.mrb[0].mxu0
  %v5868 = vpop.f32.mrb[0].mxu0
  %v5869 = vadd.f32 %v5773, %v5868
  %v5870 = vpop.f32.mrb[0].mxu0
  %5871 = vmatprep.mubr.bf16.mxu0 0
  %5872 = vmatmul.mubr.bf16.gmra.mrb[0].mxu0 %v5802
  %v5873 = vpop.f32.mrb[0].mxu0
  %v5874 = vadd.f32 %v5773, %v5873
  %v5875 = vpop.f32.mrb[0].mxu0
  %v5876 = vpop.f32.mrb[0].mxu0
  %v5877 = vadd.f32 %v5773, %v5876
  %v5878 = vpop.f32.mrb[0].mxu0
  %5879 = vmatprep.mubr.bf16.mxu0 0
  %5880 = vmatmul.mubr.bf16.gmra.mrb[0].mxu0 %v5804
  %v5881 = vpop.f32.mrb[0].mxu0
  %v5882 = vadd.f32 %v5773, %v5881
  %v5883 = vpop.f32.mrb[0].mxu0
  %v5884 = vpop.f32.mrb[0].mxu0
  %v5885 = vadd.f32 %v5773, %v5884
  %v5886 = vpop.f32.mrb[0].mxu0
  %5887 = vmatprep.mubr.bf16.mxu0 0
  %5888 = vmatmul.mubr.bf16.gmra.mrb[0].mxu0 %v5806
  %v5889 = vpop.f32.mrb[0].mxu0
  %v5890 = vadd.f32 %v5773, %v5889
  %v5891 = vpop.f32.mrb[0].mxu0
  %v5892 = vpop.f32.mrb[0].mxu0
  %v5893 = vadd.f32 %v5773, %v5892
  %v5894 = vpop.f32.mrb[0].mxu0
  %5895 = vmatprep.mubr.bf16.mxu0 0
  %5896 = vmatmul.mubr.bf16.gmra.mrb[0].mxu0 %v5809
  %v5897 = vpop.f32.mrb[0].mxu0
  %v5898 = vadd.f32 %v5773, %v5897
  %v5899 = vpop.f32.mrb[0].mxu0
  %v5900 = vpop.f32.mrb[0].mxu0
  %v5901 = vadd.f32 %v5773, %v5900
  %v5902 = vpop.f32.mrb[0].mxu0
  %5903 = vmatprep.mubr.bf16.mxu0 0
  %5904 = vmatmul.mubr.bf16.gmra.mrb[0].mxu0 %v5812
  %v5905 = vpop.f32.mrb[0].mxu0
  %v5906 = vadd.f32 %v5773, %v5905
  %v5907 = vpop.f32.mrb[0].mxu0
  %v5908 = vpop.f32.mrb[0].mxu0
  %v5909 = vadd.f32 %v5773, %v5908
  %v5910 = vpop.f32.mrb[0].mxu0
  %5911 = vmatprep.mubr.bf16.mxu0 0
  %5912 = vmatmul.mubr.bf16.gmra.mrb[0].mxu0 %v5815
  %v5913 = vpop.f32.mrb[0].mxu0
  %v5914 = vadd.f32 %v5773, %v5913
  %v5915 = vpop.f32.mrb[0].mxu0
  %v5916 = vpop.f32.mrb[0].mxu0
  %v5917 = vadd.f32 %v5773, %v5916
  %v5918 = vpop.f32.mrb[0].mxu0
  %5919 = vmatprep.mubr.bf16.mxu0 0
  %5920 = vmatmul.mubr.bf16.gmra.mrb[0].mxu0 %v5818
  %v5921 = vpop.f32.mrb[0].mxu0
  %v5922 = vadd.f32 %v5773, %v5921
  %v5923 = vpop.f32.mrb[0].mxu0
  %v5924 = vpop.f32.mrb[0].mxu0
  %v5925 = vadd.f32 %v5773, %v5924
  %v5926 = vpop.f32.mrb[0].mxu0
  %5927 = vmatprep.mubr.bf16.mxu0 0
  %5928 = vmatmul.mubr.bf16.gmra.mrb[0].mxu0 %v5821
  %v5929 = vpop.f32.mrb[0].mxu0
  %v5930 = vadd.f32 %v5773, %v5929
  %v5931 = vpop.f32.mrb[0].mxu0
  %v5932 = vpop.f32.mrb[0].mxu0
  %v5933 = vadd.f32 %v5773, %v5932
  %v5934 = vpop.f32.mrb[0].mxu0
  %5935 = vdwg.mxu0
  %v5936 = vadd.f32 %v5858, %v5861
  %v5937 = vadd.f32 %v5936, %v5866
  %v5938 = vadd.f32 %v5937, %v5869
  %v5939 = vadd.f32 %v5938, %v5874
  %v5940 = vadd.f32 %v5939, %v5877
  %v5941 = vadd.f32 %v5940, %v5882
  %v5942 = vadd.f32 %v5941, %v5885
  %v5943 = vadd.f32 %v5942, %v5890
  %v5944 = vadd.f32 %v5943, %v5893
  %v5945 = vadd.f32 %v5944, %v5898
  %v5946 = vadd.f32 %v5945, %v5901
  %v5947 = vadd.f32 %v5946, %v5906
  %v5948 = vadd.f32 %v5947, %v5909
  %v5949 = vadd.f32 %v5948, %v5914
  %v5950 = vadd.f32 %v5949, %v5917
  %v5951 = vadd.f32 %v5950, %v5922
  %v5952 = vadd.f32 %v5951, %v5925
  %v5953 = vadd.f32 %v5952, %v5930
  %v5954 = vadd.f32 %v5953, %v5933
  %v5955 = vrot.slane %v5954, 4
  %v5956 = vadd.f32 %v5954, %v5955
  %v5957 = vrot.slane %v5956, 2
  %v5958 = vadd.f32 %v5956, %v5957
  %v5959 = vrot.slane %v5958, 1
  %v5960 = vadd.f32 %v5958, %v5959
  %v5961 = vmul.f32 %v5960, %v910
  %v5962 = vsub.f32 %v5858, %v5961
  %v5963 = vsub.f32 %v5861, %v5961
  %v5964 = vsub.f32 %v5866, %v5961
  %v5965 = vsub.f32 %v5869, %v5961
  %v5966 = vsub.f32 %v5874, %v5961
  %v5967 = vsub.f32 %v5877, %v5961
  %v5968 = vsub.f32 %v5882, %v5961
  %v5969 = vsub.f32 %v5885, %v5961
  %v5970 = vsub.f32 %v5890, %v5961
  %v5971 = vsub.f32 %v5893, %v5961
  %v5972 = vsub.f32 %v5898, %v5961
  %v5973 = vsub.f32 %v5901, %v5961
  %v5974 = vsub.f32 %v5906, %v5961
  %v5975 = vsub.f32 %v5909, %v5961
  %v5976 = vsub.f32 %v5914, %v5961
  %v5977 = vsub.f32 %v5917, %v5961
  %v5978 = vsub.f32 %v5922, %v5961
  %v5979 = vsub.f32 %v5925, %v5961
  %v5980 = vsub.f32 %v5930, %v5961
  %v5981 = vsub.f32 %v5933, %v5961
  %v5982 = vmul.f32 %v5962, %v5962
  %v5983 = vmul.f32 %v5963, %v5963
  %v5984 = vmul.f32 %v5964, %v5964
  %v5985 = vmul.f32 %v5965, %v5965
  %v5986 = vmul.f32 %v5966, %v5966
  %v5987 = vmul.f32 %v5967, %v5967
  %v5988 = vmul.f32 %v5968, %v5968
  %v5989 = vmul.f32 %v5969, %v5969
  %v5990 = vmul.f32 %v5970, %v5970
  %v5991 = vmul.f32 %v5971, %v5971
  %v5992 = vmul.f32 %v5972, %v5972
  %v5993 = vmul.f32 %v5973, %v5973
  %v5994 = vmul.f32 %v5974, %v5974
  %v5995 = vmul.f32 %v5975, %v5975
  %v5996 = vmul.f32 %v5976, %v5976
  %v5997 = vmul.f32 %v5977, %v5977
  %v5998 = vmul.f32 %v5978, %v5978
  %v5999 = vmul.f32 %v5979, %v5979
  %v6000 = vmul.f32 %v5980, %v5980
  %v6001 = vmul.f32 %v5981, %v5981
  %v6002 = vadd.f32 %v5982, %v5983
  %v6003 = vadd.f32 %v6002, %v5984
  %v6004 = vadd.f32 %v6003, %v5985
  %v6005 = vadd.f32 %v6004, %v5986
  %v6006 = vadd.f32 %v6005, %v5987
  %v6007 = vadd.f32 %v6006, %v5988
  %v6008 = vadd.f32 %v6007, %v5989
  %v6009 = vadd.f32 %v6008, %v5990
  %v6010 = vadd.f32 %v6009, %v5991
  %v6011 = vadd.f32 %v6010, %v5992
  %v6012 = vadd.f32 %v6011, %v5993
  %v6013 = vadd.f32 %v6012, %v5994
  %v6014 = vadd.f32 %v6013, %v5995
  %v6015 = vadd.f32 %v6014, %v5996
  %v6016 = vadd.f32 %v6015, %v5997
  %v6017 = vadd.f32 %v6016, %v5998
  %v6018 = vadd.f32 %v6017, %v5999
  %v6019 = vadd.f32 %v6018, %v6000
  %v6020 = vadd.f32 %v6019, %v6001
  %v6021 = vrot.slane %v6020, 4
  %v6022 = vadd.f32 %v6020, %v6021
  %v6023 = vrot.slane %v6022, 2
  %v6024 = vadd.f32 %v6022, %v6023
  %v6025 = vrot.slane %v6024, 1
  %v6026 = vadd.f32 %v6024, %v6025
  %v6027 = vmul.f32 %v6026, %v910
  %v6028 = vadd.f32 %v6027, 1e-05
  %v6029 = vrsqrt.pop %v6028
  %v6030 = vmul.f32 %v5962, %v6029
  %v6031 = vmul.f32 %v5963, %v6029
  %v6032 = vmul.f32 %v5964, %v6029
  %v6033 = vmul.f32 %v5965, %v6029
  %v6034 = vmul.f32 %v5966, %v6029
  %v6035 = vmul.f32 %v5967, %v6029
  %v6036 = vmul.f32 %v5968, %v6029
  %v6037 = vmul.f32 %v5969, %v6029
  %v6038 = vmul.f32 %v5970, %v6029
  %v6039 = vmul.f32 %v5971, %v6029
  %v6040 = vmul.f32 %v5972, %v6029
  %v6041 = vmul.f32 %v5973, %v6029
  %v6042 = vmul.f32 %v5974, %v6029
  %v6043 = vmul.f32 %v5975, %v6029
  %v6044 = vmul.f32 %v5976, %v6029
  %v6045 = vmul.f32 %v5977, %v6029
  %v6046 = vmul.f32 %v5978, %v6029
  %v6047 = vmul.f32 %v5979, %v6029
  %v6048 = vmul.f32 %v5980, %v6029
  %v6049 = vmul.f32 %v5981, %v6029
  %v6050 = vlaneseq
  %v6051 = vshrl.u32 %v6050, 7
  %v6052 = vsub.s32 0, %v6051
  %v6053 = vrot.slane %v24, %v6052
  %v6054 = vmul.f32 %v6030, %v6053
  %v6055 = vmul.f32 %v6031, %v6053
  %v6056 = vmul.f32 %v6032, %v6053
  %v6057 = vmul.f32 %v6033, %v6053
  %v6058 = vmul.f32 %v6034, %v6053
  %v6059 = vmul.f32 %v6035, %v6053
  %v6060 = vmul.f32 %v6036, %v6053
  %v6061 = vmul.f32 %v6037, %v6053
  %v6062 = vmul.f32 %v6038, %v6053
  %v6063 = vmul.f32 %v6039, %v6053
  %v6064 = vmul.f32 %v6040, %v6053
  %v6065 = vmul.f32 %v6041, %v6053
  %v6066 = vmul.f32 %v6042, %v6053
  %v6067 = vmul.f32 %v6043, %v6053
  %v6068 = vmul.f32 %v6044, %v6053
  %v6069 = vmul.f32 %v6045, %v6053
  %v6070 = vmul.f32 %v6046, %v6053
  %v6071 = vmul.f32 %v6047, %v6053
  %v6072 = vmul.f32 %v6048, %v6053
  %v6073 = vmul.f32 %v6049, %v6053
  %v6074 = vlaneseq
  %v6075 = vshrl.u32 %v6074, 7
  %v6076 = vsub.s32 0, %v6075
  %v6077 = vrot.slane %v26, %v6076
  %v6078 = vadd.f32 %v6054, %v6077
  %v6079 = vadd.f32 %v6055, %v6077
  %v6080 = vadd.f32 %v6056, %v6077
  %v6081 = vadd.f32 %v6057, %v6077
  %v6082 = vadd.f32 %v6058, %v6077
  %v6083 = vadd.f32 %v6059, %v6077
  %v6084 = vadd.f32 %v6060, %v6077
  %v6085 = vadd.f32 %v6061, %v6077
  %v6086 = vadd.f32 %v6062, %v6077
  %v6087 = vadd.f32 %v6063, %v6077
  %v6088 = vadd.f32 %v6064, %v6077
  %v6089 = vadd.f32 %v6065, %v6077
  %v6090 = vadd.f32 %v6066, %v6077
  %v6091 = vadd.f32 %v6067, %v6077
  %v6092 = vadd.f32 %v6068, %v6077
  %v6093 = vadd.f32 %v6069, %v6077
  %v6094 = vadd.f32 %v6070, %v6077
  %v6095 = vadd.f32 %v6071, %v6077
  %v6096 = vadd.f32 %v6072, %v6077
  %v6097 = vadd.f32 %v6073, %v6077
  %v6098 = vmax.f32 %v6078, 0.0
  %v6099 = vmax.f32 %v6079, 0.0
  %v6100 = vmax.f32 %v6080, 0.0
  %v6101 = vmax.f32 %v6081, 0.0
  %v6102 = vmax.f32 %v6082, 0.0
  %v6103 = vmax.f32 %v6083, 0.0
  %v6104 = vmax.f32 %v6084, 0.0
  %v6105 = vmax.f32 %v6085, 0.0
  %v6106 = vmax.f32 %v6086, 0.0
  %v6107 = vmax.f32 %v6087, 0.0
  %v6108 = vmax.f32 %v6088, 0.0
  %v6109 = vmax.f32 %v6089, 0.0
  %v6110 = vmax.f32 %v6090, 0.0
  %v6111 = vmax.f32 %v6091, 0.0
  %v6112 = vmax.f32 %v6092, 0.0
  %v6113 = vmax.f32 %v6093, 0.0
  %v6114 = vmax.f32 %v6094, 0.0
  %v6115 = vmax.f32 %v6095, 0.0
  %v6116 = vmax.f32 %v6096, 0.0
  %v6117 = vmax.f32 %v6097, 0.0
  %v6118 = vpack.c.bf16 %v6099, %v6098
  %v6119 = vpack.c.bf16 %v6101, %v6100
  %v6120 = vpack.c.bf16 %v6103, %v6102
  %v6121 = vpack.c.bf16 %v6105, %v6104
  %v6122 = vpack.c.bf16 %v6107, %v6106
  %v6123 = vpack.c.bf16 %v6109, %v6108
  %v6124 = vpack.c.bf16 %v6111, %v6110
  %v6125 = vpack.c.bf16 %v6113, %v6112
  %v6126 = vpack.c.bf16 %v6115, %v6114
  %v6127 = vpack.c.bf16 %v6117, %v6116
  %v6128 = vld [vmem:[%s1 + $0x328] sm:$0xf]
  %v6129 = vld [vmem:[%s1 + $0x32c] sm:$0xf]
  %v6130 = vld [vmem:[%s1 + $0x330] sm:$0xf]
  %v6131 = vld [vmem:[%s1 + $0x334] sm:$0xf]
  %v6132 = vld [vmem:[%s1 + $0x338] sm:$0xf]
  %v6133 = vld [vmem:[%s1 + $0x33c] sm:$0xf]
  %v6134 = vld [vmem:[%s1 + $0x340] sm:$0xf]
  %v6135 = vld [vmem:[%s1 + $0x344] sm:$0xf]
  %v6136 = vld [vmem:[%s1 + $0x348] sm:$0xf]
  %v6137 = vld [vmem:[%s1 + $0x34c] sm:$0xf]
  %v6138 = vld [vmem:[%s1 + $0x350] sm:$0xf]
  %v6139 = vld [vmem:[%s1 + $0x354] sm:$0xf]
  %v6140 = vld [vmem:[%s1 + $0x358] sm:$0xf]
  %v6141 = vld [vmem:[%s1 + $0x35c] sm:$0xf]
  %v6147 = vrot.slane %v6118, 5
  %v6148 = vrot.slane %v6119, 5
  %v6149 = vsel %vm438, %v6147, %v6148
  %v6150 = vrot.slane %v6120, 5
  %v6151 = vsel %vm438, %v6148, %v6150
  %v6152 = vrot.slane %v6121, 5
  %v6153 = vsel %vm438, %v6150, %v6152
  %v6154 = vrot.slane %v6122, 5
  %v6155 = vsel %vm438, %v6152, %v6154
  %v6157 = vsel %vm2896, 0, %v6147
  %v6159 = vsel %vm2896, %v6154, 0
  %v6165 = vrot.slane %v6123, 5
  %v6166 = vrot.slane %v6124, 5
  %v6167 = vsel %vm438, %v6165, %v6166
  %v6168 = vrot.slane %v6125, 5
  %v6169 = vsel %vm438, %v6166, %v6168
  %v6170 = vrot.slane %v6126, 5
  %v6171 = vsel %vm438, %v6168, %v6170
  %v6172 = vrot.slane %v6127, 5
  %v6173 = vsel %vm438, %v6170, %v6172
  %v6175 = vsel %vm2896, 0, %v6165
  %v6177 = vsel %vm2896, %v6172, 0
  %v6178 = vshrl.u32 %v6157, 16
  %v6180 = vshll.u32 %v6157, 16
  %v6182 = vrot.slane %v6180, 1
  %v6183 = vor.u32 %v6178, %v6182
  %v6185 = vshll.u32 %v6149, 16
  %v6187 = vrot.slane %v6185, 1
  %v6188 = vsel %vm91, %v6183, %v6187
  %v6189 = vshrl.u32 %v6149, 16
  %v6191 = vor.u32 %v6189, %v6187
  %v6193 = vshll.u32 %v6151, 16
  %v6195 = vrot.slane %v6193, 1
  %v6196 = vsel %vm91, %v6191, %v6195
  %v6197 = vshrl.u32 %v6151, 16
  %v6199 = vor.u32 %v6197, %v6195
  %v6201 = vshll.u32 %v6153, 16
  %v6203 = vrot.slane %v6201, 1
  %v6204 = vsel %vm91, %v6199, %v6203
  %v6205 = vshrl.u32 %v6153, 16
  %v6207 = vor.u32 %v6205, %v6203
  %v6209 = vshll.u32 %v6155, 16
  %v6211 = vrot.slane %v6209, 1
  %v6212 = vsel %vm91, %v6207, %v6211
  %v6213 = vshrl.u32 %v6155, 16
  %v6215 = vor.u32 %v6213, %v6211
  %v6216 = vshll.u32 %v6159, 16
  %v6218 = vrot.slane %v6216, 1
  %v6219 = vsel %vm91, %v6215, %v6218
  %v6220 = vshrl.u32 %v6159, 16
  %v6222 = vor.u32 %v6220, %v6218
  %6223 = vrot.lane.b32.xlu0 %v6188, 16
  %v6224 = vpop.permute.xlu0 %6223
  %6225 = vrot.lane.b32.xlu0 %v6196, 16
  %v6226 = vpop.permute.xlu0 %6225
  %6227 = vrot.lane.b32.xlu0 %v6204, 16
  %v6228 = vpop.permute.xlu0 %6227
  %6229 = vrot.lane.b32.xlu0 %v6212, 16
  %v6230 = vpop.permute.xlu0 %6229
  %6231 = vrot.lane.b32.xlu0 %v6219, 16
  %v6232 = vpop.permute.xlu0 %6231
  %6233 = vrot.lane.b32.xlu0 %v6222, 16
  %v6234 = vpop.permute.xlu0 %6233
  %v6237 = vrot.slane %v6157, 1
  %v6238 = vrot.slane %v6149, 1
  %v6239 = vsel %vm146, %v6237, %v6238
  %v6240 = vrot.slane %v6151, 1
  %v6241 = vsel %vm146, %v6238, %v6240
  %v6242 = vrot.slane %v6153, 1
  %v6243 = vsel %vm146, %v6240, %v6242
  %v6244 = vrot.slane %v6155, 1
  %v6245 = vsel %vm146, %v6242, %v6244
  %v6246 = vrot.slane %v6159, 1
  %v6247 = vsel %vm146, %v6244, %v6246
  %6248 = vrot.lane.b32.xlu0 %v6239, 32
  %v6249 = vpop.permute.xlu0 %6248
  %6250 = vrot.lane.b32.xlu0 %v6241, 32
  %v6251 = vpop.permute.xlu0 %6250
  %6252 = vrot.lane.b32.xlu0 %v6243, 32
  %v6253 = vpop.permute.xlu0 %6252
  %6254 = vrot.lane.b32.xlu0 %v6245, 32
  %v6255 = vpop.permute.xlu0 %6254
  %6256 = vrot.lane.b32.xlu0 %v6247, 32
  %v6257 = vpop.permute.xlu0 %6256
  %6258 = vrot.lane.b32.xlu0 %v6246, 32
  %v6259 = vpop.permute.xlu0 %6258
  %v6260 = vrot.slane %v6178, 1
  %v6261 = vrot.slane %v6180, 2
  %v6262 = vor.u32 %v6260, %v6261
  %v6263 = vrot.slane %v6189, 1
  %v6264 = vrot.slane %v6185, 2
  %v6265 = vor.u32 %v6263, %v6264
  %v6266 = vsel %vm168, %v6262, %v6265
  %v6267 = vrot.slane %v6197, 1
  %v6268 = vrot.slane %v6193, 2
  %v6269 = vor.u32 %v6267, %v6268
  %v6270 = vsel %vm168, %v6265, %v6269
  %v6271 = vrot.slane %v6205, 1
  %v6272 = vrot.slane %v6201, 2
  %v6273 = vor.u32 %v6271, %v6272
  %v6274 = vsel %vm168, %v6269, %v6273
  %v6275 = vrot.slane %v6213, 1
  %v6276 = vrot.slane %v6209, 2
  %v6277 = vor.u32 %v6275, %v6276
  %v6278 = vsel %vm168, %v6273, %v6277
  %v6279 = vrot.slane %v6220, 1
  %v6280 = vrot.slane %v6216, 2
  %v6281 = vor.u32 %v6279, %v6280
  %v6282 = vsel %vm168, %v6277, %v6281
  %6283 = vrot.lane.b32.xlu0 %v6266, 48
  %v6284 = vpop.permute.xlu0 %6283
  %6285 = vrot.lane.b32.xlu0 %v6270, 48
  %v6286 = vpop.permute.xlu0 %6285
  %6287 = vrot.lane.b32.xlu0 %v6274, 48
  %v6288 = vpop.permute.xlu0 %6287
  %6289 = vrot.lane.b32.xlu0 %v6278, 48
  %v6290 = vpop.permute.xlu0 %6289
  %6291 = vrot.lane.b32.xlu0 %v6282, 48
  %v6292 = vpop.permute.xlu0 %6291
  %6293 = vrot.lane.b32.xlu0 %v6281, 48
  %v6294 = vpop.permute.xlu0 %6293
  %v6295 = vrot.slane %v6157, 2
  %v6296 = vrot.slane %v6149, 2
  %v6297 = vsel %vm204, %v6295, %v6296
  %v6298 = vrot.slane %v6151, 2
  %v6299 = vsel %vm204, %v6296, %v6298
  %v6300 = vrot.slane %v6153, 2
  %v6301 = vsel %vm204, %v6298, %v6300
  %v6302 = vrot.slane %v6155, 2
  %v6303 = vsel %vm204, %v6300, %v6302
  %v6304 = vrot.slane %v6159, 2
  %v6305 = vsel %vm204, %v6302, %v6304
  %6306 = vrot.lane.b32.xlu0 %v6297, 64
  %v6307 = vpop.permute.xlu0 %6306
  %6308 = vrot.lane.b32.xlu0 %v6299, 64
  %v6309 = vpop.permute.xlu0 %6308
  %6310 = vrot.lane.b32.xlu0 %v6301, 64
  %v6311 = vpop.permute.xlu0 %6310
  %6312 = vrot.lane.b32.xlu0 %v6303, 64
  %v6313 = vpop.permute.xlu0 %6312
  %6314 = vrot.lane.b32.xlu0 %v6305, 64
  %v6315 = vpop.permute.xlu0 %6314
  %6316 = vrot.lane.b32.xlu0 %v6304, 64
  %v6317 = vpop.permute.xlu0 %6316
  %v6318 = vrot.slane %v6178, 2
  %v6319 = vrot.slane %v6180, 3
  %v6320 = vor.u32 %v6318, %v6319
  %v6321 = vrot.slane %v6189, 2
  %v6322 = vrot.slane %v6185, 3
  %v6323 = vor.u32 %v6321, %v6322
  %v6324 = vsel %vm226, %v6320, %v6323
  %v6325 = vrot.slane %v6197, 2
  %v6326 = vrot.slane %v6193, 3
  %v6327 = vor.u32 %v6325, %v6326
  %v6328 = vsel %vm226, %v6323, %v6327
  %v6329 = vrot.slane %v6205, 2
  %v6330 = vrot.slane %v6201, 3
  %v6331 = vor.u32 %v6329, %v6330
  %v6332 = vsel %vm226, %v6327, %v6331
  %v6333 = vrot.slane %v6213, 2
  %v6334 = vrot.slane %v6209, 3
  %v6335 = vor.u32 %v6333, %v6334
  %v6336 = vsel %vm226, %v6331, %v6335
  %v6337 = vrot.slane %v6220, 2
  %v6338 = vrot.slane %v6216, 3
  %v6339 = vor.u32 %v6337, %v6338
  %v6340 = vsel %vm226, %v6335, %v6339
  %6341 = vrot.lane.b32.xlu0 %v6324, 80
  %v6342 = vpop.permute.xlu0 %6341
  %6343 = vrot.lane.b32.xlu0 %v6328, 80
  %v6344 = vpop.permute.xlu0 %6343
  %6345 = vrot.lane.b32.xlu0 %v6332, 80
  %v6346 = vpop.permute.xlu0 %6345
  %6347 = vrot.lane.b32.xlu0 %v6336, 80
  %v6348 = vpop.permute.xlu0 %6347
  %6349 = vrot.lane.b32.xlu0 %v6340, 80
  %v6350 = vpop.permute.xlu0 %6349
  %6351 = vrot.lane.b32.xlu0 %v6339, 80
  %v6352 = vpop.permute.xlu0 %6351
  %v6353 = vrot.slane %v6157, 3
  %v6354 = vrot.slane %v6149, 3
  %v6355 = vsel %vm260, %v6353, %v6354
  %v6356 = vrot.slane %v6151, 3
  %v6357 = vsel %vm260, %v6354, %v6356
  %v6358 = vrot.slane %v6153, 3
  %v6359 = vsel %vm260, %v6356, %v6358
  %v6360 = vrot.slane %v6155, 3
  %v6361 = vsel %vm260, %v6358, %v6360
  %v6362 = vrot.slane %v6159, 3
  %v6363 = vsel %vm260, %v6360, %v6362
  %6364 = vrot.lane.b32.xlu0 %v6355, 96
  %v6365 = vpop.permute.xlu0 %6364
  %6366 = vrot.lane.b32.xlu0 %v6357, 96
  %v6367 = vpop.permute.xlu0 %6366
  %6368 = vrot.lane.b32.xlu0 %v6359, 96
  %v6369 = vpop.permute.xlu0 %6368
  %6370 = vrot.lane.b32.xlu0 %v6361, 96
  %v6371 = vpop.permute.xlu0 %6370
  %6372 = vrot.lane.b32.xlu0 %v6363, 96
  %v6373 = vpop.permute.xlu0 %6372
  %6374 = vrot.lane.b32.xlu0 %v6362, 96
  %v6375 = vpop.permute.xlu0 %6374
  %v6377 = vsel %vm282, %v6157, %v6224
  %v6379 = vsel %vm282, %v6149, %v6226
  %v6381 = vsel %vm282, %v6151, %v6228
  %v6383 = vsel %vm282, %v6153, %v6230
  %v6385 = vsel %vm282, %v6155, %v6232
  %v6387 = vsel %vm282, %v6159, %v6234
  %v6389 = vsel %vm293, %v6377, %v6249
  %v6391 = vsel %vm293, %v6379, %v6251
  %v6393 = vsel %vm293, %v6381, %v6253
  %v6395 = vsel %vm293, %v6383, %v6255
  %v6397 = vsel %vm293, %v6385, %v6257
  %v6399 = vsel %vm293, %v6387, %v6259
  %v6401 = vsel %vm304, %v6389, %v6284
  %v6403 = vsel %vm304, %v6391, %v6286
  %v6405 = vsel %vm304, %v6393, %v6288
  %v6407 = vsel %vm304, %v6395, %v6290
  %v6409 = vsel %vm304, %v6397, %v6292
  %v6411 = vsel %vm304, %v6399, %v6294
  %v6413 = vsel %vm315, %v6401, %v6307
  %v6415 = vsel %vm315, %v6403, %v6309
  %v6417 = vsel %vm315, %v6405, %v6311
  %v6419 = vsel %vm315, %v6407, %v6313
  %v6421 = vsel %vm315, %v6409, %v6315
  %v6423 = vsel %vm315, %v6411, %v6317
  %v6425 = vsel %vm326, %v6413, %v6342
  %v6427 = vsel %vm326, %v6415, %v6344
  %v6429 = vsel %vm326, %v6417, %v6346
  %v6431 = vsel %vm326, %v6419, %v6348
  %v6433 = vsel %vm326, %v6421, %v6350
  %v6435 = vsel %vm326, %v6423, %v6352
  %v6437 = vsel %vm337, %v6425, %v6365
  %v6439 = vsel %vm337, %v6427, %v6367
  %v6441 = vsel %vm337, %v6429, %v6369
  %v6443 = vsel %vm337, %v6431, %v6371
  %v6445 = vsel %vm337, %v6433, %v6373
  %v6447 = vsel %vm337, %v6435, %v6375
  %v6448 = vshrl.u32 %v6175, 16
  %v6450 = vshll.u32 %v6175, 16
  %v6452 = vrot.slane %v6450, 1
  %v6453 = vor.u32 %v6448, %v6452
  %v6455 = vshll.u32 %v6167, 16
  %v6457 = vrot.slane %v6455, 1
  %v6458 = vsel %vm91, %v6453, %v6457
  %v6459 = vshrl.u32 %v6167, 16
  %v6461 = vor.u32 %v6459, %v6457
  %v6463 = vshll.u32 %v6169, 16
  %v6465 = vrot.slane %v6463, 1
  %v6466 = vsel %vm91, %v6461, %v6465
  %v6467 = vshrl.u32 %v6169, 16
  %v6469 = vor.u32 %v6467, %v6465
  %v6471 = vshll.u32 %v6171, 16
  %v6473 = vrot.slane %v6471, 1
  %v6474 = vsel %vm91, %v6469, %v6473
  %v6475 = vshrl.u32 %v6171, 16
  %v6477 = vor.u32 %v6475, %v6473
  %v6479 = vshll.u32 %v6173, 16
  %v6481 = vrot.slane %v6479, 1
  %v6482 = vsel %vm91, %v6477, %v6481
  %v6483 = vshrl.u32 %v6173, 16
  %v6485 = vor.u32 %v6483, %v6481
  %v6486 = vshll.u32 %v6177, 16
  %v6488 = vrot.slane %v6486, 1
  %v6489 = vsel %vm91, %v6485, %v6488
  %v6490 = vshrl.u32 %v6177, 16
  %v6492 = vor.u32 %v6490, %v6488
  %6493 = vrot.lane.b32.xlu0 %v6458, 16
  %v6494 = vpop.permute.xlu0 %6493
  %6495 = vrot.lane.b32.xlu0 %v6466, 16
  %v6496 = vpop.permute.xlu0 %6495
  %6497 = vrot.lane.b32.xlu0 %v6474, 16
  %v6498 = vpop.permute.xlu0 %6497
  %6499 = vrot.lane.b32.xlu0 %v6482, 16
  %v6500 = vpop.permute.xlu0 %6499
  %6501 = vrot.lane.b32.xlu0 %v6489, 16
  %v6502 = vpop.permute.xlu0 %6501
  %6503 = vrot.lane.b32.xlu0 %v6492, 16
  %v6504 = vpop.permute.xlu0 %6503
  %v6507 = vrot.slane %v6175, 1
  %v6508 = vrot.slane %v6167, 1
  %v6509 = vsel %vm146, %v6507, %v6508
  %v6510 = vrot.slane %v6169, 1
  %v6511 = vsel %vm146, %v6508, %v6510
  %v6512 = vrot.slane %v6171, 1
  %v6513 = vsel %vm146, %v6510, %v6512
  %v6514 = vrot.slane %v6173, 1
  %v6515 = vsel %vm146, %v6512, %v6514
  %v6516 = vrot.slane %v6177, 1
  %v6517 = vsel %vm146, %v6514, %v6516
  %6518 = vrot.lane.b32.xlu0 %v6509, 32
  %v6519 = vpop.permute.xlu0 %6518
  %6520 = vrot.lane.b32.xlu0 %v6511, 32
  %v6521 = vpop.permute.xlu0 %6520
  %6522 = vrot.lane.b32.xlu0 %v6513, 32
  %v6523 = vpop.permute.xlu0 %6522
  %6524 = vrot.lane.b32.xlu0 %v6515, 32
  %v6525 = vpop.permute.xlu0 %6524
  %6526 = vrot.lane.b32.xlu0 %v6517, 32
  %v6527 = vpop.permute.xlu0 %6526
  %6528 = vrot.lane.b32.xlu0 %v6516, 32
  %v6529 = vpop.permute.xlu0 %6528
  %v6530 = vrot.slane %v6448, 1
  %v6531 = vrot.slane %v6450, 2
  %v6532 = vor.u32 %v6530, %v6531
  %v6533 = vrot.slane %v6459, 1
  %v6534 = vrot.slane %v6455, 2
  %v6535 = vor.u32 %v6533, %v6534
  %v6536 = vsel %vm168, %v6532, %v6535
  %v6537 = vrot.slane %v6467, 1
  %v6538 = vrot.slane %v6463, 2
  %v6539 = vor.u32 %v6537, %v6538
  %v6540 = vsel %vm168, %v6535, %v6539
  %v6541 = vrot.slane %v6475, 1
  %v6542 = vrot.slane %v6471, 2
  %v6543 = vor.u32 %v6541, %v6542
  %v6544 = vsel %vm168, %v6539, %v6543
  %v6545 = vrot.slane %v6483, 1
  %v6546 = vrot.slane %v6479, 2
  %v6547 = vor.u32 %v6545, %v6546
  %v6548 = vsel %vm168, %v6543, %v6547
  %v6549 = vrot.slane %v6490, 1
  %v6550 = vrot.slane %v6486, 2
  %v6551 = vor.u32 %v6549, %v6550
  %v6552 = vsel %vm168, %v6547, %v6551
  %6553 = vrot.lane.b32.xlu0 %v6536, 48
  %v6554 = vpop.permute.xlu0 %6553
  %6555 = vrot.lane.b32.xlu0 %v6540, 48
  %v6556 = vpop.permute.xlu0 %6555
  %6557 = vrot.lane.b32.xlu0 %v6544, 48
  %v6558 = vpop.permute.xlu0 %6557
  %6559 = vrot.lane.b32.xlu0 %v6548, 48
  %v6560 = vpop.permute.xlu0 %6559
  %6561 = vrot.lane.b32.xlu0 %v6552, 48
  %v6562 = vpop.permute.xlu0 %6561
  %6563 = vrot.lane.b32.xlu0 %v6551, 48
  %v6564 = vpop.permute.xlu0 %6563
  %v6565 = vrot.slane %v6175, 2
  %v6566 = vrot.slane %v6167, 2
  %v6567 = vsel %vm204, %v6565, %v6566
  %v6568 = vrot.slane %v6169, 2
  %v6569 = vsel %vm204, %v6566, %v6568
  %v6570 = vrot.slane %v6171, 2
  %v6571 = vsel %vm204, %v6568, %v6570
  %v6572 = vrot.slane %v6173, 2
  %v6573 = vsel %vm204, %v6570, %v6572
  %v6574 = vrot.slane %v6177, 2
  %v6575 = vsel %vm204, %v6572, %v6574
  %6576 = vrot.lane.b32.xlu0 %v6567, 64
  %v6577 = vpop.permute.xlu0 %6576
  %6578 = vrot.lane.b32.xlu0 %v6569, 64
  %v6579 = vpop.permute.xlu0 %6578
  %6580 = vrot.lane.b32.xlu0 %v6571, 64
  %v6581 = vpop.permute.xlu0 %6580
  %6582 = vrot.lane.b32.xlu0 %v6573, 64
  %v6583 = vpop.permute.xlu0 %6582
  %6584 = vrot.lane.b32.xlu0 %v6575, 64
  %v6585 = vpop.permute.xlu0 %6584
  %6586 = vrot.lane.b32.xlu0 %v6574, 64
  %v6587 = vpop.permute.xlu0 %6586
  %v6588 = vrot.slane %v6448, 2
  %v6589 = vrot.slane %v6450, 3
  %v6590 = vor.u32 %v6588, %v6589
  %v6591 = vrot.slane %v6459, 2
  %v6592 = vrot.slane %v6455, 3
  %v6593 = vor.u32 %v6591, %v6592
  %v6594 = vsel %vm226, %v6590, %v6593
  %v6595 = vrot.slane %v6467, 2
  %v6596 = vrot.slane %v6463, 3
  %v6597 = vor.u32 %v6595, %v6596
  %v6598 = vsel %vm226, %v6593, %v6597
  %v6599 = vrot.slane %v6475, 2
  %v6600 = vrot.slane %v6471, 3
  %v6601 = vor.u32 %v6599, %v6600
  %v6602 = vsel %vm226, %v6597, %v6601
  %v6603 = vrot.slane %v6483, 2
  %v6604 = vrot.slane %v6479, 3
  %v6605 = vor.u32 %v6603, %v6604
  %v6606 = vsel %vm226, %v6601, %v6605
  %v6607 = vrot.slane %v6490, 2
  %v6608 = vrot.slane %v6486, 3
  %v6609 = vor.u32 %v6607, %v6608
  %v6610 = vsel %vm226, %v6605, %v6609
  %6611 = vrot.lane.b32.xlu0 %v6594, 80
  %v6612 = vpop.permute.xlu0 %6611
  %6613 = vrot.lane.b32.xlu0 %v6598, 80
  %v6614 = vpop.permute.xlu0 %6613
  %6615 = vrot.lane.b32.xlu0 %v6602, 80
  %v6616 = vpop.permute.xlu0 %6615
  %6617 = vrot.lane.b32.xlu0 %v6606, 80
  %v6618 = vpop.permute.xlu0 %6617
  %6619 = vrot.lane.b32.xlu0 %v6610, 80
  %v6620 = vpop.permute.xlu0 %6619
  %6621 = vrot.lane.b32.xlu0 %v6609, 80
  %v6622 = vpop.permute.xlu0 %6621
  %v6623 = vrot.slane %v6175, 3
  %v6624 = vrot.slane %v6167, 3
  %v6625 = vsel %vm260, %v6623, %v6624
  %v6626 = vrot.slane %v6169, 3
  %v6627 = vsel %vm260, %v6624, %v6626
  %v6628 = vrot.slane %v6171, 3
  %v6629 = vsel %vm260, %v6626, %v6628
  %v6630 = vrot.slane %v6173, 3
  %v6631 = vsel %vm260, %v6628, %v6630
  %v6632 = vrot.slane %v6177, 3
  %v6633 = vsel %vm260, %v6630, %v6632
  %6634 = vrot.lane.b32.xlu0 %v6625, 96
  %v6635 = vpop.permute.xlu0 %6634
  %6636 = vrot.lane.b32.xlu0 %v6627, 96
  %v6637 = vpop.permute.xlu0 %6636
  %6638 = vrot.lane.b32.xlu0 %v6629, 96
  %v6639 = vpop.permute.xlu0 %6638
  %6640 = vrot.lane.b32.xlu0 %v6631, 96
  %v6641 = vpop.permute.xlu0 %6640
  %6642 = vrot.lane.b32.xlu0 %v6633, 96
  %v6643 = vpop.permute.xlu0 %6642
  %6644 = vrot.lane.b32.xlu0 %v6632, 96
  %v6645 = vpop.permute.xlu0 %6644
  %v6647 = vsel %vm282, %v6175, %v6494
  %v6649 = vsel %vm282, %v6167, %v6496
  %v6651 = vsel %vm282, %v6169, %v6498
  %v6653 = vsel %vm282, %v6171, %v6500
  %v6655 = vsel %vm282, %v6173, %v6502
  %v6657 = vsel %vm282, %v6177, %v6504
  %v6659 = vsel %vm293, %v6647, %v6519
  %v6661 = vsel %vm293, %v6649, %v6521
  %v6663 = vsel %vm293, %v6651, %v6523
  %v6665 = vsel %vm293, %v6653, %v6525
  %v6667 = vsel %vm293, %v6655, %v6527
  %v6669 = vsel %vm293, %v6657, %v6529
  %v6671 = vsel %vm304, %v6659, %v6554
  %v6673 = vsel %vm304, %v6661, %v6556
  %v6675 = vsel %vm304, %v6663, %v6558
  %v6677 = vsel %vm304, %v6665, %v6560
  %v6679 = vsel %vm304, %v6667, %v6562
  %v6681 = vsel %vm304, %v6669, %v6564
  %v6683 = vsel %vm315, %v6671, %v6577
  %v6685 = vsel %vm315, %v6673, %v6579
  %v6687 = vsel %vm315, %v6675, %v6581
  %v6689 = vsel %vm315, %v6677, %v6583
  %v6691 = vsel %vm315, %v6679, %v6585
  %v6693 = vsel %vm315, %v6681, %v6587
  %v6695 = vsel %vm326, %v6683, %v6612
  %v6697 = vsel %vm326, %v6685, %v6614
  %v6699 = vsel %vm326, %v6687, %v6616
  %v6701 = vsel %vm326, %v6689, %v6618
  %v6703 = vsel %vm326, %v6691, %v6620
  %v6705 = vsel %vm326, %v6693, %v6622
  %v6707 = vsel %vm337, %v6695, %v6635
  %v6709 = vsel %vm337, %v6697, %v6637
  %v6711 = vsel %vm337, %v6699, %v6639
  %v6713 = vsel %vm337, %v6701, %v6641
  %v6715 = vsel %vm337, %v6703, %v6643
  %v6717 = vsel %vm337, %v6705, %v6645
  %v6724 = vrot.slane %v6707, 5
  %v6725 = vrot.slane %v6709, 5
  %v6726 = vsel %vm438, %v6724, %v6725
  %v6727 = vrot.slane %v6711, 5
  %v6728 = vsel %vm438, %v6725, %v6727
  %v6729 = vrot.slane %v6713, 5
  %v6730 = vsel %vm438, %v6727, %v6729
  %v6731 = vrot.slane %v6715, 5
  %v6732 = vsel %vm438, %v6729, %v6731
  %v6733 = vrot.slane %v6717, 5
  %v6734 = vsel %vm438, %v6731, %v6733
  %v6736 = vsel %vm2896, %v6447, %v6724
  %v6737 = vlaneseq
  %v6738 = vshrl.u32 %v6737, 7
  %v6739 = vsub.s32 1, %v6738
  %v6740 = vrot.slane %v22, %v6739
  %v6755 = vunpack.c.l.b16 %v6128
  %v6756 = vunpack.c.l.b16 %v6129
  %v6757 = vunpack.c.l.b16 %v6130
  %v6758 = vunpack.c.l.b16 %v6131
  %v6759 = vunpack.c.l.b16 %v6132
  %v6760 = vunpack.c.l.b16 %v6133
  %v6761 = vunpack.c.l.b16 %v6134
  %v6762 = vunpack.c.l.b16 %v6135
  %v6763 = vunpack.c.l.b16 %v6136
  %v6764 = vunpack.c.l.b16 %v6137
  %v6765 = vunpack.c.l.b16 %v6138
  %v6766 = vunpack.c.l.b16 %v6139
  %v6767 = vunpack.c.l.b16 %v6140
  %v6768 = vunpack.c.l.b16 %v6141
  %v6769 = vpack.c.b16 %v6756, %v6755
  %v6770 = vpack.c.b16 %v6758, %v6757
  %v6771 = vpack.c.b16 %v6760, %v6759
  %v6772 = vpack.c.b16 %v6762, %v6761
  %v6773 = vpack.c.b16 %v6764, %v6763
  %v6774 = vpack.c.b16 %v6766, %v6765
  %v6775 = vpack.c.b16 %v6768, %v6767
  %v6783 = vsel %vm746, %v6437, 0
  %v6785 = vsel %vm746, %v6439, 0
  %v6787 = vsel %vm746, %v6441, 0
  %v6789 = vsel %vm746, %v6443, 0
  %v6791 = vsel %vm746, %v6445, 0
  %v6793 = vsel %vm746, %v6736, 0
  %v6796 = vsel %vm746, %v6726, 0
  %v6799 = vsel %vm746, %v6728, 0
  %v6802 = vsel %vm746, %v6730, 0
  %v6805 = vsel %vm746, %v6732, 0
  %v6808 = vsel %vm746, %v6734, 0
  %6810 = vmatprep.subr.bf16.mxu0 0
  %6811 = vmatpush1.bf16.msra.mxu0 %v6769
  %6812 = vmatprep.subr.bf16.mxu0 0
  %6813 = vmatpush1.bf16.msra.mxu0 %v6770
  %6814 = vmatprep.subr.bf16.mxu0 0
  %6815 = vmatpush1.bf16.msra.mxu0 %v6771
  %6816 = vmatprep.subr.bf16.mxu0 0
  %6817 = vmatpush1.bf16.msra.mxu0 %v6772
  %6818 = vmatprep.subr.bf16.mxu0 0
  %6819 = vmatpush1.bf16.msra.mxu0 %v6773
  %6820 = vmatprep.subr.bf16.mxu0 0
  %6821 = vmatpush1.bf16.msra.mxu0 %v6774
  %6822 = vmatprep.subr.bf16.mxu0 0
  %6823 = vmatpush1.bf16.msra.mxu0 %v6775
  %6824 = vmatprep.subr.bf16.mxu0 0
  %6825 = vmatpush1.bf16.msra.mxu0 0
  %6826 = vmatprep.subr.bf16.mxu0 0
  %6827 = vmatpush1.bf16.msra.mxu0 0
  %6828 = vmatprep.subr.bf16.mxu0 0
  %6829 = vmatpush1.bf16.msra.mxu0 0
  %6830 = vmatprep.subr.bf16.mxu0 0
  %6831 = vmatpush1.bf16.msra.mxu0 0
  %6832 = vmatprep.subr.bf16.mxu0 0
  %6833 = vmatpush1.bf16.msra.mxu0 0
  %6834 = vmatprep.subr.bf16.mxu0 0
  %6835 = vmatpush1.bf16.msra.mxu0 0
  %6836 = vmatprep.subr.bf16.mxu0 0
  %6837 = vmatpush1.bf16.msra.mxu0 0
  %6838 = vmatprep.subr.bf16.mxu0 0
  %6839 = vmatpush1.bf16.msra.mxu0 0
  %6840 = vmatprep.subr.bf16.mxu0 0
  %6841 = vmatpush1.bf16.msra.mxu0 0
  %6842 = vmatprep.mubr.bf16.mxu0 0
  %6843 = vmatmul.mubr.bf16.gmra.mrb[0].mxu0 %v6783
  %v6844 = vpop.f32.mrb[0].mxu0
  %v6845 = vadd.f32 %v6740, %v6844
  %v6846 = vpop.f32.mrb[0].mxu0
  %v6847 = vpop.f32.mrb[0].mxu0
  %v6848 = vadd.f32 %v6740, %v6847
  %v6849 = vpop.f32.mrb[0].mxu0
  %6850 = vmatprep.mubr.bf16.mxu0 0
  %6851 = vmatmul.mubr.bf16.gmra.mrb[0].mxu0 %v6785
  %v6852 = vpop.f32.mrb[0].mxu0
  %v6853 = vadd.f32 %v6740, %v6852
  %v6854 = vpop.f32.mrb[0].mxu0
  %v6855 = vpop.f32.mrb[0].mxu0
  %v6856 = vadd.f32 %v6740, %v6855
  %v6857 = vpop.f32.mrb[0].mxu0
  %6858 = vmatprep.mubr.bf16.mxu0 0
  %6859 = vmatmul.mubr.bf16.gmra.mrb[0].mxu0 %v6787
  %v6860 = vpop.f32.mrb[0].mxu0
  %v6861 = vadd.f32 %v6740, %v6860
  %v6862 = vpop.f32.mrb[0].mxu0
  %v6863 = vpop.f32.mrb[0].mxu0
  %v6864 = vadd.f32 %v6740, %v6863
  %v6865 = vpop.f32.mrb[0].mxu0
  %6866 = vmatprep.mubr.bf16.mxu0 0
  %6867 = vmatmul.mubr.bf16.gmra.mrb[0].mxu0 %v6789
  %v6868 = vpop.f32.mrb[0].mxu0
  %v6869 = vadd.f32 %v6740, %v6868
  %v6870 = vpop.f32.mrb[0].mxu0
  %v6871 = vpop.f32.mrb[0].mxu0
  %v6872 = vadd.f32 %v6740, %v6871
  %v6873 = vpop.f32.mrb[0].mxu0
  %6874 = vmatprep.mubr.bf16.mxu0 0
  %6875 = vmatmul.mubr.bf16.gmra.mrb[0].mxu0 %v6791
  %v6876 = vpop.f32.mrb[0].mxu0
  %v6877 = vadd.f32 %v6740, %v6876
  %v6878 = vpop.f32.mrb[0].mxu0
  %v6879 = vpop.f32.mrb[0].mxu0
  %v6880 = vadd.f32 %v6740, %v6879
  %v6881 = vpop.f32.mrb[0].mxu0
  %6882 = vmatprep.mubr.bf16.mxu0 0
  %6883 = vmatmul.mubr.bf16.gmra.mrb[0].mxu0 %v6793
  %v6884 = vpop.f32.mrb[0].mxu0
  %v6885 = vadd.f32 %v6740, %v6884
  %v6886 = vpop.f32.mrb[0].mxu0
  %v6887 = vpop.f32.mrb[0].mxu0
  %v6888 = vadd.f32 %v6740, %v6887
  %v6889 = vpop.f32.mrb[0].mxu0
  %6890 = vmatprep.mubr.bf16.mxu0 0
  %6891 = vmatmul.mubr.bf16.gmra.mrb[0].mxu0 %v6796
  %v6892 = vpop.f32.mrb[0].mxu0
  %v6893 = vadd.f32 %v6740, %v6892
  %v6894 = vpop.f32.mrb[0].mxu0
  %v6895 = vpop.f32.mrb[0].mxu0
  %v6896 = vadd.f32 %v6740, %v6895
  %v6897 = vpop.f32.mrb[0].mxu0
  %6898 = vmatprep.mubr.bf16.mxu0 0
  %6899 = vmatmul.mubr.bf16.gmra.mrb[0].mxu0 %v6799
  %v6900 = vpop.f32.mrb[0].mxu0
  %v6901 = vadd.f32 %v6740, %v6900
  %v6902 = vpop.f32.mrb[0].mxu0
  %v6903 = vpop.f32.mrb[0].mxu0
  %v6904 = vadd.f32 %v6740, %v6903
  %v6905 = vpop.f32.mrb[0].mxu0
  %6906 = vmatprep.mubr.bf16.mxu0 0
  %6907 = vmatmul.mubr.bf16.gmra.mrb[0].mxu0 %v6802
  %v6908 = vpop.f32.mrb[0].mxu0
  %v6909 = vadd.f32 %v6740, %v6908
  %v6910 = vpop.f32.mrb[0].mxu0
  %v6911 = vpop.f32.mrb[0].mxu0
  %v6912 = vadd.f32 %v6740, %v6911
  %v6913 = vpop.f32.mrb[0].mxu0
  %6914 = vmatprep.mubr.bf16.mxu0 0
  %6915 = vmatmul.mubr.bf16.gmra.mrb[0].mxu0 %v6805
  %v6916 = vpop.f32.mrb[0].mxu0
  %v6917 = vadd.f32 %v6740, %v6916
  %v6918 = vpop.f32.mrb[0].mxu0
  %v6919 = vpop.f32.mrb[0].mxu0
  %v6920 = vadd.f32 %v6740, %v6919
  %v6921 = vpop.f32.mrb[0].mxu0
  %6922 = vmatprep.mubr.bf16.mxu0 0
  %6923 = vmatmul.mubr.bf16.gmra.mrb[0].mxu0 %v6808
  %v6924 = vpop.f32.mrb[0].mxu0
  %v6925 = vadd.f32 %v6740, %v6924
  %v6926 = vpop.f32.mrb[0].mxu0
  %v6927 = vpop.f32.mrb[0].mxu0
  %v6928 = vadd.f32 %v6740, %v6927
  %v6929 = vpop.f32.mrb[0].mxu0
  %6930 = vdwg.mxu0
  %v6931 = vtanh.pop %v6845
  %v6932 = vtanh.pop %v6848
  %v6933 = vtanh.pop %v6853
  %v6934 = vtanh.pop %v6856
  %v6935 = vtanh.pop %v6861
  %v6936 = vtanh.pop %v6864
  %v6937 = vtanh.pop %v6869
  %v6938 = vtanh.pop %v6872
  %v6939 = vtanh.pop %v6877
  %v6940 = vtanh.pop %v6880
  %v6941 = vtanh.pop %v6885
  %v6942 = vtanh.pop %v6888
  %v6943 = vtanh.pop %v6893
  %v6944 = vtanh.pop %v6896
  %v6945 = vtanh.pop %v6901
  %v6946 = vtanh.pop %v6904
  %v6947 = vtanh.pop %v6909
  %v6948 = vtanh.pop %v6912
  %v6949 = vtanh.pop %v6917
  %v6950 = vtanh.pop %v6920
  %v6951 = vtanh.pop %v6925
  %v6952 = vtanh.pop %v6928
  %6953 = vst [vmem:[%s5] sm:$0xff] %v6931
  %6954 = vst [vmem:[%s5 + $0x8] sm:$0xff] %v6932
  %6955 = vst [vmem:[%s5 + $0x10] sm:$0xff] %v6933
  %6956 = vst [vmem:[%s5 + $0x18] sm:$0xff] %v6934
  %6957 = vst [vmem:[%s5 + $0x20] sm:$0xff] %v6935
  %6958 = vst [vmem:[%s5 + $0x28] sm:$0xff] %v6936
  %6959 = vst [vmem:[%s5 + $0x30] sm:$0xff] %v6937
  %6960 = vst [vmem:[%s5 + $0x38] sm:$0xff] %v6938
  %6961 = vst [vmem:[%s5 + $0x40] sm:$0xff] %v6939
  %6962 = vst [vmem:[%s5 + $0x48] sm:$0xff] %v6940
  %6963 = vst [vmem:[%s5 + $0x50] sm:$0xff] %v6941
  %6964 = vst [vmem:[%s5 + $0x58] sm:$0xff] %v6942
  %6965 = vst [vmem:[%s5 + $0x60] sm:$0xff] %v6943
  %6966 = vst [vmem:[%s5 + $0x68] sm:$0xff] %v6944
  %6967 = vst [vmem:[%s5 + $0x70] sm:$0xff] %v6945
  %6968 = vst [vmem:[%s5 + $0x78] sm:$0xff] %v6946
  %6969 = vst [vmem:[%s5 + $0x80] sm:$0xff] %v6947
  %6970 = vst [vmem:[%s5 + $0x88] sm:$0xff] %v6948
  %6971 = vst [vmem:[%s5 + $0x90] sm:$0xff] %v6949
  %6972 = vst [vmem:[%s5 + $0x98] sm:$0xff] %v6950
  %6973 = vst [vmem:[%s5 + $0xa0] sm:$0xff] %v6951
  %6974 = vst [vmem:[%s5 + $0xa8] sm:$0xf] %v6952
  // Predicated region
  $region22: #{autoencoder_forward.1} parent=0 // pred_check
    _
  $region23: #{autoencoder_forward.1} parent=0 // pred_check_branch
    %6976 = sbr.rel (0) target = $region25
  $region24: #{autoencoder_forward.1} parent=0 // pred_region
    _
  $region25: #{autoencoder_forward.1} parent=0 // pred_fallthru
    _
  // Predicated region
  $region26: #{autoencoder_forward.1} parent=0 // pred_check
    _
  $region27: #{autoencoder_forward.1} parent=0 // pred_check_branch
    %6978 = sbr.rel (0) target = $region29
  $region28: #{autoencoder_forward.1} parent=0 // pred_region
    _
  $region29: #{autoencoder_forward.1} parent=0 // pred_fallthru
    _

</llo_original>
